<compile_context>
chip_gen: v7x
topology: tpu7x:2x2x1
jax: 0.10.0
libtpu: 0.0.40
codegen_flags: <defaults>
</compile_context>

<pallas_src>
import math

import numpy as np
import jax
import jax.numpy as jnp
from jax.experimental import pallas as pl
from jax.experimental.pallas import tpu as pltpu

# ----- structural constants from the PyTorch module -----
K_SIZE = 8        # kernel size K
S_CONV = 4        # stride
RESAMPLE = 4      # resample factor
DEPTH = 5         # L
assert K_SIZE == 2 * S_CONV

# ----- small synthetic model config -----
HIDDEN0 = 2
GROWTH = 2
CHOUT = 1
BATCH = 2
BASE_LENGTH_SMALL = 256  # small stand-in for SAMPLE_RATE * TARGET_AUDIO_LENGTH
SINC_ZEROS = 56          # taps/2 of the downsample2 sinc filter


def compute_valid_length(base_length, depth, kernel_size, stride, resample):
    L_val = math.ceil(base_length * resample)
    for _ in range(depth):
        L_val = math.ceil((L_val - kernel_size) / stride) + 1
        L_val = max(L_val, 1)
    for _ in range(depth):
        L_val = (L_val - 1) * stride + kernel_size
    return int(math.ceil(L_val / resample))


def sinc_downsample_filter():
    z = SINC_ZEROS
    win = 0.5 * (1.0 - np.cos(2.0 * np.pi * np.arange(4 * z + 1) / (4 * z)))
    winodd = win[1::2]
    t = np.linspace(-z + 0.5, z - 0.5, 2 * z) * np.pi
    return jnp.asarray((np.sin(t) / t) * winodd, jnp.float32)   # (112,)


# =====================================================================
# Host-side constant builders (plain numpy, run once in the wrapper)
# =====================================================================
def _make_scatter_matrix(t_len):
    """G[(k*T + q), 4q + k] = 1.

    With ycat[o, k*T + q] = (W_k u)[o, q], `ycat @ G` is exactly the
    stride-4, kernel-8 ConvTranspose1d output in true time order."""
    to = S_CONV * (t_len + 1)
    g = np.zeros((K_SIZE * t_len, to), np.float32)
    q = np.arange(t_len)
    for k in range(K_SIZE):
        g[k * t_len + q, S_CONV * q + k] = 1.0
    return jnp.asarray(g)


def _downsample2_matrix(n, kern_np):
    """Dense D (n, n//2) such that downsample2(x) == x @ D (row-vector conv),
    including the zero padding at both edges."""
    assert n % 2 == 0
    half = n // 2
    d = np.zeros((n, half), np.float64)
    i = np.arange(half)
    d[2 * i, i] = 0.5
    for j in range(2 * SINC_ZEROS):
        src = i + j - SINC_ZEROS          # index into the odd-sample stream
        valid = (src >= 0) & (src < half)
        d[2 * src[valid] + 1, i[valid]] += 0.5 * kern_np[j]
    return d


def _build_composed_tail(wt_last, bt_last, kern_np, t_last, out_pad):
    """Compose last ConvTranspose1d (+bias) with the two downsample2 stages.

    Returns A (Cin, T_last, out_pad) and bias (1, out_pad) with
        out[0, :] = bias + sum_c u[c, :] @ A[c]
    The bias vector is composed through the full matrices, so the edge ramps
    within ~28 samples of each boundary are exact (not approximated)."""
    t_len = int(t_last)
    ty = S_CONV * t_len + K_SIZE - S_CONV       # ConvTranspose output length
    cin = wt_last.shape[0]
    d1 = _downsample2_matrix(ty, kern_np)       # (Ty, Ty/2)
    d2 = _downsample2_matrix(ty // 2, kern_np)  # (Ty/2, Ty/4)
    m = ty // RESAMPLE
    q = np.arange(t_len)
    a = np.zeros((cin, t_len, out_pad), np.float32)
    for c in range(cin):
        # (M_c @ D1) computed sparsely: M_c[q, 4q+k] = wt[c, 0, k]
        md1 = np.zeros((t_len, ty // 2), np.float64)
        for k in range(K_SIZE):
            md1 += wt_last[c, 0, k] * d1[S_CONV * q + k, :]
        a[c, :, :m] = (md1 @ d2).astype(np.float32)
    bias = np.zeros((1, out_pad), np.float32)
    bias[0, :m] = ((bt_last[0] * d1.sum(axis=0)) @ d2).astype(np.float32)
    return jnp.asarray(a), jnp.asarray(bias)


# =====================================================================
# Fused Pallas kernel: 5 decoder layers + composed resample tail
# =====================================================================
def _fused_decode_kernel(*refs):
    nw = 4 * (DEPTH - 1) + 2
    latent_ref = refs[0]
    skip_refs = refs[1:1 + DEPTH]
    w_refs = refs[1 + DEPTH:1 + DEPTH + nw]
    g_refs = refs[1 + DEPTH + nw:DEPTH + nw + DEPTH]
    a_ref = refs[DEPTH + nw + DEPTH]
    btail_ref = refs[DEPTH + nw + DEPTH + 1]
    out_ref = refs[DEPTH + nw + DEPTH + 2]

    x = latent_ref[0]                               # (C0, T0), channels on sublanes

    # ---------------- decoder layers 0 .. DEPTH-2 ----------------
    for l in range(DEPTH - 1):
        w1 = w_refs[4 * l][...]                     # (2C, C)
        b1 = w_refs[4 * l + 1][...]                 # (2C, 1)
        wt = w_refs[4 * l + 2][...]                 # (K*Cout, C), tap-major rows
        bt = w_refs[4 * l + 3][...]                 # (Cout, 1)
        c_in = x.shape[0]
        c_out = bt.shape[0]

        xa = x + skip_refs[l][0]                                       # skip add
        h = jnp.dot(w1, xa, preferred_element_type=jnp.float32) + b1
        u = h[:c_in, :] * jax.nn.sigmoid(h[c_in:, :])                  # GLU

        # all K taps of the ConvTranspose1d in one MXU call
        y = jnp.dot(wt, u, preferred_element_type=jnp.float32)        # (K*Cout, T)
        # taps moved from sublanes to lanes, then one scatter matmul puts the
        # output directly in true time order (ReLU commutes with the scatter).
        ycat = jnp.concatenate(
            [y[k * c_out:(k + 1) * c_out, :] for k in range(K_SIZE)], axis=1)
        x = jnp.maximum(
            jnp.dot(ycat, g_refs[l][...],
                    preferred_element_type=jnp.float32) + bt, 0.0)     # (Cout, 4T+4)

    # ---------------- last layer: 1x1 + GLU, then composed tail ----------------
    w1 = w_refs[4 * (DEPTH - 1)][...]
    b1 = w_refs[4 * (DEPTH - 1) + 1][...]
    c_in = x.shape[0]
    xa = x + skip_refs[DEPTH - 1][0]
    h = jnp.dot(w1, xa, preferred_element_type=jnp.float32) + b1
    u = h[:c_in, :] * jax.nn.sigmoid(h[c_in:, :])                      # (Cin, T)

    # composed (last ConvTranspose1d + bias + 2x downsample2 + 0.5 scalings):
    # a single matmul per input channel, output already lane-padded/zeroed.
    out = btail_ref[...]                                               # (1, out_pad)
    for c in range(c_in):
        out = out + jnp.dot(u[c:c + 1, :], a_ref[c],
                            preferred_element_type=jnp.float32)
    out_ref[0] = out


# =====================================================================
# Wrapper
# =====================================================================
def demucs_decoder_onnx_forward(layer_params, frame_length, kern, latent, *skips):
    """Mirror of DemucsDecoderONNX.forward: inputs = (latent, *skip_list).

    layer_params[l] = (w1 (2C,C), b1 (2C,), wt (Cin,Cout,K), bt (Cout,))."""
    B = latent.shape[0]
    skips = list(skips)
    assert len(skips) == DEPTH and len(layer_params) == DEPTH

    # decode-order skips, trimmed to the exact length each layer consumes
    dec_skips, dec_lens = [], []
    t_len = latent.shape[-1]
    for l in range(DEPTH):
        dec_skips.append(skips[DEPTH - 1 - l][..., :t_len])
        dec_lens.append(t_len)
        t_len = S_CONV * (t_len + 1)
    m = t_len // RESAMPLE                    # length after the 4x downsample
    assert frame_length <= m
    out_pad = ((m + 127) // 128) * 128       # lane-dense output block

    chout = layer_params[-1][3].shape[0]
    assert chout == 1  # TODO(synk): generalize the composed tail to CHOUT > 1

    # packed weights (layer DEPTH-1's ConvTranspose is folded into the tail)
    flat_w = []
    for l in range(DEPTH):
        w1, b1, wt, bt = layer_params[l]
        cin = w1.shape[1]
        flat_w += [w1, b1.reshape(2 * cin, 1)]
        if l < DEPTH - 1:
            cout = wt.shape[1]
            wt_packed = jnp.transpose(wt, (2, 1, 0)).reshape(K_SIZE * cout, cin)
            flat_w += [wt_packed, bt.reshape(cout, 1)]

    # constants: per-layer tap-scatter matrices + composed tail
    g_mats = [_make_scatter_matrix(dec_lens[l]) for l in range(DEPTH - 1)]
    kern_np = np.asarray(kern, np.float64)
    wt_last = np.asarray(layer_params[-1][2], np.float64)
    bt_last = np.asarray(layer_params[-1][3], np.float64)
    a_tail, bias_tail = _build_composed_tail(wt_last, bt_last, kern_np,
                                             dec_lens[-1], out_pad)

    args = [latent] + dec_skips + flat_w + g_mats + [a_tail, bias_tail]

    in_specs = [pl.BlockSpec((1,) + latent.shape[1:], lambda b: (b, 0, 0))]
    for sk in dec_skips:
        in_specs.append(pl.BlockSpec((1,) + sk.shape[1:], lambda b: (b, 0, 0)))
    for w in flat_w + g_mats + [a_tail, bias_tail]:
        in_specs.append(pl.BlockSpec(w.shape, lambda b, n=w.ndim: (0,) * n))

    out = pl.pallas_call(
        _fused_decode_kernel,
        grid=(B,),
        in_specs=in_specs,
        out_specs=pl.BlockSpec((1, chout, out_pad), lambda b: (b, 0, 0)),
        out_shape=jax.ShapeDtypeStruct((B, chout, out_pad), jnp.float32),
        compiler_params=pltpu.CompilerParams(
            dimension_semantics=("parallel",),
            vmem_limit_bytes=32 * 1024 * 1024),
    )(*args)
    return out[..., :frame_length]


# =====================================================================
# Pure-JAX reference (for correctness check only)
# =====================================================================
def ref_downsample2(x, kern):
    xe = x[..., 0::2]
    xo = x[..., 1::2]
    tm = xo.shape[-1]
    pad = jnp.pad(xo, ((0, 0), (0, 0), (SINC_ZEROS, SINC_ZEROS)))
    conv = jnp.zeros_like(xo)
    for j in range(2 * SINC_ZEROS):
        conv = conv + kern[j] * pad[..., j:j + tm]
    return 0.5 * (xe + conv)


def ref_decode(ref_params, frame_length, kern, latent, skips):
    x = latent
    sk = list(skips)
    for (w1, b1, wt, bt, relu) in ref_params:
        skip = sk.pop(-1)
        T = x.shape[-1]
        x = x + skip[..., :T]
        h = jnp.einsum('oc,bct->bot', w1, x) + b1[None, :, None]
        C = x.shape[1]
        u = h[:, :C] * jax.nn.sigmoid(h[:, C:])
        To = (T - 1) * S_CONV + K_SIZE
        out = jnp.zeros((x.shape[0], bt.shape[0], To), jnp.float32)
        for k in range(K_SIZE):
            contrib = jnp.einsum('co,bct->bot', wt[:, :, k], u)
            out = out.at[:, :, k:k + S_CONV * T:S_CONV].add(contrib)
        out = out + bt[None, :, None]
        if relu:
            out = jnp.maximum(out, 0.0)
        x = out
    x = ref_downsample2(x, kern)
    x = ref_downsample2(x, kern)
    return x[..., :frame_length]


# =====================================================================
if __name__ == "__main__":
    frame_length = compute_valid_length(BASE_LENGTH_SMALL, DEPTH, K_SIZE,
                                        S_CONV, RESAMPLE)            # -> 597

    # Encoder channel / length bookkeeping (to build consistent skip shapes).
    H = [HIDDEN0 * GROWTH ** i for i in range(DEPTH)]                # [2,4,8,16,32]
    enc_lens = []
    t = frame_length * RESAMPLE
    for _ in range(DEPTH):
        t = (t - K_SIZE) // S_CONV + 1
        enc_lens.append(t)                                           # [596,148,36,8,1]

    # Deterministic parameter init.
    key = jax.random.PRNGKey(0)
    layer_params = []   # natural (PyTorch-layout) parameters, packed in wrapper
    ref_params = []
    for i in range(DEPTH):
        Cin = H[DEPTH - 1 - i]
        Cout = H[DEPTH - 2 - i] if i < DEPTH - 1 else CHOUT
        key, k1, k2, k3, k4 = jax.random.split(key, 5)
        w1 = jax.random.normal(k1, (2 * Cin, Cin), jnp.float32) / jnp.sqrt(Cin)
        b1 = jax.random.normal(k2, (2 * Cin,), jnp.float32) * 0.1
        wt = jax.random.normal(k3, (Cin, Cout, K_SIZE),
                               jnp.float32) / jnp.sqrt(Cin * K_SIZE)
        bt = jax.random.normal(k4, (Cout,), jnp.float32) * 0.1
        relu = i < DEPTH - 1
        layer_params.append((w1, b1, wt, bt))
        ref_params.append((w1, b1, wt, bt, relu))

    # Deterministic example inputs: latent + skip list (encoder order).
    key, kl = jax.random.split(key)
    latent = jax.random.normal(kl, (BATCH, H[-1], enc_lens[-1]), jnp.float32)
    skips = []
    for i in range(DEPTH):
        key, ks = jax.random.split(key)
        skips.append(jax.random.normal(ks, (BATCH, H[i], enc_lens[i]),
                                       jnp.float32))

    kern = sinc_downsample_filter()

    out = demucs_decoder_onnx_forward(layer_params, frame_length, kern,
                                      latent, *skips)
    out = jax.block_until_ready(out)
    assert out.shape == (BATCH, CHOUT, frame_length), out.shape

    ref = jax.block_until_ready(
        ref_decode(ref_params, frame_length, kern, latent, skips))
    max_err = float(jnp.max(jnp.abs(out - ref)))
    ref_scale = float(jnp.max(jnp.abs(ref)))
    assert max_err <= 1e-3 + 1e-3 * ref_scale, \
        f"mismatch vs reference: {max_err} (ref max {ref_scale})"

    print("KERNEL_OK")
</pallas_src>

<mosaic_0001>
module attributes {stable_mosaic.version = 11 : i64} {
  func.func @_fused_decode_kernel(%arg0: i32, %arg1: memref<1x32x1xf32, #tpu.memory_space<vmem>>, %arg2: memref<1x32x1xf32, #tpu.memory_space<vmem>>, %arg3: memref<1x16x8xf32, #tpu.memory_space<vmem>>, %arg4: memref<1x8x36xf32, #tpu.memory_space<vmem>>, %arg5: memref<1x4x148xf32, #tpu.memory_space<vmem>>, %arg6: memref<1x2x596xf32, #tpu.memory_space<vmem>>, %arg7: memref<64x32xf32, #tpu.memory_space<vmem>>, %arg8: memref<64x1xf32, #tpu.memory_space<vmem>>, %arg9: memref<128x32xf32, #tpu.memory_space<vmem>>, %arg10: memref<16x1xf32, #tpu.memory_space<vmem>>, %arg11: memref<32x16xf32, #tpu.memory_space<vmem>>, %arg12: memref<32x1xf32, #tpu.memory_space<vmem>>, %arg13: memref<64x16xf32, #tpu.memory_space<vmem>>, %arg14: memref<8x1xf32, #tpu.memory_space<vmem>>, %arg15: memref<16x8xf32, #tpu.memory_space<vmem>>, %arg16: memref<16x1xf32, #tpu.memory_space<vmem>>, %arg17: memref<32x8xf32, #tpu.memory_space<vmem>>, %arg18: memref<4x1xf32, #tpu.memory_space<vmem>>, %arg19: memref<8x4xf32, #tpu.memory_space<vmem>>, %arg20: memref<8x1xf32, #tpu.memory_space<vmem>>, %arg21: memref<16x4xf32, #tpu.memory_space<vmem>>, %arg22: memref<2x1xf32, #tpu.memory_space<vmem>>, %arg23: memref<4x2xf32, #tpu.memory_space<vmem>>, %arg24: memref<4x1xf32, #tpu.memory_space<vmem>>, %arg25: memref<8x8xf32, #tpu.memory_space<vmem>>, %arg26: memref<64x36xf32, #tpu.memory_space<vmem>>, %arg27: memref<288x148xf32, #tpu.memory_space<vmem>>, %arg28: memref<1184x596xf32, #tpu.memory_space<vmem>>, %arg29: memref<2x596x640xf32, #tpu.memory_space<vmem>>, %arg30: memref<1x640xf32, #tpu.memory_space<vmem>>, %arg31: memref<1x1x640xf32, #tpu.memory_space<vmem>>) attributes {dimension_semantics = [#tpu.dimension_semantics<parallel>], iteration_bounds = array<i64: 2>, scalar_prefetch = 0 : i64, scratch_operands = 0 : i64, tpu.core_type = #tpu.core_type<tc>, window_params = [{transform_indices = @transform_0, window_bounds = array<i64: 1, 32, 1>}, {transform_indices = @transform_1, window_bounds = array<i64: 1, 32, 1>}, {transform_indices = @transform_2, window_bounds = array<i64: 1, 16, 8>}, {transform_indices = @transform_3, window_bounds = array<i64: 1, 8, 36>}, {transform_indices = @transform_4, window_bounds = array<i64: 1, 4, 148>}, {transform_indices = @transform_5, window_bounds = array<i64: 1, 2, 596>}, {pipeline_mode = #tpu.pipeline_mode<synchronous>, transform_indices = @transform_6, window_bounds = array<i64: 64, 32>}, {pipeline_mode = #tpu.pipeline_mode<synchronous>, transform_indices = @transform_7, window_bounds = array<i64: 64, 1>}, {pipeline_mode = #tpu.pipeline_mode<synchronous>, transform_indices = @transform_8, window_bounds = array<i64: 128, 32>}, {pipeline_mode = #tpu.pipeline_mode<synchronous>, transform_indices = @transform_9, window_bounds = array<i64: 16, 1>}, {pipeline_mode = #tpu.pipeline_mode<synchronous>, transform_indices = @transform_10, window_bounds = array<i64: 32, 16>}, {pipeline_mode = #tpu.pipeline_mode<synchronous>, transform_indices = @transform_11, window_bounds = array<i64: 32, 1>}, {pipeline_mode = #tpu.pipeline_mode<synchronous>, transform_indices = @transform_12, window_bounds = array<i64: 64, 16>}, {pipeline_mode = #tpu.pipeline_mode<synchronous>, transform_indices = @transform_13, window_bounds = array<i64: 8, 1>}, {pipeline_mode = #tpu.pipeline_mode<synchronous>, transform_indices = @transform_14, window_bounds = array<i64: 16, 8>}, {pipeline_mode = #tpu.pipeline_mode<synchronous>, transform_indices = @transform_15, window_bounds = array<i64: 16, 1>}, {pipeline_mode = #tpu.pipeline_mode<synchronous>, transform_indices = @transform_16, window_bounds = array<i64: 32, 8>}, {pipeline_mode = #tpu.pipeline_mode<synchronous>, transform_indices = @transform_17, window_bounds = array<i64: 4, 1>}, {pipeline_mode = #tpu.pipeline_mode<synchronous>, transform_indices = @transform_18, window_bounds = array<i64: 8, 4>}, {pipeline_mode = #tpu.pipeline_mode<synchronous>, transform_indices = @transform_19, window_bounds = array<i64: 8, 1>}, {pipeline_mode = #tpu.pipeline_mode<synchronous>, transform_indices = @transform_20, window_bounds = array<i64: 16, 4>}, {pipeline_mode = #tpu.pipeline_mode<synchronous>, transform_indices = @transform_21, window_bounds = array<i64: 2, 1>}, {pipeline_mode = #tpu.pipeline_mode<synchronous>, transform_indices = @transform_22, window_bounds = array<i64: 4, 2>}, {pipeline_mode = #tpu.pipeline_mode<synchronous>, transform_indices = @transform_23, window_bounds = array<i64: 4, 1>}, {pipeline_mode = #tpu.pipeline_mode<synchronous>, transform_indices = @transform_24, window_bounds = array<i64: 8, 8>}, {pipeline_mode = #tpu.pipeline_mode<synchronous>, transform_indices = @transform_25, window_bounds = array<i64: 64, 36>}, {pipeline_mode = #tpu.pipeline_mode<synchronous>, transform_indices = @transform_26, window_bounds = array<i64: 288, 148>}, {pipeline_mode = #tpu.pipeline_mode<synchronous>, transform_indices = @transform_27, window_bounds = array<i64: 1184, 596>}, {pipeline_mode = #tpu.pipeline_mode<synchronous>, transform_indices = @transform_28, window_bounds = array<i64: 2, 596, 640>}, {pipeline_mode = #tpu.pipeline_mode<synchronous>, transform_indices = @transform_29, window_bounds = array<i64: 1, 640>}, {transform_indices = @transform_30, window_bounds = array<i64: 1, 1, 640>}]} {
    %c0 = arith.constant 0 : index
    %c0_0 = arith.constant 0 : index
    %c0_1 = arith.constant 0 : index
    %0 = vector.load %arg1[%c0, %c0_0, %c0_1] : memref<1x32x1xf32, #tpu.memory_space<vmem>>, vector<1x32x1xf32>
    %1 = vector.shape_cast %0 : vector<1x32x1xf32> to vector<32x1xf32>
    %c0_2 = arith.constant 0 : index
    %c0_3 = arith.constant 0 : index
    %2 = vector.load %arg7[%c0_2, %c0_3] : memref<64x32xf32, #tpu.memory_space<vmem>>, vector<64x32xf32>
    %c0_4 = arith.constant 0 : index
    %c0_5 = arith.constant 0 : index
    %3 = vector.load %arg8[%c0_4, %c0_5] : memref<64x1xf32, #tpu.memory_space<vmem>>, vector<64x1xf32>
    %c0_6 = arith.constant 0 : index
    %c0_7 = arith.constant 0 : index
    %4 = vector.load %arg9[%c0_6, %c0_7] : memref<128x32xf32, #tpu.memory_space<vmem>>, vector<128x32xf32>
    %c0_8 = arith.constant 0 : index
    %c0_9 = arith.constant 0 : index
    %5 = vector.load %arg10[%c0_8, %c0_9] : memref<16x1xf32, #tpu.memory_space<vmem>>, vector<16x1xf32>
    %c0_10 = arith.constant 0 : index
    %c0_11 = arith.constant 0 : index
    %c0_12 = arith.constant 0 : index
    %6 = vector.load %arg2[%c0_10, %c0_11, %c0_12] : memref<1x32x1xf32, #tpu.memory_space<vmem>>, vector<1x32x1xf32>
    %7 = vector.shape_cast %6 : vector<1x32x1xf32> to vector<32x1xf32>
    %8 = arith.addf %1, %7 : vector<32x1xf32>
    %cst = arith.constant dense<0.000000e+00> : vector<64x1xf32>
    %9 = tpu.matmul %2, %8, %cst {dimension_numbers = #tpu.dot_dimension_numbers<[1], [0], [0], [1], [0, 0, 1, 1], [], []>} : vector<64x32xf32>, vector<32x1xf32>, vector<64x1xf32> -> vector<64x1xf32>
    %10 = arith.addf %9, %3 : vector<64x1xf32>
    %11 = vector.extract_strided_slice %10 {offsets = [0, 0], sizes = [32, 1], strides = [1, 1]} : vector<64x1xf32> to vector<32x1xf32>
    %12 = vector.extract_strided_slice %10 {offsets = [32, 0], sizes = [32, 1], strides = [1, 1]} : vector<64x1xf32> to vector<32x1xf32>
    %13 = arith.negf %12 : vector<32x1xf32>
    %14 = math.exp %13 : vector<32x1xf32>
    %cst_13 = arith.constant 1.000000e+00 : f32
    %15 = vector.broadcast %cst_13 : f32 to vector<32x1xf32>
    %16 = arith.addf %15, %14 : vector<32x1xf32>
    %17 = arith.divf %15, %16 : vector<32x1xf32>
    %18 = arith.mulf %11, %17 : vector<32x1xf32>
    %cst_14 = arith.constant dense<0.000000e+00> : vector<128x1xf32>
    %19 = tpu.matmul %4, %18, %cst_14 {dimension_numbers = #tpu.dot_dimension_numbers<[1], [0], [0], [1], [0, 0, 1, 1], [], []>} : vector<128x32xf32>, vector<32x1xf32>, vector<128x1xf32> -> vector<128x1xf32>
    %20 = vector.extract_strided_slice %19 {offsets = [0, 0], sizes = [16, 1], strides = [1, 1]} : vector<128x1xf32> to vector<16x1xf32>
    %21 = vector.extract_strided_slice %19 {offsets = [16, 0], sizes = [16, 1], strides = [1, 1]} : vector<128x1xf32> to vector<16x1xf32>
    %22 = vector.extract_strided_slice %19 {offsets = [32, 0], sizes = [16, 1], strides = [1, 1]} : vector<128x1xf32> to vector<16x1xf32>
    %23 = vector.extract_strided_slice %19 {offsets = [48, 0], sizes = [16, 1], strides = [1, 1]} : vector<128x1xf32> to vector<16x1xf32>
    %24 = vector.extract_strided_slice %19 {offsets = [64, 0], sizes = [16, 1], strides = [1, 1]} : vector<128x1xf32> to vector<16x1xf32>
    %25 = vector.extract_strided_slice %19 {offsets = [80, 0], sizes = [16, 1], strides = [1, 1]} : vector<128x1xf32> to vector<16x1xf32>
    %26 = vector.extract_strided_slice %19 {offsets = [96, 0], sizes = [16, 1], strides = [1, 1]} : vector<128x1xf32> to vector<16x1xf32>
    %27 = vector.extract_strided_slice %19 {offsets = [112, 0], sizes = [16, 1], strides = [1, 1]} : vector<128x1xf32> to vector<16x1xf32>
    %28 = tpu.concatenate %20, %21, %22, %23, %24, %25, %26, %27 in 1 : vector<16x1xf32>, vector<16x1xf32>, vector<16x1xf32>, vector<16x1xf32>, vector<16x1xf32>, vector<16x1xf32>, vector<16x1xf32>, vector<16x1xf32> -> vector<16x8xf32>
    %c0_15 = arith.constant 0 : index
    %c0_16 = arith.constant 0 : index
    %29 = vector.load %arg25[%c0_15, %c0_16] : memref<8x8xf32, #tpu.memory_space<vmem>>, vector<8x8xf32>
    %cst_17 = arith.constant dense<0.000000e+00> : vector<16x8xf32>
    %30 = tpu.matmul %28, %29, %cst_17 {dimension_numbers = #tpu.dot_dimension_numbers<[1], [0], [0], [1], [0, 0, 1, 1], [], []>} : vector<16x8xf32>, vector<8x8xf32>, vector<16x8xf32> -> vector<16x8xf32>
    %31 = vector.broadcast %5 : vector<16x1xf32> to vector<16x8xf32>
    %32 = arith.addf %30, %31 : vector<16x8xf32>
    %cst_18 = arith.constant 0.000000e+00 : f32
    %33 = vector.broadcast %cst_18 : f32 to vector<16x8xf32>
    %34 = arith.maximumf %32, %33 : vector<16x8xf32>
    %c0_19 = arith.constant 0 : index
    %c0_20 = arith.constant 0 : index
    %35 = vector.load %arg11[%c0_19, %c0_20] : memref<32x16xf32, #tpu.memory_space<vmem>>, vector<32x16xf32>
    %c0_21 = arith.constant 0 : index
    %c0_22 = arith.constant 0 : index
    %36 = vector.load %arg12[%c0_21, %c0_22] : memref<32x1xf32, #tpu.memory_space<vmem>>, vector<32x1xf32>
    %c0_23 = arith.constant 0 : index
    %c0_24 = arith.constant 0 : index
    %37 = vector.load %arg13[%c0_23, %c0_24] : memref<64x16xf32, #tpu.memory_space<vmem>>, vector<64x16xf32>
    %c0_25 = arith.constant 0 : index
    %c0_26 = arith.constant 0 : index
    %38 = vector.load %arg14[%c0_25, %c0_26] : memref<8x1xf32, #tpu.memory_space<vmem>>, vector<8x1xf32>
    %c0_27 = arith.constant 0 : index
    %c0_28 = arith.constant 0 : index
    %c0_29 = arith.constant 0 : index
    %39 = vector.load %arg3[%c0_27, %c0_28, %c0_29] : memref<1x16x8xf32, #tpu.memory_space<vmem>>, vector<1x16x8xf32>
    %40 = vector.shape_cast %39 : vector<1x16x8xf32> to vector<16x8xf32>
    %41 = arith.addf %34, %40 : vector<16x8xf32>
    %cst_30 = arith.constant dense<0.000000e+00> : vector<32x8xf32>
    %42 = tpu.matmul %35, %41, %cst_30 {dimension_numbers = #tpu.dot_dimension_numbers<[1], [0], [0], [1], [0, 0, 1, 1], [], []>} : vector<32x16xf32>, vector<16x8xf32>, vector<32x8xf32> -> vector<32x8xf32>
    %43 = vector.broadcast %36 : vector<32x1xf32> to vector<32x8xf32>
    %44 = arith.addf %42, %43 : vector<32x8xf32>
    %45 = vector.extract_strided_slice %44 {offsets = [0, 0], sizes = [16, 8], strides = [1, 1]} : vector<32x8xf32> to vector<16x8xf32>
    %46 = vector.extract_strided_slice %44 {offsets = [16, 0], sizes = [16, 8], strides = [1, 1]} : vector<32x8xf32> to vector<16x8xf32>
    %47 = arith.negf %46 : vector<16x8xf32>
    %48 = math.exp %47 : vector<16x8xf32>
    %cst_31 = arith.constant 1.000000e+00 : f32
    %49 = vector.broadcast %cst_31 : f32 to vector<16x8xf32>
    %50 = arith.addf %49, %48 : vector<16x8xf32>
    %51 = arith.divf %49, %50 : vector<16x8xf32>
    %52 = arith.mulf %45, %51 : vector<16x8xf32>
    %cst_32 = arith.constant dense<0.000000e+00> : vector<64x8xf32>
    %53 = tpu.matmul %37, %52, %cst_32 {dimension_numbers = #tpu.dot_dimension_numbers<[1], [0], [0], [1], [0, 0, 1, 1], [], []>} : vector<64x16xf32>, vector<16x8xf32>, vector<64x8xf32> -> vector<64x8xf32>
    %54 = vector.extract_strided_slice %53 {offsets = [0, 0], sizes = [8, 8], strides = [1, 1]} : vector<64x8xf32> to vector<8x8xf32>
    %55 = vector.extract_strided_slice %53 {offsets = [8, 0], sizes = [8, 8], strides = [1, 1]} : vector<64x8xf32> to vector<8x8xf32>
    %56 = vector.extract_strided_slice %53 {offsets = [16, 0], sizes = [8, 8], strides = [1, 1]} : vector<64x8xf32> to vector<8x8xf32>
    %57 = vector.extract_strided_slice %53 {offsets = [24, 0], sizes = [8, 8], strides = [1, 1]} : vector<64x8xf32> to vector<8x8xf32>
    %58 = vector.extract_strided_slice %53 {offsets = [32, 0], sizes = [8, 8], strides = [1, 1]} : vector<64x8xf32> to vector<8x8xf32>
    %59 = vector.extract_strided_slice %53 {offsets = [40, 0], sizes = [8, 8], strides = [1, 1]} : vector<64x8xf32> to vector<8x8xf32>
    %60 = vector.extract_strided_slice %53 {offsets = [48, 0], sizes = [8, 8], strides = [1, 1]} : vector<64x8xf32> to vector<8x8xf32>
    %61 = vector.extract_strided_slice %53 {offsets = [56, 0], sizes = [8, 8], strides = [1, 1]} : vector<64x8xf32> to vector<8x8xf32>
    %62 = tpu.concatenate %54, %55, %56, %57, %58, %59, %60, %61 in 1 : vector<8x8xf32>, vector<8x8xf32>, vector<8x8xf32>, vector<8x8xf32>, vector<8x8xf32>, vector<8x8xf32>, vector<8x8xf32>, vector<8x8xf32> -> vector<8x64xf32>
    %c0_33 = arith.constant 0 : index
    %c0_34 = arith.constant 0 : index
    %63 = vector.load %arg26[%c0_33, %c0_34] : memref<64x36xf32, #tpu.memory_space<vmem>>, vector<64x36xf32>
    %cst_35 = arith.constant dense<0.000000e+00> : vector<8x36xf32>
    %64 = tpu.matmul %62, %63, %cst_35 {dimension_numbers = #tpu.dot_dimension_numbers<[1], [0], [0], [1], [0, 0, 1, 1], [], []>} : vector<8x64xf32>, vector<64x36xf32>, vector<8x36xf32> -> vector<8x36xf32>
    %65 = vector.broadcast %38 : vector<8x1xf32> to vector<8x36xf32>
    %66 = arith.addf %64, %65 : vector<8x36xf32>
    %cst_36 = arith.constant 0.000000e+00 : f32
    %67 = vector.broadcast %cst_36 : f32 to vector<8x36xf32>
    %68 = arith.maximumf %66, %67 : vector<8x36xf32>
    %c0_37 = arith.constant 0 : index
    %c0_38 = arith.constant 0 : index
    %69 = vector.load %arg15[%c0_37, %c0_38] : memref<16x8xf32, #tpu.memory_space<vmem>>, vector<16x8xf32>
    %c0_39 = arith.constant 0 : index
    %c0_40 = arith.constant 0 : index
    %70 = vector.load %arg16[%c0_39, %c0_40] : memref<16x1xf32, #tpu.memory_space<vmem>>, vector<16x1xf32>
    %c0_41 = arith.constant 0 : index
    %c0_42 = arith.constant 0 : index
    %71 = vector.load %arg17[%c0_41, %c0_42] : memref<32x8xf32, #tpu.memory_space<vmem>>, vector<32x8xf32>
    %c0_43 = arith.constant 0 : index
    %c0_44 = arith.constant 0 : index
    %72 = vector.load %arg18[%c0_43, %c0_44] : memref<4x1xf32, #tpu.memory_space<vmem>>, vector<4x1xf32>
    %c0_45 = arith.constant 0 : index
    %c0_46 = arith.constant 0 : index
    %c0_47 = arith.constant 0 : index
    %73 = vector.load %arg4[%c0_45, %c0_46, %c0_47] : memref<1x8x36xf32, #tpu.memory_space<vmem>>, vector<1x8x36xf32>
    %74 = vector.shape_cast %73 : vector<1x8x36xf32> to vector<8x36xf32>
    %75 = arith.addf %68, %74 : vector<8x36xf32>
    %cst_48 = arith.constant dense<0.000000e+00> : vector<16x36xf32>
    %76 = tpu.matmul %69, %75, %cst_48 {dimension_numbers = #tpu.dot_dimension_numbers<[1], [0], [0], [1], [0, 0, 1, 1], [], []>} : vector<16x8xf32>, vector<8x36xf32>, vector<16x36xf32> -> vector<16x36xf32>
    %77 = vector.broadcast %70 : vector<16x1xf32> to vector<16x36xf32>
    %78 = arith.addf %76, %77 : vector<16x36xf32>
    %79 = vector.extract_strided_slice %78 {offsets = [0, 0], sizes = [8, 36], strides = [1, 1]} : vector<16x36xf32> to vector<8x36xf32>
    %80 = vector.extract_strided_slice %78 {offsets = [8, 0], sizes = [8, 36], strides = [1, 1]} : vector<16x36xf32> to vector<8x36xf32>
    %81 = arith.negf %80 : vector<8x36xf32>
    %82 = math.exp %81 : vector<8x36xf32>
    %cst_49 = arith.constant 1.000000e+00 : f32
    %83 = vector.broadcast %cst_49 : f32 to vector<8x36xf32>
    %84 = arith.addf %83, %82 : vector<8x36xf32>
    %85 = arith.divf %83, %84 : vector<8x36xf32>
    %86 = arith.mulf %79, %85 : vector<8x36xf32>
    %cst_50 = arith.constant dense<0.000000e+00> : vector<32x36xf32>
    %87 = tpu.matmul %71, %86, %cst_50 {dimension_numbers = #tpu.dot_dimension_numbers<[1], [0], [0], [1], [0, 0, 1, 1], [], []>} : vector<32x8xf32>, vector<8x36xf32>, vector<32x36xf32> -> vector<32x36xf32>
    %88 = vector.extract_strided_slice %87 {offsets = [0, 0], sizes = [4, 36], strides = [1, 1]} : vector<32x36xf32> to vector<4x36xf32>
    %89 = vector.extract_strided_slice %87 {offsets = [4, 0], sizes = [4, 36], strides = [1, 1]} : vector<32x36xf32> to vector<4x36xf32>
    %90 = vector.extract_strided_slice %87 {offsets = [8, 0], sizes = [4, 36], strides = [1, 1]} : vector<32x36xf32> to vector<4x36xf32>
    %91 = vector.extract_strided_slice %87 {offsets = [12, 0], sizes = [4, 36], strides = [1, 1]} : vector<32x36xf32> to vector<4x36xf32>
    %92 = vector.extract_strided_slice %87 {offsets = [16, 0], sizes = [4, 36], strides = [1, 1]} : vector<32x36xf32> to vector<4x36xf32>
    %93 = vector.extract_strided_slice %87 {offsets = [20, 0], sizes = [4, 36], strides = [1, 1]} : vector<32x36xf32> to vector<4x36xf32>
    %94 = vector.extract_strided_slice %87 {offsets = [24, 0], sizes = [4, 36], strides = [1, 1]} : vector<32x36xf32> to vector<4x36xf32>
    %95 = vector.extract_strided_slice %87 {offsets = [28, 0], sizes = [4, 36], strides = [1, 1]} : vector<32x36xf32> to vector<4x36xf32>
    %96 = tpu.concatenate %88, %89, %90, %91, %92, %93, %94, %95 in 1 : vector<4x36xf32>, vector<4x36xf32>, vector<4x36xf32>, vector<4x36xf32>, vector<4x36xf32>, vector<4x36xf32>, vector<4x36xf32>, vector<4x36xf32> -> vector<4x288xf32>
    %c0_51 = arith.constant 0 : index
    %c0_52 = arith.constant 0 : index
    %97 = vector.load %arg27[%c0_51, %c0_52] : memref<288x148xf32, #tpu.memory_space<vmem>>, vector<288x148xf32>
    %cst_53 = arith.constant dense<0.000000e+00> : vector<4x148xf32>
    %98 = tpu.matmul %96, %97, %cst_53 {dimension_numbers = #tpu.dot_dimension_numbers<[1], [0], [0], [1], [0, 0, 1, 1], [], []>} : vector<4x288xf32>, vector<288x148xf32>, vector<4x148xf32> -> vector<4x148xf32>
    %99 = vector.broadcast %72 : vector<4x1xf32> to vector<4x148xf32>
    %100 = arith.addf %98, %99 : vector<4x148xf32>
    %cst_54 = arith.constant 0.000000e+00 : f32
    %101 = vector.broadcast %cst_54 : f32 to vector<4x148xf32>
    %102 = arith.maximumf %100, %101 : vector<4x148xf32>
    %c0_55 = arith.constant 0 : index
    %c0_56 = arith.constant 0 : index
    %103 = vector.load %arg19[%c0_55, %c0_56] : memref<8x4xf32, #tpu.memory_space<vmem>>, vector<8x4xf32>
    %c0_57 = arith.constant 0 : index
    %c0_58 = arith.constant 0 : index
    %104 = vector.load %arg20[%c0_57, %c0_58] : memref<8x1xf32, #tpu.memory_space<vmem>>, vector<8x1xf32>
    %c0_59 = arith.constant 0 : index
    %c0_60 = arith.constant 0 : index
    %105 = vector.load %arg21[%c0_59, %c0_60] : memref<16x4xf32, #tpu.memory_space<vmem>>, vector<16x4xf32>
    %c0_61 = arith.constant 0 : index
    %c0_62 = arith.constant 0 : index
    %106 = vector.load %arg22[%c0_61, %c0_62] : memref<2x1xf32, #tpu.memory_space<vmem>>, vector<2x1xf32>
    %c0_63 = arith.constant 0 : index
    %c0_64 = arith.constant 0 : index
    %c0_65 = arith.constant 0 : index
    %107 = vector.load %arg5[%c0_63, %c0_64, %c0_65] : memref<1x4x148xf32, #tpu.memory_space<vmem>>, vector<1x4x148xf32>
    %108 = vector.shape_cast %107 : vector<1x4x148xf32> to vector<4x148xf32>
    %109 = arith.addf %102, %108 : vector<4x148xf32>
    %cst_66 = arith.constant dense<0.000000e+00> : vector<8x148xf32>
    %110 = tpu.matmul %103, %109, %cst_66 {dimension_numbers = #tpu.dot_dimension_numbers<[1], [0], [0], [1], [0, 0, 1, 1], [], []>} : vector<8x4xf32>, vector<4x148xf32>, vector<8x148xf32> -> vector<8x148xf32>
    %111 = vector.broadcast %104 : vector<8x1xf32> to vector<8x148xf32>
    %112 = arith.addf %110, %111 : vector<8x148xf32>
    %113 = vector.extract_strided_slice %112 {offsets = [0, 0], sizes = [4, 148], strides = [1, 1]} : vector<8x148xf32> to vector<4x148xf32>
    %114 = vector.extract_strided_slice %112 {offsets = [4, 0], sizes = [4, 148], strides = [1, 1]} : vector<8x148xf32> to vector<4x148xf32>
    %115 = arith.negf %114 : vector<4x148xf32>
    %116 = math.exp %115 : vector<4x148xf32>
    %cst_67 = arith.constant 1.000000e+00 : f32
    %117 = vector.broadcast %cst_67 : f32 to vector<4x148xf32>
    %118 = arith.addf %117, %116 : vector<4x148xf32>
    %119 = arith.divf %117, %118 : vector<4x148xf32>
    %120 = arith.mulf %113, %119 : vector<4x148xf32>
    %cst_68 = arith.constant dense<0.000000e+00> : vector<16x148xf32>
    %121 = tpu.matmul %105, %120, %cst_68 {dimension_numbers = #tpu.dot_dimension_numbers<[1], [0], [0], [1], [0, 0, 1, 1], [], []>} : vector<16x4xf32>, vector<4x148xf32>, vector<16x148xf32> -> vector<16x148xf32>
    %122 = vector.extract_strided_slice %121 {offsets = [0, 0], sizes = [2, 148], strides = [1, 1]} : vector<16x148xf32> to vector<2x148xf32>
    %123 = vector.extract_strided_slice %121 {offsets = [2, 0], sizes = [2, 148], strides = [1, 1]} : vector<16x148xf32> to vector<2x148xf32>
    %124 = vector.extract_strided_slice %121 {offsets = [4, 0], sizes = [2, 148], strides = [1, 1]} : vector<16x148xf32> to vector<2x148xf32>
    %125 = vector.extract_strided_slice %121 {offsets = [6, 0], sizes = [2, 148], strides = [1, 1]} : vector<16x148xf32> to vector<2x148xf32>
    %126 = vector.extract_strided_slice %121 {offsets = [8, 0], sizes = [2, 148], strides = [1, 1]} : vector<16x148xf32> to vector<2x148xf32>
    %127 = vector.extract_strided_slice %121 {offsets = [10, 0], sizes = [2, 148], strides = [1, 1]} : vector<16x148xf32> to vector<2x148xf32>
    %128 = vector.extract_strided_slice %121 {offsets = [12, 0], sizes = [2, 148], strides = [1, 1]} : vector<16x148xf32> to vector<2x148xf32>
    %129 = vector.extract_strided_slice %121 {offsets = [14, 0], sizes = [2, 148], strides = [1, 1]} : vector<16x148xf32> to vector<2x148xf32>
    %130 = tpu.concatenate %122, %123, %124, %125, %126, %127, %128, %129 in 1 : vector<2x148xf32>, vector<2x148xf32>, vector<2x148xf32>, vector<2x148xf32>, vector<2x148xf32>, vector<2x148xf32>, vector<2x148xf32>, vector<2x148xf32> -> vector<2x1184xf32>
    %c0_69 = arith.constant 0 : index
    %c0_70 = arith.constant 0 : index
    %131 = vector.load %arg28[%c0_69, %c0_70] : memref<1184x596xf32, #tpu.memory_space<vmem>>, vector<1184x596xf32>
    %cst_71 = arith.constant dense<0.000000e+00> : vector<2x596xf32>
    %132 = tpu.matmul %130, %131, %cst_71 {dimension_numbers = #tpu.dot_dimension_numbers<[1], [0], [0], [1], [0, 0, 1, 1], [], []>} : vector<2x1184xf32>, vector<1184x596xf32>, vector<2x596xf32> -> vector<2x596xf32>
    %133 = vector.broadcast %106 : vector<2x1xf32> to vector<2x596xf32>
    %134 = arith.addf %132, %133 : vector<2x596xf32>
    %cst_72 = arith.constant 0.000000e+00 : f32
    %135 = vector.broadcast %cst_72 : f32 to vector<2x596xf32>
    %136 = arith.maximumf %134, %135 : vector<2x596xf32>
    %c0_73 = arith.constant 0 : index
    %c0_74 = arith.constant 0 : index
    %137 = vector.load %arg23[%c0_73, %c0_74] : memref<4x2xf32, #tpu.memory_space<vmem>>, vector<4x2xf32>
    %c0_75 = arith.constant 0 : index
    %c0_76 = arith.constant 0 : index
    %138 = vector.load %arg24[%c0_75, %c0_76] : memref<4x1xf32, #tpu.memory_space<vmem>>, vector<4x1xf32>
    %c0_77 = arith.constant 0 : index
    %c0_78 = arith.constant 0 : index
    %c0_79 = arith.constant 0 : index
    %139 = vector.load %arg6[%c0_77, %c0_78, %c0_79] : memref<1x2x596xf32, #tpu.memory_space<vmem>>, vector<1x2x596xf32>
    %140 = vector.shape_cast %139 : vector<1x2x596xf32> to vector<2x596xf32>
    %141 = arith.addf %136, %140 : vector<2x596xf32>
    %cst_80 = arith.constant dense<0.000000e+00> : vector<4x596xf32>
    %142 = tpu.matmul %137, %141, %cst_80 {dimension_numbers = #tpu.dot_dimension_numbers<[1], [0], [0], [1], [0, 0, 1, 1], [], []>} : vector<4x2xf32>, vector<2x596xf32>, vector<4x596xf32> -> vector<4x596xf32>
    %143 = vector.broadcast %138 : vector<4x1xf32> to vector<4x596xf32>
    %144 = arith.addf %142, %143 : vector<4x596xf32>
    %145 = vector.extract_strided_slice %144 {offsets = [0, 0], sizes = [2, 596], strides = [1, 1]} : vector<4x596xf32> to vector<2x596xf32>
    %146 = vector.extract_strided_slice %144 {offsets = [2, 0], sizes = [2, 596], strides = [1, 1]} : vector<4x596xf32> to vector<2x596xf32>
    %147 = arith.negf %146 : vector<2x596xf32>
    %148 = math.exp %147 : vector<2x596xf32>
    %cst_81 = arith.constant 1.000000e+00 : f32
    %149 = vector.broadcast %cst_81 : f32 to vector<2x596xf32>
    %150 = arith.addf %149, %148 : vector<2x596xf32>
    %151 = arith.divf %149, %150 : vector<2x596xf32>
    %152 = arith.mulf %145, %151 : vector<2x596xf32>
    %c0_82 = arith.constant 0 : index
    %c0_83 = arith.constant 0 : index
    %153 = vector.load %arg30[%c0_82, %c0_83] : memref<1x640xf32, #tpu.memory_space<vmem>>, vector<1x640xf32>
    %154 = vector.extract_strided_slice %152 {offsets = [0, 0], sizes = [1, 596], strides = [1, 1]} : vector<2x596xf32> to vector<1x596xf32>
    %c0_84 = arith.constant 0 : index
    %c0_85 = arith.constant 0 : index
    %c0_86 = arith.constant 0 : index
    %155 = vector.load %arg29[%c0_84, %c0_85, %c0_86] : memref<2x596x640xf32, #tpu.memory_space<vmem>>, vector<1x596x640xf32>
    %156 = vector.shape_cast %155 : vector<1x596x640xf32> to vector<596x640xf32>
    %cst_87 = arith.constant dense<0.000000e+00> : vector<1x640xf32>
    %157 = tpu.matmul %154, %156, %cst_87 {dimension_numbers = #tpu.dot_dimension_numbers<[1], [0], [0], [1], [0, 0, 1, 1], [], []>} : vector<1x596xf32>, vector<596x640xf32>, vector<1x640xf32> -> vector<1x640xf32>
    %158 = arith.addf %153, %157 : vector<1x640xf32>
    %159 = vector.extract_strided_slice %152 {offsets = [1, 0], sizes = [1, 596], strides = [1, 1]} : vector<2x596xf32> to vector<1x596xf32>
    %c1 = arith.constant 1 : index
    %c0_88 = arith.constant 0 : index
    %c0_89 = arith.constant 0 : index
    %160 = vector.load %arg29[%c1, %c0_88, %c0_89] : memref<2x596x640xf32, #tpu.memory_space<vmem>>, vector<1x596x640xf32>
    %161 = vector.shape_cast %160 : vector<1x596x640xf32> to vector<596x640xf32>
    %cst_90 = arith.constant dense<0.000000e+00> : vector<1x640xf32>
    %162 = tpu.matmul %159, %161, %cst_90 {dimension_numbers = #tpu.dot_dimension_numbers<[1], [0], [0], [1], [0, 0, 1, 1], [], []>} : vector<1x596xf32>, vector<596x640xf32>, vector<1x640xf32> -> vector<1x640xf32>
    %163 = arith.addf %158, %162 : vector<1x640xf32>
    %c0_91 = arith.constant 0 : index
    %c0_92 = arith.constant 0 : index
    %c0_93 = arith.constant 0 : index
    %164 = vector.load %arg31[%c0_91, %c0_92, %c0_93] : memref<1x1x640xf32, #tpu.memory_space<vmem>>, vector<1x1x640xf32>
    %165 = vector.shape_cast %164 : vector<1x1x640xf32> to vector<1x640xf32>
    %166 = vector.shape_cast %163 : vector<1x640xf32> to vector<1x1x640xf32>
    tpu.vector_store %arg31[%c0_91, %c0_92, %c0_93], %166 {strides = array<i32>} : memref<1x1x640xf32, #tpu.memory_space<vmem>>, vector<1x1x640xf32>,
    return
  }
  func.func @transform_0(%arg0: i32) -> (i32, i32, i32) {
    %c0_i32 = arith.constant 0 : i32
    %c0_i32_0 = arith.constant 0 : i32
    %c0_i32_1 = arith.constant 0 : i32
    return %arg0, %c0_i32, %c0_i32_0 : i32, i32, i32
  }
  func.func @transform_1(%arg0: i32) -> (i32, i32, i32) {
    %c0_i32 = arith.constant 0 : i32
    %c0_i32_0 = arith.constant 0 : i32
    %c0_i32_1 = arith.constant 0 : i32
    return %arg0, %c0_i32, %c0_i32_0 : i32, i32, i32
  }
  func.func @transform_2(%arg0: i32) -> (i32, i32, i32) {
    %c0_i32 = arith.constant 0 : i32
    %c0_i32_0 = arith.constant 0 : i32
    %c0_i32_1 = arith.constant 0 : i32
    return %arg0, %c0_i32, %c0_i32_0 : i32, i32, i32
  }
  func.func @transform_3(%arg0: i32) -> (i32, i32, i32) {
    %c0_i32 = arith.constant 0 : i32
    %c0_i32_0 = arith.constant 0 : i32
    %c0_i32_1 = arith.constant 0 : i32
    return %arg0, %c0_i32, %c0_i32_0 : i32, i32, i32
  }
  func.func @transform_4(%arg0: i32) -> (i32, i32, i32) {
    %c0_i32 = arith.constant 0 : i32
    %c0_i32_0 = arith.constant 0 : i32
    %c0_i32_1 = arith.constant 0 : i32
    return %arg0, %c0_i32, %c0_i32_0 : i32, i32, i32
  }
  func.func @transform_5(%arg0: i32) -> (i32, i32, i32) {
    %c0_i32 = arith.constant 0 : i32
    %c0_i32_0 = arith.constant 0 : i32
    %c0_i32_1 = arith.constant 0 : i32
    return %arg0, %c0_i32, %c0_i32_0 : i32, i32, i32
  }
  func.func @transform_6(%arg0: i32) -> (i32, i32) {
    %c0_i32 = arith.constant 0 : i32
    %c0_i32_0 = arith.constant 0 : i32
    %c0_i32_1 = arith.constant 0 : i32
    return %c0_i32, %c0_i32_0 : i32, i32
  }
  func.func @transform_7(%arg0: i32) -> (i32, i32) {
    %c0_i32 = arith.constant 0 : i32
    %c0_i32_0 = arith.constant 0 : i32
    %c0_i32_1 = arith.constant 0 : i32
    return %c0_i32, %c0_i32_0 : i32, i32
  }
  func.func @transform_8(%arg0: i32) -> (i32, i32) {
    %c0_i32 = arith.constant 0 : i32
    %c0_i32_0 = arith.constant 0 : i32
    %c0_i32_1 = arith.constant 0 : i32
    return %c0_i32, %c0_i32_0 : i32, i32
  }
  func.func @transform_9(%arg0: i32) -> (i32, i32) {
    %c0_i32 = arith.constant 0 : i32
    %c0_i32_0 = arith.constant 0 : i32
    %c0_i32_1 = arith.constant 0 : i32
    return %c0_i32, %c0_i32_0 : i32, i32
  }
  func.func @transform_10(%arg0: i32) -> (i32, i32) {
    %c0_i32 = arith.constant 0 : i32
    %c0_i32_0 = arith.constant 0 : i32
    %c0_i32_1 = arith.constant 0 : i32
    return %c0_i32, %c0_i32_0 : i32, i32
  }
  func.func @transform_11(%arg0: i32) -> (i32, i32) {
    %c0_i32 = arith.constant 0 : i32
    %c0_i32_0 = arith.constant 0 : i32
    %c0_i32_1 = arith.constant 0 : i32
    return %c0_i32, %c0_i32_0 : i32, i32
  }
  func.func @transform_12(%arg0: i32) -> (i32, i32) {
    %c0_i32 = arith.constant 0 : i32
    %c0_i32_0 = arith.constant 0 : i32
    %c0_i32_1 = arith.constant 0 : i32
    return %c0_i32, %c0_i32_0 : i32, i32
  }
  func.func @transform_13(%arg0: i32) -> (i32, i32) {
    %c0_i32 = arith.constant 0 : i32
    %c0_i32_0 = arith.constant 0 : i32
    %c0_i32_1 = arith.constant 0 : i32
    return %c0_i32, %c0_i32_0 : i32, i32
  }
  func.func @transform_14(%arg0: i32) -> (i32, i32) {
    %c0_i32 = arith.constant 0 : i32
    %c0_i32_0 = arith.constant 0 : i32
    %c0_i32_1 = arith.constant 0 : i32
    return %c0_i32, %c0_i32_0 : i32, i32
  }
  func.func @transform_15(%arg0: i32) -> (i32, i32) {
    %c0_i32 = arith.constant 0 : i32
    %c0_i32_0 = arith.constant 0 : i32
    %c0_i32_1 = arith.constant 0 : i32
    return %c0_i32, %c0_i32_0 : i32, i32
  }
  func.func @transform_16(%arg0: i32) -> (i32, i32) {
    %c0_i32 = arith.constant 0 : i32
    %c0_i32_0 = arith.constant 0 : i32
    %c0_i32_1 = arith.constant 0 : i32
    return %c0_i32, %c0_i32_0 : i32, i32
  }
  func.func @transform_17(%arg0: i32) -> (i32, i32) {
    %c0_i32 = arith.constant 0 : i32
    %c0_i32_0 = arith.constant 0 : i32
    %c0_i32_1 = arith.constant 0 : i32
    return %c0_i32, %c0_i32_0 : i32, i32
  }
  func.func @transform_18(%arg0: i32) -> (i32, i32) {
    %c0_i32 = arith.constant 0 : i32
    %c0_i32_0 = arith.constant 0 : i32
    %c0_i32_1 = arith.constant 0 : i32
    return %c0_i32, %c0_i32_0 : i32, i32
  }
  func.func @transform_19(%arg0: i32) -> (i32, i32) {
    %c0_i32 = arith.constant 0 : i32
    %c0_i32_0 = arith.constant 0 : i32
    %c0_i32_1 = arith.constant 0 : i32
    return %c0_i32, %c0_i32_0 : i32, i32
  }
  func.func @transform_20(%arg0: i32) -> (i32, i32) {
    %c0_i32 = arith.constant 0 : i32
    %c0_i32_0 = arith.constant 0 : i32
    %c0_i32_1 = arith.constant 0 : i32
    return %c0_i32, %c0_i32_0 : i32, i32
  }
  func.func @transform_21(%arg0: i32) -> (i32, i32) {
    %c0_i32 = arith.constant 0 : i32
    %c0_i32_0 = arith.constant 0 : i32
    %c0_i32_1 = arith.constant 0 : i32
    return %c0_i32, %c0_i32_0 : i32, i32
  }
  func.func @transform_22(%arg0: i32) -> (i32, i32) {
    %c0_i32 = arith.constant 0 : i32
    %c0_i32_0 = arith.constant 0 : i32
    %c0_i32_1 = arith.constant 0 : i32
    return %c0_i32, %c0_i32_0 : i32, i32
  }
  func.func @transform_23(%arg0: i32) -> (i32, i32) {
    %c0_i32 = arith.constant 0 : i32
    %c0_i32_0 = arith.constant 0 : i32
    %c0_i32_1 = arith.constant 0 : i32
    return %c0_i32, %c0_i32_0 : i32, i32
  }
  func.func @transform_24(%arg0: i32) -> (i32, i32) {
    %c0_i32 = arith.constant 0 : i32
    %c0_i32_0 = arith.constant 0 : i32
    %c0_i32_1 = arith.constant 0 : i32
    return %c0_i32, %c0_i32_0 : i32, i32
  }
  func.func @transform_25(%arg0: i32) -> (i32, i32) {
    %c0_i32 = arith.constant 0 : i32
    %c0_i32_0 = arith.constant 0 : i32
    %c0_i32_1 = arith.constant 0 : i32
    return %c0_i32, %c0_i32_0 : i32, i32
  }
  func.func @transform_26(%arg0: i32) -> (i32, i32) {
    %c0_i32 = arith.constant 0 : i32
    %c0_i32_0 = arith.constant 0 : i32
    %c0_i32_1 = arith.constant 0 : i32
    return %c0_i32, %c0_i32_0 : i32, i32
  }
  func.func @transform_27(%arg0: i32) -> (i32, i32) {
    %c0_i32 = arith.constant 0 : i32
    %c0_i32_0 = arith.constant 0 : i32
    %c0_i32_1 = arith.constant 0 : i32
    return %c0_i32, %c0_i32_0 : i32, i32
  }
  func.func @transform_28(%arg0: i32) -> (i32, i32, i32) {
    %c0_i32 = arith.constant 0 : i32
    %c0_i32_0 = arith.constant 0 : i32
    %c0_i32_1 = arith.constant 0 : i32
    %c0_i32_2 = arith.constant 0 : i32
    return %c0_i32, %c0_i32_0, %c0_i32_1 : i32, i32, i32
  }
  func.func @transform_29(%arg0: i32) -> (i32, i32) {
    %c0_i32 = arith.constant 0 : i32
    %c0_i32_0 = arith.constant 0 : i32
    %c0_i32_1 = arith.constant 0 : i32
    return %c0_i32, %c0_i32_0 : i32, i32
  }
  func.func @transform_30(%arg0: i32) -> (i32, i32, i32) {
    %c0_i32 = arith.constant 0 : i32
    %c0_i32_0 = arith.constant 0 : i32
    %c0_i32_1 = arith.constant 0 : i32
    return %arg0, %c0_i32, %c0_i32_0 : i32, i32, i32
  }
}

</mosaic_0001>

<llo_original>
// kernel: tpu_custom_call.1
$region0: #{tpu_custom_call.1}
  #allocation0 [shape = 'u32[]', space=smem, size = 0x4, offset = 0x4, fixed_abs, tag = 'smem constant byte address 0x4 - core index']
  #allocation1 [shape = 'u32[144,128]{1,0:T(1,128)}', space=vmem, size = 0x12000, scoped, tag = 'internal scratch']
  %s0 = inlined_call_operand.smem [shape: u32[31], index: -1, kind: input, shape index: {}]
  %s1 = sld [smem:[%s0]]
  %s2 = scalar_lea.smem %s0, 1
  %s3 = sld [smem:[%s2]]
  %s4 = scalar_lea.smem %s0, 2
  %s5 = sld [smem:[%s4]]
  %s6 = scalar_lea.smem %s0, 3
  %s7 = sld [smem:[%s6]]
  %s8 = scalar_lea.smem %s0, 4
  %s9 = sld [smem:[%s8]]
  %s10 = scalar_lea.smem %s0, 5
  %s11 = sld [smem:[%s10]]
  %s12 = scalar_lea.smem %s0, 6
  %s13 = sld [smem:[%s12]]
  %s14 = scalar_lea.smem %s0, 7
  %s15 = sld [smem:[%s14]]
  %s16 = scalar_lea.smem %s0, 8
  %s17 = sld [smem:[%s16]]
  %s18 = scalar_lea.smem %s0, 9
  %s19 = sld [smem:[%s18]]
  %s20 = scalar_lea.smem %s0, 10
  %s21 = sld [smem:[%s20]]
  %s22 = scalar_lea.smem %s0, 11
  %s23 = sld [smem:[%s22]]
  %s24 = scalar_lea.smem %s0, 12
  %s25 = sld [smem:[%s24]]
  %s26 = scalar_lea.smem %s0, 13
  %s27 = sld [smem:[%s26]]
  %s28 = scalar_lea.smem %s0, 14
  %s29 = sld [smem:[%s28]]
  %s30 = scalar_lea.smem %s0, 15
  %s31 = sld [smem:[%s30]]
  %s32 = scalar_lea.smem %s0, 16
  %s33 = sld [smem:[%s32]]
  %s34 = scalar_lea.smem %s0, 17
  %s35 = sld [smem:[%s34]]
  %s36 = scalar_lea.smem %s0, 18
  %s37 = sld [smem:[%s36]]
  %s38 = scalar_lea.smem %s0, 19
  %s39 = sld [smem:[%s38]]
  %s40 = scalar_lea.smem %s0, 20
  %s41 = sld [smem:[%s40]]
  %s42 = scalar_lea.smem %s0, 21
  %s43 = sld [smem:[%s42]]
  %s44 = scalar_lea.smem %s0, 22
  %s45 = sld [smem:[%s44]]
  %s46 = scalar_lea.smem %s0, 23
  %s47 = sld [smem:[%s46]]
  %s48 = scalar_lea.smem %s0, 24
  %s49 = sld [smem:[%s48]]
  %s50 = scalar_lea.smem %s0, 25
  %s51 = sld [smem:[%s50]]
  %s52 = scalar_lea.smem %s0, 26
  %s53 = sld [smem:[%s52]]
  %s54 = scalar_lea.smem %s0, 27
  %s55 = sld [smem:[%s54]]
  %s56 = scalar_lea.smem %s0, 28
  %s57 = sld [smem:[%s56]]
  %s58 = scalar_lea.smem %s0, 29
  %s59 = sld [smem:[%s58]]
  %s60 = scalar_lea.smem %s0, 30
  %s61 = sld [smem:[%s60]]
  %s62 = sld [smem:[#allocation0]]
  $region153: #{tpu_custom_call.1} parent=0
    _
  %s64 = ssub.s32 1, %s62
  %s65 = scalar_select 0, %s64, %s62
  $region1: #{tpu_custom_call.1} parent=0
    #allocation2 [shape = 'u8[5120]{0}', space=vmem, size = 0x1400, scoped, tag = 'output window, operand 0']
    #allocation3 [shape = 's32[2]{0}', space=sflag, size = 0x8, scoped, tag = 'scoped memory for tpu_custom_call.1']
    %66 = vsyncpa [#allocation3], 0
    %s67 = scalar_lea.sflag [#allocation3], 1
    %68 = vsyncpa %s67, 0
    loop: start=0, step=1, limit=4
    $region2: #{tpu_custom_call.1} parent=1 // loop_pre_header
      _
    $region3: #{tpu_custom_call.1} parent=1 // loop_header
      %s70 = sphi 0, %s74
      %p71 = scmp.ge.s32.totalorder %s70, 4
      %s80 = sphi 0, %s82
      %s83 = sphi 0, %s80
      %s84 = sphi 0, %s83
      %s100 = sphi 0, %s84
      %s106 = sphi 0, %s108
      %s109 = sphi 0, %s106
      %s110 = sphi 0, %s109
      %s126 = sphi 0, %s110
      %s132 = sphi 0, %s134
      %s135 = sphi 0, %s132
      %s136 = sphi 0, %s135
      %s152 = sphi 0, %s136
      %s158 = sphi 0, %s160
      %s161 = sphi 0, %s158
      %s162 = sphi 0, %s161
      %s178 = sphi 0, %s162
      %s184 = sphi 0, %s186
      %s187 = sphi 0, %s184
      %s188 = sphi 0, %s187
      %s204 = sphi 0, %s188
      %s210 = sphi 0, %s212
      %s213 = sphi 0, %s210
      %s214 = sphi 0, %s213
      %s230 = sphi 0, %s214
      %s234 = sphi 0, %s234
      %s236 = sphi 0, %s234
      %s237 = sphi 0, %s236
      %s251 = sphi 0, %s237
      %s255 = sphi 0, %s255
      %s257 = sphi 0, %s255
      %s258 = sphi 0, %s257
      %s272 = sphi 0, %s258
      %s276 = sphi 0, %s276
      %s278 = sphi 0, %s276
      %s279 = sphi 0, %s278
      %s293 = sphi 0, %s279
      %s297 = sphi 0, %s297
      %s299 = sphi 0, %s297
      %s300 = sphi 0, %s299
      %s314 = sphi 0, %s300
      %s318 = sphi 0, %s318
      %s320 = sphi 0, %s318
      %s321 = sphi 0, %s320
      %s335 = sphi 0, %s321
      %s339 = sphi 0, %s339
      %s341 = sphi 0, %s339
      %s342 = sphi 0, %s341
      %s356 = sphi 0, %s342
      %s360 = sphi 0, %s360
      %s362 = sphi 0, %s360
      %s363 = sphi 0, %s362
      %s377 = sphi 0, %s363
      %s381 = sphi 0, %s381
      %s383 = sphi 0, %s381
      %s384 = sphi 0, %s383
      %s398 = sphi 0, %s384
      %s402 = sphi 0, %s402
      %s404 = sphi 0, %s402
      %s405 = sphi 0, %s404
      %s419 = sphi 0, %s405
      %s423 = sphi 0, %s423
      %s425 = sphi 0, %s423
      %s426 = sphi 0, %s425
      %s440 = sphi 0, %s426
      %s444 = sphi 0, %s444
      %s446 = sphi 0, %s444
      %s447 = sphi 0, %s446
      %s461 = sphi 0, %s447
      %s465 = sphi 0, %s465
      %s467 = sphi 0, %s465
      %s468 = sphi 0, %s467
      %s482 = sphi 0, %s468
      %s486 = sphi 0, %s486
      %s488 = sphi 0, %s486
      %s489 = sphi 0, %s488
      %s503 = sphi 0, %s489
      %s507 = sphi 0, %s507
      %s509 = sphi 0, %s507
      %s510 = sphi 0, %s509
      %s524 = sphi 0, %s510
      %s528 = sphi 0, %s528
      %s530 = sphi 0, %s528
      %s531 = sphi 0, %s530
      %s545 = sphi 0, %s531
      %s549 = sphi 0, %s549
      %s551 = sphi 0, %s549
      %s552 = sphi 0, %s551
      %s566 = sphi 0, %s552
      %s570 = sphi 0, %s570
      %s572 = sphi 0, %s570
      %s573 = sphi 0, %s572
      %s587 = sphi 0, %s573
      %s591 = sphi 0, %s591
      %s593 = sphi 0, %s591
      %s594 = sphi 0, %s593
      %s608 = sphi 0, %s594
      %s612 = sphi 0, %s612
      %s614 = sphi 0, %s612
      %s615 = sphi 0, %s614
      %s629 = sphi 0, %s615
      %s633 = sphi 0, %s633
      %s635 = sphi 0, %s633
      %s636 = sphi 0, %s635
      %s650 = sphi 0, %s636
      %s654 = sphi 0, %s654
      %s656 = sphi 0, %s654
      %s657 = sphi 0, %s656
      %s671 = sphi 0, %s657
      %s675 = sphi 0, %s675
      %s677 = sphi 0, %s675
      %s678 = sphi 0, %s677
      %s692 = sphi 0, %s678
      %s696 = sphi 0, %s696
      %s698 = sphi 0, %s696
      %s699 = sphi 0, %s698
      %s713 = sphi 0, %s699
      %s717 = sphi 0, %s717
      %s719 = sphi 0, %s717
      %s720 = sphi 0, %s719
      %s734 = sphi 0, %s720
      %s740 = sphi 0, %s742
      %s743 = sphi 0, %s740
      %s744 = sphi 0, %s743
      %s760 = sphi 0, %s744
    $region4: #{tpu_custom_call.1} parent=1 // loop_header_branch
      %73 = sbr.rel (%p71) target = $region8
    $region5: #{tpu_custom_call.1} parent=1 // loop_body
      %s75 = ssub.s32 %s70, 1
      %s76 = ssub.s32 %s70, 2
      %s77 = sadd.s32 %s70, 1
      %s78 = ssub.s32 %s70, %s77
      %p79 = scmp.eq.s32.totalorder %s78, 0
      %s81 = sadd.s32 %s80, 1
      %s82 = scalar_select %p79, %s80, %s81
      %p85 = pneg %p79
      %p86 = scmp.eq.s32.totalorder %s70, 1
      %p87 = por %p85, %p86
      %p88 = scmp.ne.s32.totalorder %s80, %s83
      %p89 = scmp.eq.s32.totalorder %s70, 0
      %p90 = por %p88, %p89
      %p91 = scmp.ne.s32.totalorder %s80, %s83
      %p92 = scmp.eq.s32.totalorder %s75, 1
      %p93 = por %p91, %p92
      %p94 = scmp.ne.s32.totalorder %s83, %s84
      %p95 = scmp.eq.s32.totalorder %s75, 0
      %p96 = por %p94, %p95
      %p97 = scmp.ne.s32.totalorder %s83, %s84
      %p98 = scmp.eq.s32.totalorder %s76, 1
      %p99 = por %p97, %p98
      %p101 = scmp.ne.s32.totalorder %s84, %s100
      %p102 = scmp.eq.s32.totalorder %s76, 0
      %p103 = por %p101, %p102
      %s104 = ssub.s32 %s70, %s77
      %p105 = scmp.eq.s32.totalorder %s104, 0
      %s107 = sadd.s32 %s106, 1
      %s108 = scalar_select %p105, %s106, %s107
      %p111 = pneg %p105
      %p112 = scmp.eq.s32.totalorder %s70, 1
      %p113 = por %p111, %p112
      %p114 = scmp.ne.s32.totalorder %s106, %s109
      %p115 = scmp.eq.s32.totalorder %s70, 0
      %p116 = por %p114, %p115
      %p117 = scmp.ne.s32.totalorder %s106, %s109
      %p118 = scmp.eq.s32.totalorder %s75, 1
      %p119 = por %p117, %p118
      %p120 = scmp.ne.s32.totalorder %s109, %s110
      %p121 = scmp.eq.s32.totalorder %s75, 0
      %p122 = por %p120, %p121
      %p123 = scmp.ne.s32.totalorder %s109, %s110
      %p124 = scmp.eq.s32.totalorder %s76, 1
      %p125 = por %p123, %p124
      %p127 = scmp.ne.s32.totalorder %s110, %s126
      %p128 = scmp.eq.s32.totalorder %s76, 0
      %p129 = por %p127, %p128
      %s130 = ssub.s32 %s70, %s77
      %p131 = scmp.eq.s32.totalorder %s130, 0
      %s133 = sadd.s32 %s132, 1
      %s134 = scalar_select %p131, %s132, %s133
      %p137 = pneg %p131
      %p138 = scmp.eq.s32.totalorder %s70, 1
      %p139 = por %p137, %p138
      %p140 = scmp.ne.s32.totalorder %s132, %s135
      %p141 = scmp.eq.s32.totalorder %s70, 0
      %p142 = por %p140, %p141
      %p143 = scmp.ne.s32.totalorder %s132, %s135
      %p144 = scmp.eq.s32.totalorder %s75, 1
      %p145 = por %p143, %p144
      %p146 = scmp.ne.s32.totalorder %s135, %s136
      %p147 = scmp.eq.s32.totalorder %s75, 0
      %p148 = por %p146, %p147
      %p149 = scmp.ne.s32.totalorder %s135, %s136
      %p150 = scmp.eq.s32.totalorder %s76, 1
      %p151 = por %p149, %p150
      %p153 = scmp.ne.s32.totalorder %s136, %s152
      %p154 = scmp.eq.s32.totalorder %s76, 0
      %p155 = por %p153, %p154
      %s156 = ssub.s32 %s70, %s77
      %p157 = scmp.eq.s32.totalorder %s156, 0
      %s159 = sadd.s32 %s158, 1
      %s160 = scalar_select %p157, %s158, %s159
      %p163 = pneg %p157
      %p164 = scmp.eq.s32.totalorder %s70, 1
      %p165 = por %p163, %p164
      %p166 = scmp.ne.s32.totalorder %s158, %s161
      %p167 = scmp.eq.s32.totalorder %s70, 0
      %p168 = por %p166, %p167
      %p169 = scmp.ne.s32.totalorder %s158, %s161
      %p170 = scmp.eq.s32.totalorder %s75, 1
      %p171 = por %p169, %p170
      %p172 = scmp.ne.s32.totalorder %s161, %s162
      %p173 = scmp.eq.s32.totalorder %s75, 0
      %p174 = por %p172, %p173
      %p175 = scmp.ne.s32.totalorder %s161, %s162
      %p176 = scmp.eq.s32.totalorder %s76, 1
      %p177 = por %p175, %p176
      %p179 = scmp.ne.s32.totalorder %s162, %s178
      %p180 = scmp.eq.s32.totalorder %s76, 0
      %p181 = por %p179, %p180
      %s182 = ssub.s32 %s70, %s77
      %p183 = scmp.eq.s32.totalorder %s182, 0
      %s185 = sadd.s32 %s184, 1
      %s186 = scalar_select %p183, %s184, %s185
      %p189 = pneg %p183
      %p190 = scmp.eq.s32.totalorder %s70, 1
      %p191 = por %p189, %p190
      %p192 = scmp.ne.s32.totalorder %s184, %s187
      %p193 = scmp.eq.s32.totalorder %s70, 0
      %p194 = por %p192, %p193
      %p195 = scmp.ne.s32.totalorder %s184, %s187
      %p196 = scmp.eq.s32.totalorder %s75, 1
      %p197 = por %p195, %p196
      %p198 = scmp.ne.s32.totalorder %s187, %s188
      %p199 = scmp.eq.s32.totalorder %s75, 0
      %p200 = por %p198, %p199
      %p201 = scmp.ne.s32.totalorder %s187, %s188
      %p202 = scmp.eq.s32.totalorder %s76, 1
      %p203 = por %p201, %p202
      %p205 = scmp.ne.s32.totalorder %s188, %s204
      %p206 = scmp.eq.s32.totalorder %s76, 0
      %p207 = por %p205, %p206
      %s208 = ssub.s32 %s70, %s77
      %p209 = scmp.eq.s32.totalorder %s208, 0
      %s211 = sadd.s32 %s210, 1
      %s212 = scalar_select %p209, %s210, %s211
      %p215 = pneg %p209
      %p216 = scmp.eq.s32.totalorder %s70, 1
      %p217 = por %p215, %p216
      %p218 = scmp.ne.s32.totalorder %s210, %s213
      %p219 = scmp.eq.s32.totalorder %s70, 0
      %p220 = por %p218, %p219
      %p221 = scmp.ne.s32.totalorder %s210, %s213
      %p222 = scmp.eq.s32.totalorder %s75, 1
      %p223 = por %p221, %p222
      %p224 = scmp.ne.s32.totalorder %s213, %s214
      %p225 = scmp.eq.s32.totalorder %s75, 0
      %p226 = por %p224, %p225
      %p227 = scmp.ne.s32.totalorder %s213, %s214
      %p228 = scmp.eq.s32.totalorder %s76, 1
      %p229 = por %p227, %p228
      %p231 = scmp.ne.s32.totalorder %s214, %s230
      %p232 = scmp.eq.s32.totalorder %s76, 0
      %p233 = por %p231, %p232
      %s235 = sadd.s32 %s234, 1
      %p238 = scmp.eq.s32.totalorder %s70, 1
      %p239 = scmp.ne.s32.totalorder %s234, %s236
      %p240 = scmp.eq.s32.totalorder %s70, 0
      %p241 = por %p239, %p240
      %p242 = scmp.ne.s32.totalorder %s234, %s236
      %p243 = scmp.eq.s32.totalorder %s75, 1
      %p244 = por %p242, %p243
      %p245 = scmp.ne.s32.totalorder %s236, %s237
      %p246 = scmp.eq.s32.totalorder %s75, 0
      %p247 = por %p245, %p246
      %p248 = scmp.ne.s32.totalorder %s236, %s237
      %p249 = scmp.eq.s32.totalorder %s76, 1
      %p250 = por %p248, %p249
      %p252 = scmp.ne.s32.totalorder %s237, %s251
      %p253 = scmp.eq.s32.totalorder %s76, 0
      %p254 = por %p252, %p253
      %s256 = sadd.s32 %s255, 1
      %p259 = scmp.eq.s32.totalorder %s70, 1
      %p260 = scmp.ne.s32.totalorder %s255, %s257
      %p261 = scmp.eq.s32.totalorder %s70, 0
      %p262 = por %p260, %p261
      %p263 = scmp.ne.s32.totalorder %s255, %s257
      %p264 = scmp.eq.s32.totalorder %s75, 1
      %p265 = por %p263, %p264
      %p266 = scmp.ne.s32.totalorder %s257, %s258
      %p267 = scmp.eq.s32.totalorder %s75, 0
      %p268 = por %p266, %p267
      %p269 = scmp.ne.s32.totalorder %s257, %s258
      %p270 = scmp.eq.s32.totalorder %s76, 1
      %p271 = por %p269, %p270
      %p273 = scmp.ne.s32.totalorder %s258, %s272
      %p274 = scmp.eq.s32.totalorder %s76, 0
      %p275 = por %p273, %p274
      %s277 = sadd.s32 %s276, 1
      %p280 = scmp.eq.s32.totalorder %s70, 1
      %p281 = scmp.ne.s32.totalorder %s276, %s278
      %p282 = scmp.eq.s32.totalorder %s70, 0
      %p283 = por %p281, %p282
      %p284 = scmp.ne.s32.totalorder %s276, %s278
      %p285 = scmp.eq.s32.totalorder %s75, 1
      %p286 = por %p284, %p285
      %p287 = scmp.ne.s32.totalorder %s278, %s279
      %p288 = scmp.eq.s32.totalorder %s75, 0
      %p289 = por %p287, %p288
      %p290 = scmp.ne.s32.totalorder %s278, %s279
      %p291 = scmp.eq.s32.totalorder %s76, 1
      %p292 = por %p290, %p291
      %p294 = scmp.ne.s32.totalorder %s279, %s293
      %p295 = scmp.eq.s32.totalorder %s76, 0
      %p296 = por %p294, %p295
      %s298 = sadd.s32 %s297, 1
      %p301 = scmp.eq.s32.totalorder %s70, 1
      %p302 = scmp.ne.s32.totalorder %s297, %s299
      %p303 = scmp.eq.s32.totalorder %s70, 0
      %p304 = por %p302, %p303
      %p305 = scmp.ne.s32.totalorder %s297, %s299
      %p306 = scmp.eq.s32.totalorder %s75, 1
      %p307 = por %p305, %p306
      %p308 = scmp.ne.s32.totalorder %s299, %s300
      %p309 = scmp.eq.s32.totalorder %s75, 0
      %p310 = por %p308, %p309
      %p311 = scmp.ne.s32.totalorder %s299, %s300
      %p312 = scmp.eq.s32.totalorder %s76, 1
      %p313 = por %p311, %p312
      %p315 = scmp.ne.s32.totalorder %s300, %s314
      %p316 = scmp.eq.s32.totalorder %s76, 0
      %p317 = por %p315, %p316
      %s319 = sadd.s32 %s318, 1
      %p322 = scmp.eq.s32.totalorder %s70, 1
      %p323 = scmp.ne.s32.totalorder %s318, %s320
      %p324 = scmp.eq.s32.totalorder %s70, 0
      %p325 = por %p323, %p324
      %p326 = scmp.ne.s32.totalorder %s318, %s320
      %p327 = scmp.eq.s32.totalorder %s75, 1
      %p328 = por %p326, %p327
      %p329 = scmp.ne.s32.totalorder %s320, %s321
      %p330 = scmp.eq.s32.totalorder %s75, 0
      %p331 = por %p329, %p330
      %p332 = scmp.ne.s32.totalorder %s320, %s321
      %p333 = scmp.eq.s32.totalorder %s76, 1
      %p334 = por %p332, %p333
      %p336 = scmp.ne.s32.totalorder %s321, %s335
      %p337 = scmp.eq.s32.totalorder %s76, 0
      %p338 = por %p336, %p337
      %s340 = sadd.s32 %s339, 1
      %p343 = scmp.eq.s32.totalorder %s70, 1
      %p344 = scmp.ne.s32.totalorder %s339, %s341
      %p345 = scmp.eq.s32.totalorder %s70, 0
      %p346 = por %p344, %p345
      %p347 = scmp.ne.s32.totalorder %s339, %s341
      %p348 = scmp.eq.s32.totalorder %s75, 1
      %p349 = por %p347, %p348
      %p350 = scmp.ne.s32.totalorder %s341, %s342
      %p351 = scmp.eq.s32.totalorder %s75, 0
      %p352 = por %p350, %p351
      %p353 = scmp.ne.s32.totalorder %s341, %s342
      %p354 = scmp.eq.s32.totalorder %s76, 1
      %p355 = por %p353, %p354
      %p357 = scmp.ne.s32.totalorder %s342, %s356
      %p358 = scmp.eq.s32.totalorder %s76, 0
      %p359 = por %p357, %p358
      %s361 = sadd.s32 %s360, 1
      %p364 = scmp.eq.s32.totalorder %s70, 1
      %p365 = scmp.ne.s32.totalorder %s360, %s362
      %p366 = scmp.eq.s32.totalorder %s70, 0
      %p367 = por %p365, %p366
      %p368 = scmp.ne.s32.totalorder %s360, %s362
      %p369 = scmp.eq.s32.totalorder %s75, 1
      %p370 = por %p368, %p369
      %p371 = scmp.ne.s32.totalorder %s362, %s363
      %p372 = scmp.eq.s32.totalorder %s75, 0
      %p373 = por %p371, %p372
      %p374 = scmp.ne.s32.totalorder %s362, %s363
      %p375 = scmp.eq.s32.totalorder %s76, 1
      %p376 = por %p374, %p375
      %p378 = scmp.ne.s32.totalorder %s363, %s377
      %p379 = scmp.eq.s32.totalorder %s76, 0
      %p380 = por %p378, %p379
      %s382 = sadd.s32 %s381, 1
      %p385 = scmp.eq.s32.totalorder %s70, 1
      %p386 = scmp.ne.s32.totalorder %s381, %s383
      %p387 = scmp.eq.s32.totalorder %s70, 0
      %p388 = por %p386, %p387
      %p389 = scmp.ne.s32.totalorder %s381, %s383
      %p390 = scmp.eq.s32.totalorder %s75, 1
      %p391 = por %p389, %p390
      %p392 = scmp.ne.s32.totalorder %s383, %s384
      %p393 = scmp.eq.s32.totalorder %s75, 0
      %p394 = por %p392, %p393
      %p395 = scmp.ne.s32.totalorder %s383, %s384
      %p396 = scmp.eq.s32.totalorder %s76, 1
      %p397 = por %p395, %p396
      %p399 = scmp.ne.s32.totalorder %s384, %s398
      %p400 = scmp.eq.s32.totalorder %s76, 0
      %p401 = por %p399, %p400
      %s403 = sadd.s32 %s402, 1
      %p406 = scmp.eq.s32.totalorder %s70, 1
      %p407 = scmp.ne.s32.totalorder %s402, %s404
      %p408 = scmp.eq.s32.totalorder %s70, 0
      %p409 = por %p407, %p408
      %p410 = scmp.ne.s32.totalorder %s402, %s404
      %p411 = scmp.eq.s32.totalorder %s75, 1
      %p412 = por %p410, %p411
      %p413 = scmp.ne.s32.totalorder %s404, %s405
      %p414 = scmp.eq.s32.totalorder %s75, 0
      %p415 = por %p413, %p414
      %p416 = scmp.ne.s32.totalorder %s404, %s405
      %p417 = scmp.eq.s32.totalorder %s76, 1
      %p418 = por %p416, %p417
      %p420 = scmp.ne.s32.totalorder %s405, %s419
      %p421 = scmp.eq.s32.totalorder %s76, 0
      %p422 = por %p420, %p421
      %s424 = sadd.s32 %s423, 1
      %p427 = scmp.eq.s32.totalorder %s70, 1
      %p428 = scmp.ne.s32.totalorder %s423, %s425
      %p429 = scmp.eq.s32.totalorder %s70, 0
      %p430 = por %p428, %p429
      %p431 = scmp.ne.s32.totalorder %s423, %s425
      %p432 = scmp.eq.s32.totalorder %s75, 1
      %p433 = por %p431, %p432
      %p434 = scmp.ne.s32.totalorder %s425, %s426
      %p435 = scmp.eq.s32.totalorder %s75, 0
      %p436 = por %p434, %p435
      %p437 = scmp.ne.s32.totalorder %s425, %s426
      %p438 = scmp.eq.s32.totalorder %s76, 1
      %p439 = por %p437, %p438
      %p441 = scmp.ne.s32.totalorder %s426, %s440
      %p442 = scmp.eq.s32.totalorder %s76, 0
      %p443 = por %p441, %p442
      %s445 = sadd.s32 %s444, 1
      %p448 = scmp.eq.s32.totalorder %s70, 1
      %p449 = scmp.ne.s32.totalorder %s444, %s446
      %p450 = scmp.eq.s32.totalorder %s70, 0
      %p451 = por %p449, %p450
      %p452 = scmp.ne.s32.totalorder %s444, %s446
      %p453 = scmp.eq.s32.totalorder %s75, 1
      %p454 = por %p452, %p453
      %p455 = scmp.ne.s32.totalorder %s446, %s447
      %p456 = scmp.eq.s32.totalorder %s75, 0
      %p457 = por %p455, %p456
      %p458 = scmp.ne.s32.totalorder %s446, %s447
      %p459 = scmp.eq.s32.totalorder %s76, 1
      %p460 = por %p458, %p459
      %p462 = scmp.ne.s32.totalorder %s447, %s461
      %p463 = scmp.eq.s32.totalorder %s76, 0
      %p464 = por %p462, %p463
      %s466 = sadd.s32 %s465, 1
      %p469 = scmp.eq.s32.totalorder %s70, 1
      %p470 = scmp.ne.s32.totalorder %s465, %s467
      %p471 = scmp.eq.s32.totalorder %s70, 0
      %p472 = por %p470, %p471
      %p473 = scmp.ne.s32.totalorder %s465, %s467
      %p474 = scmp.eq.s32.totalorder %s75, 1
      %p475 = por %p473, %p474
      %p476 = scmp.ne.s32.totalorder %s467, %s468
      %p477 = scmp.eq.s32.totalorder %s75, 0
      %p478 = por %p476, %p477
      %p479 = scmp.ne.s32.totalorder %s467, %s468
      %p480 = scmp.eq.s32.totalorder %s76, 1
      %p481 = por %p479, %p480
      %p483 = scmp.ne.s32.totalorder %s468, %s482
      %p484 = scmp.eq.s32.totalorder %s76, 0
      %p485 = por %p483, %p484
      %s487 = sadd.s32 %s486, 1
      %p490 = scmp.eq.s32.totalorder %s70, 1
      %p491 = scmp.ne.s32.totalorder %s486, %s488
      %p492 = scmp.eq.s32.totalorder %s70, 0
      %p493 = por %p491, %p492
      %p494 = scmp.ne.s32.totalorder %s486, %s488
      %p495 = scmp.eq.s32.totalorder %s75, 1
      %p496 = por %p494, %p495
      %p497 = scmp.ne.s32.totalorder %s488, %s489
      %p498 = scmp.eq.s32.totalorder %s75, 0
      %p499 = por %p497, %p498
      %p500 = scmp.ne.s32.totalorder %s488, %s489
      %p501 = scmp.eq.s32.totalorder %s76, 1
      %p502 = por %p500, %p501
      %p504 = scmp.ne.s32.totalorder %s489, %s503
      %p505 = scmp.eq.s32.totalorder %s76, 0
      %p506 = por %p504, %p505
      %s508 = sadd.s32 %s507, 1
      %p511 = scmp.eq.s32.totalorder %s70, 1
      %p512 = scmp.ne.s32.totalorder %s507, %s509
      %p513 = scmp.eq.s32.totalorder %s70, 0
      %p514 = por %p512, %p513
      %p515 = scmp.ne.s32.totalorder %s507, %s509
      %p516 = scmp.eq.s32.totalorder %s75, 1
      %p517 = por %p515, %p516
      %p518 = scmp.ne.s32.totalorder %s509, %s510
      %p519 = scmp.eq.s32.totalorder %s75, 0
      %p520 = por %p518, %p519
      %p521 = scmp.ne.s32.totalorder %s509, %s510
      %p522 = scmp.eq.s32.totalorder %s76, 1
      %p523 = por %p521, %p522
      %p525 = scmp.ne.s32.totalorder %s510, %s524
      %p526 = scmp.eq.s32.totalorder %s76, 0
      %p527 = por %p525, %p526
      %s529 = sadd.s32 %s528, 1
      %p532 = scmp.eq.s32.totalorder %s70, 1
      %p533 = scmp.ne.s32.totalorder %s528, %s530
      %p534 = scmp.eq.s32.totalorder %s70, 0
      %p535 = por %p533, %p534
      %p536 = scmp.ne.s32.totalorder %s528, %s530
      %p537 = scmp.eq.s32.totalorder %s75, 1
      %p538 = por %p536, %p537
      %p539 = scmp.ne.s32.totalorder %s530, %s531
      %p540 = scmp.eq.s32.totalorder %s75, 0
      %p541 = por %p539, %p540
      %p542 = scmp.ne.s32.totalorder %s530, %s531
      %p543 = scmp.eq.s32.totalorder %s76, 1
      %p544 = por %p542, %p543
      %p546 = scmp.ne.s32.totalorder %s531, %s545
      %p547 = scmp.eq.s32.totalorder %s76, 0
      %p548 = por %p546, %p547
      %s550 = sadd.s32 %s549, 1
      %p553 = scmp.eq.s32.totalorder %s70, 1
      %p554 = scmp.ne.s32.totalorder %s549, %s551
      %p555 = scmp.eq.s32.totalorder %s70, 0
      %p556 = por %p554, %p555
      %p557 = scmp.ne.s32.totalorder %s549, %s551
      %p558 = scmp.eq.s32.totalorder %s75, 1
      %p559 = por %p557, %p558
      %p560 = scmp.ne.s32.totalorder %s551, %s552
      %p561 = scmp.eq.s32.totalorder %s75, 0
      %p562 = por %p560, %p561
      %p563 = scmp.ne.s32.totalorder %s551, %s552
      %p564 = scmp.eq.s32.totalorder %s76, 1
      %p565 = por %p563, %p564
      %p567 = scmp.ne.s32.totalorder %s552, %s566
      %p568 = scmp.eq.s32.totalorder %s76, 0
      %p569 = por %p567, %p568
      %s571 = sadd.s32 %s570, 1
      %p574 = scmp.eq.s32.totalorder %s70, 1
      %p575 = scmp.ne.s32.totalorder %s570, %s572
      %p576 = scmp.eq.s32.totalorder %s70, 0
      %p577 = por %p575, %p576
      %p578 = scmp.ne.s32.totalorder %s570, %s572
      %p579 = scmp.eq.s32.totalorder %s75, 1
      %p580 = por %p578, %p579
      %p581 = scmp.ne.s32.totalorder %s572, %s573
      %p582 = scmp.eq.s32.totalorder %s75, 0
      %p583 = por %p581, %p582
      %p584 = scmp.ne.s32.totalorder %s572, %s573
      %p585 = scmp.eq.s32.totalorder %s76, 1
      %p586 = por %p584, %p585
      %p588 = scmp.ne.s32.totalorder %s573, %s587
      %p589 = scmp.eq.s32.totalorder %s76, 0
      %p590 = por %p588, %p589
      %s592 = sadd.s32 %s591, 1
      %p595 = scmp.eq.s32.totalorder %s70, 1
      %p596 = scmp.ne.s32.totalorder %s591, %s593
      %p597 = scmp.eq.s32.totalorder %s70, 0
      %p598 = por %p596, %p597
      %p599 = scmp.ne.s32.totalorder %s591, %s593
      %p600 = scmp.eq.s32.totalorder %s75, 1
      %p601 = por %p599, %p600
      %p602 = scmp.ne.s32.totalorder %s593, %s594
      %p603 = scmp.eq.s32.totalorder %s75, 0
      %p604 = por %p602, %p603
      %p605 = scmp.ne.s32.totalorder %s593, %s594
      %p606 = scmp.eq.s32.totalorder %s76, 1
      %p607 = por %p605, %p606
      %p609 = scmp.ne.s32.totalorder %s594, %s608
      %p610 = scmp.eq.s32.totalorder %s76, 0
      %p611 = por %p609, %p610
      %s613 = sadd.s32 %s612, 1
      %p616 = scmp.eq.s32.totalorder %s70, 1
      %p617 = scmp.ne.s32.totalorder %s612, %s614
      %p618 = scmp.eq.s32.totalorder %s70, 0
      %p619 = por %p617, %p618
      %p620 = scmp.ne.s32.totalorder %s612, %s614
      %p621 = scmp.eq.s32.totalorder %s75, 1
      %p622 = por %p620, %p621
      %p623 = scmp.ne.s32.totalorder %s614, %s615
      %p624 = scmp.eq.s32.totalorder %s75, 0
      %p625 = por %p623, %p624
      %p626 = scmp.ne.s32.totalorder %s614, %s615
      %p627 = scmp.eq.s32.totalorder %s76, 1
      %p628 = por %p626, %p627
      %p630 = scmp.ne.s32.totalorder %s615, %s629
      %p631 = scmp.eq.s32.totalorder %s76, 0
      %p632 = por %p630, %p631
      %s634 = sadd.s32 %s633, 1
      %p637 = scmp.eq.s32.totalorder %s70, 1
      %p638 = scmp.ne.s32.totalorder %s633, %s635
      %p639 = scmp.eq.s32.totalorder %s70, 0
      %p640 = por %p638, %p639
      %p641 = scmp.ne.s32.totalorder %s633, %s635
      %p642 = scmp.eq.s32.totalorder %s75, 1
      %p643 = por %p641, %p642
      %p644 = scmp.ne.s32.totalorder %s635, %s636
      %p645 = scmp.eq.s32.totalorder %s75, 0
      %p646 = por %p644, %p645
      %p647 = scmp.ne.s32.totalorder %s635, %s636
      %p648 = scmp.eq.s32.totalorder %s76, 1
      %p649 = por %p647, %p648
      %p651 = scmp.ne.s32.totalorder %s636, %s650
      %p652 = scmp.eq.s32.totalorder %s76, 0
      %p653 = por %p651, %p652
      %s655 = sadd.s32 %s654, 1
      %p658 = scmp.eq.s32.totalorder %s70, 1
      %p659 = scmp.ne.s32.totalorder %s654, %s656
      %p660 = scmp.eq.s32.totalorder %s70, 0
      %p661 = por %p659, %p660
      %p662 = scmp.ne.s32.totalorder %s654, %s656
      %p663 = scmp.eq.s32.totalorder %s75, 1
      %p664 = por %p662, %p663
      %p665 = scmp.ne.s32.totalorder %s656, %s657
      %p666 = scmp.eq.s32.totalorder %s75, 0
      %p667 = por %p665, %p666
      %p668 = scmp.ne.s32.totalorder %s656, %s657
      %p669 = scmp.eq.s32.totalorder %s76, 1
      %p670 = por %p668, %p669
      %p672 = scmp.ne.s32.totalorder %s657, %s671
      %p673 = scmp.eq.s32.totalorder %s76, 0
      %p674 = por %p672, %p673
      %s676 = sadd.s32 %s675, 1
      %p679 = scmp.eq.s32.totalorder %s70, 1
      %p680 = scmp.ne.s32.totalorder %s675, %s677
      %p681 = scmp.eq.s32.totalorder %s70, 0
      %p682 = por %p680, %p681
      %p683 = scmp.ne.s32.totalorder %s675, %s677
      %p684 = scmp.eq.s32.totalorder %s75, 1
      %p685 = por %p683, %p684
      %p686 = scmp.ne.s32.totalorder %s677, %s678
      %p687 = scmp.eq.s32.totalorder %s75, 0
      %p688 = por %p686, %p687
      %p689 = scmp.ne.s32.totalorder %s677, %s678
      %p690 = scmp.eq.s32.totalorder %s76, 1
      %p691 = por %p689, %p690
      %p693 = scmp.ne.s32.totalorder %s678, %s692
      %p694 = scmp.eq.s32.totalorder %s76, 0
      %p695 = por %p693, %p694
      %s697 = sadd.s32 %s696, 1
      %p700 = scmp.eq.s32.totalorder %s70, 1
      %p701 = scmp.ne.s32.totalorder %s696, %s698
      %p702 = scmp.eq.s32.totalorder %s70, 0
      %p703 = por %p701, %p702
      %p704 = scmp.ne.s32.totalorder %s696, %s698
      %p705 = scmp.eq.s32.totalorder %s75, 1
      %p706 = por %p704, %p705
      %p707 = scmp.ne.s32.totalorder %s698, %s699
      %p708 = scmp.eq.s32.totalorder %s75, 0
      %p709 = por %p707, %p708
      %p710 = scmp.ne.s32.totalorder %s698, %s699
      %p711 = scmp.eq.s32.totalorder %s76, 1
      %p712 = por %p710, %p711
      %p714 = scmp.ne.s32.totalorder %s699, %s713
      %p715 = scmp.eq.s32.totalorder %s76, 0
      %p716 = por %p714, %p715
      %s718 = sadd.s32 %s717, 1
      %p721 = scmp.eq.s32.totalorder %s70, 1
      %p722 = scmp.ne.s32.totalorder %s717, %s719
      %p723 = scmp.eq.s32.totalorder %s70, 0
      %p724 = por %p722, %p723
      %p725 = scmp.ne.s32.totalorder %s717, %s719
      %p726 = scmp.eq.s32.totalorder %s75, 1
      %p727 = por %p725, %p726
      %p728 = scmp.ne.s32.totalorder %s719, %s720
      %p729 = scmp.eq.s32.totalorder %s75, 0
      %p730 = por %p728, %p729
      %p731 = scmp.ne.s32.totalorder %s719, %s720
      %p732 = scmp.eq.s32.totalorder %s76, 1
      %p733 = por %p731, %p732
      %p735 = scmp.ne.s32.totalorder %s720, %s734
      %p736 = scmp.eq.s32.totalorder %s76, 0
      %p737 = por %p735, %p736
      %s738 = ssub.s32 %s70, %s77
      %p739 = scmp.eq.s32.totalorder %s738, 0
      %s741 = sadd.s32 %s740, 1
      %s742 = scalar_select %p739, %s740, %s741
      %p745 = pneg %p739
      %p746 = scmp.eq.s32.totalorder %s70, 1
      %p747 = por %p745, %p746
      %p748 = scmp.ne.s32.totalorder %s740, %s743
      %p749 = scmp.eq.s32.totalorder %s70, 0
      %p750 = por %p748, %p749
      %p751 = scmp.ne.s32.totalorder %s740, %s743
      %p752 = scmp.eq.s32.totalorder %s75, 1
      %p753 = por %p751, %p752
      %p754 = scmp.ne.s32.totalorder %s743, %s744
      %p755 = scmp.eq.s32.totalorder %s75, 0
      %p756 = por %p754, %p755
      %p757 = scmp.ne.s32.totalorder %s743, %s744
      %p758 = scmp.eq.s32.totalorder %s76, 1
      %p759 = por %p757, %p758
      %p761 = scmp.ne.s32.totalorder %s744, %s760
      %p762 = scmp.eq.s32.totalorder %s76, 0
      %p763 = por %p761, %p762
      %p764 = scmp.le.s32.totalorder 1, %s70
      %p765 = scmp.lt.s32.totalorder %s70, 3
      %p766 = pnand %p764, %p765
      %p767 = pneg %p766
      // Predicated region
      $region9: #{tpu_custom_call.1} parent=5 // pred_check
        _
      $region10: #{tpu_custom_call.1} parent=5 // pred_check_branch
        %769 = sbr.rel (%p766) target = $region12
      $region11: #{tpu_custom_call.1} parent=5 // pred_region
        %s770 = ssub.s32 %s70, 1
        // Predicated region
        $region13: #{tpu_custom_call.1} parent=11 // pred_check
          %p771 = pneg %p247
        $region14: #{tpu_custom_call.1} parent=11 // pred_check_branch
          %773 = sbr.rel (%p771) target = $region16
        $region15: #{tpu_custom_call.1} parent=11 // pred_region
          _
        $region16: #{tpu_custom_call.1} parent=11 // pred_fallthru
          _
        // Predicated region
        $region17: #{tpu_custom_call.1} parent=11 // pred_check
          %p774 = pneg %p268
        $region18: #{tpu_custom_call.1} parent=11 // pred_check_branch
          %776 = sbr.rel (%p774) target = $region20
        $region19: #{tpu_custom_call.1} parent=11 // pred_region
          _
        $region20: #{tpu_custom_call.1} parent=11 // pred_fallthru
          _
        // Predicated region
        $region21: #{tpu_custom_call.1} parent=11 // pred_check
          %p777 = pneg %p289
        $region22: #{tpu_custom_call.1} parent=11 // pred_check_branch
          %779 = sbr.rel (%p777) target = $region24
        $region23: #{tpu_custom_call.1} parent=11 // pred_region
          _
        $region24: #{tpu_custom_call.1} parent=11 // pred_fallthru
          _
        // Predicated region
        $region25: #{tpu_custom_call.1} parent=11 // pred_check
          %p780 = pneg %p310
        $region26: #{tpu_custom_call.1} parent=11 // pred_check_branch
          %782 = sbr.rel (%p780) target = $region28
        $region27: #{tpu_custom_call.1} parent=11 // pred_region
          _
        $region28: #{tpu_custom_call.1} parent=11 // pred_fallthru
          _
        // Predicated region
        $region29: #{tpu_custom_call.1} parent=11 // pred_check
          %p783 = pneg %p331
        $region30: #{tpu_custom_call.1} parent=11 // pred_check_branch
          %785 = sbr.rel (%p783) target = $region32
        $region31: #{tpu_custom_call.1} parent=11 // pred_region
          _
        $region32: #{tpu_custom_call.1} parent=11 // pred_fallthru
          _
        // Predicated region
        $region33: #{tpu_custom_call.1} parent=11 // pred_check
          %p786 = pneg %p352
        $region34: #{tpu_custom_call.1} parent=11 // pred_check_branch
          %788 = sbr.rel (%p786) target = $region36
        $region35: #{tpu_custom_call.1} parent=11 // pred_region
          _
        $region36: #{tpu_custom_call.1} parent=11 // pred_fallthru
          _
        // Predicated region
        $region37: #{tpu_custom_call.1} parent=11 // pred_check
          %p789 = pneg %p373
        $region38: #{tpu_custom_call.1} parent=11 // pred_check_branch
          %791 = sbr.rel (%p789) target = $region40
        $region39: #{tpu_custom_call.1} parent=11 // pred_region
          _
        $region40: #{tpu_custom_call.1} parent=11 // pred_fallthru
          _
        // Predicated region
        $region41: #{tpu_custom_call.1} parent=11 // pred_check
          %p792 = pneg %p394
        $region42: #{tpu_custom_call.1} parent=11 // pred_check_branch
          %794 = sbr.rel (%p792) target = $region44
        $region43: #{tpu_custom_call.1} parent=11 // pred_region
          _
        $region44: #{tpu_custom_call.1} parent=11 // pred_fallthru
          _
        // Predicated region
        $region45: #{tpu_custom_call.1} parent=11 // pred_check
          %p795 = pneg %p415
        $region46: #{tpu_custom_call.1} parent=11 // pred_check_branch
          %797 = sbr.rel (%p795) target = $region48
        $region47: #{tpu_custom_call.1} parent=11 // pred_region
          _
        $region48: #{tpu_custom_call.1} parent=11 // pred_fallthru
          _
        // Predicated region
        $region49: #{tpu_custom_call.1} parent=11 // pred_check
          %p798 = pneg %p436
        $region50: #{tpu_custom_call.1} parent=11 // pred_check_branch
          %800 = sbr.rel (%p798) target = $region52
        $region51: #{tpu_custom_call.1} parent=11 // pred_region
          _
        $region52: #{tpu_custom_call.1} parent=11 // pred_fallthru
          _
        // Predicated region
        $region53: #{tpu_custom_call.1} parent=11 // pred_check
          %p801 = pneg %p457
        $region54: #{tpu_custom_call.1} parent=11 // pred_check_branch
          %803 = sbr.rel (%p801) target = $region56
        $region55: #{tpu_custom_call.1} parent=11 // pred_region
          _
        $region56: #{tpu_custom_call.1} parent=11 // pred_fallthru
          _
        // Predicated region
        $region57: #{tpu_custom_call.1} parent=11 // pred_check
          %p804 = pneg %p478
        $region58: #{tpu_custom_call.1} parent=11 // pred_check_branch
          %806 = sbr.rel (%p804) target = $region60
        $region59: #{tpu_custom_call.1} parent=11 // pred_region
          _
        $region60: #{tpu_custom_call.1} parent=11 // pred_fallthru
          _
        // Predicated region
        $region61: #{tpu_custom_call.1} parent=11 // pred_check
          %p807 = pneg %p499
        $region62: #{tpu_custom_call.1} parent=11 // pred_check_branch
          %809 = sbr.rel (%p807) target = $region64
        $region63: #{tpu_custom_call.1} parent=11 // pred_region
          _
        $region64: #{tpu_custom_call.1} parent=11 // pred_fallthru
          _
        // Predicated region
        $region65: #{tpu_custom_call.1} parent=11 // pred_check
          %p810 = pneg %p520
        $region66: #{tpu_custom_call.1} parent=11 // pred_check_branch
          %812 = sbr.rel (%p810) target = $region68
        $region67: #{tpu_custom_call.1} parent=11 // pred_region
          _
        $region68: #{tpu_custom_call.1} parent=11 // pred_fallthru
          _
        // Predicated region
        $region69: #{tpu_custom_call.1} parent=11 // pred_check
          %p813 = pneg %p541
        $region70: #{tpu_custom_call.1} parent=11 // pred_check_branch
          %815 = sbr.rel (%p813) target = $region72
        $region71: #{tpu_custom_call.1} parent=11 // pred_region
          _
        $region72: #{tpu_custom_call.1} parent=11 // pred_fallthru
          _
        // Predicated region
        $region73: #{tpu_custom_call.1} parent=11 // pred_check
          %p816 = pneg %p562
        $region74: #{tpu_custom_call.1} parent=11 // pred_check_branch
          %818 = sbr.rel (%p816) target = $region76
        $region75: #{tpu_custom_call.1} parent=11 // pred_region
          _
        $region76: #{tpu_custom_call.1} parent=11 // pred_fallthru
          _
        // Predicated region
        $region77: #{tpu_custom_call.1} parent=11 // pred_check
          %p819 = pneg %p583
        $region78: #{tpu_custom_call.1} parent=11 // pred_check_branch
          %821 = sbr.rel (%p819) target = $region80
        $region79: #{tpu_custom_call.1} parent=11 // pred_region
          _
        $region80: #{tpu_custom_call.1} parent=11 // pred_fallthru
          _
        // Predicated region
        $region81: #{tpu_custom_call.1} parent=11 // pred_check
          %p822 = pneg %p604
        $region82: #{tpu_custom_call.1} parent=11 // pred_check_branch
          %824 = sbr.rel (%p822) target = $region84
        $region83: #{tpu_custom_call.1} parent=11 // pred_region
          _
        $region84: #{tpu_custom_call.1} parent=11 // pred_fallthru
          _
        // Predicated region
        $region85: #{tpu_custom_call.1} parent=11 // pred_check
          %p825 = pneg %p625
        $region86: #{tpu_custom_call.1} parent=11 // pred_check_branch
          %827 = sbr.rel (%p825) target = $region88
        $region87: #{tpu_custom_call.1} parent=11 // pred_region
          _
        $region88: #{tpu_custom_call.1} parent=11 // pred_fallthru
          _
        // Predicated region
        $region89: #{tpu_custom_call.1} parent=11 // pred_check
          %p828 = pneg %p646
        $region90: #{tpu_custom_call.1} parent=11 // pred_check_branch
          %830 = sbr.rel (%p828) target = $region92
        $region91: #{tpu_custom_call.1} parent=11 // pred_region
          _
        $region92: #{tpu_custom_call.1} parent=11 // pred_fallthru
          _
        // Predicated region
        $region93: #{tpu_custom_call.1} parent=11 // pred_check
          %p831 = pneg %p667
        $region94: #{tpu_custom_call.1} parent=11 // pred_check_branch
          %833 = sbr.rel (%p831) target = $region96
        $region95: #{tpu_custom_call.1} parent=11 // pred_region
          _
        $region96: #{tpu_custom_call.1} parent=11 // pred_fallthru
          _
        // Predicated region
        $region97: #{tpu_custom_call.1} parent=11 // pred_check
          %p834 = pneg %p688
        $region98: #{tpu_custom_call.1} parent=11 // pred_check_branch
          %836 = sbr.rel (%p834) target = $region100
        $region99: #{tpu_custom_call.1} parent=11 // pred_region
          _
        $region100: #{tpu_custom_call.1} parent=11 // pred_fallthru
          _
        // Predicated region
        $region101: #{tpu_custom_call.1} parent=11 // pred_check
          %p837 = pneg %p709
        $region102: #{tpu_custom_call.1} parent=11 // pred_check_branch
          %839 = sbr.rel (%p837) target = $region104
        $region103: #{tpu_custom_call.1} parent=11 // pred_region
          _
        $region104: #{tpu_custom_call.1} parent=11 // pred_fallthru
          _
        // Predicated region
        $region105: #{tpu_custom_call.1} parent=11 // pred_check
          %p840 = pneg %p730
        $region106: #{tpu_custom_call.1} parent=11 // pred_check_branch
          %842 = sbr.rel (%p840) target = $region108
        $region107: #{tpu_custom_call.1} parent=11 // pred_region
          _
        $region108: #{tpu_custom_call.1} parent=11 // pred_fallthru
          _
      $region12: #{tpu_custom_call.1} parent=5 // pred_fallthru
        _
      %p843 = scmp.lt.s32.totalorder %s70, 2
      // Predicated region
      $region109: #{tpu_custom_call.1} parent=5 // pred_check
        %p844 = pneg %p843
      $region110: #{tpu_custom_call.1} parent=5 // pred_check_branch
        %846 = sbr.rel (%p844) target = $region112
      $region111: #{tpu_custom_call.1} parent=5 // pred_region
        // Predicated region
        $region113: #{tpu_custom_call.1} parent=111 // pred_check
          %p847 = pneg %p90
        $region114: #{tpu_custom_call.1} parent=111 // pred_check_branch
          %849 = sbr.rel (%p847) target = $region116
        $region115: #{tpu_custom_call.1} parent=111 // pred_region
          %p850 = scmp.lt.s32.totalorder %s70, 1
          %s851 = scalar_select %p850, %s70, 1
          %s852 = smul.addr %s851, 4
          %s853 = smul.addr %s852, 8
          %s854 = scalar_lea.vmem %s1, %s853
        $region116: #{tpu_custom_call.1} parent=111 // pred_fallthru
          _
        // Predicated region
        $region117: #{tpu_custom_call.1} parent=111 // pred_check
          %p855 = pneg %p116
        $region118: #{tpu_custom_call.1} parent=111 // pred_check_branch
          %857 = sbr.rel (%p855) target = $region120
        $region119: #{tpu_custom_call.1} parent=111 // pred_region
          %p858 = scmp.lt.s32.totalorder %s70, 1
          %s859 = scalar_select %p858, %s70, 1
          %s860 = smul.addr %s859, 4
          %s861 = smul.addr %s860, 8
          %s862 = scalar_lea.vmem %s3, %s861
        $region120: #{tpu_custom_call.1} parent=111 // pred_fallthru
          _
        // Predicated region
        $region121: #{tpu_custom_call.1} parent=111 // pred_check
          %p863 = pneg %p142
        $region122: #{tpu_custom_call.1} parent=111 // pred_check_branch
          %865 = sbr.rel (%p863) target = $region124
        $region123: #{tpu_custom_call.1} parent=111 // pred_region
          %p866 = scmp.lt.s32.totalorder %s70, 1
          %s867 = scalar_select %p866, %s70, 1
          %s868 = smul.addr %s867, 2
          %s869 = smul.addr %s868, 8
          %s870 = scalar_lea.vmem %s5, %s869
        $region124: #{tpu_custom_call.1} parent=111 // pred_fallthru
          _
        // Predicated region
        $region125: #{tpu_custom_call.1} parent=111 // pred_check
          %p871 = pneg %p168
        $region126: #{tpu_custom_call.1} parent=111 // pred_check_branch
          %873 = sbr.rel (%p871) target = $region128
        $region127: #{tpu_custom_call.1} parent=111 // pred_region
          %p874 = scmp.lt.s32.totalorder %s70, 1
          %s875 = scalar_select %p874, %s70, 1
          %s876 = smul.addr %s875, 8
          %s877 = scalar_lea.vmem %s7, %s876
        $region128: #{tpu_custom_call.1} parent=111 // pred_fallthru
          _
        // Predicated region
        $region129: #{tpu_custom_call.1} parent=111 // pred_check
          %p878 = pneg %p194
        $region130: #{tpu_custom_call.1} parent=111 // pred_check_branch
          %880 = sbr.rel (%p878) target = $region132
        $region131: #{tpu_custom_call.1} parent=111 // pred_region
          %p881 = scmp.lt.s32.totalorder %s70, 1
          %s882 = scalar_select %p881, %s70, 1
          %s883 = smul.addr %s882, 2
          %s884 = smul.addr %s883, 4
          %s885 = scalar_lea.vmem %s9, %s884
        $region132: #{tpu_custom_call.1} parent=111 // pred_fallthru
          _
        // Predicated region
        $region133: #{tpu_custom_call.1} parent=111 // pred_check
          %p886 = pneg %p220
        $region134: #{tpu_custom_call.1} parent=111 // pred_check_branch
          %888 = sbr.rel (%p886) target = $region136
        $region135: #{tpu_custom_call.1} parent=111 // pred_region
          %p889 = scmp.lt.s32.totalorder %s70, 1
          %s890 = scalar_select %p889, %s70, 1
          %s891 = smul.addr %s890, 5
          %s892 = smul.addr %s891, 2
          %s893 = scalar_lea.vmem %s11, %s892
        $region136: #{tpu_custom_call.1} parent=111 // pred_fallthru
          _
      $region112: #{tpu_custom_call.1} parent=5 // pred_fallthru
        _
      %p894 = scmp.le.s32.totalorder 1, %s70
      %p895 = scmp.lt.s32.totalorder %s70, 3
      %p896 = pnand %p894, %p895
      %p897 = pneg %p896
      // Predicated region
      $region137: #{tpu_custom_call.1} parent=5 // pred_check
        _
      $region138: #{tpu_custom_call.1} parent=5 // pred_check_branch
        %899 = sbr.rel (%p896) target = $region140
      $region139: #{tpu_custom_call.1} parent=5 // pred_region
        %s900 = ssub.s32 %s70, 1
        %p901 = scmp.lt.s32.totalorder %s75, 1
        %s902 = scalar_select %p901, %s75, 1
        %s903 = smul.addr %s902, 4
        %s904 = smul.addr %s903, 8
        %s905 = scalar_lea.vmem %s1, %s904
        %p906 = pneg %p96
        %p907 = pneg %p93
        %p908 = scmp.lt.s32.totalorder %s75, 1
        %s909 = scalar_select %p908, %s75, 1
        %s910 = smul.addr %s909, 4
        %s911 = smul.addr %s910, 8
        %s912 = scalar_lea.vmem %s3, %s911
        %p913 = pneg %p122
        %p914 = pneg %p119
        %p915 = scmp.lt.s32.totalorder %s75, 1
        %s916 = scalar_select %p915, %s75, 1
        %s917 = smul.addr %s916, 2
        %s918 = smul.addr %s917, 8
        %s919 = scalar_lea.vmem %s5, %s918
        %p920 = pneg %p148
        %p921 = pneg %p145
        %p922 = scmp.lt.s32.totalorder %s75, 1
        %s923 = scalar_select %p922, %s75, 1
        %s924 = smul.addr %s923, 8
        %s925 = scalar_lea.vmem %s7, %s924
        %p926 = pneg %p174
        %p927 = pneg %p171
        %p928 = scmp.lt.s32.totalorder %s75, 1
        %s929 = scalar_select %p928, %s75, 1
        %s930 = smul.addr %s929, 2
        %s931 = smul.addr %s930, 4
        %s932 = scalar_lea.vmem %s9, %s931
        %p933 = pneg %p200
        %p934 = pneg %p197
        %p935 = scmp.lt.s32.totalorder %s75, 1
        %s936 = scalar_select %p935, %s75, 1
        %s937 = smul.addr %s936, 5
        %s938 = smul.addr %s937, 2
        %s939 = scalar_lea.vmem %s11, %s938
        %p940 = pneg %p226
        %p941 = pneg %p223
        %p942 = pneg %p247
        %p943 = pneg %p244
        %p944 = pneg %p268
        %p945 = pneg %p265
        %p946 = pneg %p289
        %p947 = pneg %p286
        %p948 = pneg %p310
        %p949 = pneg %p307
        %p950 = pneg %p331
        %p951 = pneg %p328
        %p952 = pneg %p352
        %p953 = pneg %p349
        %p954 = pneg %p373
        %p955 = pneg %p370
        %p956 = pneg %p394
        %p957 = pneg %p391
        %p958 = pneg %p415
        %p959 = pneg %p412
        %p960 = pneg %p436
        %p961 = pneg %p433
        %p962 = pneg %p457
        %p963 = pneg %p454
        %p964 = pneg %p478
        %p965 = pneg %p475
        %p966 = pneg %p499
        %p967 = pneg %p496
        %p968 = pneg %p520
        %p969 = pneg %p517
        %p970 = pneg %p541
        %p971 = pneg %p538
        %p972 = pneg %p562
        %p973 = pneg %p559
        %p974 = pneg %p583
        %p975 = pneg %p580
        %p976 = pneg %p604
        %p977 = pneg %p601
        %p978 = pneg %p625
        %p979 = pneg %p622
        %p980 = pneg %p646
        %p981 = pneg %p643
        %p982 = pneg %p667
        %p983 = pneg %p664
        %p984 = pneg %p688
        %p985 = pneg %p685
        %p986 = pneg %p709
        %p987 = pneg %p706
        %p988 = pneg %p730
        %p989 = pneg %p727
        %p990 = pneg %p756
        %p991 = pneg %p753
        %s992 = sand.u32 %s743, 1
        %s993 = scalar_lea.sflag [#allocation3], %s992
        %s994 = sand.u32 %s743, 1
        %s995 = smul.addr %s994, 5
        %s996 = scalar_lea.vmem [#allocation2], %s995
        %p997 = scmp.lt.s32.totalorder %s75, 1
        %s998 = scalar_select %p997, %s75, 1
        %s999 = smul.addr %s998, 4
        %s1000 = smul.addr %s999, 8
        %s1001 = scalar_lea.vmem %s1, %s1000
        %p1002 = scmp.lt.s32.totalorder %s75, 1
        %s1003 = scalar_select %p1002, %s75, 1
        %s1004 = smul.addr %s1003, 4
        %s1005 = smul.addr %s1004, 8
        %s1006 = scalar_lea.vmem %s3, %s1005
        %p1007 = scmp.lt.s32.totalorder %s75, 1
        %s1008 = scalar_select %p1007, %s75, 1
        %s1009 = smul.addr %s1008, 2
        %s1010 = smul.addr %s1009, 8
        %s1011 = scalar_lea.vmem %s5, %s1010
        %p1012 = scmp.lt.s32.totalorder %s75, 1
        %s1013 = scalar_select %p1012, %s75, 1
        %s1014 = smul.addr %s1013, 8
        %s1015 = scalar_lea.vmem %s7, %s1014
        %p1016 = scmp.lt.s32.totalorder %s75, 1
        %s1017 = scalar_select %p1016, %s75, 1
        %s1018 = smul.addr %s1017, 2
        %s1019 = smul.addr %s1018, 4
        %s1020 = scalar_lea.vmem %s9, %s1019
        %p1021 = scmp.lt.s32.totalorder %s75, 1
        %s1022 = scalar_select %p1021, %s75, 1
        %s1023 = smul.addr %s1022, 5
        %s1024 = smul.addr %s1023, 2
        %s1025 = scalar_lea.vmem %s11, %s1024
        %v1026 = vld [vmem:[%s1001] sm:$0xff]
        %v1027 = vld [vmem:[%s1001 + $0x8] sm:$0xff]
        %v1028 = vld [vmem:[%s1001 + $0x10] sm:$0xff]
        %v1029 = vld [vmem:[%s1001 + $0x18] sm:$0xff]
        %v1030 = vld [vmem:[%s13] sm:$0xff]
        %v1031 = vld [vmem:[%s13 + $0x8] sm:$0xff]
        %v1032 = vld [vmem:[%s13 + $0x10] sm:$0xff]
        %v1033 = vld [vmem:[%s13 + $0x18] sm:$0xff]
        %v1034 = vld [vmem:[%s13 + $0x20] sm:$0xff]
        %v1035 = vld [vmem:[%s13 + $0x28] sm:$0xff]
        %v1036 = vld [vmem:[%s13 + $0x30] sm:$0xff]
        %v1037 = vld [vmem:[%s13 + $0x38] sm:$0xff]
        %v1038 = vld [vmem:[%s15] sm:$0xff]
        %v1039 = vld [vmem:[%s15 + $0x8] sm:$0xff]
        %v1040 = vld [vmem:[%s15 + $0x10] sm:$0xff]
        %v1041 = vld [vmem:[%s15 + $0x18] sm:$0xff]
        %v1042 = vld [vmem:[%s15 + $0x20] sm:$0xff]
        %v1043 = vld [vmem:[%s15 + $0x28] sm:$0xff]
        %v1044 = vld [vmem:[%s15 + $0x30] sm:$0xff]
        %v1045 = vld [vmem:[%s15 + $0x38] sm:$0xff]
        %v1046 = vld [vmem:[%s17] sm:$0xff]
        %v1047 = vld [vmem:[%s17 + $0x8] sm:$0xff]
        %v1048 = vld [vmem:[%s17 + $0x10] sm:$0xff]
        %v1049 = vld [vmem:[%s17 + $0x18] sm:$0xff]
        %v1050 = vld [vmem:[%s17 + $0x20] sm:$0xff]
        %v1051 = vld [vmem:[%s17 + $0x28] sm:$0xff]
        %v1052 = vld [vmem:[%s17 + $0x30] sm:$0xff]
        %v1053 = vld [vmem:[%s17 + $0x38] sm:$0xff]
        %v1054 = vld [vmem:[%s17 + $0x40] sm:$0xff]
        %v1055 = vld [vmem:[%s17 + $0x48] sm:$0xff]
        %v1056 = vld [vmem:[%s17 + $0x50] sm:$0xff]
        %v1057 = vld [vmem:[%s17 + $0x58] sm:$0xff]
        %v1058 = vld [vmem:[%s17 + $0x60] sm:$0xff]
        %v1059 = vld [vmem:[%s17 + $0x68] sm:$0xff]
        %v1060 = vld [vmem:[%s17 + $0x70] sm:$0xff]
        %v1061 = vld [vmem:[%s17 + $0x78] sm:$0xff]
        %v1062 = vld [vmem:[%s19] sm:$0xff]
        %v1063 = vld [vmem:[%s19 + $0x8] sm:$0xff]
        %v1064 = vld [vmem:[%s1006] sm:$0xff]
        %v1065 = vld [vmem:[%s1006 + $0x8] sm:$0xff]
        %v1066 = vld [vmem:[%s1006 + $0x10] sm:$0xff]
        %v1067 = vld [vmem:[%s1006 + $0x18] sm:$0xff]
        %v1068 = vadd.f32 %v1026, %v1064
        %v1069 = vadd.f32 %v1027, %v1065
        %v1070 = vadd.f32 %v1028, %v1066
        %v1071 = vadd.f32 %v1029, %v1067
        %vm1072 = vcmask 261120
        %v1074 = vsel %vm1072, %v1030, 0
        %v1077 = vsel %vm1072, %v1031, 0
        %v1080 = vsel %vm1072, %v1032, 0
        %v1083 = vsel %vm1072, %v1033, 0
        %v1086 = vsel %vm1072, %v1034, 0
        %v1089 = vsel %vm1072, %v1035, 0
        %v1092 = vsel %vm1072, %v1036, 0
        %v1095 = vsel %vm1072, %v1037, 0
        %1097 = vmatprep.subr.mxu0 0.0
        %1098 = vmatpush1.msra.mxu0 %v1068
        %1099 = vmatprep.subr.mxu0 0.0
        %1100 = vmatpush1.msra.mxu0 %v1069
        %1101 = vmatprep.subr.mxu0 0.0
        %1102 = vmatpush1.msra.mxu0 %v1070
        %1103 = vmatprep.subr.mxu0 0.0
        %1104 = vmatpush1.msra.mxu0 %v1071
        %1105 = vmatprep.subr.mxu0 0.0
        %1106 = vmatpush1.msra.mxu0 0.0
        %1107 = vmatprep.subr.mxu0 0.0
        %1108 = vmatpush1.msra.mxu0 0.0
        %1109 = vmatprep.subr.mxu0 0.0
        %1110 = vmatpush1.msra.mxu0 0.0
        %1111 = vmatprep.subr.mxu0 0.0
        %1112 = vmatpush1.msra.mxu0 0.0
        %1113 = vmatprep.subr.mxu0 0.0
        %1114 = vmatpush1.msra.mxu0 0.0
        %1115 = vmatprep.subr.mxu0 0.0
        %1116 = vmatpush1.msra.mxu0 0.0
        %1117 = vmatprep.subr.mxu0 0.0
        %1118 = vmatpush1.msra.mxu0 0.0
        %1119 = vmatprep.subr.mxu0 0.0
        %1120 = vmatpush1.msra.mxu0 0.0
        %1121 = vmatprep.subr.mxu0 0.0
        %1122 = vmatpush1.msra.mxu0 0.0
        %1123 = vmatprep.subr.mxu0 0.0
        %1124 = vmatpush1.msra.mxu0 0.0
        %1125 = vmatprep.subr.mxu0 0.0
        %1126 = vmatpush1.msra.mxu0 0.0
        %1127 = vmatprep.subr.mxu0 0.0
        %1128 = vmatpush1.msra.mxu0 0.0
        %1129 = vmatprep.subr.mxu0 0.0
        %1130 = vmatpush1.msra.mxu0 0.0
        %1131 = vmatprep.subr.mxu0 0.0
        %1132 = vmatpush1.msra.mxu0 0.0
        %1133 = vmatprep.subr.mxu0 0.0
        %1134 = vmatpush1.msra.mxu0 0.0
        %1135 = vmatprep.subr.mxu0 0.0
        %1136 = vmatpush1.msra.mxu0 0.0
        %1137 = vmatprep.subr.mxu0 0.0
        %1138 = vmatpush1.msra.mxu0 0.0
        %1139 = vmatprep.subr.mxu0 0.0
        %1140 = vmatpush1.msra.mxu0 0.0
        %1141 = vmatprep.subr.mxu0 0.0
        %1142 = vmatpush1.msra.mxu0 0.0
        %1143 = vmatprep.subr.mxu0 0.0
        %1144 = vmatpush1.msra.mxu0 0.0
        %1145 = vmatprep.subr.mxu0 0.0
        %1146 = vmatpush1.msra.mxu0 0.0
        %1147 = vmatprep.subr.mxu0 0.0
        %1148 = vmatpush1.msra.mxu0 0.0
        %1149 = vmatprep.subr.mxu0 0.0
        %1150 = vmatpush1.msra.mxu0 0.0
        %1151 = vmatprep.subr.mxu0 0.0
        %1152 = vmatpush1.msra.mxu0 0.0
        %1153 = vmatprep.subr.mxu0 0.0
        %1154 = vmatpush1.msra.mxu0 0.0
        %1155 = vmatprep.subr.mxu0 0.0
        %1156 = vmatpush1.msra.mxu0 0.0
        %1157 = vmatprep.subr.mxu0 0.0
        %1158 = vmatpush1.msra.mxu0 0.0
        %1159 = vmatprep.subr.mxu0 0.0
        %1160 = vmatpush1.msra.mxu0 0.0
        %1161 = vmatprep.mubr.f32.mxu0 0.0
        %1162 = vmatmul.mubr.f32.gmra.mrb[0].mxu0 %v1074
        %v1163 = vpop.f32.mrb[0].mxu0
        %v1164 = vadd.f32 %v1038, %v1163
        %v1165 = vpop.f32.mrb[0].mxu0
        %1166 = vmatprep.mubr.f32.mxu0 0.0
        %1167 = vmatmul.mubr.f32.gmra.mrb[0].mxu0 %v1077
        %v1168 = vpop.f32.mrb[0].mxu0
        %v1169 = vadd.f32 %v1039, %v1168
        %v1170 = vpop.f32.mrb[0].mxu0
        %1171 = vmatprep.mubr.f32.mxu0 0.0
        %1172 = vmatmul.mubr.f32.gmra.mrb[0].mxu0 %v1080
        %v1173 = vpop.f32.mrb[0].mxu0
        %v1174 = vadd.f32 %v1040, %v1173
        %v1175 = vpop.f32.mrb[0].mxu0
        %1176 = vmatprep.mubr.f32.mxu0 0.0
        %1177 = vmatmul.mubr.f32.gmra.mrb[0].mxu0 %v1083
        %v1178 = vpop.f32.mrb[0].mxu0
        %v1179 = vadd.f32 %v1041, %v1178
        %v1180 = vpop.f32.mrb[0].mxu0
        %1181 = vmatprep.mubr.f32.mxu0 0.0
        %1182 = vmatmul.mubr.f32.gmra.mrb[0].mxu0 %v1086
        %v1183 = vpop.f32.mrb[0].mxu0
        %v1184 = vadd.f32 %v1042, %v1183
        %v1185 = vpop.f32.mrb[0].mxu0
        %1186 = vmatprep.mubr.f32.mxu0 0.0
        %1187 = vmatmul.mubr.f32.gmra.mrb[0].mxu0 %v1089
        %v1188 = vpop.f32.mrb[0].mxu0
        %v1189 = vadd.f32 %v1043, %v1188
        %v1190 = vpop.f32.mrb[0].mxu0
        %1191 = vmatprep.mubr.f32.mxu0 0.0
        %1192 = vmatmul.mubr.f32.gmra.mrb[0].mxu0 %v1092
        %v1193 = vpop.f32.mrb[0].mxu0
        %v1194 = vadd.f32 %v1044, %v1193
        %v1195 = vpop.f32.mrb[0].mxu0
        %1196 = vmatprep.mubr.f32.mxu0 0.0
        %1197 = vmatmul.mubr.f32.gmra.mrb[0].mxu0 %v1095
        %v1198 = vpop.f32.mrb[0].mxu0
        %v1199 = vadd.f32 %v1045, %v1198
        %v1200 = vpop.f32.mrb[0].mxu0
        %1201 = vdwg.mxu0
        %v1202 = vxor.u32 %v1184, 2147483648
        %v1203 = vxor.u32 %v1189, 2147483648
        %v1204 = vxor.u32 %v1194, 2147483648
        %v1205 = vxor.u32 %v1199, 2147483648
        %v1206 = vmul.f32 %v1202, 1.442695
        %v1207 = vpow.pop %v1206
        %v1208 = vmul.f32 %v1203, 1.442695
        %v1209 = vpow.pop %v1208
        %v1210 = vmul.f32 %v1204, 1.442695
        %v1211 = vpow.pop %v1210
        %v1212 = vmul.f32 %v1205, 1.442695
        %v1213 = vpow.pop %v1212
        %v1214 = vadd.f32 %v1207, 1.0
        %v1215 = vadd.f32 %v1209, 1.0
        %v1216 = vadd.f32 %v1211, 1.0
        %v1217 = vadd.f32 %v1213, 1.0
        %v1218 = vrcp.pop %v1214
        %v1219 = vmul.f32 1.0, %v1218
        %v1220 = vrcp.pop %v1215
        %v1221 = vmul.f32 1.0, %v1220
        %v1222 = vrcp.pop %v1216
        %v1223 = vmul.f32 1.0, %v1222
        %v1224 = vrcp.pop %v1217
        %v1225 = vmul.f32 1.0, %v1224
        %v1226 = vmul.f32 %v1164, %v1219
        %v1227 = vmul.f32 %v1169, %v1221
        %v1228 = vmul.f32 %v1174, %v1223
        %v1229 = vmul.f32 %v1179, %v1225
        %v1231 = vsel %vm1072, %v1046, 0
        %v1234 = vsel %vm1072, %v1047, 0
        %v1237 = vsel %vm1072, %v1048, 0
        %v1240 = vsel %vm1072, %v1049, 0
        %v1243 = vsel %vm1072, %v1050, 0
        %v1246 = vsel %vm1072, %v1051, 0
        %v1249 = vsel %vm1072, %v1052, 0
        %v1252 = vsel %vm1072, %v1053, 0
        %v1255 = vsel %vm1072, %v1054, 0
        %v1258 = vsel %vm1072, %v1055, 0
        %v1261 = vsel %vm1072, %v1056, 0
        %v1264 = vsel %vm1072, %v1057, 0
        %v1267 = vsel %vm1072, %v1058, 0
        %v1270 = vsel %vm1072, %v1059, 0
        %v1273 = vsel %vm1072, %v1060, 0
        %v1276 = vsel %vm1072, %v1061, 0
        %1278 = vmatprep.subr.mxu0 0.0
        %1279 = vmatpush1.msra.mxu0 %v1226
        %1280 = vmatprep.subr.mxu0 0.0
        %1281 = vmatpush1.msra.mxu0 %v1227
        %1282 = vmatprep.subr.mxu0 0.0
        %1283 = vmatpush1.msra.mxu0 %v1228
        %1284 = vmatprep.subr.mxu0 0.0
        %1285 = vmatpush1.msra.mxu0 %v1229
        %1286 = vmatprep.subr.mxu0 0.0
        %1287 = vmatpush1.msra.mxu0 0.0
        %1288 = vmatprep.subr.mxu0 0.0
        %1289 = vmatpush1.msra.mxu0 0.0
        %1290 = vmatprep.subr.mxu0 0.0
        %1291 = vmatpush1.msra.mxu0 0.0
        %1292 = vmatprep.subr.mxu0 0.0
        %1293 = vmatpush1.msra.mxu0 0.0
        %1294 = vmatprep.subr.mxu0 0.0
        %1295 = vmatpush1.msra.mxu0 0.0
        %1296 = vmatprep.subr.mxu0 0.0
        %1297 = vmatpush1.msra.mxu0 0.0
        %1298 = vmatprep.subr.mxu0 0.0
        %1299 = vmatpush1.msra.mxu0 0.0
        %1300 = vmatprep.subr.mxu0 0.0
        %1301 = vmatpush1.msra.mxu0 0.0
        %1302 = vmatprep.subr.mxu0 0.0
        %1303 = vmatpush1.msra.mxu0 0.0
        %1304 = vmatprep.subr.mxu0 0.0
        %1305 = vmatpush1.msra.mxu0 0.0
        %1306 = vmatprep.subr.mxu0 0.0
        %1307 = vmatpush1.msra.mxu0 0.0
        %1308 = vmatprep.subr.mxu0 0.0
        %1309 = vmatpush1.msra.mxu0 0.0
        %1310 = vmatprep.subr.mxu0 0.0
        %1311 = vmatpush1.msra.mxu0 0.0
        %1312 = vmatprep.subr.mxu0 0.0
        %1313 = vmatpush1.msra.mxu0 0.0
        %1314 = vmatprep.subr.mxu0 0.0
        %1315 = vmatpush1.msra.mxu0 0.0
        %1316 = vmatprep.subr.mxu0 0.0
        %1317 = vmatpush1.msra.mxu0 0.0
        %1318 = vmatprep.subr.mxu0 0.0
        %1319 = vmatpush1.msra.mxu0 0.0
        %1320 = vmatprep.subr.mxu0 0.0
        %1321 = vmatpush1.msra.mxu0 0.0
        %1322 = vmatprep.subr.mxu0 0.0
        %1323 = vmatpush1.msra.mxu0 0.0
        %1324 = vmatprep.subr.mxu0 0.0
        %1325 = vmatpush1.msra.mxu0 0.0
        %1326 = vmatprep.subr.mxu0 0.0
        %1327 = vmatpush1.msra.mxu0 0.0
        %1328 = vmatprep.subr.mxu0 0.0
        %1329 = vmatpush1.msra.mxu0 0.0
        %1330 = vmatprep.subr.mxu0 0.0
        %1331 = vmatpush1.msra.mxu0 0.0
        %1332 = vmatprep.subr.mxu0 0.0
        %1333 = vmatpush1.msra.mxu0 0.0
        %1334 = vmatprep.subr.mxu0 0.0
        %1335 = vmatpush1.msra.mxu0 0.0
        %1336 = vmatprep.subr.mxu0 0.0
        %1337 = vmatpush1.msra.mxu0 0.0
        %1338 = vmatprep.subr.mxu0 0.0
        %1339 = vmatpush1.msra.mxu0 0.0
        %1340 = vmatprep.subr.mxu0 0.0
        %1341 = vmatpush1.msra.mxu0 0.0
        %1342 = vmatprep.mubr.f32.mxu0 0.0
        %1343 = vmatmul.mubr.f32.gmra.mrb[0].mxu0 %v1231
        %v1344 = vpop.f32.mrb[0].mxu0
        %v1345 = vadd.f32 0.0, %v1344
        %v1346 = vpop.f32.mrb[0].mxu0
        %1347 = vmatprep.mubr.f32.mxu0 0.0
        %1348 = vmatmul.mubr.f32.gmra.mrb[0].mxu0 %v1234
        %v1349 = vpop.f32.mrb[0].mxu0
        %v1350 = vadd.f32 0.0, %v1349
        %v1351 = vpop.f32.mrb[0].mxu0
        %1352 = vmatprep.mubr.f32.mxu0 0.0
        %1353 = vmatmul.mubr.f32.gmra.mrb[0].mxu0 %v1237
        %v1354 = vpop.f32.mrb[0].mxu0
        %v1355 = vadd.f32 0.0, %v1354
        %v1356 = vpop.f32.mrb[0].mxu0
        %1357 = vmatprep.mubr.f32.mxu0 0.0
        %1358 = vmatmul.mubr.f32.gmra.mrb[0].mxu0 %v1240
        %v1359 = vpop.f32.mrb[0].mxu0
        %v1360 = vadd.f32 0.0, %v1359
        %v1361 = vpop.f32.mrb[0].mxu0
        %1362 = vmatprep.mubr.f32.mxu0 0.0
        %1363 = vmatmul.mubr.f32.gmra.mrb[0].mxu0 %v1243
        %v1364 = vpop.f32.mrb[0].mxu0
        %v1365 = vadd.f32 0.0, %v1364
        %v1366 = vpop.f32.mrb[0].mxu0
        %1367 = vmatprep.mubr.f32.mxu0 0.0
        %1368 = vmatmul.mubr.f32.gmra.mrb[0].mxu0 %v1246
        %v1369 = vpop.f32.mrb[0].mxu0
        %v1370 = vadd.f32 0.0, %v1369
        %v1371 = vpop.f32.mrb[0].mxu0
        %1372 = vmatprep.mubr.f32.mxu0 0.0
        %1373 = vmatmul.mubr.f32.gmra.mrb[0].mxu0 %v1249
        %v1374 = vpop.f32.mrb[0].mxu0
        %v1375 = vadd.f32 0.0, %v1374
        %v1376 = vpop.f32.mrb[0].mxu0
        %1377 = vmatprep.mubr.f32.mxu0 0.0
        %1378 = vmatmul.mubr.f32.gmra.mrb[0].mxu0 %v1252
        %v1379 = vpop.f32.mrb[0].mxu0
        %v1380 = vadd.f32 0.0, %v1379
        %v1381 = vpop.f32.mrb[0].mxu0
        %1382 = vmatprep.mubr.f32.mxu0 0.0
        %1383 = vmatmul.mubr.f32.gmra.mrb[0].mxu0 %v1255
        %v1384 = vpop.f32.mrb[0].mxu0
        %v1385 = vadd.f32 0.0, %v1384
        %v1386 = vpop.f32.mrb[0].mxu0
        %1387 = vmatprep.mubr.f32.mxu0 0.0
        %1388 = vmatmul.mubr.f32.gmra.mrb[0].mxu0 %v1258
        %v1389 = vpop.f32.mrb[0].mxu0
        %v1390 = vadd.f32 0.0, %v1389
        %v1391 = vpop.f32.mrb[0].mxu0
        %1392 = vmatprep.mubr.f32.mxu0 0.0
        %1393 = vmatmul.mubr.f32.gmra.mrb[0].mxu0 %v1261
        %v1394 = vpop.f32.mrb[0].mxu0
        %v1395 = vadd.f32 0.0, %v1394
        %v1396 = vpop.f32.mrb[0].mxu0
        %1397 = vmatprep.mubr.f32.mxu0 0.0
        %1398 = vmatmul.mubr.f32.gmra.mrb[0].mxu0 %v1264
        %v1399 = vpop.f32.mrb[0].mxu0
        %v1400 = vadd.f32 0.0, %v1399
        %v1401 = vpop.f32.mrb[0].mxu0
        %1402 = vmatprep.mubr.f32.mxu0 0.0
        %1403 = vmatmul.mubr.f32.gmra.mrb[0].mxu0 %v1267
        %v1404 = vpop.f32.mrb[0].mxu0
        %v1405 = vadd.f32 0.0, %v1404
        %v1406 = vpop.f32.mrb[0].mxu0
        %1407 = vmatprep.mubr.f32.mxu0 0.0
        %1408 = vmatmul.mubr.f32.gmra.mrb[0].mxu0 %v1270
        %v1409 = vpop.f32.mrb[0].mxu0
        %v1410 = vadd.f32 0.0, %v1409
        %v1411 = vpop.f32.mrb[0].mxu0
        %1412 = vmatprep.mubr.f32.mxu0 0.0
        %1413 = vmatmul.mubr.f32.gmra.mrb[0].mxu0 %v1273
        %v1414 = vpop.f32.mrb[0].mxu0
        %v1415 = vadd.f32 0.0, %v1414
        %v1416 = vpop.f32.mrb[0].mxu0
        %1417 = vmatprep.mubr.f32.mxu0 0.0
        %1418 = vmatmul.mubr.f32.gmra.mrb[0].mxu0 %v1276
        %v1419 = vpop.f32.mrb[0].mxu0
        %v1420 = vadd.f32 0.0, %v1419
        %v1421 = vpop.f32.mrb[0].mxu0
        %1422 = vdwg.mxu0
        %1425 = vrot.lane.b32.xlu0 %v1355, 1
        %v1426 = vpop.permute.xlu0 %1425
        %1427 = vrot.lane.b32.xlu0 %v1360, 1
        %v1428 = vpop.permute.xlu0 %1427
        %1433 = vrot.lane.b32.xlu0 %v1365, 2
        %v1434 = vpop.permute.xlu0 %1433
        %1435 = vrot.lane.b32.xlu0 %v1370, 2
        %v1436 = vpop.permute.xlu0 %1435
        %1441 = vrot.lane.b32.xlu0 %v1375, 3
        %v1442 = vpop.permute.xlu0 %1441
        %1443 = vrot.lane.b32.xlu0 %v1380, 3
        %v1444 = vpop.permute.xlu0 %1443
        %1449 = vrot.lane.b32.xlu0 %v1385, 4
        %v1450 = vpop.permute.xlu0 %1449
        %1451 = vrot.lane.b32.xlu0 %v1390, 4
        %v1452 = vpop.permute.xlu0 %1451
        %1457 = vrot.lane.b32.xlu0 %v1395, 5
        %v1458 = vpop.permute.xlu0 %1457
        %1459 = vrot.lane.b32.xlu0 %v1400, 5
        %v1460 = vpop.permute.xlu0 %1459
        %1465 = vrot.lane.b32.xlu0 %v1405, 6
        %v1466 = vpop.permute.xlu0 %1465
        %1467 = vrot.lane.b32.xlu0 %v1410, 6
        %v1468 = vpop.permute.xlu0 %1467
        %1473 = vrot.lane.b32.xlu0 %v1415, 7
        %v1474 = vpop.permute.xlu0 %1473
        %1475 = vrot.lane.b32.xlu0 %v1420, 7
        %v1476 = vpop.permute.xlu0 %1475
        %vm1479 = vcmask 7168
        %v1480 = vsel %vm1479, %v1345, %v1426
        %v1481 = vsel %vm1479, %v1350, %v1428
        %vm1482 = vcmask 15360
        %v1483 = vsel %vm1482, %v1480, %v1434
        %v1484 = vsel %vm1482, %v1481, %v1436
        %vm1485 = vcmask 23552
        %v1486 = vsel %vm1485, %v1483, %v1442
        %v1487 = vsel %vm1485, %v1484, %v1444
        %vm1488 = vcmask 31744
        %v1489 = vsel %vm1488, %v1486, %v1450
        %v1490 = vsel %vm1488, %v1487, %v1452
        %vm1491 = vcmask 39936
        %v1492 = vsel %vm1491, %v1489, %v1458
        %v1493 = vsel %vm1491, %v1490, %v1460
        %vm1494 = vcmask 48128
        %v1495 = vsel %vm1494, %v1492, %v1466
        %v1496 = vsel %vm1494, %v1493, %v1468
        %vm1497 = vcmask 56320
        %v1498 = vsel %vm1497, %v1495, %v1474
        %v1499 = vsel %vm1497, %v1496, %v1476
        %v1500 = vld [vmem:[%s49] sm:$0xff]
        %1502 = vset.pattern.permute.xlu0 0
        %1503 = vperm.xlu0 %1502, %v1062
        %v1504 = vpop.permute.xlu0 %1503
        %1507 = vset.pattern.permute.xlu0 0
        %1508 = vperm.xlu0 %1507, %v1063
        %v1509 = vpop.permute.xlu0 %1508
        %vm1511 = vcmask 64512
        %v1513 = vsel %vm1511, %v1498, 0
        %v1516 = vsel %vm1511, %v1499, 0
        %1518 = vmatprep.subr.mxu0 0.0
        %1519 = vmatpush1.msra.mxu0 %v1500
        %1520 = vmatprep.subr.mxu0 0.0
        %1521 = vmatpush1.msra.mxu0 0.0
        %1522 = vmatprep.subr.mxu0 0.0
        %1523 = vmatpush1.msra.mxu0 0.0
        %1524 = vmatprep.subr.mxu0 0.0
        %1525 = vmatpush1.msra.mxu0 0.0
        %1526 = vmatprep.subr.mxu0 0.0
        %1527 = vmatpush1.msra.mxu0 0.0
        %1528 = vmatprep.subr.mxu0 0.0
        %1529 = vmatpush1.msra.mxu0 0.0
        %1530 = vmatprep.subr.mxu0 0.0
        %1531 = vmatpush1.msra.mxu0 0.0
        %1532 = vmatprep.subr.mxu0 0.0
        %1533 = vmatpush1.msra.mxu0 0.0
        %1534 = vmatprep.subr.mxu0 0.0
        %1535 = vmatpush1.msra.mxu0 0.0
        %1536 = vmatprep.subr.mxu0 0.0
        %1537 = vmatpush1.msra.mxu0 0.0
        %1538 = vmatprep.subr.mxu0 0.0
        %1539 = vmatpush1.msra.mxu0 0.0
        %1540 = vmatprep.subr.mxu0 0.0
        %1541 = vmatpush1.msra.mxu0 0.0
        %1542 = vmatprep.subr.mxu0 0.0
        %1543 = vmatpush1.msra.mxu0 0.0
        %1544 = vmatprep.subr.mxu0 0.0
        %1545 = vmatpush1.msra.mxu0 0.0
        %1546 = vmatprep.subr.mxu0 0.0
        %1547 = vmatpush1.msra.mxu0 0.0
        %1548 = vmatprep.subr.mxu0 0.0
        %1549 = vmatpush1.msra.mxu0 0.0
        %1550 = vmatprep.subr.mxu0 0.0
        %1551 = vmatpush1.msra.mxu0 0.0
        %1552 = vmatprep.subr.mxu0 0.0
        %1553 = vmatpush1.msra.mxu0 0.0
        %1554 = vmatprep.subr.mxu0 0.0
        %1555 = vmatpush1.msra.mxu0 0.0
        %1556 = vmatprep.subr.mxu0 0.0
        %1557 = vmatpush1.msra.mxu0 0.0
        %1558 = vmatprep.subr.mxu0 0.0
        %1559 = vmatpush1.msra.mxu0 0.0
        %1560 = vmatprep.subr.mxu0 0.0
        %1561 = vmatpush1.msra.mxu0 0.0
        %1562 = vmatprep.subr.mxu0 0.0
        %1563 = vmatpush1.msra.mxu0 0.0
        %1564 = vmatprep.subr.mxu0 0.0
        %1565 = vmatpush1.msra.mxu0 0.0
        %1566 = vmatprep.subr.mxu0 0.0
        %1567 = vmatpush1.msra.mxu0 0.0
        %1568 = vmatprep.subr.mxu0 0.0
        %1569 = vmatpush1.msra.mxu0 0.0
        %1570 = vmatprep.subr.mxu0 0.0
        %1571 = vmatpush1.msra.mxu0 0.0
        %1572 = vmatprep.subr.mxu0 0.0
        %1573 = vmatpush1.msra.mxu0 0.0
        %1574 = vmatprep.subr.mxu0 0.0
        %1575 = vmatpush1.msra.mxu0 0.0
        %1576 = vmatprep.subr.mxu0 0.0
        %1577 = vmatpush1.msra.mxu0 0.0
        %1578 = vmatprep.subr.mxu0 0.0
        %1579 = vmatpush1.msra.mxu0 0.0
        %1580 = vmatprep.subr.mxu0 0.0
        %1581 = vmatpush1.msra.mxu0 0.0
        %1582 = vmatprep.mubr.f32.mxu0 0.0
        %1583 = vmatmul.mubr.f32.gmra.mrb[0].mxu0 %v1513
        %v1584 = vpop.f32.mrb[0].mxu0
        %v1585 = vadd.f32 %v1504, %v1584
        %v1586 = vpop.f32.mrb[0].mxu0
        %1587 = vmatprep.mubr.f32.mxu0 0.0
        %1588 = vmatmul.mubr.f32.gmra.mrb[0].mxu0 %v1516
        %v1589 = vpop.f32.mrb[0].mxu0
        %v1590 = vadd.f32 %v1509, %v1589
        %v1591 = vpop.f32.mrb[0].mxu0
        %1592 = vdwg.mxu0
        %v1593 = vmax.f32 %v1585, 0.0
        %v1594 = vmax.f32 %v1590, 0.0
        %v1595 = vld [vmem:[%s21] sm:$0xff]
        %v1596 = vld [vmem:[%s21 + $0x8] sm:$0xff]
        %v1597 = vld [vmem:[%s21 + $0x10] sm:$0xff]
        %v1598 = vld [vmem:[%s21 + $0x18] sm:$0xff]
        %v1599 = vld [vmem:[%s23] sm:$0xff]
        %v1600 = vld [vmem:[%s23 + $0x8] sm:$0xff]
        %v1601 = vld [vmem:[%s23 + $0x10] sm:$0xff]
        %v1602 = vld [vmem:[%s23 + $0x18] sm:$0xff]
        %v1603 = vld [vmem:[%s25] sm:$0xff]
        %v1604 = vld [vmem:[%s25 + $0x8] sm:$0xff]
        %v1605 = vld [vmem:[%s25 + $0x10] sm:$0xff]
        %v1606 = vld [vmem:[%s25 + $0x18] sm:$0xff]
        %v1607 = vld [vmem:[%s25 + $0x20] sm:$0xff]
        %v1608 = vld [vmem:[%s25 + $0x28] sm:$0xff]
        %v1609 = vld [vmem:[%s25 + $0x30] sm:$0xff]
        %v1610 = vld [vmem:[%s25 + $0x38] sm:$0xff]
        %v1611 = vld [vmem:[%s27] sm:$0xff]
        %v1612 = vld [vmem:[%s1011] sm:$0xff]
        %v1613 = vld [vmem:[%s1011 + $0x8] sm:$0xff]
        %v1614 = vadd.f32 %v1593, %v1612
        %v1615 = vadd.f32 %v1594, %v1613
        %1617 = vset.pattern.permute.xlu0 0
        %1618 = vperm.xlu0 %1617, %v1599
        %v1619 = vpop.permute.xlu0 %1618
        %1622 = vset.pattern.permute.xlu0 0
        %1623 = vperm.xlu0 %1622, %v1600
        %v1624 = vpop.permute.xlu0 %1623
        %1627 = vset.pattern.permute.xlu0 0
        %1628 = vperm.xlu0 %1627, %v1601
        %v1629 = vpop.permute.xlu0 %1628
        %1632 = vset.pattern.permute.xlu0 0
        %1633 = vperm.xlu0 %1632, %v1602
        %v1634 = vpop.permute.xlu0 %1633
        %vm1636 = vcmask 130048
        %v1638 = vsel %vm1636, %v1595, 0
        %v1641 = vsel %vm1636, %v1596, 0
        %v1644 = vsel %vm1636, %v1597, 0
        %v1647 = vsel %vm1636, %v1598, 0
        %1649 = vmatprep.subr.mxu0 0.0
        %1650 = vmatpush1.msra.mxu0 %v1614
        %1651 = vmatprep.subr.mxu0 0.0
        %1652 = vmatpush1.msra.mxu0 %v1615
        %1653 = vmatprep.subr.mxu0 0.0
        %1654 = vmatpush1.msra.mxu0 0.0
        %1655 = vmatprep.subr.mxu0 0.0
        %1656 = vmatpush1.msra.mxu0 0.0
        %1657 = vmatprep.subr.mxu0 0.0
        %1658 = vmatpush1.msra.mxu0 0.0
        %1659 = vmatprep.subr.mxu0 0.0
        %1660 = vmatpush1.msra.mxu0 0.0
        %1661 = vmatprep.subr.mxu0 0.0
        %1662 = vmatpush1.msra.mxu0 0.0
        %1663 = vmatprep.subr.mxu0 0.0
        %1664 = vmatpush1.msra.mxu0 0.0
        %1665 = vmatprep.subr.mxu0 0.0
        %1666 = vmatpush1.msra.mxu0 0.0
        %1667 = vmatprep.subr.mxu0 0.0
        %1668 = vmatpush1.msra.mxu0 0.0
        %1669 = vmatprep.subr.mxu0 0.0
        %1670 = vmatpush1.msra.mxu0 0.0
        %1671 = vmatprep.subr.mxu0 0.0
        %1672 = vmatpush1.msra.mxu0 0.0
        %1673 = vmatprep.subr.mxu0 0.0
        %1674 = vmatpush1.msra.mxu0 0.0
        %1675 = vmatprep.subr.mxu0 0.0
        %1676 = vmatpush1.msra.mxu0 0.0
        %1677 = vmatprep.subr.mxu0 0.0
        %1678 = vmatpush1.msra.mxu0 0.0
        %1679 = vmatprep.subr.mxu0 0.0
        %1680 = vmatpush1.msra.mxu0 0.0
        %1681 = vmatprep.subr.mxu0 0.0
        %1682 = vmatpush1.msra.mxu0 0.0
        %1683 = vmatprep.subr.mxu0 0.0
        %1684 = vmatpush1.msra.mxu0 0.0
        %1685 = vmatprep.subr.mxu0 0.0
        %1686 = vmatpush1.msra.mxu0 0.0
        %1687 = vmatprep.subr.mxu0 0.0
        %1688 = vmatpush1.msra.mxu0 0.0
        %1689 = vmatprep.subr.mxu0 0.0
        %1690 = vmatpush1.msra.mxu0 0.0
        %1691 = vmatprep.subr.mxu0 0.0
        %1692 = vmatpush1.msra.mxu0 0.0
        %1693 = vmatprep.subr.mxu0 0.0
        %1694 = vmatpush1.msra.mxu0 0.0
        %1695 = vmatprep.subr.mxu0 0.0
        %1696 = vmatpush1.msra.mxu0 0.0
        %1697 = vmatprep.subr.mxu0 0.0
        %1698 = vmatpush1.msra.mxu0 0.0
        %1699 = vmatprep.subr.mxu0 0.0
        %1700 = vmatpush1.msra.mxu0 0.0
        %1701 = vmatprep.subr.mxu0 0.0
        %1702 = vmatpush1.msra.mxu0 0.0
        %1703 = vmatprep.subr.mxu0 0.0
        %1704 = vmatpush1.msra.mxu0 0.0
        %1705 = vmatprep.subr.mxu0 0.0
        %1706 = vmatpush1.msra.mxu0 0.0
        %1707 = vmatprep.subr.mxu0 0.0
        %1708 = vmatpush1.msra.mxu0 0.0
        %1709 = vmatprep.subr.mxu0 0.0
        %1710 = vmatpush1.msra.mxu0 0.0
        %1711 = vmatprep.subr.mxu0 0.0
        %1712 = vmatpush1.msra.mxu0 0.0
        %1713 = vmatprep.mubr.f32.mxu0 0.0
        %1714 = vmatmul.mubr.f32.gmra.mrb[0].mxu0 %v1638
        %v1715 = vpop.f32.mrb[0].mxu0
        %v1716 = vadd.f32 %v1619, %v1715
        %v1717 = vpop.f32.mrb[0].mxu0
        %1718 = vmatprep.mubr.f32.mxu0 0.0
        %1719 = vmatmul.mubr.f32.gmra.mrb[0].mxu0 %v1641
        %v1720 = vpop.f32.mrb[0].mxu0
        %v1721 = vadd.f32 %v1624, %v1720
        %v1722 = vpop.f32.mrb[0].mxu0
        %1723 = vmatprep.mubr.f32.mxu0 0.0
        %1724 = vmatmul.mubr.f32.gmra.mrb[0].mxu0 %v1644
        %v1725 = vpop.f32.mrb[0].mxu0
        %v1726 = vadd.f32 %v1629, %v1725
        %v1727 = vpop.f32.mrb[0].mxu0
        %1728 = vmatprep.mubr.f32.mxu0 0.0
        %1729 = vmatmul.mubr.f32.gmra.mrb[0].mxu0 %v1647
        %v1730 = vpop.f32.mrb[0].mxu0
        %v1731 = vadd.f32 %v1634, %v1730
        %v1732 = vpop.f32.mrb[0].mxu0
        %1733 = vdwg.mxu0
        %v1734 = vxor.u32 %v1726, 2147483648
        %v1735 = vxor.u32 %v1731, 2147483648
        %v1736 = vmul.f32 %v1734, 1.442695
        %v1737 = vpow.pop %v1736
        %v1738 = vmul.f32 %v1735, 1.442695
        %v1739 = vpow.pop %v1738
        %v1740 = vadd.f32 %v1737, 1.0
        %v1741 = vadd.f32 %v1739, 1.0
        %v1742 = vrcp.pop %v1740
        %v1743 = vmul.f32 1.0, %v1742
        %v1744 = vrcp.pop %v1741
        %v1745 = vmul.f32 1.0, %v1744
        %v1746 = vmul.f32 %v1716, %v1743
        %v1747 = vmul.f32 %v1721, %v1745
        %v1749 = vsel %vm1636, %v1603, 0
        %v1752 = vsel %vm1636, %v1604, 0
        %v1755 = vsel %vm1636, %v1605, 0
        %v1758 = vsel %vm1636, %v1606, 0
        %v1761 = vsel %vm1636, %v1607, 0
        %v1764 = vsel %vm1636, %v1608, 0
        %v1767 = vsel %vm1636, %v1609, 0
        %v1770 = vsel %vm1636, %v1610, 0
        %1772 = vmatprep.subr.mxu0 0.0
        %1773 = vmatpush1.msra.mxu0 %v1746
        %1774 = vmatprep.subr.mxu0 0.0
        %1775 = vmatpush1.msra.mxu0 %v1747
        %1776 = vmatprep.subr.mxu0 0.0
        %1777 = vmatpush1.msra.mxu0 0.0
        %1778 = vmatprep.subr.mxu0 0.0
        %1779 = vmatpush1.msra.mxu0 0.0
        %1780 = vmatprep.subr.mxu0 0.0
        %1781 = vmatpush1.msra.mxu0 0.0
        %1782 = vmatprep.subr.mxu0 0.0
        %1783 = vmatpush1.msra.mxu0 0.0
        %1784 = vmatprep.subr.mxu0 0.0
        %1785 = vmatpush1.msra.mxu0 0.0
        %1786 = vmatprep.subr.mxu0 0.0
        %1787 = vmatpush1.msra.mxu0 0.0
        %1788 = vmatprep.subr.mxu0 0.0
        %1789 = vmatpush1.msra.mxu0 0.0
        %1790 = vmatprep.subr.mxu0 0.0
        %1791 = vmatpush1.msra.mxu0 0.0
        %1792 = vmatprep.subr.mxu0 0.0
        %1793 = vmatpush1.msra.mxu0 0.0
        %1794 = vmatprep.subr.mxu0 0.0
        %1795 = vmatpush1.msra.mxu0 0.0
        %1796 = vmatprep.subr.mxu0 0.0
        %1797 = vmatpush1.msra.mxu0 0.0
        %1798 = vmatprep.subr.mxu0 0.0
        %1799 = vmatpush1.msra.mxu0 0.0
        %1800 = vmatprep.subr.mxu0 0.0
        %1801 = vmatpush1.msra.mxu0 0.0
        %1802 = vmatprep.subr.mxu0 0.0
        %1803 = vmatpush1.msra.mxu0 0.0
        %1804 = vmatprep.subr.mxu0 0.0
        %1805 = vmatpush1.msra.mxu0 0.0
        %1806 = vmatprep.subr.mxu0 0.0
        %1807 = vmatpush1.msra.mxu0 0.0
        %1808 = vmatprep.subr.mxu0 0.0
        %1809 = vmatpush1.msra.mxu0 0.0
        %1810 = vmatprep.subr.mxu0 0.0
        %1811 = vmatpush1.msra.mxu0 0.0
        %1812 = vmatprep.subr.mxu0 0.0
        %1813 = vmatpush1.msra.mxu0 0.0
        %1814 = vmatprep.subr.mxu0 0.0
        %1815 = vmatpush1.msra.mxu0 0.0
        %1816 = vmatprep.subr.mxu0 0.0
        %1817 = vmatpush1.msra.mxu0 0.0
        %1818 = vmatprep.subr.mxu0 0.0
        %1819 = vmatpush1.msra.mxu0 0.0
        %1820 = vmatprep.subr.mxu0 0.0
        %1821 = vmatpush1.msra.mxu0 0.0
        %1822 = vmatprep.subr.mxu0 0.0
        %1823 = vmatpush1.msra.mxu0 0.0
        %1824 = vmatprep.subr.mxu0 0.0
        %1825 = vmatpush1.msra.mxu0 0.0
        %1826 = vmatprep.subr.mxu0 0.0
        %1827 = vmatpush1.msra.mxu0 0.0
        %1828 = vmatprep.subr.mxu0 0.0
        %1829 = vmatpush1.msra.mxu0 0.0
        %1830 = vmatprep.subr.mxu0 0.0
        %1831 = vmatpush1.msra.mxu0 0.0
        %1832 = vmatprep.subr.mxu0 0.0
        %1833 = vmatpush1.msra.mxu0 0.0
        %1834 = vmatprep.subr.mxu0 0.0
        %1835 = vmatpush1.msra.mxu0 0.0
        %1836 = vmatprep.mubr.f32.mxu0 0.0
        %1837 = vmatmul.mubr.f32.gmra.mrb[0].mxu0 %v1749
        %v1838 = vpop.f32.mrb[0].mxu0
        %v1839 = vadd.f32 0.0, %v1838
        %v1840 = vpop.f32.mrb[0].mxu0
        %1841 = vmatprep.mubr.f32.mxu0 0.0
        %1842 = vmatmul.mubr.f32.gmra.mrb[0].mxu0 %v1752
        %v1843 = vpop.f32.mrb[0].mxu0
        %v1844 = vadd.f32 0.0, %v1843
        %v1845 = vpop.f32.mrb[0].mxu0
        %1846 = vmatprep.mubr.f32.mxu0 0.0
        %1847 = vmatmul.mubr.f32.gmra.mrb[0].mxu0 %v1755
        %v1848 = vpop.f32.mrb[0].mxu0
        %v1849 = vadd.f32 0.0, %v1848
        %v1850 = vpop.f32.mrb[0].mxu0
        %1851 = vmatprep.mubr.f32.mxu0 0.0
        %1852 = vmatmul.mubr.f32.gmra.mrb[0].mxu0 %v1758
        %v1853 = vpop.f32.mrb[0].mxu0
        %v1854 = vadd.f32 0.0, %v1853
        %v1855 = vpop.f32.mrb[0].mxu0
        %1856 = vmatprep.mubr.f32.mxu0 0.0
        %1857 = vmatmul.mubr.f32.gmra.mrb[0].mxu0 %v1761
        %v1858 = vpop.f32.mrb[0].mxu0
        %v1859 = vadd.f32 0.0, %v1858
        %v1860 = vpop.f32.mrb[0].mxu0
        %1861 = vmatprep.mubr.f32.mxu0 0.0
        %1862 = vmatmul.mubr.f32.gmra.mrb[0].mxu0 %v1764
        %v1863 = vpop.f32.mrb[0].mxu0
        %v1864 = vadd.f32 0.0, %v1863
        %v1865 = vpop.f32.mrb[0].mxu0
        %1866 = vmatprep.mubr.f32.mxu0 0.0
        %1867 = vmatmul.mubr.f32.gmra.mrb[0].mxu0 %v1767
        %v1868 = vpop.f32.mrb[0].mxu0
        %v1869 = vadd.f32 0.0, %v1868
        %v1870 = vpop.f32.mrb[0].mxu0
        %1871 = vmatprep.mubr.f32.mxu0 0.0
        %1872 = vmatmul.mubr.f32.gmra.mrb[0].mxu0 %v1770
        %v1873 = vpop.f32.mrb[0].mxu0
        %v1874 = vadd.f32 0.0, %v1873
        %v1875 = vpop.f32.mrb[0].mxu0
        %1876 = vdwg.mxu0
        %1878 = vrot.lane.b32.xlu0 %v1844, 8
        %v1879 = vpop.permute.xlu0 %1878
        %1882 = vrot.lane.b32.xlu0 %v1849, 16
        %v1883 = vpop.permute.xlu0 %1882
        %1886 = vrot.lane.b32.xlu0 %v1854, 24
        %v1887 = vpop.permute.xlu0 %1886
        %1890 = vrot.lane.b32.xlu0 %v1859, 32
        %v1891 = vpop.permute.xlu0 %1890
        %1894 = vrot.lane.b32.xlu0 %v1864, 40
        %v1895 = vpop.permute.xlu0 %1894
        %1898 = vrot.lane.b32.xlu0 %v1869, 48
        %v1899 = vpop.permute.xlu0 %1898
        %1902 = vrot.lane.b32.xlu0 %v1874, 56
        %v1903 = vpop.permute.xlu0 %1902
        %v1905 = vsel %vm1511, %v1839, %v1879
        %v1906 = vsel %vm1636, %v1905, %v1883
        %vm1907 = vcmask 195584
        %v1908 = vsel %vm1907, %v1906, %v1887
        %v1909 = vsel %vm1072, %v1908, %v1891
        %vm1910 = vcmask 326656
        %v1911 = vsel %vm1910, %v1909, %v1895
        %vm1912 = vcmask 392192
        %v1913 = vsel %vm1912, %v1911, %v1899
        %vm1914 = vcmask 457728
        %v1915 = vsel %vm1914, %v1913, %v1903
        %v1916 = vld [vmem:[%s51] sm:$0xff]
        %v1917 = vld [vmem:[%s51 + $0x8] sm:$0xff]
        %v1918 = vld [vmem:[%s51 + $0x10] sm:$0xff]
        %v1919 = vld [vmem:[%s51 + $0x18] sm:$0xff]
        %v1920 = vld [vmem:[%s51 + $0x20] sm:$0xff]
        %v1921 = vld [vmem:[%s51 + $0x28] sm:$0xff]
        %v1922 = vld [vmem:[%s51 + $0x30] sm:$0xff]
        %v1923 = vld [vmem:[%s51 + $0x38] sm:$0xff]
        %1925 = vset.pattern.permute.xlu0 0
        %1926 = vperm.xlu0 %1925, %v1611
        %v1927 = vpop.permute.xlu0 %1926
        %vm1929 = vcmask 523264
        %v1931 = vsel %vm1929, %v1915, 0
        %1933 = vmatprep.subr.mxu0 0.0
        %1934 = vmatpush1.msra.mxu0 %v1916
        %1935 = vmatprep.subr.mxu0 0.0
        %1936 = vmatpush1.msra.mxu0 %v1917
        %1937 = vmatprep.subr.mxu0 0.0
        %1938 = vmatpush1.msra.mxu0 %v1918
        %1939 = vmatprep.subr.mxu0 0.0
        %1940 = vmatpush1.msra.mxu0 %v1919
        %1941 = vmatprep.subr.mxu0 0.0
        %1942 = vmatpush1.msra.mxu0 %v1920
        %1943 = vmatprep.subr.mxu0 0.0
        %1944 = vmatpush1.msra.mxu0 %v1921
        %1945 = vmatprep.subr.mxu0 0.0
        %1946 = vmatpush1.msra.mxu0 %v1922
        %1947 = vmatprep.subr.mxu0 0.0
        %1948 = vmatpush1.msra.mxu0 %v1923
        %1949 = vmatprep.subr.mxu0 0.0
        %1950 = vmatpush1.msra.mxu0 0.0
        %1951 = vmatprep.subr.mxu0 0.0
        %1952 = vmatpush1.msra.mxu0 0.0
        %1953 = vmatprep.subr.mxu0 0.0
        %1954 = vmatpush1.msra.mxu0 0.0
        %1955 = vmatprep.subr.mxu0 0.0
        %1956 = vmatpush1.msra.mxu0 0.0
        %1957 = vmatprep.subr.mxu0 0.0
        %1958 = vmatpush1.msra.mxu0 0.0
        %1959 = vmatprep.subr.mxu0 0.0
        %1960 = vmatpush1.msra.mxu0 0.0
        %1961 = vmatprep.subr.mxu0 0.0
        %1962 = vmatpush1.msra.mxu0 0.0
        %1963 = vmatprep.subr.mxu0 0.0
        %1964 = vmatpush1.msra.mxu0 0.0
        %1965 = vmatprep.subr.mxu0 0.0
        %1966 = vmatpush1.msra.mxu0 0.0
        %1967 = vmatprep.subr.mxu0 0.0
        %1968 = vmatpush1.msra.mxu0 0.0
        %1969 = vmatprep.subr.mxu0 0.0
        %1970 = vmatpush1.msra.mxu0 0.0
        %1971 = vmatprep.subr.mxu0 0.0
        %1972 = vmatpush1.msra.mxu0 0.0
        %1973 = vmatprep.subr.mxu0 0.0
        %1974 = vmatpush1.msra.mxu0 0.0
        %1975 = vmatprep.subr.mxu0 0.0
        %1976 = vmatpush1.msra.mxu0 0.0
        %1977 = vmatprep.subr.mxu0 0.0
        %1978 = vmatpush1.msra.mxu0 0.0
        %1979 = vmatprep.subr.mxu0 0.0
        %1980 = vmatpush1.msra.mxu0 0.0
        %1981 = vmatprep.subr.mxu0 0.0
        %1982 = vmatpush1.msra.mxu0 0.0
        %1983 = vmatprep.subr.mxu0 0.0
        %1984 = vmatpush1.msra.mxu0 0.0
        %1985 = vmatprep.subr.mxu0 0.0
        %1986 = vmatpush1.msra.mxu0 0.0
        %1987 = vmatprep.subr.mxu0 0.0
        %1988 = vmatpush1.msra.mxu0 0.0
        %1989 = vmatprep.subr.mxu0 0.0
        %1990 = vmatpush1.msra.mxu0 0.0
        %1991 = vmatprep.subr.mxu0 0.0
        %1992 = vmatpush1.msra.mxu0 0.0
        %1993 = vmatprep.subr.mxu0 0.0
        %1994 = vmatpush1.msra.mxu0 0.0
        %1995 = vmatprep.subr.mxu0 0.0
        %1996 = vmatpush1.msra.mxu0 0.0
        %1997 = vmatprep.mubr.f32.mxu0 0.0
        %1998 = vmatmul.mubr.f32.gmra.mrb[0].mxu0 %v1931
        %v1999 = vpop.f32.mrb[0].mxu0
        %v2000 = vadd.f32 %v1927, %v1999
        %v2001 = vpop.f32.mrb[0].mxu0
        %2002 = vdwg.mxu0
        %v2003 = vmax.f32 %v2000, 0.0
        %v2004 = vld [vmem:[%s29] sm:$0xff]
        %v2005 = vld [vmem:[%s29 + $0x8] sm:$0xff]
        %v2006 = vld [vmem:[%s31] sm:$0xff]
        %v2007 = vld [vmem:[%s31 + $0x8] sm:$0xff]
        %v2008 = vld [vmem:[%s33] sm:$0xff]
        %v2009 = vld [vmem:[%s33 + $0x8] sm:$0xff]
        %v2010 = vld [vmem:[%s33 + $0x10] sm:$0xff]
        %v2011 = vld [vmem:[%s33 + $0x18] sm:$0xff]
        %v2012 = vld [vmem:[%s35] sm:$0xf]
        %v2013 = vld [vmem:[%s1015] sm:$0xff]
        %v2014 = vadd.f32 %v2003, %v2013
        %2016 = vset.pattern.permute.xlu0 0
        %2017 = vperm.xlu0 %2016, %v2006
        %v2018 = vpop.permute.xlu0 %2017
        %2021 = vset.pattern.permute.xlu0 0
        %2022 = vperm.xlu0 %2021, %v2007
        %v2023 = vpop.permute.xlu0 %2022
        %v2026 = vsel %vm1511, %v2004, 0
        %v2029 = vsel %vm1511, %v2005, 0
        %2031 = vmatprep.subr.mxu0 0.0
        %2032 = vmatpush1.msra.mxu0 %v2014
        %2033 = vmatprep.subr.mxu0 0.0
        %2034 = vmatpush1.msra.mxu0 0.0
        %2035 = vmatprep.subr.mxu0 0.0
        %2036 = vmatpush1.msra.mxu0 0.0
        %2037 = vmatprep.subr.mxu0 0.0
        %2038 = vmatpush1.msra.mxu0 0.0
        %2039 = vmatprep.subr.mxu0 0.0
        %2040 = vmatpush1.msra.mxu0 0.0
        %2041 = vmatprep.subr.mxu0 0.0
        %2042 = vmatpush1.msra.mxu0 0.0
        %2043 = vmatprep.subr.mxu0 0.0
        %2044 = vmatpush1.msra.mxu0 0.0
        %2045 = vmatprep.subr.mxu0 0.0
        %2046 = vmatpush1.msra.mxu0 0.0
        %2047 = vmatprep.subr.mxu0 0.0
        %2048 = vmatpush1.msra.mxu0 0.0
        %2049 = vmatprep.subr.mxu0 0.0
        %2050 = vmatpush1.msra.mxu0 0.0
        %2051 = vmatprep.subr.mxu0 0.0
        %2052 = vmatpush1.msra.mxu0 0.0
        %2053 = vmatprep.subr.mxu0 0.0
        %2054 = vmatpush1.msra.mxu0 0.0
        %2055 = vmatprep.subr.mxu0 0.0
        %2056 = vmatpush1.msra.mxu0 0.0
        %2057 = vmatprep.subr.mxu0 0.0
        %2058 = vmatpush1.msra.mxu0 0.0
        %2059 = vmatprep.subr.mxu0 0.0
        %2060 = vmatpush1.msra.mxu0 0.0
        %2061 = vmatprep.subr.mxu0 0.0
        %2062 = vmatpush1.msra.mxu0 0.0
        %2063 = vmatprep.subr.mxu0 0.0
        %2064 = vmatpush1.msra.mxu0 0.0
        %2065 = vmatprep.subr.mxu0 0.0
        %2066 = vmatpush1.msra.mxu0 0.0
        %2067 = vmatprep.subr.mxu0 0.0
        %2068 = vmatpush1.msra.mxu0 0.0
        %2069 = vmatprep.subr.mxu0 0.0
        %2070 = vmatpush1.msra.mxu0 0.0
        %2071 = vmatprep.subr.mxu0 0.0
        %2072 = vmatpush1.msra.mxu0 0.0
        %2073 = vmatprep.subr.mxu0 0.0
        %2074 = vmatpush1.msra.mxu0 0.0
        %2075 = vmatprep.subr.mxu0 0.0
        %2076 = vmatpush1.msra.mxu0 0.0
        %2077 = vmatprep.subr.mxu0 0.0
        %2078 = vmatpush1.msra.mxu0 0.0
        %2079 = vmatprep.subr.mxu0 0.0
        %2080 = vmatpush1.msra.mxu0 0.0
        %2081 = vmatprep.subr.mxu0 0.0
        %2082 = vmatpush1.msra.mxu0 0.0
        %2083 = vmatprep.subr.mxu0 0.0
        %2084 = vmatpush1.msra.mxu0 0.0
        %2085 = vmatprep.subr.mxu0 0.0
        %2086 = vmatpush1.msra.mxu0 0.0
        %2087 = vmatprep.subr.mxu0 0.0
        %2088 = vmatpush1.msra.mxu0 0.0
        %2089 = vmatprep.subr.mxu0 0.0
        %2090 = vmatpush1.msra.mxu0 0.0
        %2091 = vmatprep.subr.mxu0 0.0
        %2092 = vmatpush1.msra.mxu0 0.0
        %2093 = vmatprep.subr.mxu0 0.0
        %2094 = vmatpush1.msra.mxu0 0.0
        %2095 = vmatprep.mubr.f32.mxu0 0.0
        %2096 = vmatmul.mubr.f32.gmra.mrb[0].mxu0 %v2026
        %v2097 = vpop.f32.mrb[0].mxu0
        %v2098 = vadd.f32 %v2018, %v2097
        %v2099 = vpop.f32.mrb[0].mxu0
        %2100 = vmatprep.mubr.f32.mxu0 0.0
        %2101 = vmatmul.mubr.f32.gmra.mrb[0].mxu0 %v2029
        %v2102 = vpop.f32.mrb[0].mxu0
        %v2103 = vadd.f32 %v2023, %v2102
        %v2104 = vpop.f32.mrb[0].mxu0
        %2105 = vdwg.mxu0
        %v2106 = vxor.u32 %v2103, 2147483648
        %v2107 = vmul.f32 %v2106, 1.442695
        %v2108 = vpow.pop %v2107
        %v2109 = vadd.f32 %v2108, 1.0
        %v2110 = vrcp.pop %v2109
        %v2111 = vmul.f32 1.0, %v2110
        %v2112 = vmul.f32 %v2098, %v2111
        %v2114 = vsel %vm1511, %v2008, 0
        %v2117 = vsel %vm1511, %v2009, 0
        %v2120 = vsel %vm1511, %v2010, 0
        %v2123 = vsel %vm1511, %v2011, 0
        %2125 = vmatprep.subr.mxu0 0.0
        %2126 = vmatpush1.msra.mxu0 %v2112
        %2127 = vmatprep.subr.mxu0 0.0
        %2128 = vmatpush1.msra.mxu0 0.0
        %2129 = vmatprep.subr.mxu0 0.0
        %2130 = vmatpush1.msra.mxu0 0.0
        %2131 = vmatprep.subr.mxu0 0.0
        %2132 = vmatpush1.msra.mxu0 0.0
        %2133 = vmatprep.subr.mxu0 0.0
        %2134 = vmatpush1.msra.mxu0 0.0
        %2135 = vmatprep.subr.mxu0 0.0
        %2136 = vmatpush1.msra.mxu0 0.0
        %2137 = vmatprep.subr.mxu0 0.0
        %2138 = vmatpush1.msra.mxu0 0.0
        %2139 = vmatprep.subr.mxu0 0.0
        %2140 = vmatpush1.msra.mxu0 0.0
        %2141 = vmatprep.subr.mxu0 0.0
        %2142 = vmatpush1.msra.mxu0 0.0
        %2143 = vmatprep.subr.mxu0 0.0
        %2144 = vmatpush1.msra.mxu0 0.0
        %2145 = vmatprep.subr.mxu0 0.0
        %2146 = vmatpush1.msra.mxu0 0.0
        %2147 = vmatprep.subr.mxu0 0.0
        %2148 = vmatpush1.msra.mxu0 0.0
        %2149 = vmatprep.subr.mxu0 0.0
        %2150 = vmatpush1.msra.mxu0 0.0
        %2151 = vmatprep.subr.mxu0 0.0
        %2152 = vmatpush1.msra.mxu0 0.0
        %2153 = vmatprep.subr.mxu0 0.0
        %2154 = vmatpush1.msra.mxu0 0.0
        %2155 = vmatprep.subr.mxu0 0.0
        %2156 = vmatpush1.msra.mxu0 0.0
        %2157 = vmatprep.subr.mxu0 0.0
        %2158 = vmatpush1.msra.mxu0 0.0
        %2159 = vmatprep.subr.mxu0 0.0
        %2160 = vmatpush1.msra.mxu0 0.0
        %2161 = vmatprep.subr.mxu0 0.0
        %2162 = vmatpush1.msra.mxu0 0.0
        %2163 = vmatprep.subr.mxu0 0.0
        %2164 = vmatpush1.msra.mxu0 0.0
        %2165 = vmatprep.subr.mxu0 0.0
        %2166 = vmatpush1.msra.mxu0 0.0
        %2167 = vmatprep.subr.mxu0 0.0
        %2168 = vmatpush1.msra.mxu0 0.0
        %2169 = vmatprep.subr.mxu0 0.0
        %2170 = vmatpush1.msra.mxu0 0.0
        %2171 = vmatprep.subr.mxu0 0.0
        %2172 = vmatpush1.msra.mxu0 0.0
        %2173 = vmatprep.subr.mxu0 0.0
        %2174 = vmatpush1.msra.mxu0 0.0
        %2175 = vmatprep.subr.mxu0 0.0
        %2176 = vmatpush1.msra.mxu0 0.0
        %2177 = vmatprep.subr.mxu0 0.0
        %2178 = vmatpush1.msra.mxu0 0.0
        %2179 = vmatprep.subr.mxu0 0.0
        %2180 = vmatpush1.msra.mxu0 0.0
        %2181 = vmatprep.subr.mxu0 0.0
        %2182 = vmatpush1.msra.mxu0 0.0
        %2183 = vmatprep.subr.mxu0 0.0
        %2184 = vmatpush1.msra.mxu0 0.0
        %2185 = vmatprep.subr.mxu0 0.0
        %2186 = vmatpush1.msra.mxu0 0.0
        %2187 = vmatprep.subr.mxu0 0.0
        %2188 = vmatpush1.msra.mxu0 0.0
        %2189 = vmatprep.mubr.f32.mxu0 0.0
        %2190 = vmatmul.mubr.f32.gmra.mrb[0].mxu0 %v2114
        %v2191 = vpop.f32.mrb[0].mxu0
        %v2192 = vadd.f32 0.0, %v2191
        %v2193 = vpop.f32.mrb[0].mxu0
        %2194 = vmatprep.mubr.f32.mxu0 0.0
        %2195 = vmatmul.mubr.f32.gmra.mrb[0].mxu0 %v2117
        %v2196 = vpop.f32.mrb[0].mxu0
        %v2197 = vadd.f32 0.0, %v2196
        %v2198 = vpop.f32.mrb[0].mxu0
        %2199 = vmatprep.mubr.f32.mxu0 0.0
        %2200 = vmatmul.mubr.f32.gmra.mrb[0].mxu0 %v2120
        %v2201 = vpop.f32.mrb[0].mxu0
        %v2202 = vadd.f32 0.0, %v2201
        %v2203 = vpop.f32.mrb[0].mxu0
        %2204 = vmatprep.mubr.f32.mxu0 0.0
        %2205 = vmatmul.mubr.f32.gmra.mrb[0].mxu0 %v2123
        %v2206 = vpop.f32.mrb[0].mxu0
        %v2207 = vadd.f32 0.0, %v2206
        %v2208 = vpop.f32.mrb[0].mxu0
        %2209 = vdwg.mxu0
        %v2211 = vrot.slane %v2192, 4
        %2212 = vrot.lane.b32.xlu0 %v2211, 36
        %v2213 = vpop.permute.xlu0 %2212
        %2216 = vrot.lane.b32.xlu0 %v2197, 72
        %v2217 = vpop.permute.xlu0 %2216
        %v2219 = vrot.slane %v2197, 4
        %2220 = vrot.lane.b32.xlu0 %v2219, 108
        %v2221 = vpop.permute.xlu0 %2220
        %2224 = vrot.lane.b32.xlu0 %v2202, 16
        %v2225 = vpop.permute.xlu0 %2224
        %v2227 = vrot.slane %v2202, 4
        %2228 = vrot.lane.b32.xlu0 %v2227, 52
        %v2229 = vpop.permute.xlu0 %2228
        %2232 = vrot.lane.b32.xlu0 %v2207, 88
        %v2233 = vpop.permute.xlu0 %2232
        %v2235 = vrot.slane %v2207, 4
        %2236 = vrot.lane.b32.xlu0 %v2235, 124
        %v2237 = vpop.permute.xlu0 %2236
        %vm2239 = vcmask 293888
        %v2240 = vsel %vm2239, %v2192, %v2213
        %vm2241 = vcmask 588800
        %v2242 = vsel %vm2241, %v2240, %v2217
        %vm2243 = vcmask 883712
        %v2244 = vsel %vm2243, %v2242, %v2221
        %v2245 = vsel %vm1636, %v2221, %v2225
        %vm2246 = vcmask 424960
        %v2247 = vsel %vm2246, %v2245, %v2229
        %vm2248 = vcmask 719872
        %v2249 = vsel %vm2248, %v2247, %v2233
        %vm2250 = vcmask 1014784
        %v2251 = vsel %vm2250, %v2249, %v2237
        %v2252 = vld [vmem:[%s53] sm:$0xff]
        %v2253 = vld [vmem:[%s53 + $0x8] sm:$0xff]
        %v2254 = vld [vmem:[%s53 + $0x10] sm:$0xff]
        %v2255 = vld [vmem:[%s53 + $0x18] sm:$0xff]
        %v2256 = vld [vmem:[%s53 + $0x20] sm:$0xff]
        %v2257 = vld [vmem:[%s53 + $0x28] sm:$0xff]
        %v2258 = vld [vmem:[%s53 + $0x30] sm:$0xff]
        %v2259 = vld [vmem:[%s53 + $0x38] sm:$0xff]
        %v2260 = vld [vmem:[%s53 + $0x40] sm:$0xff]
        %v2261 = vld [vmem:[%s53 + $0x48] sm:$0xff]
        %v2262 = vld [vmem:[%s53 + $0x50] sm:$0xff]
        %v2263 = vld [vmem:[%s53 + $0x58] sm:$0xff]
        %v2264 = vld [vmem:[%s53 + $0x60] sm:$0xff]
        %v2265 = vld [vmem:[%s53 + $0x68] sm:$0xff]
        %v2266 = vld [vmem:[%s53 + $0x70] sm:$0xff]
        %v2267 = vld [vmem:[%s53 + $0x78] sm:$0xff]
        %v2268 = vld [vmem:[%s53 + $0x80] sm:$0xff]
        %v2269 = vld [vmem:[%s53 + $0x88] sm:$0xff]
        %v2270 = vld [vmem:[%s53 + $0x90] sm:$0xff]
        %v2271 = vld [vmem:[%s53 + $0x98] sm:$0xff]
        %v2272 = vld [vmem:[%s53 + $0xa0] sm:$0xff]
        %v2273 = vld [vmem:[%s53 + $0xa8] sm:$0xff]
        %v2274 = vld [vmem:[%s53 + $0xb0] sm:$0xff]
        %v2275 = vld [vmem:[%s53 + $0xb8] sm:$0xff]
        %v2276 = vld [vmem:[%s53 + $0xc0] sm:$0xff]
        %v2277 = vld [vmem:[%s53 + $0xc8] sm:$0xff]
        %v2278 = vld [vmem:[%s53 + $0xd0] sm:$0xff]
        %v2279 = vld [vmem:[%s53 + $0xd8] sm:$0xff]
        %v2280 = vld [vmem:[%s53 + $0xe0] sm:$0xff]
        %v2281 = vld [vmem:[%s53 + $0xe8] sm:$0xff]
        %v2282 = vld [vmem:[%s53 + $0xf0] sm:$0xff]
        %v2283 = vld [vmem:[%s53 + $0xf8] sm:$0xff]
        %v2284 = vld [vmem:[%s53 + $0x100] sm:$0xff]
        %v2285 = vld [vmem:[%s53 + $0x108] sm:$0xff]
        %v2286 = vld [vmem:[%s53 + $0x110] sm:$0xff]
        %v2287 = vld [vmem:[%s53 + $0x118] sm:$0xff]
        %v2288 = vld [vmem:[%s53 + $0x120] sm:$0xff]
        %v2289 = vld [vmem:[%s53 + $0x128] sm:$0xff]
        %v2290 = vld [vmem:[%s53 + $0x130] sm:$0xff]
        %v2291 = vld [vmem:[%s53 + $0x138] sm:$0xff]
        %v2292 = vld [vmem:[%s53 + $0x140] sm:$0xff]
        %v2293 = vld [vmem:[%s53 + $0x148] sm:$0xff]
        %v2294 = vld [vmem:[%s53 + $0x150] sm:$0xff]
        %v2295 = vld [vmem:[%s53 + $0x158] sm:$0xff]
        %v2296 = vld [vmem:[%s53 + $0x160] sm:$0xff]
        %v2297 = vld [vmem:[%s53 + $0x168] sm:$0xff]
        %v2298 = vld [vmem:[%s53 + $0x170] sm:$0xff]
        %v2299 = vld [vmem:[%s53 + $0x178] sm:$0xff]
        %v2300 = vld [vmem:[%s53 + $0x180] sm:$0xff]
        %v2301 = vld [vmem:[%s53 + $0x188] sm:$0xff]
        %v2302 = vld [vmem:[%s53 + $0x190] sm:$0xff]
        %v2303 = vld [vmem:[%s53 + $0x198] sm:$0xff]
        %v2304 = vld [vmem:[%s53 + $0x1a0] sm:$0xff]
        %v2305 = vld [vmem:[%s53 + $0x1a8] sm:$0xff]
        %v2306 = vld [vmem:[%s53 + $0x1b0] sm:$0xff]
        %v2307 = vld [vmem:[%s53 + $0x1b8] sm:$0xff]
        %v2308 = vld [vmem:[%s53 + $0x1c0] sm:$0xff]
        %v2309 = vld [vmem:[%s53 + $0x1c8] sm:$0xff]
        %v2310 = vld [vmem:[%s53 + $0x1d0] sm:$0xff]
        %v2311 = vld [vmem:[%s53 + $0x1d8] sm:$0xff]
        %v2312 = vld [vmem:[%s53 + $0x1e0] sm:$0xff]
        %v2313 = vld [vmem:[%s53 + $0x1e8] sm:$0xff]
        %v2314 = vld [vmem:[%s53 + $0x1f0] sm:$0xff]
        %v2315 = vld [vmem:[%s53 + $0x1f8] sm:$0xff]
        %v2316 = vld [vmem:[%s53 + $0x200] sm:$0xff]
        %v2317 = vld [vmem:[%s53 + $0x208] sm:$0xff]
        %v2318 = vld [vmem:[%s53 + $0x210] sm:$0xff]
        %v2319 = vld [vmem:[%s53 + $0x218] sm:$0xff]
        %v2320 = vld [vmem:[%s53 + $0x220] sm:$0xff]
        %v2321 = vld [vmem:[%s53 + $0x228] sm:$0xff]
        %v2322 = vld [vmem:[%s53 + $0x230] sm:$0xff]
        %v2323 = vld [vmem:[%s53 + $0x238] sm:$0xff]
        %2325 = vset.pattern.permute.xlu0 0
        %2326 = vperm.xlu0 %2325, %v2012
        %v2327 = vpop.permute.xlu0 %2326
        %v2329 = vsel %vm1072, %v2237, 0
        %2331 = vmatprep.subr.mxu0 %v2253
        %2332 = vmatpush1.msra.mxu0 %v2252
        %2333 = vmatprep.subr.mxu0 %v2255
        %2334 = vmatpush1.msra.mxu0 %v2254
        %2335 = vmatprep.subr.mxu0 %v2257
        %2336 = vmatpush1.msra.mxu0 %v2256
        %2337 = vmatprep.subr.mxu0 %v2259
        %2338 = vmatpush1.msra.mxu0 %v2258
        %2339 = vmatprep.subr.mxu0 %v2261
        %2340 = vmatpush1.msra.mxu0 %v2260
        %2341 = vmatprep.subr.mxu0 %v2263
        %2342 = vmatpush1.msra.mxu0 %v2262
        %2343 = vmatprep.subr.mxu0 %v2265
        %2344 = vmatpush1.msra.mxu0 %v2264
        %2345 = vmatprep.subr.mxu0 %v2267
        %2346 = vmatpush1.msra.mxu0 %v2266
        %2347 = vmatprep.subr.mxu0 %v2269
        %2348 = vmatpush1.msra.mxu0 %v2268
        %2349 = vmatprep.subr.mxu0 %v2271
        %2350 = vmatpush1.msra.mxu0 %v2270
        %2351 = vmatprep.subr.mxu0 %v2273
        %2352 = vmatpush1.msra.mxu0 %v2272
        %2353 = vmatprep.subr.mxu0 %v2275
        %2354 = vmatpush1.msra.mxu0 %v2274
        %2355 = vmatprep.subr.mxu0 %v2277
        %2356 = vmatpush1.msra.mxu0 %v2276
        %2357 = vmatprep.subr.mxu0 %v2279
        %2358 = vmatpush1.msra.mxu0 %v2278
        %2359 = vmatprep.subr.mxu0 %v2281
        %2360 = vmatpush1.msra.mxu0 %v2280
        %2361 = vmatprep.subr.mxu0 %v2283
        %2362 = vmatpush1.msra.mxu0 %v2282
        %2363 = vmatprep.subr.mxu0 %v2285
        %2364 = vmatpush1.msra.mxu0 %v2284
        %2365 = vmatprep.subr.mxu0 %v2287
        %2366 = vmatpush1.msra.mxu0 %v2286
        %2367 = vmatprep.subr.mxu0 %v2289
        %2368 = vmatpush1.msra.mxu0 %v2288
        %2369 = vmatprep.subr.mxu0 %v2291
        %2370 = vmatpush1.msra.mxu0 %v2290
        %2371 = vmatprep.subr.mxu0 %v2293
        %2372 = vmatpush1.msra.mxu0 %v2292
        %2373 = vmatprep.subr.mxu0 %v2295
        %2374 = vmatpush1.msra.mxu0 %v2294
        %2375 = vmatprep.subr.mxu0 %v2297
        %2376 = vmatpush1.msra.mxu0 %v2296
        %2377 = vmatprep.subr.mxu0 %v2299
        %2378 = vmatpush1.msra.mxu0 %v2298
        %2379 = vmatprep.subr.mxu0 %v2301
        %2380 = vmatpush1.msra.mxu0 %v2300
        %2381 = vmatprep.subr.mxu0 %v2303
        %2382 = vmatpush1.msra.mxu0 %v2302
        %2383 = vmatprep.subr.mxu0 %v2305
        %2384 = vmatpush1.msra.mxu0 %v2304
        %2385 = vmatprep.subr.mxu0 %v2307
        %2386 = vmatpush1.msra.mxu0 %v2306
        %2387 = vmatprep.subr.mxu0 %v2309
        %2388 = vmatpush1.msra.mxu0 %v2308
        %2389 = vmatprep.subr.mxu0 %v2311
        %2390 = vmatpush1.msra.mxu0 %v2310
        %2391 = vmatprep.subr.mxu0 %v2313
        %2392 = vmatpush1.msra.mxu0 %v2312
        %2393 = vmatprep.subr.mxu0 %v2315
        %2394 = vmatpush1.msra.mxu0 %v2314
        %2395 = vmatprep.mubr.f32.mxu0 %v2251
        %2396 = vmatmul.mubr.f32.gmra.mrb[0].mxu0 %v2244
        %v2397 = vpop.f32.mrb[0].mxu0
        %v2398 = vadd.f32 %v2327, %v2397
        %v2399 = vpop.f32.mrb[0].mxu0
        %v2400 = vadd.f32 %v2327, %v2399
        %2401 = vdwg.mxu0
        %2402 = vmatprep.subr.mxu0 %v2317
        %2403 = vmatpush1.msra.mxu0 %v2316
        %2404 = vmatprep.subr.mxu0 %v2319
        %2405 = vmatpush1.msra.mxu0 %v2318
        %2406 = vmatprep.subr.mxu0 %v2321
        %2407 = vmatpush1.msra.mxu0 %v2320
        %2408 = vmatprep.subr.mxu0 %v2323
        %2409 = vmatpush1.msra.mxu0 %v2322
        %2410 = vmatprep.subr.mxu0 0.0
        %2411 = vmatpush1.msra.mxu0 0.0
        %2412 = vmatprep.subr.mxu0 0.0
        %2413 = vmatpush1.msra.mxu0 0.0
        %2414 = vmatprep.subr.mxu0 0.0
        %2415 = vmatpush1.msra.mxu0 0.0
        %2416 = vmatprep.subr.mxu0 0.0
        %2417 = vmatpush1.msra.mxu0 0.0
        %2418 = vmatprep.subr.mxu0 0.0
        %2419 = vmatpush1.msra.mxu0 0.0
        %2420 = vmatprep.subr.mxu0 0.0
        %2421 = vmatpush1.msra.mxu0 0.0
        %2422 = vmatprep.subr.mxu0 0.0
        %2423 = vmatpush1.msra.mxu0 0.0
        %2424 = vmatprep.subr.mxu0 0.0
        %2425 = vmatpush1.msra.mxu0 0.0
        %2426 = vmatprep.subr.mxu0 0.0
        %2427 = vmatpush1.msra.mxu0 0.0
        %2428 = vmatprep.subr.mxu0 0.0
        %2429 = vmatpush1.msra.mxu0 0.0
        %2430 = vmatprep.subr.mxu0 0.0
        %2431 = vmatpush1.msra.mxu0 0.0
        %2432 = vmatprep.subr.mxu0 0.0
        %2433 = vmatpush1.msra.mxu0 0.0
        %2434 = vmatprep.subr.mxu0 0.0
        %2435 = vmatpush1.msra.mxu0 0.0
        %2436 = vmatprep.subr.mxu0 0.0
        %2437 = vmatpush1.msra.mxu0 0.0
        %2438 = vmatprep.subr.mxu0 0.0
        %2439 = vmatpush1.msra.mxu0 0.0
        %2440 = vmatprep.subr.mxu0 0.0
        %2441 = vmatpush1.msra.mxu0 0.0
        %2442 = vmatprep.subr.mxu0 0.0
        %2443 = vmatpush1.msra.mxu0 0.0
        %2444 = vmatprep.subr.mxu0 0.0
        %2445 = vmatpush1.msra.mxu0 0.0
        %2446 = vmatprep.subr.mxu0 0.0
        %2447 = vmatpush1.msra.mxu0 0.0
        %2448 = vmatprep.subr.mxu0 0.0
        %2449 = vmatpush1.msra.mxu0 0.0
        %2450 = vmatprep.subr.mxu0 0.0
        %2451 = vmatpush1.msra.mxu0 0.0
        %2452 = vmatprep.subr.mxu0 0.0
        %2453 = vmatpush1.msra.mxu0 0.0
        %2454 = vmatprep.subr.mxu0 0.0
        %2455 = vmatpush1.msra.mxu0 0.0
        %2456 = vmatprep.subr.mxu0 0.0
        %2457 = vmatpush1.msra.mxu0 0.0
        %2458 = vmatprep.subr.mxu0 0.0
        %2459 = vmatpush1.msra.mxu0 0.0
        %2460 = vmatprep.subr.mxu0 0.0
        %2461 = vmatpush1.msra.mxu0 0.0
        %2462 = vmatprep.subr.mxu0 0.0
        %2463 = vmatpush1.msra.mxu0 0.0
        %2464 = vmatprep.subr.mxu0 0.0
        %2465 = vmatpush1.msra.mxu0 0.0
        %2466 = vmatprep.mubr.f32.mxu0 0.0
        %2467 = vmatmul.mubr.f32.gmra.mrb[0].mxu0 %v2329
        %v2468 = vpop.f32.mrb[0].mxu0
        %v2469 = vadd.f32 %v2398, %v2468
        %v2470 = vpop.f32.mrb[0].mxu0
        %v2471 = vadd.f32 %v2400, %v2470
        %2472 = vdwg.mxu0
        %v2473 = vmax.f32 %v2469, 0.0
        %v2474 = vmax.f32 %v2471, 0.0
        %v2475 = vld [vmem:[%s37] sm:$0xff]
        %v2476 = vld [vmem:[%s39] sm:$0xff]
        %v2477 = vld [vmem:[%s41] sm:$0xff]
        %v2478 = vld [vmem:[%s41 + $0x8] sm:$0xff]
        %v2479 = vld [vmem:[%s43] sm:$0x3]
        %v2480 = vld [vmem:[%s1020] sm:$0xff]
        %v2482 = vcombine.high %v2480, %v2480
        %v2484 = vadd.f32 %v2473, %v2480
        %v2485 = vadd.f32 %v2474, %v2482
        %2487 = vset.pattern.permute.xlu0 0
        %2488 = vperm.xlu0 %2487, %v2476
        %v2489 = vpop.permute.xlu0 %2488
        %v2492 = vsel %vm1488, %v2475, 0
        %vm2494 = vcmask 1043456
        %v2496 = vsel %vm2494, %v2484, 0
        %v2499 = vsel %vm2494, %v2485, 0
        %2501 = vmatprep.subr.mxu0 %v2499
        %2502 = vmatpush1.msra.mxu0 %v2496
        %2503 = vmatprep.subr.mxu0 0.0
        %2504 = vmatpush1.msra.mxu0 0.0
        %2505 = vmatprep.subr.mxu0 0.0
        %2506 = vmatpush1.msra.mxu0 0.0
        %2507 = vmatprep.subr.mxu0 0.0
        %2508 = vmatpush1.msra.mxu0 0.0
        %2509 = vmatprep.subr.mxu0 0.0
        %2510 = vmatpush1.msra.mxu0 0.0
        %2511 = vmatprep.subr.mxu0 0.0
        %2512 = vmatpush1.msra.mxu0 0.0
        %2513 = vmatprep.subr.mxu0 0.0
        %2514 = vmatpush1.msra.mxu0 0.0
        %2515 = vmatprep.subr.mxu0 0.0
        %2516 = vmatpush1.msra.mxu0 0.0
        %2517 = vmatprep.subr.mxu0 0.0
        %2518 = vmatpush1.msra.mxu0 0.0
        %2519 = vmatprep.subr.mxu0 0.0
        %2520 = vmatpush1.msra.mxu0 0.0
        %2521 = vmatprep.subr.mxu0 0.0
        %2522 = vmatpush1.msra.mxu0 0.0
        %2523 = vmatprep.subr.mxu0 0.0
        %2524 = vmatpush1.msra.mxu0 0.0
        %2525 = vmatprep.subr.mxu0 0.0
        %2526 = vmatpush1.msra.mxu0 0.0
        %2527 = vmatprep.subr.mxu0 0.0
        %2528 = vmatpush1.msra.mxu0 0.0
        %2529 = vmatprep.subr.mxu0 0.0
        %2530 = vmatpush1.msra.mxu0 0.0
        %2531 = vmatprep.subr.mxu0 0.0
        %2532 = vmatpush1.msra.mxu0 0.0
        %2533 = vmatprep.subr.mxu0 0.0
        %2534 = vmatpush1.msra.mxu0 0.0
        %2535 = vmatprep.subr.mxu0 0.0
        %2536 = vmatpush1.msra.mxu0 0.0
        %2537 = vmatprep.subr.mxu0 0.0
        %2538 = vmatpush1.msra.mxu0 0.0
        %2539 = vmatprep.subr.mxu0 0.0
        %2540 = vmatpush1.msra.mxu0 0.0
        %2541 = vmatprep.subr.mxu0 0.0
        %2542 = vmatpush1.msra.mxu0 0.0
        %2543 = vmatprep.subr.mxu0 0.0
        %2544 = vmatpush1.msra.mxu0 0.0
        %2545 = vmatprep.subr.mxu0 0.0
        %2546 = vmatpush1.msra.mxu0 0.0
        %2547 = vmatprep.subr.mxu0 0.0
        %2548 = vmatpush1.msra.mxu0 0.0
        %2549 = vmatprep.subr.mxu0 0.0
        %2550 = vmatpush1.msra.mxu0 0.0
        %2551 = vmatprep.subr.mxu0 0.0
        %2552 = vmatpush1.msra.mxu0 0.0
        %2553 = vmatprep.subr.mxu0 0.0
        %2554 = vmatpush1.msra.mxu0 0.0
        %2555 = vmatprep.subr.mxu0 0.0
        %2556 = vmatpush1.msra.mxu0 0.0
        %2557 = vmatprep.subr.mxu0 0.0
        %2558 = vmatpush1.msra.mxu0 0.0
        %2559 = vmatprep.subr.mxu0 0.0
        %2560 = vmatpush1.msra.mxu0 0.0
        %2561 = vmatprep.subr.mxu0 0.0
        %2562 = vmatpush1.msra.mxu0 0.0
        %2563 = vmatprep.subr.mxu0 0.0
        %2564 = vmatpush1.msra.mxu0 0.0
        %2565 = vmatprep.mubr.f32.mxu0 0.0
        %2566 = vmatmul.mubr.f32.gmra.mrb[0].mxu0 %v2492
        %v2567 = vpop.f32.mrb[0].mxu0
        %v2568 = vadd.f32 %v2489, %v2567
        %v2569 = vpop.f32.mrb[0].mxu0
        %v2570 = vadd.f32 %v2489, %v2569
        %2571 = vdwg.mxu0
        %v2572 = vxor.u32 %v2568, 2147483648
        %v2573 = vxor.u32 %v2570, 2147483648
        %v2574 = vmul.f32 %v2572, 1.442695
        %v2575 = vpow.pop %v2574
        %v2576 = vmul.f32 %v2573, 1.442695
        %v2577 = vpow.pop %v2576
        %v2578 = vadd.f32 %v2575, 1.0
        %v2579 = vadd.f32 %v2577, 1.0
        %v2580 = vrcp.pop %v2578
        %v2581 = vmul.f32 1.0, %v2580
        %v2582 = vrcp.pop %v2579
        %v2583 = vmul.f32 1.0, %v2582
        %v2586 = vrot.slane %v2581, 4
        %v2587 = vrot.slane %v2583, 4
        %v2590 = vmul.f32 %v2568, %v2586
        %v2591 = vmul.f32 %v2570, %v2587
        %v2593 = vsel %vm1488, %v2477, 0
        %v2596 = vsel %vm1488, %v2478, 0
        %v2599 = vsel %vm2494, %v2590, 0
        %v2602 = vsel %vm2494, %v2591, 0
        %2604 = vmatprep.subr.mxu0 %v2602
        %2605 = vmatpush1.msra.mxu0 %v2599
        %2606 = vmatprep.subr.mxu0 0.0
        %2607 = vmatpush1.msra.mxu0 0.0
        %2608 = vmatprep.subr.mxu0 0.0
        %2609 = vmatpush1.msra.mxu0 0.0
        %2610 = vmatprep.subr.mxu0 0.0
        %2611 = vmatpush1.msra.mxu0 0.0
        %2612 = vmatprep.subr.mxu0 0.0
        %2613 = vmatpush1.msra.mxu0 0.0
        %2614 = vmatprep.subr.mxu0 0.0
        %2615 = vmatpush1.msra.mxu0 0.0
        %2616 = vmatprep.subr.mxu0 0.0
        %2617 = vmatpush1.msra.mxu0 0.0
        %2618 = vmatprep.subr.mxu0 0.0
        %2619 = vmatpush1.msra.mxu0 0.0
        %2620 = vmatprep.subr.mxu0 0.0
        %2621 = vmatpush1.msra.mxu0 0.0
        %2622 = vmatprep.subr.mxu0 0.0
        %2623 = vmatpush1.msra.mxu0 0.0
        %2624 = vmatprep.subr.mxu0 0.0
        %2625 = vmatpush1.msra.mxu0 0.0
        %2626 = vmatprep.subr.mxu0 0.0
        %2627 = vmatpush1.msra.mxu0 0.0
        %2628 = vmatprep.subr.mxu0 0.0
        %2629 = vmatpush1.msra.mxu0 0.0
        %2630 = vmatprep.subr.mxu0 0.0
        %2631 = vmatpush1.msra.mxu0 0.0
        %2632 = vmatprep.subr.mxu0 0.0
        %2633 = vmatpush1.msra.mxu0 0.0
        %2634 = vmatprep.subr.mxu0 0.0
        %2635 = vmatpush1.msra.mxu0 0.0
        %2636 = vmatprep.subr.mxu0 0.0
        %2637 = vmatpush1.msra.mxu0 0.0
        %2638 = vmatprep.subr.mxu0 0.0
        %2639 = vmatpush1.msra.mxu0 0.0
        %2640 = vmatprep.subr.mxu0 0.0
        %2641 = vmatpush1.msra.mxu0 0.0
        %2642 = vmatprep.subr.mxu0 0.0
        %2643 = vmatpush1.msra.mxu0 0.0
        %2644 = vmatprep.subr.mxu0 0.0
        %2645 = vmatpush1.msra.mxu0 0.0
        %2646 = vmatprep.subr.mxu0 0.0
        %2647 = vmatpush1.msra.mxu0 0.0
        %2648 = vmatprep.subr.mxu0 0.0
        %2649 = vmatpush1.msra.mxu0 0.0
        %2650 = vmatprep.subr.mxu0 0.0
        %2651 = vmatpush1.msra.mxu0 0.0
        %2652 = vmatprep.subr.mxu0 0.0
        %2653 = vmatpush1.msra.mxu0 0.0
        %2654 = vmatprep.subr.mxu0 0.0
        %2655 = vmatpush1.msra.mxu0 0.0
        %2656 = vmatprep.subr.mxu0 0.0
        %2657 = vmatpush1.msra.mxu0 0.0
        %2658 = vmatprep.subr.mxu0 0.0
        %2659 = vmatpush1.msra.mxu0 0.0
        %2660 = vmatprep.subr.mxu0 0.0
        %2661 = vmatpush1.msra.mxu0 0.0
        %2662 = vmatprep.subr.mxu0 0.0
        %2663 = vmatpush1.msra.mxu0 0.0
        %2664 = vmatprep.subr.mxu0 0.0
        %2665 = vmatpush1.msra.mxu0 0.0
        %2666 = vmatprep.subr.mxu0 0.0
        %2667 = vmatpush1.msra.mxu0 0.0
        %2668 = vmatprep.mubr.f32.mxu0 0.0
        %2669 = vmatmul.mubr.f32.gmra.mrb[0].mxu0 %v2593
        %v2670 = vpop.f32.mrb[0].mxu0
        %v2671 = vadd.f32 0.0, %v2670
        %v2672 = vpop.f32.mrb[0].mxu0
        %v2673 = vadd.f32 0.0, %v2672
        %2674 = vmatprep.mubr.f32.mxu0 0.0
        %2675 = vmatmul.mubr.f32.gmra.mrb[0].mxu0 %v2596
        %v2676 = vpop.f32.mrb[0].mxu0
        %v2677 = vadd.f32 0.0, %v2676
        %v2678 = vpop.f32.mrb[0].mxu0
        %v2679 = vadd.f32 0.0, %v2678
        %2680 = vdwg.mxu0
        %v2683 = vrot.slane %v2671, 2
        %v2684 = vrot.slane %v2673, 2
        %2685 = vrot.lane.b32.xlu0 %v2683, 20
        %v2686 = vpop.permute.xlu0 %2685
        %2687 = vrot.lane.b32.xlu0 %v2684, 20
        %v2688 = vpop.permute.xlu0 %2687
        %vm2689 = vcmask 162816
        %v2690 = vsel %vm2689, %v2686, %v2688
        %v2693 = vrot.slane %v2671, 4
        %v2694 = vrot.slane %v2673, 4
        %2695 = vrot.lane.b32.xlu0 %v2693, 40
        %v2696 = vpop.permute.xlu0 %2695
        %2697 = vrot.lane.b32.xlu0 %v2694, 40
        %v2698 = vpop.permute.xlu0 %2697
        %v2699 = vsel %vm1910, %v2696, %v2698
        %v2702 = vrot.slane %v2671, 6
        %v2703 = vrot.slane %v2673, 6
        %2704 = vrot.lane.b32.xlu0 %v2702, 60
        %v2705 = vpop.permute.xlu0 %2704
        %2706 = vrot.lane.b32.xlu0 %v2703, 60
        %v2707 = vpop.permute.xlu0 %2706
        %vm2708 = vcmask 490496
        %v2709 = vsel %vm2708, %v2705, %v2707
        %2714 = vrot.lane.b32.xlu0 %v2677, 80
        %v2715 = vpop.permute.xlu0 %2714
        %2716 = vrot.lane.b32.xlu0 %v2679, 80
        %v2717 = vpop.permute.xlu0 %2716
        %vm2718 = vcmask 654336
        %v2719 = vsel %vm2718, %v2715, %v2717
        %v2722 = vrot.slane %v2677, 2
        %v2723 = vrot.slane %v2679, 2
        %2724 = vrot.lane.b32.xlu0 %v2722, 100
        %v2725 = vpop.permute.xlu0 %2724
        %2726 = vrot.lane.b32.xlu0 %v2723, 100
        %v2727 = vpop.permute.xlu0 %2726
        %vm2728 = vcmask 818176
        %v2729 = vsel %vm2728, %v2725, %v2727
        %v2732 = vrot.slane %v2677, 4
        %v2733 = vrot.slane %v2679, 4
        %2734 = vrot.lane.b32.xlu0 %v2732, 120
        %v2735 = vpop.permute.xlu0 %2734
        %2736 = vrot.lane.b32.xlu0 %v2733, 120
        %v2737 = vpop.permute.xlu0 %2736
        %vm2738 = vcmask 982016
        %v2739 = vsel %vm2738, %v2735, %v2737
        %v2743 = vrot.slane %v2677, 6
        %v2744 = vrot.slane %v2679, 6
        %2745 = vrot.lane.b32.xlu0 %v2743, 12
        %v2746 = vpop.permute.xlu0 %2745
        %2747 = vrot.lane.b32.xlu0 %v2744, 12
        %v2748 = vpop.permute.xlu0 %2747
        %vm2749 = vcmask 97280
        %v2750 = vsel %vm2749, %v2746, %v2748
        %v2752 = vsel %vm2689, %v2673, %v2686
        %v2753 = vsel %vm1910, %v2690, %v2696
        %v2754 = vsel %vm2708, %v2699, %v2705
        %v2755 = vsel %vm2718, %v2709, %v2715
        %v2756 = vsel %vm2728, %v2719, %v2725
        %v2757 = vsel %vm2738, %v2729, %v2735
        %v2758 = vsel %vm2749, %v2737, %v2746
        %v2759 = vld [vmem:[%s55] sm:$0xff]
        %v2760 = vld [vmem:[%s55 + $0x8] sm:$0xff]
        %v2761 = vld [vmem:[%s55 + $0x10] sm:$0xff]
        %v2762 = vld [vmem:[%s55 + $0x18] sm:$0xff]
        %v2763 = vld [vmem:[%s55 + $0x20] sm:$0xff]
        %v2764 = vld [vmem:[%s55 + $0x28] sm:$0xff]
        %v2765 = vld [vmem:[%s55 + $0x30] sm:$0xff]
        %v2766 = vld [vmem:[%s55 + $0x38] sm:$0xff]
        %v2767 = vld [vmem:[%s55 + $0x40] sm:$0xff]
        %v2768 = vld [vmem:[%s55 + $0x48] sm:$0xff]
        %v2769 = vld [vmem:[%s55 + $0x50] sm:$0xff]
        %v2770 = vld [vmem:[%s55 + $0x58] sm:$0xff]
        %v2771 = vld [vmem:[%s55 + $0x60] sm:$0xff]
        %v2772 = vld [vmem:[%s55 + $0x68] sm:$0xff]
        %v2773 = vld [vmem:[%s55 + $0x70] sm:$0xff]
        %v2774 = vld [vmem:[%s55 + $0x78] sm:$0xff]
        %v2775 = vld [vmem:[%s55 + $0x80] sm:$0xff]
        %v2776 = vld [vmem:[%s55 + $0x88] sm:$0xff]
        %v2777 = vld [vmem:[%s55 + $0x90] sm:$0xff]
        %v2778 = vld [vmem:[%s55 + $0x98] sm:$0xff]
        %v2779 = vld [vmem:[%s55 + $0xa0] sm:$0xff]
        %v2780 = vld [vmem:[%s55 + $0xa8] sm:$0xff]
        %v2781 = vld [vmem:[%s55 + $0xb0] sm:$0xff]
        %v2782 = vld [vmem:[%s55 + $0xb8] sm:$0xff]
        %v2783 = vld [vmem:[%s55 + $0xc0] sm:$0xff]
        %v2784 = vld [vmem:[%s55 + $0xc8] sm:$0xff]
        %v2785 = vld [vmem:[%s55 + $0xd0] sm:$0xff]
        %v2786 = vld [vmem:[%s55 + $0xd8] sm:$0xff]
        %v2787 = vld [vmem:[%s55 + $0xe0] sm:$0xff]
        %v2788 = vld [vmem:[%s55 + $0xe8] sm:$0xff]
        %v2789 = vld [vmem:[%s55 + $0xf0] sm:$0xff]
        %v2790 = vld [vmem:[%s55 + $0xf8] sm:$0xff]
        %v2791 = vld [vmem:[%s55 + $0x100] sm:$0xff]
        %v2792 = vld [vmem:[%s55 + $0x108] sm:$0xff]
        %v2793 = vld [vmem:[%s55 + $0x110] sm:$0xff]
        %v2794 = vld [vmem:[%s55 + $0x118] sm:$0xff]
        %v2795 = vld [vmem:[%s55 + $0x120] sm:$0xff]
        %v2796 = vld [vmem:[%s55 + $0x128] sm:$0xff]
        %v2797 = vld [vmem:[%s55 + $0x130] sm:$0xff]
        %v2798 = vld [vmem:[%s55 + $0x138] sm:$0xff]
        %v2799 = vld [vmem:[%s55 + $0x140] sm:$0xff]
        %v2800 = vld [vmem:[%s55 + $0x148] sm:$0xff]
        %v2801 = vld [vmem:[%s55 + $0x150] sm:$0xff]
        %v2802 = vld [vmem:[%s55 + $0x158] sm:$0xff]
        %v2803 = vld [vmem:[%s55 + $0x160] sm:$0xff]
        %v2804 = vld [vmem:[%s55 + $0x168] sm:$0xff]
        %v2805 = vld [vmem:[%s55 + $0x170] sm:$0xff]
        %v2806 = vld [vmem:[%s55 + $0x178] sm:$0xff]
        %v2807 = vld [vmem:[%s55 + $0x180] sm:$0xff]
        %v2808 = vld [vmem:[%s55 + $0x188] sm:$0xff]
        %v2809 = vld [vmem:[%s55 + $0x190] sm:$0xff]
        %v2810 = vld [vmem:[%s55 + $0x198] sm:$0xff]
        %v2811 = vld [vmem:[%s55 + $0x1a0] sm:$0xff]
        %v2812 = vld [vmem:[%s55 + $0x1a8] sm:$0xff]
        %v2813 = vld [vmem:[%s55 + $0x1b0] sm:$0xff]
        %v2814 = vld [vmem:[%s55 + $0x1b8] sm:$0xff]
        %v2815 = vld [vmem:[%s55 + $0x1c0] sm:$0xff]
        %v2816 = vld [vmem:[%s55 + $0x1c8] sm:$0xff]
        %v2817 = vld [vmem:[%s55 + $0x1d0] sm:$0xff]
        %v2818 = vld [vmem:[%s55 + $0x1d8] sm:$0xff]
        %v2819 = vld [vmem:[%s55 + $0x1e0] sm:$0xff]
        %v2820 = vld [vmem:[%s55 + $0x1e8] sm:$0xff]
        %v2821 = vld [vmem:[%s55 + $0x1f0] sm:$0xff]
        %v2822 = vld [vmem:[%s55 + $0x1f8] sm:$0xff]
        %v2823 = vld [vmem:[%s55 + $0x200] sm:$0xff]
        %v2824 = vld [vmem:[%s55 + $0x208] sm:$0xff]
        %v2825 = vld [vmem:[%s55 + $0x210] sm:$0xff]
        %v2826 = vld [vmem:[%s55 + $0x218] sm:$0xff]
        %v2827 = vld [vmem:[%s55 + $0x220] sm:$0xff]
        %v2828 = vld [vmem:[%s55 + $0x228] sm:$0xff]
        %v2829 = vld [vmem:[%s55 + $0x230] sm:$0xff]
        %v2830 = vld [vmem:[%s55 + $0x238] sm:$0xff]
        %v2831 = vld [vmem:[%s55 + $0x240] sm:$0xff]
        %v2832 = vld [vmem:[%s55 + $0x248] sm:$0xff]
        %v2833 = vld [vmem:[%s55 + $0x250] sm:$0xff]
        %v2834 = vld [vmem:[%s55 + $0x258] sm:$0xff]
        %v2835 = vld [vmem:[%s55 + $0x260] sm:$0xff]
        %v2836 = vld [vmem:[%s55 + $0x268] sm:$0xff]
        %v2837 = vld [vmem:[%s55 + $0x270] sm:$0xff]
        %v2838 = vld [vmem:[%s55 + $0x278] sm:$0xff]
        %v2839 = vld [vmem:[%s55 + $0x280] sm:$0xff]
        %v2840 = vld [vmem:[%s55 + $0x288] sm:$0xff]
        %v2841 = vld [vmem:[%s55 + $0x290] sm:$0xff]
        %v2842 = vld [vmem:[%s55 + $0x298] sm:$0xff]
        %v2843 = vld [vmem:[%s55 + $0x2a0] sm:$0xff]
        %v2844 = vld [vmem:[%s55 + $0x2a8] sm:$0xff]
        %v2845 = vld [vmem:[%s55 + $0x2b0] sm:$0xff]
        %v2846 = vld [vmem:[%s55 + $0x2b8] sm:$0xff]
        %v2847 = vld [vmem:[%s55 + $0x2c0] sm:$0xff]
        %v2848 = vld [vmem:[%s55 + $0x2c8] sm:$0xff]
        %v2849 = vld [vmem:[%s55 + $0x2d0] sm:$0xff]
        %v2850 = vld [vmem:[%s55 + $0x2d8] sm:$0xff]
        %v2851 = vld [vmem:[%s55 + $0x2e0] sm:$0xff]
        %v2852 = vld [vmem:[%s55 + $0x2e8] sm:$0xff]
        %v2853 = vld [vmem:[%s55 + $0x2f0] sm:$0xff]
        %v2854 = vld [vmem:[%s55 + $0x2f8] sm:$0xff]
        %v2855 = vld [vmem:[%s55 + $0x300] sm:$0xff]
        %v2856 = vld [vmem:[%s55 + $0x308] sm:$0xff]
        %v2857 = vld [vmem:[%s55 + $0x310] sm:$0xff]
        %v2858 = vld [vmem:[%s55 + $0x318] sm:$0xff]
        %v2859 = vld [vmem:[%s55 + $0x320] sm:$0xff]
        %v2860 = vld [vmem:[%s55 + $0x328] sm:$0xff]
        %v2861 = vld [vmem:[%s55 + $0x330] sm:$0xff]
        %v2862 = vld [vmem:[%s55 + $0x338] sm:$0xff]
        %v2863 = vld [vmem:[%s55 + $0x340] sm:$0xff]
        %v2864 = vld [vmem:[%s55 + $0x348] sm:$0xff]
        %v2865 = vld [vmem:[%s55 + $0x350] sm:$0xff]
        %v2866 = vld [vmem:[%s55 + $0x358] sm:$0xff]
        %v2867 = vld [vmem:[%s55 + $0x360] sm:$0xff]
        %v2868 = vld [vmem:[%s55 + $0x368] sm:$0xff]
        %v2869 = vld [vmem:[%s55 + $0x370] sm:$0xff]
        %v2870 = vld [vmem:[%s55 + $0x378] sm:$0xff]
        %v2871 = vld [vmem:[%s55 + $0x380] sm:$0xff]
        %v2872 = vld [vmem:[%s55 + $0x388] sm:$0xff]
        %v2873 = vld [vmem:[%s55 + $0x390] sm:$0xff]
        %v2874 = vld [vmem:[%s55 + $0x398] sm:$0xff]
        %v2875 = vld [vmem:[%s55 + $0x3a0] sm:$0xff]
        %v2876 = vld [vmem:[%s55 + $0x3a8] sm:$0xff]
        %v2877 = vld [vmem:[%s55 + $0x3b0] sm:$0xff]
        %v2878 = vld [vmem:[%s55 + $0x3b8] sm:$0xff]
        %v2879 = vld [vmem:[%s55 + $0x3c0] sm:$0xff]
        %v2880 = vld [vmem:[%s55 + $0x3c8] sm:$0xff]
        %v2881 = vld [vmem:[%s55 + $0x3d0] sm:$0xff]
        %v2882 = vld [vmem:[%s55 + $0x3d8] sm:$0xff]
        %v2883 = vld [vmem:[%s55 + $0x3e0] sm:$0xff]
        %v2884 = vld [vmem:[%s55 + $0x3e8] sm:$0xff]
        %v2885 = vld [vmem:[%s55 + $0x3f0] sm:$0xff]
        %v2886 = vld [vmem:[%s55 + $0x3f8] sm:$0xff]
        %v2887 = vld [vmem:[%s55 + $0x400] sm:$0xff]
        %v2888 = vld [vmem:[%s55 + $0x408] sm:$0xff]
        %v2889 = vld [vmem:[%s55 + $0x410] sm:$0xff]
        %v2890 = vld [vmem:[%s55 + $0x418] sm:$0xff]
        %v2891 = vld [vmem:[%s55 + $0x420] sm:$0xff]
        %v2892 = vld [vmem:[%s55 + $0x428] sm:$0xff]
        %v2893 = vld [vmem:[%s55 + $0x430] sm:$0xff]
        %v2894 = vld [vmem:[%s55 + $0x438] sm:$0xff]
        %v2895 = vld [vmem:[%s55 + $0x440] sm:$0xff]
        %v2896 = vld [vmem:[%s55 + $0x448] sm:$0xff]
        %v2897 = vld [vmem:[%s55 + $0x450] sm:$0xff]
        %v2898 = vld [vmem:[%s55 + $0x458] sm:$0xff]
        %v2899 = vld [vmem:[%s55 + $0x460] sm:$0xff]
        %v2900 = vld [vmem:[%s55 + $0x468] sm:$0xff]
        %v2901 = vld [vmem:[%s55 + $0x470] sm:$0xff]
        %v2902 = vld [vmem:[%s55 + $0x478] sm:$0xff]
        %v2903 = vld [vmem:[%s55 + $0x480] sm:$0xff]
        %v2904 = vld [vmem:[%s55 + $0x488] sm:$0xff]
        %v2905 = vld [vmem:[%s55 + $0x490] sm:$0xff]
        %v2906 = vld [vmem:[%s55 + $0x498] sm:$0xff]
        %v2907 = vld [vmem:[%s55 + $0x4a0] sm:$0xff]
        %v2908 = vld [vmem:[%s55 + $0x4a8] sm:$0xff]
        %v2909 = vld [vmem:[%s55 + $0x4b0] sm:$0xff]
        %v2910 = vld [vmem:[%s55 + $0x4b8] sm:$0xff]
        %v2911 = vld [vmem:[%s55 + $0x4c0] sm:$0xff]
        %v2912 = vld [vmem:[%s55 + $0x4c8] sm:$0xff]
        %v2913 = vld [vmem:[%s55 + $0x4d0] sm:$0xff]
        %v2914 = vld [vmem:[%s55 + $0x4d8] sm:$0xff]
        %v2915 = vld [vmem:[%s55 + $0x4e0] sm:$0xff]
        %v2916 = vld [vmem:[%s55 + $0x4e8] sm:$0xff]
        %v2917 = vld [vmem:[%s55 + $0x4f0] sm:$0xff]
        %v2918 = vld [vmem:[%s55 + $0x4f8] sm:$0xff]
        %v2919 = vld [vmem:[%s55 + $0x500] sm:$0xff]
        %v2920 = vld [vmem:[%s55 + $0x508] sm:$0xff]
        %v2921 = vld [vmem:[%s55 + $0x510] sm:$0xff]
        %v2922 = vld [vmem:[%s55 + $0x518] sm:$0xff]
        %v2923 = vld [vmem:[%s55 + $0x520] sm:$0xff]
        %v2924 = vld [vmem:[%s55 + $0x528] sm:$0xff]
        %v2925 = vld [vmem:[%s55 + $0x530] sm:$0xff]
        %v2926 = vld [vmem:[%s55 + $0x538] sm:$0xff]
        %v2927 = vld [vmem:[%s55 + $0x540] sm:$0xff]
        %v2928 = vld [vmem:[%s55 + $0x548] sm:$0xff]
        %v2929 = vld [vmem:[%s55 + $0x550] sm:$0xff]
        %v2930 = vld [vmem:[%s55 + $0x558] sm:$0xff]
        %v2931 = vld [vmem:[%s55 + $0x560] sm:$0xff]
        %v2932 = vld [vmem:[%s55 + $0x568] sm:$0xff]
        %v2933 = vld [vmem:[%s55 + $0x570] sm:$0xff]
        %v2934 = vld [vmem:[%s55 + $0x578] sm:$0xff]
        %v2935 = vld [vmem:[%s55 + $0x580] sm:$0xff]
        %v2936 = vld [vmem:[%s55 + $0x588] sm:$0xff]
        %v2937 = vld [vmem:[%s55 + $0x590] sm:$0xff]
        %v2938 = vld [vmem:[%s55 + $0x598] sm:$0xff]
        %v2939 = vld [vmem:[%s55 + $0x5a0] sm:$0xff]
        %v2940 = vld [vmem:[%s55 + $0x5a8] sm:$0xff]
        %v2941 = vld [vmem:[%s55 + $0x5b0] sm:$0xff]
        %v2942 = vld [vmem:[%s55 + $0x5b8] sm:$0xff]
        %v2943 = vld [vmem:[%s55 + $0x5c0] sm:$0xff]
        %v2944 = vld [vmem:[%s55 + $0x5c8] sm:$0xff]
        %v2945 = vld [vmem:[%s55 + $0x5d0] sm:$0xff]
        %v2946 = vld [vmem:[%s55 + $0x5d8] sm:$0xff]
        %v2947 = vld [vmem:[%s55 + $0x5e0] sm:$0xff]
        %v2948 = vld [vmem:[%s55 + $0x5e8] sm:$0xff]
        %v2949 = vld [vmem:[%s55 + $0x5f0] sm:$0xff]
        %v2950 = vld [vmem:[%s55 + $0x5f8] sm:$0xff]
        %v2951 = vld [vmem:[%s55 + $0x600] sm:$0xff]
        %v2952 = vld [vmem:[%s55 + $0x608] sm:$0xff]
        %v2953 = vld [vmem:[%s55 + $0x610] sm:$0xff]
        %v2954 = vld [vmem:[%s55 + $0x618] sm:$0xff]
        %v2955 = vld [vmem:[%s55 + $0x620] sm:$0xff]
        %v2956 = vld [vmem:[%s55 + $0x628] sm:$0xff]
        %v2957 = vld [vmem:[%s55 + $0x630] sm:$0xff]
        %v2958 = vld [vmem:[%s55 + $0x638] sm:$0xff]
        %v2959 = vld [vmem:[%s55 + $0x640] sm:$0xff]
        %v2960 = vld [vmem:[%s55 + $0x648] sm:$0xff]
        %v2961 = vld [vmem:[%s55 + $0x650] sm:$0xff]
        %v2962 = vld [vmem:[%s55 + $0x658] sm:$0xff]
        %v2963 = vld [vmem:[%s55 + $0x660] sm:$0xff]
        %v2964 = vld [vmem:[%s55 + $0x668] sm:$0xff]
        %v2965 = vld [vmem:[%s55 + $0x670] sm:$0xff]
        %v2966 = vld [vmem:[%s55 + $0x678] sm:$0xff]
        %v2967 = vld [vmem:[%s55 + $0x680] sm:$0xff]
        %v2968 = vld [vmem:[%s55 + $0x688] sm:$0xff]
        %v2969 = vld [vmem:[%s55 + $0x690] sm:$0xff]
        %v2970 = vld [vmem:[%s55 + $0x698] sm:$0xff]
        %v2971 = vld [vmem:[%s55 + $0x6a0] sm:$0xff]
        %v2972 = vld [vmem:[%s55 + $0x6a8] sm:$0xff]
        %v2973 = vld [vmem:[%s55 + $0x6b0] sm:$0xff]
        %v2974 = vld [vmem:[%s55 + $0x6b8] sm:$0xff]
        %v2975 = vld [vmem:[%s55 + $0x6c0] sm:$0xff]
        %v2976 = vld [vmem:[%s55 + $0x6c8] sm:$0xff]
        %v2977 = vld [vmem:[%s55 + $0x6d0] sm:$0xff]
        %v2978 = vld [vmem:[%s55 + $0x6d8] sm:$0xff]
        %v2979 = vld [vmem:[%s55 + $0x6e0] sm:$0xff]
        %v2980 = vld [vmem:[%s55 + $0x6e8] sm:$0xff]
        %v2981 = vld [vmem:[%s55 + $0x6f0] sm:$0xff]
        %v2982 = vld [vmem:[%s55 + $0x6f8] sm:$0xff]
        %v2983 = vld [vmem:[%s55 + $0x700] sm:$0xff]
        %v2984 = vld [vmem:[%s55 + $0x708] sm:$0xff]
        %v2985 = vld [vmem:[%s55 + $0x710] sm:$0xff]
        %v2986 = vld [vmem:[%s55 + $0x718] sm:$0xff]
        %v2987 = vld [vmem:[%s55 + $0x720] sm:$0xff]
        %v2988 = vld [vmem:[%s55 + $0x728] sm:$0xff]
        %v2989 = vld [vmem:[%s55 + $0x730] sm:$0xff]
        %v2990 = vld [vmem:[%s55 + $0x738] sm:$0xff]
        %v2991 = vld [vmem:[%s55 + $0x740] sm:$0xff]
        %v2992 = vld [vmem:[%s55 + $0x748] sm:$0xff]
        %v2993 = vld [vmem:[%s55 + $0x750] sm:$0xff]
        %v2994 = vld [vmem:[%s55 + $0x758] sm:$0xff]
        %v2995 = vld [vmem:[%s55 + $0x760] sm:$0xff]
        %v2996 = vld [vmem:[%s55 + $0x768] sm:$0xff]
        %v2997 = vld [vmem:[%s55 + $0x770] sm:$0xff]
        %v2998 = vld [vmem:[%s55 + $0x778] sm:$0xff]
        %v2999 = vld [vmem:[%s55 + $0x780] sm:$0xff]
        %v3000 = vld [vmem:[%s55 + $0x788] sm:$0xff]
        %v3001 = vld [vmem:[%s55 + $0x790] sm:$0xff]
        %v3002 = vld [vmem:[%s55 + $0x798] sm:$0xff]
        %v3003 = vld [vmem:[%s55 + $0x7a0] sm:$0xff]
        %v3004 = vld [vmem:[%s55 + $0x7a8] sm:$0xff]
        %v3005 = vld [vmem:[%s55 + $0x7b0] sm:$0xff]
        %v3006 = vld [vmem:[%s55 + $0x7b8] sm:$0xff]
        %v3007 = vld [vmem:[%s55 + $0x7c0] sm:$0xff]
        %v3008 = vld [vmem:[%s55 + $0x7c8] sm:$0xff]
        %v3009 = vld [vmem:[%s55 + $0x7d0] sm:$0xff]
        %v3010 = vld [vmem:[%s55 + $0x7d8] sm:$0xff]
        %v3011 = vld [vmem:[%s55 + $0x7e0] sm:$0xff]
        %v3012 = vld [vmem:[%s55 + $0x7e8] sm:$0xff]
        %v3013 = vld [vmem:[%s55 + $0x7f0] sm:$0xff]
        %v3014 = vld [vmem:[%s55 + $0x7f8] sm:$0xff]
        %v3015 = vld [vmem:[%s55 + $0x800] sm:$0xff]
        %v3016 = vld [vmem:[%s55 + $0x808] sm:$0xff]
        %v3017 = vld [vmem:[%s55 + $0x810] sm:$0xff]
        %v3018 = vld [vmem:[%s55 + $0x818] sm:$0xff]
        %v3019 = vld [vmem:[%s55 + $0x820] sm:$0xff]
        %v3020 = vld [vmem:[%s55 + $0x828] sm:$0xff]
        %v3021 = vld [vmem:[%s55 + $0x830] sm:$0xff]
        %v3022 = vld [vmem:[%s55 + $0x838] sm:$0xff]
        %v3023 = vld [vmem:[%s55 + $0x840] sm:$0xff]
        %v3024 = vld [vmem:[%s55 + $0x848] sm:$0xff]
        %v3025 = vld [vmem:[%s55 + $0x850] sm:$0xff]
        %v3026 = vld [vmem:[%s55 + $0x858] sm:$0xff]
        %v3027 = vld [vmem:[%s55 + $0x860] sm:$0xff]
        %v3028 = vld [vmem:[%s55 + $0x868] sm:$0xff]
        %v3029 = vld [vmem:[%s55 + $0x870] sm:$0xff]
        %v3030 = vld [vmem:[%s55 + $0x878] sm:$0xff]
        %v3031 = vld [vmem:[%s55 + $0x880] sm:$0xff]
        %v3032 = vld [vmem:[%s55 + $0x888] sm:$0xff]
        %v3033 = vld [vmem:[%s55 + $0x890] sm:$0xff]
        %v3034 = vld [vmem:[%s55 + $0x898] sm:$0xff]
        %v3035 = vld [vmem:[%s55 + $0x8a0] sm:$0xff]
        %v3036 = vld [vmem:[%s55 + $0x8a8] sm:$0xff]
        %v3037 = vld [vmem:[%s55 + $0x8b0] sm:$0xff]
        %v3038 = vld [vmem:[%s55 + $0x8b8] sm:$0xff]
        %v3039 = vld [vmem:[%s55 + $0x8c0] sm:$0xff]
        %v3040 = vld [vmem:[%s55 + $0x8c8] sm:$0xff]
        %v3041 = vld [vmem:[%s55 + $0x8d0] sm:$0xff]
        %v3042 = vld [vmem:[%s55 + $0x8d8] sm:$0xff]
        %v3043 = vld [vmem:[%s55 + $0x8e0] sm:$0xff]
        %v3044 = vld [vmem:[%s55 + $0x8e8] sm:$0xff]
        %v3045 = vld [vmem:[%s55 + $0x8f0] sm:$0xff]
        %v3046 = vld [vmem:[%s55 + $0x8f8] sm:$0xff]
        %v3047 = vld [vmem:[%s55 + $0x900] sm:$0xff]
        %v3048 = vld [vmem:[%s55 + $0x908] sm:$0xff]
        %v3049 = vld [vmem:[%s55 + $0x910] sm:$0xff]
        %v3050 = vld [vmem:[%s55 + $0x918] sm:$0xff]
        %v3051 = vld [vmem:[%s55 + $0x920] sm:$0xff]
        %v3052 = vld [vmem:[%s55 + $0x928] sm:$0xff]
        %v3053 = vld [vmem:[%s55 + $0x930] sm:$0xff]
        %v3054 = vld [vmem:[%s55 + $0x938] sm:$0xff]
        %v3055 = vld [vmem:[%s55 + $0x940] sm:$0xff]
        %v3056 = vld [vmem:[%s55 + $0x948] sm:$0xff]
        %v3057 = vld [vmem:[%s55 + $0x950] sm:$0xff]
        %v3058 = vld [vmem:[%s55 + $0x958] sm:$0xff]
        %v3059 = vld [vmem:[%s55 + $0x960] sm:$0xff]
        %v3060 = vld [vmem:[%s55 + $0x968] sm:$0xff]
        %v3061 = vld [vmem:[%s55 + $0x970] sm:$0xff]
        %v3062 = vld [vmem:[%s55 + $0x978] sm:$0xff]
        %v3063 = vld [vmem:[%s55 + $0x980] sm:$0xff]
        %v3064 = vld [vmem:[%s55 + $0x988] sm:$0xff]
        %v3065 = vld [vmem:[%s55 + $0x990] sm:$0xff]
        %v3066 = vld [vmem:[%s55 + $0x998] sm:$0xff]
        %v3067 = vld [vmem:[%s55 + $0x9a0] sm:$0xff]
        %v3068 = vld [vmem:[%s55 + $0x9a8] sm:$0xff]
        %v3069 = vld [vmem:[%s55 + $0x9b0] sm:$0xff]
        %v3070 = vld [vmem:[%s55 + $0x9b8] sm:$0xff]
        %v3071 = vld [vmem:[%s55 + $0x9c0] sm:$0xff]
        %v3072 = vld [vmem:[%s55 + $0x9c8] sm:$0xff]
        %v3073 = vld [vmem:[%s55 + $0x9d0] sm:$0xff]
        %v3074 = vld [vmem:[%s55 + $0x9d8] sm:$0xff]
        %v3075 = vld [vmem:[%s55 + $0x9e0] sm:$0xff]
        %v3076 = vld [vmem:[%s55 + $0x9e8] sm:$0xff]
        %v3077 = vld [vmem:[%s55 + $0x9f0] sm:$0xff]
        %v3078 = vld [vmem:[%s55 + $0x9f8] sm:$0xff]
        %v3079 = vld [vmem:[%s55 + $0xa00] sm:$0xff]
        %v3080 = vld [vmem:[%s55 + $0xa08] sm:$0xff]
        %v3081 = vld [vmem:[%s55 + $0xa10] sm:$0xff]
        %v3082 = vld [vmem:[%s55 + $0xa18] sm:$0xff]
        %v3083 = vld [vmem:[%s55 + $0xa20] sm:$0xff]
        %v3084 = vld [vmem:[%s55 + $0xa28] sm:$0xff]
        %v3085 = vld [vmem:[%s55 + $0xa30] sm:$0xff]
        %v3086 = vld [vmem:[%s55 + $0xa38] sm:$0xff]
        %v3087 = vld [vmem:[%s55 + $0xa40] sm:$0xff]
        %v3088 = vld [vmem:[%s55 + $0xa48] sm:$0xff]
        %v3089 = vld [vmem:[%s55 + $0xa50] sm:$0xff]
        %v3090 = vld [vmem:[%s55 + $0xa58] sm:$0xff]
        %v3091 = vld [vmem:[%s55 + $0xa60] sm:$0xff]
        %v3092 = vld [vmem:[%s55 + $0xa68] sm:$0xff]
        %v3093 = vld [vmem:[%s55 + $0xa70] sm:$0xff]
        %v3094 = vld [vmem:[%s55 + $0xa78] sm:$0xff]
        %v3095 = vld [vmem:[%s55 + $0xa80] sm:$0xff]
        %v3096 = vld [vmem:[%s55 + $0xa88] sm:$0xff]
        %v3097 = vld [vmem:[%s55 + $0xa90] sm:$0xff]
        %v3098 = vld [vmem:[%s55 + $0xa98] sm:$0xff]
        %v3099 = vld [vmem:[%s55 + $0xaa0] sm:$0xff]
        %v3100 = vld [vmem:[%s55 + $0xaa8] sm:$0xff]
        %v3101 = vld [vmem:[%s55 + $0xab0] sm:$0xff]
        %v3102 = vld [vmem:[%s55 + $0xab8] sm:$0xff]
        %v3103 = vld [vmem:[%s55 + $0xac0] sm:$0xff]
        %v3104 = vld [vmem:[%s55 + $0xac8] sm:$0xff]
        %v3105 = vld [vmem:[%s55 + $0xad0] sm:$0xff]
        %v3106 = vld [vmem:[%s55 + $0xad8] sm:$0xff]
        %v3107 = vld [vmem:[%s55 + $0xae0] sm:$0xff]
        %v3108 = vld [vmem:[%s55 + $0xae8] sm:$0xff]
        %v3109 = vld [vmem:[%s55 + $0xaf0] sm:$0xff]
        %v3110 = vld [vmem:[%s55 + $0xaf8] sm:$0xff]
        %v3111 = vld [vmem:[%s55 + $0xb00] sm:$0xff]
        %v3112 = vld [vmem:[%s55 + $0xb08] sm:$0xff]
        %v3113 = vld [vmem:[%s55 + $0xb10] sm:$0xff]
        %v3114 = vld [vmem:[%s55 + $0xb18] sm:$0xff]
        %v3115 = vld [vmem:[%s55 + $0xb20] sm:$0xff]
        %v3116 = vld [vmem:[%s55 + $0xb28] sm:$0xff]
        %v3117 = vld [vmem:[%s55 + $0xb30] sm:$0xff]
        %v3118 = vld [vmem:[%s55 + $0xb38] sm:$0xff]
        %v3119 = vld [vmem:[%s55 + $0xb40] sm:$0xff]
        %v3120 = vld [vmem:[%s55 + $0xb48] sm:$0xff]
        %v3121 = vld [vmem:[%s55 + $0xb50] sm:$0xff]
        %v3122 = vld [vmem:[%s55 + $0xb58] sm:$0xff]
        %v3123 = vld [vmem:[%s55 + $0xb60] sm:$0xff]
        %v3124 = vld [vmem:[%s55 + $0xb68] sm:$0xff]
        %v3125 = vld [vmem:[%s55 + $0xb70] sm:$0xff]
        %v3126 = vld [vmem:[%s55 + $0xb78] sm:$0xff]
        %v3127 = vld [vmem:[%s55 + $0xb80] sm:$0xff]
        %v3128 = vld [vmem:[%s55 + $0xb88] sm:$0xff]
        %v3129 = vld [vmem:[%s55 + $0xb90] sm:$0xff]
        %v3130 = vld [vmem:[%s55 + $0xb98] sm:$0xff]
        %v3131 = vld [vmem:[%s55 + $0xba0] sm:$0xff]
        %v3132 = vld [vmem:[%s55 + $0xba8] sm:$0xff]
        %v3133 = vld [vmem:[%s55 + $0xbb0] sm:$0xff]
        %v3134 = vld [vmem:[%s55 + $0xbb8] sm:$0xff]
        %v3135 = vld [vmem:[%s55 + $0xbc0] sm:$0xff]
        %v3136 = vld [vmem:[%s55 + $0xbc8] sm:$0xff]
        %v3137 = vld [vmem:[%s55 + $0xbd0] sm:$0xff]
        %v3138 = vld [vmem:[%s55 + $0xbd8] sm:$0xff]
        %v3139 = vld [vmem:[%s55 + $0xbe0] sm:$0xff]
        %v3140 = vld [vmem:[%s55 + $0xbe8] sm:$0xff]
        %v3141 = vld [vmem:[%s55 + $0xbf0] sm:$0xff]
        %v3142 = vld [vmem:[%s55 + $0xbf8] sm:$0xff]
        %v3143 = vld [vmem:[%s55 + $0xc00] sm:$0xff]
        %v3144 = vld [vmem:[%s55 + $0xc08] sm:$0xff]
        %v3145 = vld [vmem:[%s55 + $0xc10] sm:$0xff]
        %v3146 = vld [vmem:[%s55 + $0xc18] sm:$0xff]
        %v3147 = vld [vmem:[%s55 + $0xc20] sm:$0xff]
        %v3148 = vld [vmem:[%s55 + $0xc28] sm:$0xff]
        %v3149 = vld [vmem:[%s55 + $0xc30] sm:$0xff]
        %v3150 = vld [vmem:[%s55 + $0xc38] sm:$0xff]
        %v3151 = vld [vmem:[%s55 + $0xc40] sm:$0xff]
        %v3152 = vld [vmem:[%s55 + $0xc48] sm:$0xff]
        %v3153 = vld [vmem:[%s55 + $0xc50] sm:$0xff]
        %v3154 = vld [vmem:[%s55 + $0xc58] sm:$0xff]
        %v3155 = vld [vmem:[%s55 + $0xc60] sm:$0xff]
        %v3156 = vld [vmem:[%s55 + $0xc68] sm:$0xff]
        %v3157 = vld [vmem:[%s55 + $0xc70] sm:$0xff]
        %v3158 = vld [vmem:[%s55 + $0xc78] sm:$0xff]
        %v3159 = vld [vmem:[%s55 + $0xc80] sm:$0xff]
        %v3160 = vld [vmem:[%s55 + $0xc88] sm:$0xff]
        %v3161 = vld [vmem:[%s55 + $0xc90] sm:$0xff]
        %v3162 = vld [vmem:[%s55 + $0xc98] sm:$0xff]
        %v3163 = vld [vmem:[%s55 + $0xca0] sm:$0xff]
        %v3164 = vld [vmem:[%s55 + $0xca8] sm:$0xff]
        %v3165 = vld [vmem:[%s55 + $0xcb0] sm:$0xff]
        %v3166 = vld [vmem:[%s55 + $0xcb8] sm:$0xff]
        %v3167 = vld [vmem:[%s55 + $0xcc0] sm:$0xff]
        %v3168 = vld [vmem:[%s55 + $0xcc8] sm:$0xff]
        %v3169 = vld [vmem:[%s55 + $0xcd0] sm:$0xff]
        %v3170 = vld [vmem:[%s55 + $0xcd8] sm:$0xff]
        %v3171 = vld [vmem:[%s55 + $0xce0] sm:$0xff]
        %v3172 = vld [vmem:[%s55 + $0xce8] sm:$0xff]
        %v3173 = vld [vmem:[%s55 + $0xcf0] sm:$0xff]
        %v3174 = vld [vmem:[%s55 + $0xcf8] sm:$0xff]
        %v3175 = vld [vmem:[%s55 + $0xd00] sm:$0xff]
        %v3176 = vld [vmem:[%s55 + $0xd08] sm:$0xff]
        %v3177 = vld [vmem:[%s55 + $0xd10] sm:$0xff]
        %v3178 = vld [vmem:[%s55 + $0xd18] sm:$0xff]
        %v3179 = vld [vmem:[%s55 + $0xd20] sm:$0xff]
        %v3180 = vld [vmem:[%s55 + $0xd28] sm:$0xff]
        %v3181 = vld [vmem:[%s55 + $0xd30] sm:$0xff]
        %v3182 = vld [vmem:[%s55 + $0xd38] sm:$0xff]
        %v3183 = vld [vmem:[%s55 + $0xd40] sm:$0xff]
        %v3184 = vld [vmem:[%s55 + $0xd48] sm:$0xff]
        %v3185 = vld [vmem:[%s55 + $0xd50] sm:$0xff]
        %v3186 = vld [vmem:[%s55 + $0xd58] sm:$0xff]
        %v3187 = vld [vmem:[%s55 + $0xd60] sm:$0xff]
        %v3188 = vld [vmem:[%s55 + $0xd68] sm:$0xff]
        %v3189 = vld [vmem:[%s55 + $0xd70] sm:$0xff]
        %v3190 = vld [vmem:[%s55 + $0xd78] sm:$0xff]
        %v3191 = vld [vmem:[%s55 + $0xd80] sm:$0xff]
        %v3192 = vld [vmem:[%s55 + $0xd88] sm:$0xff]
        %v3193 = vld [vmem:[%s55 + $0xd90] sm:$0xff]
        %v3194 = vld [vmem:[%s55 + $0xd98] sm:$0xff]
        %v3195 = vld [vmem:[%s55 + $0xda0] sm:$0xff]
        %v3196 = vld [vmem:[%s55 + $0xda8] sm:$0xff]
        %v3197 = vld [vmem:[%s55 + $0xdb0] sm:$0xff]
        %v3198 = vld [vmem:[%s55 + $0xdb8] sm:$0xff]
        %v3199 = vld [vmem:[%s55 + $0xdc0] sm:$0xff]
        %v3200 = vld [vmem:[%s55 + $0xdc8] sm:$0xff]
        %v3201 = vld [vmem:[%s55 + $0xdd0] sm:$0xff]
        %v3202 = vld [vmem:[%s55 + $0xdd8] sm:$0xff]
        %v3203 = vld [vmem:[%s55 + $0xde0] sm:$0xff]
        %v3204 = vld [vmem:[%s55 + $0xde8] sm:$0xff]
        %v3205 = vld [vmem:[%s55 + $0xdf0] sm:$0xff]
        %v3206 = vld [vmem:[%s55 + $0xdf8] sm:$0xff]
        %v3207 = vld [vmem:[%s55 + $0xe00] sm:$0xff]
        %v3208 = vld [vmem:[%s55 + $0xe08] sm:$0xff]
        %v3209 = vld [vmem:[%s55 + $0xe10] sm:$0xff]
        %v3210 = vld [vmem:[%s55 + $0xe18] sm:$0xff]
        %v3211 = vld [vmem:[%s55 + $0xe20] sm:$0xff]
        %v3212 = vld [vmem:[%s55 + $0xe28] sm:$0xff]
        %v3213 = vld [vmem:[%s55 + $0xe30] sm:$0xff]
        %v3214 = vld [vmem:[%s55 + $0xe38] sm:$0xff]
        %v3215 = vld [vmem:[%s55 + $0xe40] sm:$0xff]
        %v3216 = vld [vmem:[%s55 + $0xe48] sm:$0xff]
        %v3217 = vld [vmem:[%s55 + $0xe50] sm:$0xff]
        %v3218 = vld [vmem:[%s55 + $0xe58] sm:$0xff]
        %v3219 = vld [vmem:[%s55 + $0xe60] sm:$0xff]
        %v3220 = vld [vmem:[%s55 + $0xe68] sm:$0xff]
        %v3221 = vld [vmem:[%s55 + $0xe70] sm:$0xff]
        %v3222 = vld [vmem:[%s55 + $0xe78] sm:$0xff]
        %v3223 = vld [vmem:[%s55 + $0xe80] sm:$0xff]
        %v3224 = vld [vmem:[%s55 + $0xe88] sm:$0xff]
        %v3225 = vld [vmem:[%s55 + $0xe90] sm:$0xff]
        %v3226 = vld [vmem:[%s55 + $0xe98] sm:$0xff]
        %v3227 = vld [vmem:[%s55 + $0xea0] sm:$0xff]
        %v3228 = vld [vmem:[%s55 + $0xea8] sm:$0xff]
        %v3229 = vld [vmem:[%s55 + $0xeb0] sm:$0xff]
        %v3230 = vld [vmem:[%s55 + $0xeb8] sm:$0xff]
        %v3231 = vld [vmem:[%s55 + $0xec0] sm:$0xff]
        %v3232 = vld [vmem:[%s55 + $0xec8] sm:$0xff]
        %v3233 = vld [vmem:[%s55 + $0xed0] sm:$0xff]
        %v3234 = vld [vmem:[%s55 + $0xed8] sm:$0xff]
        %v3235 = vld [vmem:[%s55 + $0xee0] sm:$0xff]
        %v3236 = vld [vmem:[%s55 + $0xee8] sm:$0xff]
        %v3237 = vld [vmem:[%s55 + $0xef0] sm:$0xff]
        %v3238 = vld [vmem:[%s55 + $0xef8] sm:$0xff]
        %v3239 = vld [vmem:[%s55 + $0xf00] sm:$0xff]
        %v3240 = vld [vmem:[%s55 + $0xf08] sm:$0xff]
        %v3241 = vld [vmem:[%s55 + $0xf10] sm:$0xff]
        %v3242 = vld [vmem:[%s55 + $0xf18] sm:$0xff]
        %v3243 = vld [vmem:[%s55 + $0xf20] sm:$0xff]
        %v3244 = vld [vmem:[%s55 + $0xf28] sm:$0xff]
        %v3245 = vld [vmem:[%s55 + $0xf30] sm:$0xff]
        %v3246 = vld [vmem:[%s55 + $0xf38] sm:$0xff]
        %v3247 = vld [vmem:[%s55 + $0xf40] sm:$0xff]
        %v3248 = vld [vmem:[%s55 + $0xf48] sm:$0xff]
        %v3249 = vld [vmem:[%s55 + $0xf50] sm:$0xff]
        %v3250 = vld [vmem:[%s55 + $0xf58] sm:$0xff]
        %v3251 = vld [vmem:[%s55 + $0xf60] sm:$0xff]
        %v3252 = vld [vmem:[%s55 + $0xf68] sm:$0xff]
        %v3253 = vld [vmem:[%s55 + $0xf70] sm:$0xff]
        %v3254 = vld [vmem:[%s55 + $0xf78] sm:$0xff]
        %v3255 = vld [vmem:[%s55 + $0xf80] sm:$0xff]
        %v3256 = vld [vmem:[%s55 + $0xf88] sm:$0xff]
        %v3257 = vld [vmem:[%s55 + $0xf90] sm:$0xff]
        %v3258 = vld [vmem:[%s55 + $0xf98] sm:$0xff]
        %v3259 = vld [vmem:[%s55 + $0xfa0] sm:$0xff]
        %v3260 = vld [vmem:[%s55 + $0xfa8] sm:$0xff]
        %v3261 = vld [vmem:[%s55 + $0xfb0] sm:$0xff]
        %v3262 = vld [vmem:[%s55 + $0xfb8] sm:$0xff]
        %v3263 = vld [vmem:[%s55 + $0xfc0] sm:$0xff]
        %v3264 = vld [vmem:[%s55 + $0xfc8] sm:$0xff]
        %v3265 = vld [vmem:[%s55 + $0xfd0] sm:$0xff]
        %v3266 = vld [vmem:[%s55 + $0xfd8] sm:$0xff]
        %v3267 = vld [vmem:[%s55 + $0xfe0] sm:$0xff]
        %v3268 = vld [vmem:[%s55 + $0xfe8] sm:$0xff]
        %v3269 = vld [vmem:[%s55 + $0xff0] sm:$0xff]
        %v3270 = vld [vmem:[%s55 + $0xff8] sm:$0xff]
        %v3271 = vld [vmem:[%s55 + $0x1000] sm:$0xff]
        %v3272 = vld [vmem:[%s55 + $0x1008] sm:$0xff]
        %v3273 = vld [vmem:[%s55 + $0x1010] sm:$0xff]
        %v3274 = vld [vmem:[%s55 + $0x1018] sm:$0xff]
        %v3275 = vld [vmem:[%s55 + $0x1020] sm:$0xff]
        %v3276 = vld [vmem:[%s55 + $0x1028] sm:$0xff]
        %v3277 = vld [vmem:[%s55 + $0x1030] sm:$0xff]
        %v3278 = vld [vmem:[%s55 + $0x1038] sm:$0xff]
        %v3279 = vld [vmem:[%s55 + $0x1040] sm:$0xff]
        %v3280 = vld [vmem:[%s55 + $0x1048] sm:$0xff]
        %v3281 = vld [vmem:[%s55 + $0x1050] sm:$0xff]
        %v3282 = vld [vmem:[%s55 + $0x1058] sm:$0xff]
        %v3283 = vld [vmem:[%s55 + $0x1060] sm:$0xff]
        %v3284 = vld [vmem:[%s55 + $0x1068] sm:$0xff]
        %v3285 = vld [vmem:[%s55 + $0x1070] sm:$0xff]
        %v3286 = vld [vmem:[%s55 + $0x1078] sm:$0xff]
        %v3287 = vld [vmem:[%s55 + $0x1080] sm:$0xff]
        %v3288 = vld [vmem:[%s55 + $0x1088] sm:$0xff]
        %v3289 = vld [vmem:[%s55 + $0x1090] sm:$0xff]
        %v3290 = vld [vmem:[%s55 + $0x1098] sm:$0xff]
        %v3291 = vld [vmem:[%s55 + $0x10a0] sm:$0xff]
        %v3292 = vld [vmem:[%s55 + $0x10a8] sm:$0xff]
        %v3293 = vld [vmem:[%s55 + $0x10b0] sm:$0xff]
        %v3294 = vld [vmem:[%s55 + $0x10b8] sm:$0xff]
        %v3295 = vld [vmem:[%s55 + $0x10c0] sm:$0xff]
        %v3296 = vld [vmem:[%s55 + $0x10c8] sm:$0xff]
        %v3297 = vld [vmem:[%s55 + $0x10d0] sm:$0xff]
        %v3298 = vld [vmem:[%s55 + $0x10d8] sm:$0xff]
        %v3299 = vld [vmem:[%s55 + $0x10e0] sm:$0xff]
        %v3300 = vld [vmem:[%s55 + $0x10e8] sm:$0xff]
        %v3301 = vld [vmem:[%s55 + $0x10f0] sm:$0xff]
        %v3302 = vld [vmem:[%s55 + $0x10f8] sm:$0xff]
        %v3303 = vld [vmem:[%s55 + $0x1100] sm:$0xff]
        %v3304 = vld [vmem:[%s55 + $0x1108] sm:$0xff]
        %v3305 = vld [vmem:[%s55 + $0x1110] sm:$0xff]
        %v3306 = vld [vmem:[%s55 + $0x1118] sm:$0xff]
        %v3307 = vld [vmem:[%s55 + $0x1120] sm:$0xff]
        %v3308 = vld [vmem:[%s55 + $0x1128] sm:$0xff]
        %v3309 = vld [vmem:[%s55 + $0x1130] sm:$0xff]
        %v3310 = vld [vmem:[%s55 + $0x1138] sm:$0xff]
        %v3311 = vld [vmem:[%s55 + $0x1140] sm:$0xff]
        %v3312 = vld [vmem:[%s55 + $0x1148] sm:$0xff]
        %v3313 = vld [vmem:[%s55 + $0x1150] sm:$0xff]
        %v3314 = vld [vmem:[%s55 + $0x1158] sm:$0xff]
        %v3315 = vld [vmem:[%s55 + $0x1160] sm:$0xff]
        %v3316 = vld [vmem:[%s55 + $0x1168] sm:$0xff]
        %v3317 = vld [vmem:[%s55 + $0x1170] sm:$0xff]
        %v3318 = vld [vmem:[%s55 + $0x1178] sm:$0xff]
        %v3319 = vld [vmem:[%s55 + $0x1180] sm:$0xff]
        %v3320 = vld [vmem:[%s55 + $0x1188] sm:$0xff]
        %v3321 = vld [vmem:[%s55 + $0x1190] sm:$0xff]
        %v3322 = vld [vmem:[%s55 + $0x1198] sm:$0xff]
        %v3323 = vld [vmem:[%s55 + $0x11a0] sm:$0xff]
        %v3324 = vld [vmem:[%s55 + $0x11a8] sm:$0xff]
        %v3325 = vld [vmem:[%s55 + $0x11b0] sm:$0xff]
        %v3326 = vld [vmem:[%s55 + $0x11b8] sm:$0xff]
        %v3327 = vld [vmem:[%s55 + $0x11c0] sm:$0xff]
        %v3328 = vld [vmem:[%s55 + $0x11c8] sm:$0xff]
        %v3329 = vld [vmem:[%s55 + $0x11d0] sm:$0xff]
        %v3330 = vld [vmem:[%s55 + $0x11d8] sm:$0xff]
        %v3331 = vld [vmem:[%s55 + $0x11e0] sm:$0xff]
        %v3332 = vld [vmem:[%s55 + $0x11e8] sm:$0xff]
        %v3333 = vld [vmem:[%s55 + $0x11f0] sm:$0xff]
        %v3334 = vld [vmem:[%s55 + $0x11f8] sm:$0xff]
        %v3335 = vld [vmem:[%s55 + $0x1200] sm:$0xff]
        %v3336 = vld [vmem:[%s55 + $0x1208] sm:$0xff]
        %v3337 = vld [vmem:[%s55 + $0x1210] sm:$0xff]
        %v3338 = vld [vmem:[%s55 + $0x1218] sm:$0xff]
        %v3339 = vld [vmem:[%s55 + $0x1220] sm:$0xff]
        %v3340 = vld [vmem:[%s55 + $0x1228] sm:$0xff]
        %v3341 = vld [vmem:[%s55 + $0x1230] sm:$0xff]
        %v3342 = vld [vmem:[%s55 + $0x1238] sm:$0xff]
        %v3343 = vld [vmem:[%s55 + $0x1240] sm:$0xff]
        %v3344 = vld [vmem:[%s55 + $0x1248] sm:$0xff]
        %v3345 = vld [vmem:[%s55 + $0x1250] sm:$0xff]
        %v3346 = vld [vmem:[%s55 + $0x1258] sm:$0xff]
        %v3347 = vld [vmem:[%s55 + $0x1260] sm:$0xff]
        %v3348 = vld [vmem:[%s55 + $0x1268] sm:$0xff]
        %v3349 = vld [vmem:[%s55 + $0x1270] sm:$0xff]
        %v3350 = vld [vmem:[%s55 + $0x1278] sm:$0xff]
        %v3351 = vld [vmem:[%s55 + $0x1280] sm:$0xff]
        %v3352 = vld [vmem:[%s55 + $0x1288] sm:$0xff]
        %v3353 = vld [vmem:[%s55 + $0x1290] sm:$0xff]
        %v3354 = vld [vmem:[%s55 + $0x1298] sm:$0xff]
        %v3355 = vld [vmem:[%s55 + $0x12a0] sm:$0xff]
        %v3356 = vld [vmem:[%s55 + $0x12a8] sm:$0xff]
        %v3357 = vld [vmem:[%s55 + $0x12b0] sm:$0xff]
        %v3358 = vld [vmem:[%s55 + $0x12b8] sm:$0xff]
        %v3359 = vld [vmem:[%s55 + $0x12c0] sm:$0xff]
        %v3360 = vld [vmem:[%s55 + $0x12c8] sm:$0xff]
        %v3361 = vld [vmem:[%s55 + $0x12d0] sm:$0xff]
        %v3362 = vld [vmem:[%s55 + $0x12d8] sm:$0xff]
        %v3363 = vld [vmem:[%s55 + $0x12e0] sm:$0xff]
        %v3364 = vld [vmem:[%s55 + $0x12e8] sm:$0xff]
        %v3365 = vld [vmem:[%s55 + $0x12f0] sm:$0xff]
        %v3366 = vld [vmem:[%s55 + $0x12f8] sm:$0xff]
        %v3367 = vld [vmem:[%s55 + $0x1300] sm:$0xff]
        %v3368 = vld [vmem:[%s55 + $0x1308] sm:$0xff]
        %v3369 = vld [vmem:[%s55 + $0x1310] sm:$0xff]
        %v3370 = vld [vmem:[%s55 + $0x1318] sm:$0xff]
        %v3371 = vld [vmem:[%s55 + $0x1320] sm:$0xff]
        %v3372 = vld [vmem:[%s55 + $0x1328] sm:$0xff]
        %v3373 = vld [vmem:[%s55 + $0x1330] sm:$0xff]
        %v3374 = vld [vmem:[%s55 + $0x1338] sm:$0xff]
        %v3375 = vld [vmem:[%s55 + $0x1340] sm:$0xff]
        %v3376 = vld [vmem:[%s55 + $0x1348] sm:$0xff]
        %v3377 = vld [vmem:[%s55 + $0x1350] sm:$0xff]
        %v3378 = vld [vmem:[%s55 + $0x1358] sm:$0xff]
        %v3379 = vld [vmem:[%s55 + $0x1360] sm:$0xff]
        %v3380 = vld [vmem:[%s55 + $0x1368] sm:$0xff]
        %v3381 = vld [vmem:[%s55 + $0x1370] sm:$0xff]
        %v3382 = vld [vmem:[%s55 + $0x1378] sm:$0xff]
        %v3383 = vld [vmem:[%s55 + $0x1380] sm:$0xff]
        %v3384 = vld [vmem:[%s55 + $0x1388] sm:$0xff]
        %v3385 = vld [vmem:[%s55 + $0x1390] sm:$0xff]
        %v3386 = vld [vmem:[%s55 + $0x1398] sm:$0xff]
        %v3387 = vld [vmem:[%s55 + $0x13a0] sm:$0xff]
        %v3388 = vld [vmem:[%s55 + $0x13a8] sm:$0xff]
        %v3389 = vld [vmem:[%s55 + $0x13b0] sm:$0xff]
        %v3390 = vld [vmem:[%s55 + $0x13b8] sm:$0xff]
        %v3391 = vld [vmem:[%s55 + $0x13c0] sm:$0xff]
        %v3392 = vld [vmem:[%s55 + $0x13c8] sm:$0xff]
        %v3393 = vld [vmem:[%s55 + $0x13d0] sm:$0xff]
        %v3394 = vld [vmem:[%s55 + $0x13d8] sm:$0xff]
        %v3395 = vld [vmem:[%s55 + $0x13e0] sm:$0xff]
        %v3396 = vld [vmem:[%s55 + $0x13e8] sm:$0xff]
        %v3397 = vld [vmem:[%s55 + $0x13f0] sm:$0xff]
        %v3398 = vld [vmem:[%s55 + $0x13f8] sm:$0xff]
        %v3399 = vld [vmem:[%s55 + $0x1400] sm:$0xff]
        %v3400 = vld [vmem:[%s55 + $0x1408] sm:$0xff]
        %v3401 = vld [vmem:[%s55 + $0x1410] sm:$0xff]
        %v3402 = vld [vmem:[%s55 + $0x1418] sm:$0xff]
        %v3403 = vld [vmem:[%s55 + $0x1420] sm:$0xff]
        %v3404 = vld [vmem:[%s55 + $0x1428] sm:$0xff]
        %v3405 = vld [vmem:[%s55 + $0x1430] sm:$0xff]
        %v3406 = vld [vmem:[%s55 + $0x1438] sm:$0xff]
        %v3407 = vld [vmem:[%s55 + $0x1440] sm:$0xff]
        %v3408 = vld [vmem:[%s55 + $0x1448] sm:$0xff]
        %v3409 = vld [vmem:[%s55 + $0x1450] sm:$0xff]
        %v3410 = vld [vmem:[%s55 + $0x1458] sm:$0xff]
        %v3411 = vld [vmem:[%s55 + $0x1460] sm:$0xff]
        %v3412 = vld [vmem:[%s55 + $0x1468] sm:$0xff]
        %v3413 = vld [vmem:[%s55 + $0x1470] sm:$0xff]
        %v3414 = vld [vmem:[%s55 + $0x1478] sm:$0xff]
        %v3415 = vld [vmem:[%s55 + $0x1480] sm:$0xff]
        %v3416 = vld [vmem:[%s55 + $0x1488] sm:$0xff]
        %v3417 = vld [vmem:[%s55 + $0x1490] sm:$0xff]
        %v3418 = vld [vmem:[%s55 + $0x1498] sm:$0xff]
        %v3419 = vld [vmem:[%s55 + $0x14a0] sm:$0xff]
        %v3420 = vld [vmem:[%s55 + $0x14a8] sm:$0xff]
        %v3421 = vld [vmem:[%s55 + $0x14b0] sm:$0xff]
        %v3422 = vld [vmem:[%s55 + $0x14b8] sm:$0xff]
        %v3423 = vld [vmem:[%s55 + $0x14c0] sm:$0xff]
        %v3424 = vld [vmem:[%s55 + $0x14c8] sm:$0xff]
        %v3425 = vld [vmem:[%s55 + $0x14d0] sm:$0xff]
        %v3426 = vld [vmem:[%s55 + $0x14d8] sm:$0xff]
        %v3427 = vld [vmem:[%s55 + $0x14e0] sm:$0xff]
        %v3428 = vld [vmem:[%s55 + $0x14e8] sm:$0xff]
        %v3429 = vld [vmem:[%s55 + $0x14f0] sm:$0xff]
        %v3430 = vld [vmem:[%s55 + $0x14f8] sm:$0xff]
        %v3431 = vld [vmem:[%s55 + $0x1500] sm:$0xff]
        %v3432 = vld [vmem:[%s55 + $0x1508] sm:$0xff]
        %v3433 = vld [vmem:[%s55 + $0x1510] sm:$0xff]
        %v3434 = vld [vmem:[%s55 + $0x1518] sm:$0xff]
        %v3435 = vld [vmem:[%s55 + $0x1520] sm:$0xff]
        %v3436 = vld [vmem:[%s55 + $0x1528] sm:$0xff]
        %v3437 = vld [vmem:[%s55 + $0x1530] sm:$0xff]
        %v3438 = vld [vmem:[%s55 + $0x1538] sm:$0xff]
        %v3439 = vld [vmem:[%s55 + $0x1540] sm:$0xff]
        %v3440 = vld [vmem:[%s55 + $0x1548] sm:$0xff]
        %v3441 = vld [vmem:[%s55 + $0x1550] sm:$0xff]
        %v3442 = vld [vmem:[%s55 + $0x1558] sm:$0xff]
        %v3443 = vld [vmem:[%s55 + $0x1560] sm:$0xff]
        %v3444 = vld [vmem:[%s55 + $0x1568] sm:$0xff]
        %v3445 = vld [vmem:[%s55 + $0x1570] sm:$0xff]
        %v3446 = vld [vmem:[%s55 + $0x1578] sm:$0xff]
        %v3447 = vld [vmem:[%s55 + $0x1580] sm:$0xff]
        %v3448 = vld [vmem:[%s55 + $0x1588] sm:$0xff]
        %v3449 = vld [vmem:[%s55 + $0x1590] sm:$0xff]
        %v3450 = vld [vmem:[%s55 + $0x1598] sm:$0xff]
        %v3451 = vld [vmem:[%s55 + $0x15a0] sm:$0xff]
        %v3452 = vld [vmem:[%s55 + $0x15a8] sm:$0xff]
        %v3453 = vld [vmem:[%s55 + $0x15b0] sm:$0xff]
        %v3454 = vld [vmem:[%s55 + $0x15b8] sm:$0xff]
        %v3455 = vld [vmem:[%s55 + $0x15c0] sm:$0xff]
        %v3456 = vld [vmem:[%s55 + $0x15c8] sm:$0xff]
        %v3457 = vld [vmem:[%s55 + $0x15d0] sm:$0xff]
        %v3458 = vld [vmem:[%s55 + $0x15d8] sm:$0xff]
        %v3459 = vld [vmem:[%s55 + $0x15e0] sm:$0xff]
        %v3460 = vld [vmem:[%s55 + $0x15e8] sm:$0xff]
        %v3461 = vld [vmem:[%s55 + $0x15f0] sm:$0xff]
        %v3462 = vld [vmem:[%s55 + $0x15f8] sm:$0xff]
        %v3463 = vld [vmem:[%s55 + $0x1600] sm:$0xff]
        %v3464 = vld [vmem:[%s55 + $0x1608] sm:$0xff]
        %v3465 = vld [vmem:[%s55 + $0x1610] sm:$0xff]
        %v3466 = vld [vmem:[%s55 + $0x1618] sm:$0xff]
        %v3467 = vld [vmem:[%s55 + $0x1620] sm:$0xff]
        %v3468 = vld [vmem:[%s55 + $0x1628] sm:$0xff]
        %v3469 = vld [vmem:[%s55 + $0x1630] sm:$0xff]
        %v3470 = vld [vmem:[%s55 + $0x1638] sm:$0xff]
        %v3471 = vld [vmem:[%s55 + $0x1640] sm:$0xff]
        %v3472 = vld [vmem:[%s55 + $0x1648] sm:$0xff]
        %v3473 = vld [vmem:[%s55 + $0x1650] sm:$0xff]
        %v3474 = vld [vmem:[%s55 + $0x1658] sm:$0xff]
        %v3475 = vld [vmem:[%s55 + $0x1660] sm:$0xff]
        %v3476 = vld [vmem:[%s55 + $0x1668] sm:$0xff]
        %v3477 = vld [vmem:[%s55 + $0x1670] sm:$0xff]
        %v3478 = vld [vmem:[%s55 + $0x1678] sm:$0xff]
        %v3479 = vld [vmem:[%s55 + $0x1680] sm:$0xff]
        %v3480 = vld [vmem:[%s55 + $0x1688] sm:$0xff]
        %v3481 = vld [vmem:[%s55 + $0x1690] sm:$0xff]
        %v3482 = vld [vmem:[%s55 + $0x1698] sm:$0xff]
        %v3483 = vld [vmem:[%s55 + $0x16a0] sm:$0xff]
        %v3484 = vld [vmem:[%s55 + $0x16a8] sm:$0xff]
        %v3485 = vld [vmem:[%s55 + $0x16b0] sm:$0xff]
        %v3486 = vld [vmem:[%s55 + $0x16b8] sm:$0xff]
        %v3487 = vld [vmem:[%s55 + $0x16c0] sm:$0xff]
        %v3488 = vld [vmem:[%s55 + $0x16c8] sm:$0xff]
        %v3489 = vld [vmem:[%s55 + $0x16d0] sm:$0xff]
        %v3490 = vld [vmem:[%s55 + $0x16d8] sm:$0xff]
        %v3491 = vld [vmem:[%s55 + $0x16e0] sm:$0xff]
        %v3492 = vld [vmem:[%s55 + $0x16e8] sm:$0xff]
        %v3493 = vld [vmem:[%s55 + $0x16f0] sm:$0xff]
        %v3494 = vld [vmem:[%s55 + $0x16f8] sm:$0xff]
        %v3495 = vld [vmem:[%s55 + $0x1700] sm:$0xff]
        %v3496 = vld [vmem:[%s55 + $0x1708] sm:$0xff]
        %v3497 = vld [vmem:[%s55 + $0x1710] sm:$0xff]
        %v3498 = vld [vmem:[%s55 + $0x1718] sm:$0xff]
        %3500 = vset.pattern.permute.xlu0 0
        %3501 = vperm.xlu0 %3500, %v2479
        %v3502 = vpop.permute.xlu0 %3501
        %v3504 = vsel %vm1072, %v2750, 0
        %3506 = vmatprep.subr.mxu0 %v2760
        %3507 = vmatpush1.msra.mxu0 %v2759
        %3508 = vmatprep.subr.mxu0 %v2765
        %3509 = vmatpush1.msra.mxu0 %v2764
        %3510 = vmatprep.subr.mxu0 %v2770
        %3511 = vmatpush1.msra.mxu0 %v2769
        %3512 = vmatprep.subr.mxu0 %v2775
        %3513 = vmatpush1.msra.mxu0 %v2774
        %3514 = vmatprep.subr.mxu0 %v2780
        %3515 = vmatpush1.msra.mxu0 %v2779
        %3516 = vmatprep.subr.mxu0 %v2785
        %3517 = vmatpush1.msra.mxu0 %v2784
        %3518 = vmatprep.subr.mxu0 %v2790
        %3519 = vmatpush1.msra.mxu0 %v2789
        %3520 = vmatprep.subr.mxu0 %v2795
        %3521 = vmatpush1.msra.mxu0 %v2794
        %3522 = vmatprep.subr.mxu0 %v2800
        %3523 = vmatpush1.msra.mxu0 %v2799
        %3524 = vmatprep.subr.mxu0 %v2805
        %3525 = vmatpush1.msra.mxu0 %v2804
        %3526 = vmatprep.subr.mxu0 %v2810
        %3527 = vmatpush1.msra.mxu0 %v2809
        %3528 = vmatprep.subr.mxu0 %v2815
        %3529 = vmatpush1.msra.mxu0 %v2814
        %3530 = vmatprep.subr.mxu0 %v2820
        %3531 = vmatpush1.msra.mxu0 %v2819
        %3532 = vmatprep.subr.mxu0 %v2825
        %3533 = vmatpush1.msra.mxu0 %v2824
        %3534 = vmatprep.subr.mxu0 %v2830
        %3535 = vmatpush1.msra.mxu0 %v2829
        %3536 = vmatprep.subr.mxu0 %v2835
        %3537 = vmatpush1.msra.mxu0 %v2834
        %3538 = vmatprep.subr.mxu0 %v2840
        %3539 = vmatpush1.msra.mxu0 %v2839
        %3540 = vmatprep.subr.mxu0 %v2845
        %3541 = vmatpush1.msra.mxu0 %v2844
        %3542 = vmatprep.subr.mxu0 %v2850
        %3543 = vmatpush1.msra.mxu0 %v2849
        %3544 = vmatprep.subr.mxu0 %v2855
        %3545 = vmatpush1.msra.mxu0 %v2854
        %3546 = vmatprep.subr.mxu0 %v2860
        %3547 = vmatpush1.msra.mxu0 %v2859
        %3548 = vmatprep.subr.mxu0 %v2865
        %3549 = vmatpush1.msra.mxu0 %v2864
        %3550 = vmatprep.subr.mxu0 %v2870
        %3551 = vmatpush1.msra.mxu0 %v2869
        %3552 = vmatprep.subr.mxu0 %v2875
        %3553 = vmatpush1.msra.mxu0 %v2874
        %3554 = vmatprep.subr.mxu0 %v2880
        %3555 = vmatpush1.msra.mxu0 %v2879
        %3556 = vmatprep.subr.mxu0 %v2885
        %3557 = vmatpush1.msra.mxu0 %v2884
        %3558 = vmatprep.subr.mxu0 %v2890
        %3559 = vmatpush1.msra.mxu0 %v2889
        %3560 = vmatprep.subr.mxu0 %v2895
        %3561 = vmatpush1.msra.mxu0 %v2894
        %3562 = vmatprep.subr.mxu0 %v2900
        %3563 = vmatpush1.msra.mxu0 %v2899
        %3564 = vmatprep.subr.mxu0 %v2905
        %3565 = vmatpush1.msra.mxu0 %v2904
        %3566 = vmatprep.subr.mxu0 %v2910
        %3567 = vmatpush1.msra.mxu0 %v2909
        %3568 = vmatprep.subr.mxu0 %v2915
        %3569 = vmatpush1.msra.mxu0 %v2914
        %3570 = vmatprep.mubr.f32.mxu0 %v2752
        %3571 = vmatmul.mubr.f32.gmra.mrb[0].mxu0 %v2671
        %v3572 = vpop.f32.mrb[0].mxu0
        %v3573 = vadd.f32 %v3502, %v3572
        %v3574 = vpop.f32.mrb[0].mxu0
        %v3575 = vadd.f32 %v3502, %v3574
        %3576 = vdwg.mxu0
        %3577 = vmatprep.subr.mxu0 %v2920
        %3578 = vmatpush1.msra.mxu0 %v2919
        %3579 = vmatprep.subr.mxu0 %v2925
        %3580 = vmatpush1.msra.mxu0 %v2924
        %3581 = vmatprep.subr.mxu0 %v2930
        %3582 = vmatpush1.msra.mxu0 %v2929
        %3583 = vmatprep.subr.mxu0 %v2935
        %3584 = vmatpush1.msra.mxu0 %v2934
        %3585 = vmatprep.subr.mxu0 %v2940
        %3586 = vmatpush1.msra.mxu0 %v2939
        %3587 = vmatprep.subr.mxu0 %v2945
        %3588 = vmatpush1.msra.mxu0 %v2944
        %3589 = vmatprep.subr.mxu0 %v2950
        %3590 = vmatpush1.msra.mxu0 %v2949
        %3591 = vmatprep.subr.mxu0 %v2955
        %3592 = vmatpush1.msra.mxu0 %v2954
        %3593 = vmatprep.subr.mxu0 %v2960
        %3594 = vmatpush1.msra.mxu0 %v2959
        %3595 = vmatprep.subr.mxu0 %v2965
        %3596 = vmatpush1.msra.mxu0 %v2964
        %3597 = vmatprep.subr.mxu0 %v2970
        %3598 = vmatpush1.msra.mxu0 %v2969
        %3599 = vmatprep.subr.mxu0 %v2975
        %3600 = vmatpush1.msra.mxu0 %v2974
        %3601 = vmatprep.subr.mxu0 %v2980
        %3602 = vmatpush1.msra.mxu0 %v2979
        %3603 = vmatprep.subr.mxu0 %v2985
        %3604 = vmatpush1.msra.mxu0 %v2984
        %3605 = vmatprep.subr.mxu0 %v2990
        %3606 = vmatpush1.msra.mxu0 %v2989
        %3607 = vmatprep.subr.mxu0 %v2995
        %3608 = vmatpush1.msra.mxu0 %v2994
        %3609 = vmatprep.subr.mxu0 %v3000
        %3610 = vmatpush1.msra.mxu0 %v2999
        %3611 = vmatprep.subr.mxu0 %v3005
        %3612 = vmatpush1.msra.mxu0 %v3004
        %3613 = vmatprep.subr.mxu0 %v3010
        %3614 = vmatpush1.msra.mxu0 %v3009
        %3615 = vmatprep.subr.mxu0 %v3015
        %3616 = vmatpush1.msra.mxu0 %v3014
        %3617 = vmatprep.subr.mxu0 %v3020
        %3618 = vmatpush1.msra.mxu0 %v3019
        %3619 = vmatprep.subr.mxu0 %v3025
        %3620 = vmatpush1.msra.mxu0 %v3024
        %3621 = vmatprep.subr.mxu0 %v3030
        %3622 = vmatpush1.msra.mxu0 %v3029
        %3623 = vmatprep.subr.mxu0 %v3035
        %3624 = vmatpush1.msra.mxu0 %v3034
        %3625 = vmatprep.subr.mxu0 %v3040
        %3626 = vmatpush1.msra.mxu0 %v3039
        %3627 = vmatprep.subr.mxu0 %v3045
        %3628 = vmatpush1.msra.mxu0 %v3044
        %3629 = vmatprep.subr.mxu0 %v3050
        %3630 = vmatpush1.msra.mxu0 %v3049
        %3631 = vmatprep.subr.mxu0 %v3055
        %3632 = vmatpush1.msra.mxu0 %v3054
        %3633 = vmatprep.subr.mxu0 %v3060
        %3634 = vmatpush1.msra.mxu0 %v3059
        %3635 = vmatprep.subr.mxu0 %v3065
        %3636 = vmatpush1.msra.mxu0 %v3064
        %3637 = vmatprep.subr.mxu0 %v3070
        %3638 = vmatpush1.msra.mxu0 %v3069
        %3639 = vmatprep.subr.mxu0 %v3075
        %3640 = vmatpush1.msra.mxu0 %v3074
        %3641 = vmatprep.mubr.f32.mxu0 %v2754
        %3642 = vmatmul.mubr.f32.gmra.mrb[0].mxu0 %v2753
        %v3643 = vpop.f32.mrb[0].mxu0
        %v3644 = vadd.f32 %v3573, %v3643
        %v3645 = vpop.f32.mrb[0].mxu0
        %v3646 = vadd.f32 %v3575, %v3645
        %3647 = vdwg.mxu0
        %3648 = vmatprep.subr.mxu0 %v3080
        %3649 = vmatpush1.msra.mxu0 %v3079
        %3650 = vmatprep.subr.mxu0 %v3085
        %3651 = vmatpush1.msra.mxu0 %v3084
        %3652 = vmatprep.subr.mxu0 %v3090
        %3653 = vmatpush1.msra.mxu0 %v3089
        %3654 = vmatprep.subr.mxu0 %v3095
        %3655 = vmatpush1.msra.mxu0 %v3094
        %3656 = vmatprep.subr.mxu0 %v3100
        %3657 = vmatpush1.msra.mxu0 %v3099
        %3658 = vmatprep.subr.mxu0 %v3105
        %3659 = vmatpush1.msra.mxu0 %v3104
        %3660 = vmatprep.subr.mxu0 %v3110
        %3661 = vmatpush1.msra.mxu0 %v3109
        %3662 = vmatprep.subr.mxu0 %v3115
        %3663 = vmatpush1.msra.mxu0 %v3114
        %3664 = vmatprep.subr.mxu0 %v3120
        %3665 = vmatpush1.msra.mxu0 %v3119
        %3666 = vmatprep.subr.mxu0 %v3125
        %3667 = vmatpush1.msra.mxu0 %v3124
        %3668 = vmatprep.subr.mxu0 %v3130
        %3669 = vmatpush1.msra.mxu0 %v3129
        %3670 = vmatprep.subr.mxu0 %v3135
        %3671 = vmatpush1.msra.mxu0 %v3134
        %3672 = vmatprep.subr.mxu0 %v3140
        %3673 = vmatpush1.msra.mxu0 %v3139
        %3674 = vmatprep.subr.mxu0 %v3145
        %3675 = vmatpush1.msra.mxu0 %v3144
        %3676 = vmatprep.subr.mxu0 %v3150
        %3677 = vmatpush1.msra.mxu0 %v3149
        %3678 = vmatprep.subr.mxu0 %v3155
        %3679 = vmatpush1.msra.mxu0 %v3154
        %3680 = vmatprep.subr.mxu0 %v3160
        %3681 = vmatpush1.msra.mxu0 %v3159
        %3682 = vmatprep.subr.mxu0 %v3165
        %3683 = vmatpush1.msra.mxu0 %v3164
        %3684 = vmatprep.subr.mxu0 %v3170
        %3685 = vmatpush1.msra.mxu0 %v3169
        %3686 = vmatprep.subr.mxu0 %v3175
        %3687 = vmatpush1.msra.mxu0 %v3174
        %3688 = vmatprep.subr.mxu0 %v3180
        %3689 = vmatpush1.msra.mxu0 %v3179
        %3690 = vmatprep.subr.mxu0 %v3185
        %3691 = vmatpush1.msra.mxu0 %v3184
        %3692 = vmatprep.subr.mxu0 %v3190
        %3693 = vmatpush1.msra.mxu0 %v3189
        %3694 = vmatprep.subr.mxu0 %v3195
        %3695 = vmatpush1.msra.mxu0 %v3194
        %3696 = vmatprep.subr.mxu0 %v3200
        %3697 = vmatpush1.msra.mxu0 %v3199
        %3698 = vmatprep.subr.mxu0 %v3205
        %3699 = vmatpush1.msra.mxu0 %v3204
        %3700 = vmatprep.subr.mxu0 %v3210
        %3701 = vmatpush1.msra.mxu0 %v3209
        %3702 = vmatprep.subr.mxu0 %v3215
        %3703 = vmatpush1.msra.mxu0 %v3214
        %3704 = vmatprep.subr.mxu0 %v3220
        %3705 = vmatpush1.msra.mxu0 %v3219
        %3706 = vmatprep.subr.mxu0 %v3225
        %3707 = vmatpush1.msra.mxu0 %v3224
        %3708 = vmatprep.subr.mxu0 %v3230
        %3709 = vmatpush1.msra.mxu0 %v3229
        %3710 = vmatprep.subr.mxu0 %v3235
        %3711 = vmatpush1.msra.mxu0 %v3234
        %3712 = vmatprep.mubr.f32.mxu0 %v2756
        %3713 = vmatmul.mubr.f32.gmra.mrb[0].mxu0 %v2755
        %v3714 = vpop.f32.mrb[0].mxu0
        %v3715 = vadd.f32 %v3644, %v3714
        %v3716 = vpop.f32.mrb[0].mxu0
        %v3717 = vadd.f32 %v3646, %v3716
        %3718 = vdwg.mxu0
        %3719 = vmatprep.subr.mxu0 %v3240
        %3720 = vmatpush1.msra.mxu0 %v3239
        %3721 = vmatprep.subr.mxu0 %v3245
        %3722 = vmatpush1.msra.mxu0 %v3244
        %3723 = vmatprep.subr.mxu0 %v3250
        %3724 = vmatpush1.msra.mxu0 %v3249
        %3725 = vmatprep.subr.mxu0 %v3255
        %3726 = vmatpush1.msra.mxu0 %v3254
        %3727 = vmatprep.subr.mxu0 %v3260
        %3728 = vmatpush1.msra.mxu0 %v3259
        %3729 = vmatprep.subr.mxu0 %v3265
        %3730 = vmatpush1.msra.mxu0 %v3264
        %3731 = vmatprep.subr.mxu0 %v3270
        %3732 = vmatpush1.msra.mxu0 %v3269
        %3733 = vmatprep.subr.mxu0 %v3275
        %3734 = vmatpush1.msra.mxu0 %v3274
        %3735 = vmatprep.subr.mxu0 %v3280
        %3736 = vmatpush1.msra.mxu0 %v3279
        %3737 = vmatprep.subr.mxu0 %v3285
        %3738 = vmatpush1.msra.mxu0 %v3284
        %3739 = vmatprep.subr.mxu0 %v3290
        %3740 = vmatpush1.msra.mxu0 %v3289
        %3741 = vmatprep.subr.mxu0 %v3295
        %3742 = vmatpush1.msra.mxu0 %v3294
        %3743 = vmatprep.subr.mxu0 %v3300
        %3744 = vmatpush1.msra.mxu0 %v3299
        %3745 = vmatprep.subr.mxu0 %v3305
        %3746 = vmatpush1.msra.mxu0 %v3304
        %3747 = vmatprep.subr.mxu0 %v3310
        %3748 = vmatpush1.msra.mxu0 %v3309
        %3749 = vmatprep.subr.mxu0 %v3315
        %3750 = vmatpush1.msra.mxu0 %v3314
        %3751 = vmatprep.subr.mxu0 %v3320
        %3752 = vmatpush1.msra.mxu0 %v3319
        %3753 = vmatprep.subr.mxu0 %v3325
        %3754 = vmatpush1.msra.mxu0 %v3324
        %3755 = vmatprep.subr.mxu0 %v3330
        %3756 = vmatpush1.msra.mxu0 %v3329
        %3757 = vmatprep.subr.mxu0 %v3335
        %3758 = vmatpush1.msra.mxu0 %v3334
        %3759 = vmatprep.subr.mxu0 %v3340
        %3760 = vmatpush1.msra.mxu0 %v3339
        %3761 = vmatprep.subr.mxu0 %v3345
        %3762 = vmatpush1.msra.mxu0 %v3344
        %3763 = vmatprep.subr.mxu0 %v3350
        %3764 = vmatpush1.msra.mxu0 %v3349
        %3765 = vmatprep.subr.mxu0 %v3355
        %3766 = vmatpush1.msra.mxu0 %v3354
        %3767 = vmatprep.subr.mxu0 %v3360
        %3768 = vmatpush1.msra.mxu0 %v3359
        %3769 = vmatprep.subr.mxu0 %v3365
        %3770 = vmatpush1.msra.mxu0 %v3364
        %3771 = vmatprep.subr.mxu0 %v3370
        %3772 = vmatpush1.msra.mxu0 %v3369
        %3773 = vmatprep.subr.mxu0 %v3375
        %3774 = vmatpush1.msra.mxu0 %v3374
        %3775 = vmatprep.subr.mxu0 %v3380
        %3776 = vmatpush1.msra.mxu0 %v3379
        %3777 = vmatprep.subr.mxu0 %v3385
        %3778 = vmatpush1.msra.mxu0 %v3384
        %3779 = vmatprep.subr.mxu0 %v3390
        %3780 = vmatpush1.msra.mxu0 %v3389
        %3781 = vmatprep.subr.mxu0 %v3395
        %3782 = vmatpush1.msra.mxu0 %v3394
        %3783 = vmatprep.mubr.f32.mxu0 %v2739
        %3784 = vmatmul.mubr.f32.gmra.mrb[0].mxu0 %v2757
        %v3785 = vpop.f32.mrb[0].mxu0
        %v3786 = vadd.f32 %v3715, %v3785
        %v3787 = vpop.f32.mrb[0].mxu0
        %v3788 = vadd.f32 %v3717, %v3787
        %3789 = vdwg.mxu0
        %3790 = vmatprep.subr.mxu0 %v3400
        %3791 = vmatpush1.msra.mxu0 %v3399
        %3792 = vmatprep.subr.mxu0 %v3405
        %3793 = vmatpush1.msra.mxu0 %v3404
        %3794 = vmatprep.subr.mxu0 %v3410
        %3795 = vmatpush1.msra.mxu0 %v3409
        %3796 = vmatprep.subr.mxu0 %v3415
        %3797 = vmatpush1.msra.mxu0 %v3414
        %3798 = vmatprep.subr.mxu0 %v3420
        %3799 = vmatpush1.msra.mxu0 %v3419
        %3800 = vmatprep.subr.mxu0 %v3425
        %3801 = vmatpush1.msra.mxu0 %v3424
        %3802 = vmatprep.subr.mxu0 %v3430
        %3803 = vmatpush1.msra.mxu0 %v3429
        %3804 = vmatprep.subr.mxu0 %v3435
        %3805 = vmatpush1.msra.mxu0 %v3434
        %3806 = vmatprep.subr.mxu0 %v3440
        %3807 = vmatpush1.msra.mxu0 %v3439
        %3808 = vmatprep.subr.mxu0 %v3445
        %3809 = vmatpush1.msra.mxu0 %v3444
        %3810 = vmatprep.subr.mxu0 %v3450
        %3811 = vmatpush1.msra.mxu0 %v3449
        %3812 = vmatprep.subr.mxu0 %v3455
        %3813 = vmatpush1.msra.mxu0 %v3454
        %3814 = vmatprep.subr.mxu0 %v3460
        %3815 = vmatpush1.msra.mxu0 %v3459
        %3816 = vmatprep.subr.mxu0 %v3465
        %3817 = vmatpush1.msra.mxu0 %v3464
        %3818 = vmatprep.subr.mxu0 %v3470
        %3819 = vmatpush1.msra.mxu0 %v3469
        %3820 = vmatprep.subr.mxu0 %v3475
        %3821 = vmatpush1.msra.mxu0 %v3474
        %3822 = vmatprep.subr.mxu0 %v3480
        %3823 = vmatpush1.msra.mxu0 %v3479
        %3824 = vmatprep.subr.mxu0 %v3485
        %3825 = vmatpush1.msra.mxu0 %v3484
        %3826 = vmatprep.subr.mxu0 %v3490
        %3827 = vmatpush1.msra.mxu0 %v3489
        %3828 = vmatprep.subr.mxu0 %v3495
        %3829 = vmatpush1.msra.mxu0 %v3494
        %3830 = vmatprep.subr.mxu0 0.0
        %3831 = vmatpush1.msra.mxu0 0.0
        %3832 = vmatprep.subr.mxu0 0.0
        %3833 = vmatpush1.msra.mxu0 0.0
        %3834 = vmatprep.subr.mxu0 0.0
        %3835 = vmatpush1.msra.mxu0 0.0
        %3836 = vmatprep.subr.mxu0 0.0
        %3837 = vmatpush1.msra.mxu0 0.0
        %3838 = vmatprep.subr.mxu0 0.0
        %3839 = vmatpush1.msra.mxu0 0.0
        %3840 = vmatprep.subr.mxu0 0.0
        %3841 = vmatpush1.msra.mxu0 0.0
        %3842 = vmatprep.subr.mxu0 0.0
        %3843 = vmatpush1.msra.mxu0 0.0
        %3844 = vmatprep.subr.mxu0 0.0
        %3845 = vmatpush1.msra.mxu0 0.0
        %3846 = vmatprep.subr.mxu0 0.0
        %3847 = vmatpush1.msra.mxu0 0.0
        %3848 = vmatprep.subr.mxu0 0.0
        %3849 = vmatpush1.msra.mxu0 0.0
        %3850 = vmatprep.subr.mxu0 0.0
        %3851 = vmatpush1.msra.mxu0 0.0
        %3852 = vmatprep.subr.mxu0 0.0
        %3853 = vmatpush1.msra.mxu0 0.0
        %3854 = vmatprep.mubr.f32.mxu0 %v3504
        %3855 = vmatmul.mubr.f32.gmra.mrb[0].mxu0 %v2758
        %v3856 = vpop.f32.mrb[0].mxu0
        %v3857 = vadd.f32 %v3786, %v3856
        %v3858 = vpop.f32.mrb[0].mxu0
        %v3859 = vadd.f32 %v3788, %v3858
        %3860 = vdwg.mxu0
        %3861 = vmatprep.subr.mxu0 %v2762
        %3862 = vmatpush1.msra.mxu0 %v2761
        %3863 = vmatprep.subr.mxu0 %v2767
        %3864 = vmatpush1.msra.mxu0 %v2766
        %3865 = vmatprep.subr.mxu0 %v2772
        %3866 = vmatpush1.msra.mxu0 %v2771
        %3867 = vmatprep.subr.mxu0 %v2777
        %3868 = vmatpush1.msra.mxu0 %v2776
        %3869 = vmatprep.subr.mxu0 %v2782
        %3870 = vmatpush1.msra.mxu0 %v2781
        %3871 = vmatprep.subr.mxu0 %v2787
        %3872 = vmatpush1.msra.mxu0 %v2786
        %3873 = vmatprep.subr.mxu0 %v2792
        %3874 = vmatpush1.msra.mxu0 %v2791
        %3875 = vmatprep.subr.mxu0 %v2797
        %3876 = vmatpush1.msra.mxu0 %v2796
        %3877 = vmatprep.subr.mxu0 %v2802
        %3878 = vmatpush1.msra.mxu0 %v2801
        %3879 = vmatprep.subr.mxu0 %v2807
        %3880 = vmatpush1.msra.mxu0 %v2806
        %3881 = vmatprep.subr.mxu0 %v2812
        %3882 = vmatpush1.msra.mxu0 %v2811
        %3883 = vmatprep.subr.mxu0 %v2817
        %3884 = vmatpush1.msra.mxu0 %v2816
        %3885 = vmatprep.subr.mxu0 %v2822
        %3886 = vmatpush1.msra.mxu0 %v2821
        %3887 = vmatprep.subr.mxu0 %v2827
        %3888 = vmatpush1.msra.mxu0 %v2826
        %3889 = vmatprep.subr.mxu0 %v2832
        %3890 = vmatpush1.msra.mxu0 %v2831
        %3891 = vmatprep.subr.mxu0 %v2837
        %3892 = vmatpush1.msra.mxu0 %v2836
        %3893 = vmatprep.subr.mxu0 %v2842
        %3894 = vmatpush1.msra.mxu0 %v2841
        %3895 = vmatprep.subr.mxu0 %v2847
        %3896 = vmatpush1.msra.mxu0 %v2846
        %3897 = vmatprep.subr.mxu0 %v2852
        %3898 = vmatpush1.msra.mxu0 %v2851
        %3899 = vmatprep.subr.mxu0 %v2857
        %3900 = vmatpush1.msra.mxu0 %v2856
        %3901 = vmatprep.subr.mxu0 %v2862
        %3902 = vmatpush1.msra.mxu0 %v2861
        %3903 = vmatprep.subr.mxu0 %v2867
        %3904 = vmatpush1.msra.mxu0 %v2866
        %3905 = vmatprep.subr.mxu0 %v2872
        %3906 = vmatpush1.msra.mxu0 %v2871
        %3907 = vmatprep.subr.mxu0 %v2877
        %3908 = vmatpush1.msra.mxu0 %v2876
        %3909 = vmatprep.subr.mxu0 %v2882
        %3910 = vmatpush1.msra.mxu0 %v2881
        %3911 = vmatprep.subr.mxu0 %v2887
        %3912 = vmatpush1.msra.mxu0 %v2886
        %3913 = vmatprep.subr.mxu0 %v2892
        %3914 = vmatpush1.msra.mxu0 %v2891
        %3915 = vmatprep.subr.mxu0 %v2897
        %3916 = vmatpush1.msra.mxu0 %v2896
        %3917 = vmatprep.subr.mxu0 %v2902
        %3918 = vmatpush1.msra.mxu0 %v2901
        %3919 = vmatprep.subr.mxu0 %v2907
        %3920 = vmatpush1.msra.mxu0 %v2906
        %3921 = vmatprep.subr.mxu0 %v2912
        %3922 = vmatpush1.msra.mxu0 %v2911
        %3923 = vmatprep.subr.mxu0 %v2917
        %3924 = vmatpush1.msra.mxu0 %v2916
        %3925 = vmatprep.mubr.f32.mxu0 %v2752
        %3926 = vmatmul.mubr.f32.gmra.mrb[0].mxu0 %v2671
        %v3927 = vpop.f32.mrb[0].mxu0
        %v3928 = vadd.f32 %v3502, %v3927
        %v3929 = vpop.f32.mrb[0].mxu0
        %v3930 = vadd.f32 %v3502, %v3929
        %3931 = vdwg.mxu0
        %3932 = vmatprep.subr.mxu0 %v2922
        %3933 = vmatpush1.msra.mxu0 %v2921
        %3934 = vmatprep.subr.mxu0 %v2927
        %3935 = vmatpush1.msra.mxu0 %v2926
        %3936 = vmatprep.subr.mxu0 %v2932
        %3937 = vmatpush1.msra.mxu0 %v2931
        %3938 = vmatprep.subr.mxu0 %v2937
        %3939 = vmatpush1.msra.mxu0 %v2936
        %3940 = vmatprep.subr.mxu0 %v2942
        %3941 = vmatpush1.msra.mxu0 %v2941
        %3942 = vmatprep.subr.mxu0 %v2947
        %3943 = vmatpush1.msra.mxu0 %v2946
        %3944 = vmatprep.subr.mxu0 %v2952
        %3945 = vmatpush1.msra.mxu0 %v2951
        %3946 = vmatprep.subr.mxu0 %v2957
        %3947 = vmatpush1.msra.mxu0 %v2956
        %3948 = vmatprep.subr.mxu0 %v2962
        %3949 = vmatpush1.msra.mxu0 %v2961
        %3950 = vmatprep.subr.mxu0 %v2967
        %3951 = vmatpush1.msra.mxu0 %v2966
        %3952 = vmatprep.subr.mxu0 %v2972
        %3953 = vmatpush1.msra.mxu0 %v2971
        %3954 = vmatprep.subr.mxu0 %v2977
        %3955 = vmatpush1.msra.mxu0 %v2976
        %3956 = vmatprep.subr.mxu0 %v2982
        %3957 = vmatpush1.msra.mxu0 %v2981
        %3958 = vmatprep.subr.mxu0 %v2987
        %3959 = vmatpush1.msra.mxu0 %v2986
        %3960 = vmatprep.subr.mxu0 %v2992
        %3961 = vmatpush1.msra.mxu0 %v2991
        %3962 = vmatprep.subr.mxu0 %v2997
        %3963 = vmatpush1.msra.mxu0 %v2996
        %3964 = vmatprep.subr.mxu0 %v3002
        %3965 = vmatpush1.msra.mxu0 %v3001
        %3966 = vmatprep.subr.mxu0 %v3007
        %3967 = vmatpush1.msra.mxu0 %v3006
        %3968 = vmatprep.subr.mxu0 %v3012
        %3969 = vmatpush1.msra.mxu0 %v3011
        %3970 = vmatprep.subr.mxu0 %v3017
        %3971 = vmatpush1.msra.mxu0 %v3016
        %3972 = vmatprep.subr.mxu0 %v3022
        %3973 = vmatpush1.msra.mxu0 %v3021
        %3974 = vmatprep.subr.mxu0 %v3027
        %3975 = vmatpush1.msra.mxu0 %v3026
        %3976 = vmatprep.subr.mxu0 %v3032
        %3977 = vmatpush1.msra.mxu0 %v3031
        %3978 = vmatprep.subr.mxu0 %v3037
        %3979 = vmatpush1.msra.mxu0 %v3036
        %3980 = vmatprep.subr.mxu0 %v3042
        %3981 = vmatpush1.msra.mxu0 %v3041
        %3982 = vmatprep.subr.mxu0 %v3047
        %3983 = vmatpush1.msra.mxu0 %v3046
        %3984 = vmatprep.subr.mxu0 %v3052
        %3985 = vmatpush1.msra.mxu0 %v3051
        %3986 = vmatprep.subr.mxu0 %v3057
        %3987 = vmatpush1.msra.mxu0 %v3056
        %3988 = vmatprep.subr.mxu0 %v3062
        %3989 = vmatpush1.msra.mxu0 %v3061
        %3990 = vmatprep.subr.mxu0 %v3067
        %3991 = vmatpush1.msra.mxu0 %v3066
        %3992 = vmatprep.subr.mxu0 %v3072
        %3993 = vmatpush1.msra.mxu0 %v3071
        %3994 = vmatprep.subr.mxu0 %v3077
        %3995 = vmatpush1.msra.mxu0 %v3076
        %3996 = vmatprep.mubr.f32.mxu0 %v2754
        %3997 = vmatmul.mubr.f32.gmra.mrb[0].mxu0 %v2753
        %v3998 = vpop.f32.mrb[0].mxu0
        %v3999 = vadd.f32 %v3928, %v3998
        %v4000 = vpop.f32.mrb[0].mxu0
        %v4001 = vadd.f32 %v3930, %v4000
        %4002 = vdwg.mxu0
        %4003 = vmatprep.subr.mxu0 %v3082
        %4004 = vmatpush1.msra.mxu0 %v3081
        %4005 = vmatprep.subr.mxu0 %v3087
        %4006 = vmatpush1.msra.mxu0 %v3086
        %4007 = vmatprep.subr.mxu0 %v3092
        %4008 = vmatpush1.msra.mxu0 %v3091
        %4009 = vmatprep.subr.mxu0 %v3097
        %4010 = vmatpush1.msra.mxu0 %v3096
        %4011 = vmatprep.subr.mxu0 %v3102
        %4012 = vmatpush1.msra.mxu0 %v3101
        %4013 = vmatprep.subr.mxu0 %v3107
        %4014 = vmatpush1.msra.mxu0 %v3106
        %4015 = vmatprep.subr.mxu0 %v3112
        %4016 = vmatpush1.msra.mxu0 %v3111
        %4017 = vmatprep.subr.mxu0 %v3117
        %4018 = vmatpush1.msra.mxu0 %v3116
        %4019 = vmatprep.subr.mxu0 %v3122
        %4020 = vmatpush1.msra.mxu0 %v3121
        %4021 = vmatprep.subr.mxu0 %v3127
        %4022 = vmatpush1.msra.mxu0 %v3126
        %4023 = vmatprep.subr.mxu0 %v3132
        %4024 = vmatpush1.msra.mxu0 %v3131
        %4025 = vmatprep.subr.mxu0 %v3137
        %4026 = vmatpush1.msra.mxu0 %v3136
        %4027 = vmatprep.subr.mxu0 %v3142
        %4028 = vmatpush1.msra.mxu0 %v3141
        %4029 = vmatprep.subr.mxu0 %v3147
        %4030 = vmatpush1.msra.mxu0 %v3146
        %4031 = vmatprep.subr.mxu0 %v3152
        %4032 = vmatpush1.msra.mxu0 %v3151
        %4033 = vmatprep.subr.mxu0 %v3157
        %4034 = vmatpush1.msra.mxu0 %v3156
        %4035 = vmatprep.subr.mxu0 %v3162
        %4036 = vmatpush1.msra.mxu0 %v3161
        %4037 = vmatprep.subr.mxu0 %v3167
        %4038 = vmatpush1.msra.mxu0 %v3166
        %4039 = vmatprep.subr.mxu0 %v3172
        %4040 = vmatpush1.msra.mxu0 %v3171
        %4041 = vmatprep.subr.mxu0 %v3177
        %4042 = vmatpush1.msra.mxu0 %v3176
        %4043 = vmatprep.subr.mxu0 %v3182
        %4044 = vmatpush1.msra.mxu0 %v3181
        %4045 = vmatprep.subr.mxu0 %v3187
        %4046 = vmatpush1.msra.mxu0 %v3186
        %4047 = vmatprep.subr.mxu0 %v3192
        %4048 = vmatpush1.msra.mxu0 %v3191
        %4049 = vmatprep.subr.mxu0 %v3197
        %4050 = vmatpush1.msra.mxu0 %v3196
        %4051 = vmatprep.subr.mxu0 %v3202
        %4052 = vmatpush1.msra.mxu0 %v3201
        %4053 = vmatprep.subr.mxu0 %v3207
        %4054 = vmatpush1.msra.mxu0 %v3206
        %4055 = vmatprep.subr.mxu0 %v3212
        %4056 = vmatpush1.msra.mxu0 %v3211
        %4057 = vmatprep.subr.mxu0 %v3217
        %4058 = vmatpush1.msra.mxu0 %v3216
        %4059 = vmatprep.subr.mxu0 %v3222
        %4060 = vmatpush1.msra.mxu0 %v3221
        %4061 = vmatprep.subr.mxu0 %v3227
        %4062 = vmatpush1.msra.mxu0 %v3226
        %4063 = vmatprep.subr.mxu0 %v3232
        %4064 = vmatpush1.msra.mxu0 %v3231
        %4065 = vmatprep.subr.mxu0 %v3237
        %4066 = vmatpush1.msra.mxu0 %v3236
        %4067 = vmatprep.mubr.f32.mxu0 %v2756
        %4068 = vmatmul.mubr.f32.gmra.mrb[0].mxu0 %v2755
        %v4069 = vpop.f32.mrb[0].mxu0
        %v4070 = vadd.f32 %v3999, %v4069
        %v4071 = vpop.f32.mrb[0].mxu0
        %v4072 = vadd.f32 %v4001, %v4071
        %4073 = vdwg.mxu0
        %4074 = vmatprep.subr.mxu0 %v3242
        %4075 = vmatpush1.msra.mxu0 %v3241
        %4076 = vmatprep.subr.mxu0 %v3247
        %4077 = vmatpush1.msra.mxu0 %v3246
        %4078 = vmatprep.subr.mxu0 %v3252
        %4079 = vmatpush1.msra.mxu0 %v3251
        %4080 = vmatprep.subr.mxu0 %v3257
        %4081 = vmatpush1.msra.mxu0 %v3256
        %4082 = vmatprep.subr.mxu0 %v3262
        %4083 = vmatpush1.msra.mxu0 %v3261
        %4084 = vmatprep.subr.mxu0 %v3267
        %4085 = vmatpush1.msra.mxu0 %v3266
        %4086 = vmatprep.subr.mxu0 %v3272
        %4087 = vmatpush1.msra.mxu0 %v3271
        %4088 = vmatprep.subr.mxu0 %v3277
        %4089 = vmatpush1.msra.mxu0 %v3276
        %4090 = vmatprep.subr.mxu0 %v3282
        %4091 = vmatpush1.msra.mxu0 %v3281
        %4092 = vmatprep.subr.mxu0 %v3287
        %4093 = vmatpush1.msra.mxu0 %v3286
        %4094 = vmatprep.subr.mxu0 %v3292
        %4095 = vmatpush1.msra.mxu0 %v3291
        %4096 = vmatprep.subr.mxu0 %v3297
        %4097 = vmatpush1.msra.mxu0 %v3296
        %4098 = vmatprep.subr.mxu0 %v3302
        %4099 = vmatpush1.msra.mxu0 %v3301
        %4100 = vmatprep.subr.mxu0 %v3307
        %4101 = vmatpush1.msra.mxu0 %v3306
        %4102 = vmatprep.subr.mxu0 %v3312
        %4103 = vmatpush1.msra.mxu0 %v3311
        %4104 = vmatprep.subr.mxu0 %v3317
        %4105 = vmatpush1.msra.mxu0 %v3316
        %4106 = vmatprep.subr.mxu0 %v3322
        %4107 = vmatpush1.msra.mxu0 %v3321
        %4108 = vmatprep.subr.mxu0 %v3327
        %4109 = vmatpush1.msra.mxu0 %v3326
        %4110 = vmatprep.subr.mxu0 %v3332
        %4111 = vmatpush1.msra.mxu0 %v3331
        %4112 = vmatprep.subr.mxu0 %v3337
        %4113 = vmatpush1.msra.mxu0 %v3336
        %4114 = vmatprep.subr.mxu0 %v3342
        %4115 = vmatpush1.msra.mxu0 %v3341
        %4116 = vmatprep.subr.mxu0 %v3347
        %4117 = vmatpush1.msra.mxu0 %v3346
        %4118 = vmatprep.subr.mxu0 %v3352
        %4119 = vmatpush1.msra.mxu0 %v3351
        %4120 = vmatprep.subr.mxu0 %v3357
        %4121 = vmatpush1.msra.mxu0 %v3356
        %4122 = vmatprep.subr.mxu0 %v3362
        %4123 = vmatpush1.msra.mxu0 %v3361
        %4124 = vmatprep.subr.mxu0 %v3367
        %4125 = vmatpush1.msra.mxu0 %v3366
        %4126 = vmatprep.subr.mxu0 %v3372
        %4127 = vmatpush1.msra.mxu0 %v3371
        %4128 = vmatprep.subr.mxu0 %v3377
        %4129 = vmatpush1.msra.mxu0 %v3376
        %4130 = vmatprep.subr.mxu0 %v3382
        %4131 = vmatpush1.msra.mxu0 %v3381
        %4132 = vmatprep.subr.mxu0 %v3387
        %4133 = vmatpush1.msra.mxu0 %v3386
        %4134 = vmatprep.subr.mxu0 %v3392
        %4135 = vmatpush1.msra.mxu0 %v3391
        %4136 = vmatprep.subr.mxu0 %v3397
        %4137 = vmatpush1.msra.mxu0 %v3396
        %4138 = vmatprep.mubr.f32.mxu0 %v2739
        %4139 = vmatmul.mubr.f32.gmra.mrb[0].mxu0 %v2757
        %v4140 = vpop.f32.mrb[0].mxu0
        %v4141 = vadd.f32 %v4070, %v4140
        %v4142 = vpop.f32.mrb[0].mxu0
        %v4143 = vadd.f32 %v4072, %v4142
        %4144 = vdwg.mxu0
        %4145 = vmatprep.subr.mxu0 %v3402
        %4146 = vmatpush1.msra.mxu0 %v3401
        %4147 = vmatprep.subr.mxu0 %v3407
        %4148 = vmatpush1.msra.mxu0 %v3406
        %4149 = vmatprep.subr.mxu0 %v3412
        %4150 = vmatpush1.msra.mxu0 %v3411
        %4151 = vmatprep.subr.mxu0 %v3417
        %4152 = vmatpush1.msra.mxu0 %v3416
        %4153 = vmatprep.subr.mxu0 %v3422
        %4154 = vmatpush1.msra.mxu0 %v3421
        %4155 = vmatprep.subr.mxu0 %v3427
        %4156 = vmatpush1.msra.mxu0 %v3426
        %4157 = vmatprep.subr.mxu0 %v3432
        %4158 = vmatpush1.msra.mxu0 %v3431
        %4159 = vmatprep.subr.mxu0 %v3437
        %4160 = vmatpush1.msra.mxu0 %v3436
        %4161 = vmatprep.subr.mxu0 %v3442
        %4162 = vmatpush1.msra.mxu0 %v3441
        %4163 = vmatprep.subr.mxu0 %v3447
        %4164 = vmatpush1.msra.mxu0 %v3446
        %4165 = vmatprep.subr.mxu0 %v3452
        %4166 = vmatpush1.msra.mxu0 %v3451
        %4167 = vmatprep.subr.mxu0 %v3457
        %4168 = vmatpush1.msra.mxu0 %v3456
        %4169 = vmatprep.subr.mxu0 %v3462
        %4170 = vmatpush1.msra.mxu0 %v3461
        %4171 = vmatprep.subr.mxu0 %v3467
        %4172 = vmatpush1.msra.mxu0 %v3466
        %4173 = vmatprep.subr.mxu0 %v3472
        %4174 = vmatpush1.msra.mxu0 %v3471
        %4175 = vmatprep.subr.mxu0 %v3477
        %4176 = vmatpush1.msra.mxu0 %v3476
        %4177 = vmatprep.subr.mxu0 %v3482
        %4178 = vmatpush1.msra.mxu0 %v3481
        %4179 = vmatprep.subr.mxu0 %v3487
        %4180 = vmatpush1.msra.mxu0 %v3486
        %4181 = vmatprep.subr.mxu0 %v3492
        %4182 = vmatpush1.msra.mxu0 %v3491
        %4183 = vmatprep.subr.mxu0 %v3497
        %4184 = vmatpush1.msra.mxu0 %v3496
        %4185 = vmatprep.subr.mxu0 0.0
        %4186 = vmatpush1.msra.mxu0 0.0
        %4187 = vmatprep.subr.mxu0 0.0
        %4188 = vmatpush1.msra.mxu0 0.0
        %4189 = vmatprep.subr.mxu0 0.0
        %4190 = vmatpush1.msra.mxu0 0.0
        %4191 = vmatprep.subr.mxu0 0.0
        %4192 = vmatpush1.msra.mxu0 0.0
        %4193 = vmatprep.subr.mxu0 0.0
        %4194 = vmatpush1.msra.mxu0 0.0
        %4195 = vmatprep.subr.mxu0 0.0
        %4196 = vmatpush1.msra.mxu0 0.0
        %4197 = vmatprep.subr.mxu0 0.0
        %4198 = vmatpush1.msra.mxu0 0.0
        %4199 = vmatprep.subr.mxu0 0.0
        %4200 = vmatpush1.msra.mxu0 0.0
        %4201 = vmatprep.subr.mxu0 0.0
        %4202 = vmatpush1.msra.mxu0 0.0
        %4203 = vmatprep.subr.mxu0 0.0
        %4204 = vmatpush1.msra.mxu0 0.0
        %4205 = vmatprep.subr.mxu0 0.0
        %4206 = vmatpush1.msra.mxu0 0.0
        %4207 = vmatprep.subr.mxu0 0.0
        %4208 = vmatpush1.msra.mxu0 0.0
        %4209 = vmatprep.mubr.f32.mxu0 %v3504
        %4210 = vmatmul.mubr.f32.gmra.mrb[0].mxu0 %v2758
        %v4211 = vpop.f32.mrb[0].mxu0
        %v4212 = vadd.f32 %v4141, %v4211
        %v4213 = vpop.f32.mrb[0].mxu0
        %v4214 = vadd.f32 %v4143, %v4213
        %4215 = vdwg.mxu0
        %4216 = vmatprep.subr.mxu0 0.0
        %4217 = vmatpush1.msra.mxu0 %v2763
        %4218 = vmatprep.subr.mxu0 0.0
        %4219 = vmatpush1.msra.mxu0 %v2768
        %4220 = vmatprep.subr.mxu0 0.0
        %4221 = vmatpush1.msra.mxu0 %v2773
        %4222 = vmatprep.subr.mxu0 0.0
        %4223 = vmatpush1.msra.mxu0 %v2778
        %4224 = vmatprep.subr.mxu0 0.0
        %4225 = vmatpush1.msra.mxu0 %v2783
        %4226 = vmatprep.subr.mxu0 0.0
        %4227 = vmatpush1.msra.mxu0 %v2788
        %4228 = vmatprep.subr.mxu0 0.0
        %4229 = vmatpush1.msra.mxu0 %v2793
        %4230 = vmatprep.subr.mxu0 0.0
        %4231 = vmatpush1.msra.mxu0 %v2798
        %4232 = vmatprep.subr.mxu0 0.0
        %4233 = vmatpush1.msra.mxu0 %v2803
        %4234 = vmatprep.subr.mxu0 0.0
        %4235 = vmatpush1.msra.mxu0 %v2808
        %4236 = vmatprep.subr.mxu0 0.0
        %4237 = vmatpush1.msra.mxu0 %v2813
        %4238 = vmatprep.subr.mxu0 0.0
        %4239 = vmatpush1.msra.mxu0 %v2818
        %4240 = vmatprep.subr.mxu0 0.0
        %4241 = vmatpush1.msra.mxu0 %v2823
        %4242 = vmatprep.subr.mxu0 0.0
        %4243 = vmatpush1.msra.mxu0 %v2828
        %4244 = vmatprep.subr.mxu0 0.0
        %4245 = vmatpush1.msra.mxu0 %v2833
        %4246 = vmatprep.subr.mxu0 0.0
        %4247 = vmatpush1.msra.mxu0 %v2838
        %4248 = vmatprep.subr.mxu0 0.0
        %4249 = vmatpush1.msra.mxu0 %v2843
        %4250 = vmatprep.subr.mxu0 0.0
        %4251 = vmatpush1.msra.mxu0 %v2848
        %4252 = vmatprep.subr.mxu0 0.0
        %4253 = vmatpush1.msra.mxu0 %v2853
        %4254 = vmatprep.subr.mxu0 0.0
        %4255 = vmatpush1.msra.mxu0 %v2858
        %4256 = vmatprep.subr.mxu0 0.0
        %4257 = vmatpush1.msra.mxu0 %v2863
        %4258 = vmatprep.subr.mxu0 0.0
        %4259 = vmatpush1.msra.mxu0 %v2868
        %4260 = vmatprep.subr.mxu0 0.0
        %4261 = vmatpush1.msra.mxu0 %v2873
        %4262 = vmatprep.subr.mxu0 0.0
        %4263 = vmatpush1.msra.mxu0 %v2878
        %4264 = vmatprep.subr.mxu0 0.0
        %4265 = vmatpush1.msra.mxu0 %v2883
        %4266 = vmatprep.subr.mxu0 0.0
        %4267 = vmatpush1.msra.mxu0 %v2888
        %4268 = vmatprep.subr.mxu0 0.0
        %4269 = vmatpush1.msra.mxu0 %v2893
        %4270 = vmatprep.subr.mxu0 0.0
        %4271 = vmatpush1.msra.mxu0 %v2898
        %4272 = vmatprep.subr.mxu0 0.0
        %4273 = vmatpush1.msra.mxu0 %v2903
        %4274 = vmatprep.subr.mxu0 0.0
        %4275 = vmatpush1.msra.mxu0 %v2908
        %4276 = vmatprep.subr.mxu0 0.0
        %4277 = vmatpush1.msra.mxu0 %v2913
        %4278 = vmatprep.subr.mxu0 0.0
        %4279 = vmatpush1.msra.mxu0 %v2918
        %4280 = vmatprep.mubr.f32.mxu0 %v2752
        %4281 = vmatmul.mubr.f32.gmra.mrb[0].mxu0 %v2671
        %v4282 = vpop.f32.mrb[0].mxu0
        %v4283 = vadd.f32 %v3502, %v4282
        %v4284 = vpop.f32.mrb[0].mxu0
        %4285 = vdwg.mxu0
        %4286 = vmatprep.subr.mxu0 0.0
        %4287 = vmatpush1.msra.mxu0 %v2923
        %4288 = vmatprep.subr.mxu0 0.0
        %4289 = vmatpush1.msra.mxu0 %v2928
        %4290 = vmatprep.subr.mxu0 0.0
        %4291 = vmatpush1.msra.mxu0 %v2933
        %4292 = vmatprep.subr.mxu0 0.0
        %4293 = vmatpush1.msra.mxu0 %v2938
        %4294 = vmatprep.subr.mxu0 0.0
        %4295 = vmatpush1.msra.mxu0 %v2943
        %4296 = vmatprep.subr.mxu0 0.0
        %4297 = vmatpush1.msra.mxu0 %v2948
        %4298 = vmatprep.subr.mxu0 0.0
        %4299 = vmatpush1.msra.mxu0 %v2953
        %4300 = vmatprep.subr.mxu0 0.0
        %4301 = vmatpush1.msra.mxu0 %v2958
        %4302 = vmatprep.subr.mxu0 0.0
        %4303 = vmatpush1.msra.mxu0 %v2963
        %4304 = vmatprep.subr.mxu0 0.0
        %4305 = vmatpush1.msra.mxu0 %v2968
        %4306 = vmatprep.subr.mxu0 0.0
        %4307 = vmatpush1.msra.mxu0 %v2973
        %4308 = vmatprep.subr.mxu0 0.0
        %4309 = vmatpush1.msra.mxu0 %v2978
        %4310 = vmatprep.subr.mxu0 0.0
        %4311 = vmatpush1.msra.mxu0 %v2983
        %4312 = vmatprep.subr.mxu0 0.0
        %4313 = vmatpush1.msra.mxu0 %v2988
        %4314 = vmatprep.subr.mxu0 0.0
        %4315 = vmatpush1.msra.mxu0 %v2993
        %4316 = vmatprep.subr.mxu0 0.0
        %4317 = vmatpush1.msra.mxu0 %v2998
        %4318 = vmatprep.subr.mxu0 0.0
        %4319 = vmatpush1.msra.mxu0 %v3003
        %4320 = vmatprep.subr.mxu0 0.0
        %4321 = vmatpush1.msra.mxu0 %v3008
        %4322 = vmatprep.subr.mxu0 0.0
        %4323 = vmatpush1.msra.mxu0 %v3013
        %4324 = vmatprep.subr.mxu0 0.0
        %4325 = vmatpush1.msra.mxu0 %v3018
        %4326 = vmatprep.subr.mxu0 0.0
        %4327 = vmatpush1.msra.mxu0 %v3023
        %4328 = vmatprep.subr.mxu0 0.0
        %4329 = vmatpush1.msra.mxu0 %v3028
        %4330 = vmatprep.subr.mxu0 0.0
        %4331 = vmatpush1.msra.mxu0 %v3033
        %4332 = vmatprep.subr.mxu0 0.0
        %4333 = vmatpush1.msra.mxu0 %v3038
        %4334 = vmatprep.subr.mxu0 0.0
        %4335 = vmatpush1.msra.mxu0 %v3043
        %4336 = vmatprep.subr.mxu0 0.0
        %4337 = vmatpush1.msra.mxu0 %v3048
        %4338 = vmatprep.subr.mxu0 0.0
        %4339 = vmatpush1.msra.mxu0 %v3053
        %4340 = vmatprep.subr.mxu0 0.0
        %4341 = vmatpush1.msra.mxu0 %v3058
        %4342 = vmatprep.subr.mxu0 0.0
        %4343 = vmatpush1.msra.mxu0 %v3063
        %4344 = vmatprep.subr.mxu0 0.0
        %4345 = vmatpush1.msra.mxu0 %v3068
        %4346 = vmatprep.subr.mxu0 0.0
        %4347 = vmatpush1.msra.mxu0 %v3073
        %4348 = vmatprep.subr.mxu0 0.0
        %4349 = vmatpush1.msra.mxu0 %v3078
        %4350 = vmatprep.mubr.f32.mxu0 %v2754
        %4351 = vmatmul.mubr.f32.gmra.mrb[0].mxu0 %v2753
        %v4352 = vpop.f32.mrb[0].mxu0
        %v4353 = vadd.f32 %v4283, %v4352
        %v4354 = vpop.f32.mrb[0].mxu0
        %4355 = vdwg.mxu0
        %4356 = vmatprep.subr.mxu0 0.0
        %4357 = vmatpush1.msra.mxu0 %v3083
        %4358 = vmatprep.subr.mxu0 0.0
        %4359 = vmatpush1.msra.mxu0 %v3088
        %4360 = vmatprep.subr.mxu0 0.0
        %4361 = vmatpush1.msra.mxu0 %v3093
        %4362 = vmatprep.subr.mxu0 0.0
        %4363 = vmatpush1.msra.mxu0 %v3098
        %4364 = vmatprep.subr.mxu0 0.0
        %4365 = vmatpush1.msra.mxu0 %v3103
        %4366 = vmatprep.subr.mxu0 0.0
        %4367 = vmatpush1.msra.mxu0 %v3108
        %4368 = vmatprep.subr.mxu0 0.0
        %4369 = vmatpush1.msra.mxu0 %v3113
        %4370 = vmatprep.subr.mxu0 0.0
        %4371 = vmatpush1.msra.mxu0 %v3118
        %4372 = vmatprep.subr.mxu0 0.0
        %4373 = vmatpush1.msra.mxu0 %v3123
        %4374 = vmatprep.subr.mxu0 0.0
        %4375 = vmatpush1.msra.mxu0 %v3128
        %4376 = vmatprep.subr.mxu0 0.0
        %4377 = vmatpush1.msra.mxu0 %v3133
        %4378 = vmatprep.subr.mxu0 0.0
        %4379 = vmatpush1.msra.mxu0 %v3138
        %4380 = vmatprep.subr.mxu0 0.0
        %4381 = vmatpush1.msra.mxu0 %v3143
        %4382 = vmatprep.subr.mxu0 0.0
        %4383 = vmatpush1.msra.mxu0 %v3148
        %4384 = vmatprep.subr.mxu0 0.0
        %4385 = vmatpush1.msra.mxu0 %v3153
        %4386 = vmatprep.subr.mxu0 0.0
        %4387 = vmatpush1.msra.mxu0 %v3158
        %4388 = vmatprep.subr.mxu0 0.0
        %4389 = vmatpush1.msra.mxu0 %v3163
        %4390 = vmatprep.subr.mxu0 0.0
        %4391 = vmatpush1.msra.mxu0 %v3168
        %4392 = vmatprep.subr.mxu0 0.0
        %4393 = vmatpush1.msra.mxu0 %v3173
        %4394 = vmatprep.subr.mxu0 0.0
        %4395 = vmatpush1.msra.mxu0 %v3178
        %4396 = vmatprep.subr.mxu0 0.0
        %4397 = vmatpush1.msra.mxu0 %v3183
        %4398 = vmatprep.subr.mxu0 0.0
        %4399 = vmatpush1.msra.mxu0 %v3188
        %4400 = vmatprep.subr.mxu0 0.0
        %4401 = vmatpush1.msra.mxu0 %v3193
        %4402 = vmatprep.subr.mxu0 0.0
        %4403 = vmatpush1.msra.mxu0 %v3198
        %4404 = vmatprep.subr.mxu0 0.0
        %4405 = vmatpush1.msra.mxu0 %v3203
        %4406 = vmatprep.subr.mxu0 0.0
        %4407 = vmatpush1.msra.mxu0 %v3208
        %4408 = vmatprep.subr.mxu0 0.0
        %4409 = vmatpush1.msra.mxu0 %v3213
        %4410 = vmatprep.subr.mxu0 0.0
        %4411 = vmatpush1.msra.mxu0 %v3218
        %4412 = vmatprep.subr.mxu0 0.0
        %4413 = vmatpush1.msra.mxu0 %v3223
        %4414 = vmatprep.subr.mxu0 0.0
        %4415 = vmatpush1.msra.mxu0 %v3228
        %4416 = vmatprep.subr.mxu0 0.0
        %4417 = vmatpush1.msra.mxu0 %v3233
        %4418 = vmatprep.subr.mxu0 0.0
        %4419 = vmatpush1.msra.mxu0 %v3238
        %4420 = vmatprep.mubr.f32.mxu0 %v2756
        %4421 = vmatmul.mubr.f32.gmra.mrb[0].mxu0 %v2755
        %v4422 = vpop.f32.mrb[0].mxu0
        %v4423 = vadd.f32 %v4353, %v4422
        %v4424 = vpop.f32.mrb[0].mxu0
        %4425 = vdwg.mxu0
        %4426 = vmatprep.subr.mxu0 0.0
        %4427 = vmatpush1.msra.mxu0 %v3243
        %4428 = vmatprep.subr.mxu0 0.0
        %4429 = vmatpush1.msra.mxu0 %v3248
        %4430 = vmatprep.subr.mxu0 0.0
        %4431 = vmatpush1.msra.mxu0 %v3253
        %4432 = vmatprep.subr.mxu0 0.0
        %4433 = vmatpush1.msra.mxu0 %v3258
        %4434 = vmatprep.subr.mxu0 0.0
        %4435 = vmatpush1.msra.mxu0 %v3263
        %4436 = vmatprep.subr.mxu0 0.0
        %4437 = vmatpush1.msra.mxu0 %v3268
        %4438 = vmatprep.subr.mxu0 0.0
        %4439 = vmatpush1.msra.mxu0 %v3273
        %4440 = vmatprep.subr.mxu0 0.0
        %4441 = vmatpush1.msra.mxu0 %v3278
        %4442 = vmatprep.subr.mxu0 0.0
        %4443 = vmatpush1.msra.mxu0 %v3283
        %4444 = vmatprep.subr.mxu0 0.0
        %4445 = vmatpush1.msra.mxu0 %v3288
        %4446 = vmatprep.subr.mxu0 0.0
        %4447 = vmatpush1.msra.mxu0 %v3293
        %4448 = vmatprep.subr.mxu0 0.0
        %4449 = vmatpush1.msra.mxu0 %v3298
        %4450 = vmatprep.subr.mxu0 0.0
        %4451 = vmatpush1.msra.mxu0 %v3303
        %4452 = vmatprep.subr.mxu0 0.0
        %4453 = vmatpush1.msra.mxu0 %v3308
        %4454 = vmatprep.subr.mxu0 0.0
        %4455 = vmatpush1.msra.mxu0 %v3313
        %4456 = vmatprep.subr.mxu0 0.0
        %4457 = vmatpush1.msra.mxu0 %v3318
        %4458 = vmatprep.subr.mxu0 0.0
        %4459 = vmatpush1.msra.mxu0 %v3323
        %4460 = vmatprep.subr.mxu0 0.0
        %4461 = vmatpush1.msra.mxu0 %v3328
        %4462 = vmatprep.subr.mxu0 0.0
        %4463 = vmatpush1.msra.mxu0 %v3333
        %4464 = vmatprep.subr.mxu0 0.0
        %4465 = vmatpush1.msra.mxu0 %v3338
        %4466 = vmatprep.subr.mxu0 0.0
        %4467 = vmatpush1.msra.mxu0 %v3343
        %4468 = vmatprep.subr.mxu0 0.0
        %4469 = vmatpush1.msra.mxu0 %v3348
        %4470 = vmatprep.subr.mxu0 0.0
        %4471 = vmatpush1.msra.mxu0 %v3353
        %4472 = vmatprep.subr.mxu0 0.0
        %4473 = vmatpush1.msra.mxu0 %v3358
        %4474 = vmatprep.subr.mxu0 0.0
        %4475 = vmatpush1.msra.mxu0 %v3363
        %4476 = vmatprep.subr.mxu0 0.0
        %4477 = vmatpush1.msra.mxu0 %v3368
        %4478 = vmatprep.subr.mxu0 0.0
        %4479 = vmatpush1.msra.mxu0 %v3373
        %4480 = vmatprep.subr.mxu0 0.0
        %4481 = vmatpush1.msra.mxu0 %v3378
        %4482 = vmatprep.subr.mxu0 0.0
        %4483 = vmatpush1.msra.mxu0 %v3383
        %4484 = vmatprep.subr.mxu0 0.0
        %4485 = vmatpush1.msra.mxu0 %v3388
        %4486 = vmatprep.subr.mxu0 0.0
        %4487 = vmatpush1.msra.mxu0 %v3393
        %4488 = vmatprep.subr.mxu0 0.0
        %4489 = vmatpush1.msra.mxu0 %v3398
        %4490 = vmatprep.mubr.f32.mxu0 %v2739
        %4491 = vmatmul.mubr.f32.gmra.mrb[0].mxu0 %v2757
        %v4492 = vpop.f32.mrb[0].mxu0
        %v4493 = vadd.f32 %v4423, %v4492
        %v4494 = vpop.f32.mrb[0].mxu0
        %4495 = vdwg.mxu0
        %4496 = vmatprep.subr.mxu0 0.0
        %4497 = vmatpush1.msra.mxu0 %v3403
        %4498 = vmatprep.subr.mxu0 0.0
        %4499 = vmatpush1.msra.mxu0 %v3408
        %4500 = vmatprep.subr.mxu0 0.0
        %4501 = vmatpush1.msra.mxu0 %v3413
        %4502 = vmatprep.subr.mxu0 0.0
        %4503 = vmatpush1.msra.mxu0 %v3418
        %4504 = vmatprep.subr.mxu0 0.0
        %4505 = vmatpush1.msra.mxu0 %v3423
        %4506 = vmatprep.subr.mxu0 0.0
        %4507 = vmatpush1.msra.mxu0 %v3428
        %4508 = vmatprep.subr.mxu0 0.0
        %4509 = vmatpush1.msra.mxu0 %v3433
        %4510 = vmatprep.subr.mxu0 0.0
        %4511 = vmatpush1.msra.mxu0 %v3438
        %4512 = vmatprep.subr.mxu0 0.0
        %4513 = vmatpush1.msra.mxu0 %v3443
        %4514 = vmatprep.subr.mxu0 0.0
        %4515 = vmatpush1.msra.mxu0 %v3448
        %4516 = vmatprep.subr.mxu0 0.0
        %4517 = vmatpush1.msra.mxu0 %v3453
        %4518 = vmatprep.subr.mxu0 0.0
        %4519 = vmatpush1.msra.mxu0 %v3458
        %4520 = vmatprep.subr.mxu0 0.0
        %4521 = vmatpush1.msra.mxu0 %v3463
        %4522 = vmatprep.subr.mxu0 0.0
        %4523 = vmatpush1.msra.mxu0 %v3468
        %4524 = vmatprep.subr.mxu0 0.0
        %4525 = vmatpush1.msra.mxu0 %v3473
        %4526 = vmatprep.subr.mxu0 0.0
        %4527 = vmatpush1.msra.mxu0 %v3478
        %4528 = vmatprep.subr.mxu0 0.0
        %4529 = vmatpush1.msra.mxu0 %v3483
        %4530 = vmatprep.subr.mxu0 0.0
        %4531 = vmatpush1.msra.mxu0 %v3488
        %4532 = vmatprep.subr.mxu0 0.0
        %4533 = vmatpush1.msra.mxu0 %v3493
        %4534 = vmatprep.subr.mxu0 0.0
        %4535 = vmatpush1.msra.mxu0 %v3498
        %4536 = vmatprep.subr.mxu0 0.0
        %4537 = vmatpush1.msra.mxu0 0.0
        %4538 = vmatprep.subr.mxu0 0.0
        %4539 = vmatpush1.msra.mxu0 0.0
        %4540 = vmatprep.subr.mxu0 0.0
        %4541 = vmatpush1.msra.mxu0 0.0
        %4542 = vmatprep.subr.mxu0 0.0
        %4543 = vmatpush1.msra.mxu0 0.0
        %4544 = vmatprep.subr.mxu0 0.0
        %4545 = vmatpush1.msra.mxu0 0.0
        %4546 = vmatprep.subr.mxu0 0.0
        %4547 = vmatpush1.msra.mxu0 0.0
        %4548 = vmatprep.subr.mxu0 0.0
        %4549 = vmatpush1.msra.mxu0 0.0
        %4550 = vmatprep.subr.mxu0 0.0
        %4551 = vmatpush1.msra.mxu0 0.0
        %4552 = vmatprep.subr.mxu0 0.0
        %4553 = vmatpush1.msra.mxu0 0.0
        %4554 = vmatprep.subr.mxu0 0.0
        %4555 = vmatpush1.msra.mxu0 0.0
        %4556 = vmatprep.subr.mxu0 0.0
        %4557 = vmatpush1.msra.mxu0 0.0
        %4558 = vmatprep.subr.mxu0 0.0
        %4559 = vmatpush1.msra.mxu0 0.0
        %4560 = vmatprep.mubr.f32.mxu0 %v3504
        %4561 = vmatmul.mubr.f32.gmra.mrb[0].mxu0 %v2758
        %v4562 = vpop.f32.mrb[0].mxu0
        %v4563 = vadd.f32 %v4493, %v4562
        %v4564 = vpop.f32.mrb[0].mxu0
        %4565 = vdwg.mxu0
        %v4566 = vmax.f32 %v3857, 0.0
        %v4567 = vmax.f32 %v3859, 0.0
        %v4568 = vmax.f32 %v4212, 0.0
        %v4569 = vmax.f32 %v4214, 0.0
        %v4570 = vmax.f32 %v4563, 0.0
        %v4571 = vld [vmem:[%s45] sm:$0xf]
        %v4572 = vld [vmem:[%s47] sm:$0xf]
        %v4573 = vld [vmem:[%s1025] sm:$0xff]
        %v4574 = vld [vmem:[%s1025 + $0x8] sm:$0x3]
        %v4577 = vcombine.high %v4573, %v4573
        %v4579 = vunpack.c.l.s4 1983009808
        %v4580 = vunpack.c.0.s8 %v4579
        %v4581 = vlaneseq
        %v4582 = vshrl.u32 %v4581, 7
        %v4583 = vsub.s32 %v4580, %v4582
        %v4584 = vrot.slane %v4573, %v4583
        %v4586 = vunpack.c.l.s4 1983009808
        %v4587 = vunpack.c.0.s8 %v4586
        %v4588 = vlaneseq
        %v4589 = vshrl.u32 %v4588, 7
        %v4590 = vsub.s32 %v4587, %v4589
        %v4591 = vrot.slane %v4577, %v4590
        %v4592 = vcombine.high %v4584, %v4584
        %v4593 = vcombine.high %v4591, %v4591
        %v4595 = vunpack.c.l.s4 1983009808
        %v4596 = vunpack.c.0.s8 %v4595
        %v4597 = vlaneseq
        %v4598 = vshrl.u32 %v4597, 7
        %v4599 = vsub.s32 %v4596, %v4598
        %v4600 = vrot.slane %v4574, %v4599
        %v4606 = vadd.f32 %v4566, %v4584
        %v4607 = vadd.f32 %v4567, %v4592
        %v4608 = vadd.f32 %v4568, %v4591
        %v4609 = vadd.f32 %v4569, %v4593
        %v4610 = vadd.f32 %v4570, %v4600
        %4612 = vset.pattern.permute.xlu0 0
        %4613 = vperm.xlu0 %4612, %v4572
        %v4614 = vpop.permute.xlu0 %4613
        %v4617 = vsel %vm1482, %v4571, 0
        %vm4619 = vcmask 1041408
        %v4621 = vsel %vm4619, %v4606, 0
        %v4624 = vsel %vm4619, %v4607, 0
        %v4627 = vsel %vm4619, %v4608, 0
        %v4630 = vsel %vm4619, %v4609, 0
        %v4633 = vsel %vm4619, %v4610, 0
        %4635 = vmatprep.subr.mxu0 %v4624
        %4636 = vmatpush1.msra.mxu0 %v4621
        %4637 = vmatprep.subr.mxu0 0.0
        %4638 = vmatpush1.msra.mxu0 0.0
        %4639 = vmatprep.subr.mxu0 0.0
        %4640 = vmatpush1.msra.mxu0 0.0
        %4641 = vmatprep.subr.mxu0 0.0
        %4642 = vmatpush1.msra.mxu0 0.0
        %4643 = vmatprep.subr.mxu0 0.0
        %4644 = vmatpush1.msra.mxu0 0.0
        %4645 = vmatprep.subr.mxu0 0.0
        %4646 = vmatpush1.msra.mxu0 0.0
        %4647 = vmatprep.subr.mxu0 0.0
        %4648 = vmatpush1.msra.mxu0 0.0
        %4649 = vmatprep.subr.mxu0 0.0
        %4650 = vmatpush1.msra.mxu0 0.0
        %4651 = vmatprep.subr.mxu0 0.0
        %4652 = vmatpush1.msra.mxu0 0.0
        %4653 = vmatprep.subr.mxu0 0.0
        %4654 = vmatpush1.msra.mxu0 0.0
        %4655 = vmatprep.subr.mxu0 0.0
        %4656 = vmatpush1.msra.mxu0 0.0
        %4657 = vmatprep.subr.mxu0 0.0
        %4658 = vmatpush1.msra.mxu0 0.0
        %4659 = vmatprep.subr.mxu0 0.0
        %4660 = vmatpush1.msra.mxu0 0.0
        %4661 = vmatprep.subr.mxu0 0.0
        %4662 = vmatpush1.msra.mxu0 0.0
        %4663 = vmatprep.subr.mxu0 0.0
        %4664 = vmatpush1.msra.mxu0 0.0
        %4665 = vmatprep.subr.mxu0 0.0
        %4666 = vmatpush1.msra.mxu0 0.0
        %4667 = vmatprep.subr.mxu0 0.0
        %4668 = vmatpush1.msra.mxu0 0.0
        %4669 = vmatprep.subr.mxu0 0.0
        %4670 = vmatpush1.msra.mxu0 0.0
        %4671 = vmatprep.subr.mxu0 0.0
        %4672 = vmatpush1.msra.mxu0 0.0
        %4673 = vmatprep.subr.mxu0 0.0
        %4674 = vmatpush1.msra.mxu0 0.0
        %4675 = vmatprep.subr.mxu0 0.0
        %4676 = vmatpush1.msra.mxu0 0.0
        %4677 = vmatprep.subr.mxu0 0.0
        %4678 = vmatpush1.msra.mxu0 0.0
        %4679 = vmatprep.subr.mxu0 0.0
        %4680 = vmatpush1.msra.mxu0 0.0
        %4681 = vmatprep.subr.mxu0 0.0
        %4682 = vmatpush1.msra.mxu0 0.0
        %4683 = vmatprep.subr.mxu0 0.0
        %4684 = vmatpush1.msra.mxu0 0.0
        %4685 = vmatprep.subr.mxu0 0.0
        %4686 = vmatpush1.msra.mxu0 0.0
        %4687 = vmatprep.subr.mxu0 0.0
        %4688 = vmatpush1.msra.mxu0 0.0
        %4689 = vmatprep.subr.mxu0 0.0
        %4690 = vmatpush1.msra.mxu0 0.0
        %4691 = vmatprep.subr.mxu0 0.0
        %4692 = vmatpush1.msra.mxu0 0.0
        %4693 = vmatprep.subr.mxu0 0.0
        %4694 = vmatpush1.msra.mxu0 0.0
        %4695 = vmatprep.subr.mxu0 0.0
        %4696 = vmatpush1.msra.mxu0 0.0
        %4697 = vmatprep.subr.mxu0 0.0
        %4698 = vmatpush1.msra.mxu0 0.0
        %4699 = vmatprep.mubr.f32.mxu0 0.0
        %4700 = vmatmul.mubr.f32.gmra.mrb[0].mxu0 %v4617
        %v4701 = vpop.f32.mrb[0].mxu0
        %v4702 = vadd.f32 %v4614, %v4701
        %v4703 = vpop.f32.mrb[0].mxu0
        %v4704 = vadd.f32 %v4614, %v4703
        %4705 = vdwg.mxu0
        %4706 = vmatprep.subr.mxu0 %v4630
        %4707 = vmatpush1.msra.mxu0 %v4627
        %4708 = vmatprep.subr.mxu0 0.0
        %4709 = vmatpush1.msra.mxu0 0.0
        %4710 = vmatprep.subr.mxu0 0.0
        %4711 = vmatpush1.msra.mxu0 0.0
        %4712 = vmatprep.subr.mxu0 0.0
        %4713 = vmatpush1.msra.mxu0 0.0
        %4714 = vmatprep.subr.mxu0 0.0
        %4715 = vmatpush1.msra.mxu0 0.0
        %4716 = vmatprep.subr.mxu0 0.0
        %4717 = vmatpush1.msra.mxu0 0.0
        %4718 = vmatprep.subr.mxu0 0.0
        %4719 = vmatpush1.msra.mxu0 0.0
        %4720 = vmatprep.subr.mxu0 0.0
        %4721 = vmatpush1.msra.mxu0 0.0
        %4722 = vmatprep.subr.mxu0 0.0
        %4723 = vmatpush1.msra.mxu0 0.0
        %4724 = vmatprep.subr.mxu0 0.0
        %4725 = vmatpush1.msra.mxu0 0.0
        %4726 = vmatprep.subr.mxu0 0.0
        %4727 = vmatpush1.msra.mxu0 0.0
        %4728 = vmatprep.subr.mxu0 0.0
        %4729 = vmatpush1.msra.mxu0 0.0
        %4730 = vmatprep.subr.mxu0 0.0
        %4731 = vmatpush1.msra.mxu0 0.0
        %4732 = vmatprep.subr.mxu0 0.0
        %4733 = vmatpush1.msra.mxu0 0.0
        %4734 = vmatprep.subr.mxu0 0.0
        %4735 = vmatpush1.msra.mxu0 0.0
        %4736 = vmatprep.subr.mxu0 0.0
        %4737 = vmatpush1.msra.mxu0 0.0
        %4738 = vmatprep.subr.mxu0 0.0
        %4739 = vmatpush1.msra.mxu0 0.0
        %4740 = vmatprep.subr.mxu0 0.0
        %4741 = vmatpush1.msra.mxu0 0.0
        %4742 = vmatprep.subr.mxu0 0.0
        %4743 = vmatpush1.msra.mxu0 0.0
        %4744 = vmatprep.subr.mxu0 0.0
        %4745 = vmatpush1.msra.mxu0 0.0
        %4746 = vmatprep.subr.mxu0 0.0
        %4747 = vmatpush1.msra.mxu0 0.0
        %4748 = vmatprep.subr.mxu0 0.0
        %4749 = vmatpush1.msra.mxu0 0.0
        %4750 = vmatprep.subr.mxu0 0.0
        %4751 = vmatpush1.msra.mxu0 0.0
        %4752 = vmatprep.subr.mxu0 0.0
        %4753 = vmatpush1.msra.mxu0 0.0
        %4754 = vmatprep.subr.mxu0 0.0
        %4755 = vmatpush1.msra.mxu0 0.0
        %4756 = vmatprep.subr.mxu0 0.0
        %4757 = vmatpush1.msra.mxu0 0.0
        %4758 = vmatprep.subr.mxu0 0.0
        %4759 = vmatpush1.msra.mxu0 0.0
        %4760 = vmatprep.subr.mxu0 0.0
        %4761 = vmatpush1.msra.mxu0 0.0
        %4762 = vmatprep.subr.mxu0 0.0
        %4763 = vmatpush1.msra.mxu0 0.0
        %4764 = vmatprep.subr.mxu0 0.0
        %4765 = vmatpush1.msra.mxu0 0.0
        %4766 = vmatprep.subr.mxu0 0.0
        %4767 = vmatpush1.msra.mxu0 0.0
        %4768 = vmatprep.subr.mxu0 0.0
        %4769 = vmatpush1.msra.mxu0 0.0
        %4770 = vmatprep.mubr.f32.mxu0 0.0
        %4771 = vmatmul.mubr.f32.gmra.mrb[0].mxu0 %v4617
        %v4772 = vpop.f32.mrb[0].mxu0
        %v4773 = vadd.f32 %v4614, %v4772
        %v4774 = vpop.f32.mrb[0].mxu0
        %v4775 = vadd.f32 %v4614, %v4774
        %4776 = vdwg.mxu0
        %4777 = vmatprep.subr.mxu0 0.0
        %4778 = vmatpush1.msra.mxu0 %v4633
        %4779 = vmatprep.subr.mxu0 0.0
        %4780 = vmatpush1.msra.mxu0 0.0
        %4781 = vmatprep.subr.mxu0 0.0
        %4782 = vmatpush1.msra.mxu0 0.0
        %4783 = vmatprep.subr.mxu0 0.0
        %4784 = vmatpush1.msra.mxu0 0.0
        %4785 = vmatprep.subr.mxu0 0.0
        %4786 = vmatpush1.msra.mxu0 0.0
        %4787 = vmatprep.subr.mxu0 0.0
        %4788 = vmatpush1.msra.mxu0 0.0
        %4789 = vmatprep.subr.mxu0 0.0
        %4790 = vmatpush1.msra.mxu0 0.0
        %4791 = vmatprep.subr.mxu0 0.0
        %4792 = vmatpush1.msra.mxu0 0.0
        %4793 = vmatprep.subr.mxu0 0.0
        %4794 = vmatpush1.msra.mxu0 0.0
        %4795 = vmatprep.subr.mxu0 0.0
        %4796 = vmatpush1.msra.mxu0 0.0
        %4797 = vmatprep.subr.mxu0 0.0
        %4798 = vmatpush1.msra.mxu0 0.0
        %4799 = vmatprep.subr.mxu0 0.0
        %4800 = vmatpush1.msra.mxu0 0.0
        %4801 = vmatprep.subr.mxu0 0.0
        %4802 = vmatpush1.msra.mxu0 0.0
        %4803 = vmatprep.subr.mxu0 0.0
        %4804 = vmatpush1.msra.mxu0 0.0
        %4805 = vmatprep.subr.mxu0 0.0
        %4806 = vmatpush1.msra.mxu0 0.0
        %4807 = vmatprep.subr.mxu0 0.0
        %4808 = vmatpush1.msra.mxu0 0.0
        %4809 = vmatprep.subr.mxu0 0.0
        %4810 = vmatpush1.msra.mxu0 0.0
        %4811 = vmatprep.subr.mxu0 0.0
        %4812 = vmatpush1.msra.mxu0 0.0
        %4813 = vmatprep.subr.mxu0 0.0
        %4814 = vmatpush1.msra.mxu0 0.0
        %4815 = vmatprep.subr.mxu0 0.0
        %4816 = vmatpush1.msra.mxu0 0.0
        %4817 = vmatprep.subr.mxu0 0.0
        %4818 = vmatpush1.msra.mxu0 0.0
        %4819 = vmatprep.subr.mxu0 0.0
        %4820 = vmatpush1.msra.mxu0 0.0
        %4821 = vmatprep.subr.mxu0 0.0
        %4822 = vmatpush1.msra.mxu0 0.0
        %4823 = vmatprep.subr.mxu0 0.0
        %4824 = vmatpush1.msra.mxu0 0.0
        %4825 = vmatprep.subr.mxu0 0.0
        %4826 = vmatpush1.msra.mxu0 0.0
        %4827 = vmatprep.subr.mxu0 0.0
        %4828 = vmatpush1.msra.mxu0 0.0
        %4829 = vmatprep.subr.mxu0 0.0
        %4830 = vmatpush1.msra.mxu0 0.0
        %4831 = vmatprep.subr.mxu0 0.0
        %4832 = vmatpush1.msra.mxu0 0.0
        %4833 = vmatprep.subr.mxu0 0.0
        %4834 = vmatpush1.msra.mxu0 0.0
        %4835 = vmatprep.subr.mxu0 0.0
        %4836 = vmatpush1.msra.mxu0 0.0
        %4837 = vmatprep.subr.mxu0 0.0
        %4838 = vmatpush1.msra.mxu0 0.0
        %4839 = vmatprep.subr.mxu0 0.0
        %4840 = vmatpush1.msra.mxu0 0.0
        %4841 = vmatprep.mubr.f32.mxu0 0.0
        %4842 = vmatmul.mubr.f32.gmra.mrb[0].mxu0 %v4617
        %v4843 = vpop.f32.mrb[0].mxu0
        %v4844 = vadd.f32 %v4614, %v4843
        %v4845 = vpop.f32.mrb[0].mxu0
        %4846 = vdwg.mxu0
        %v4847 = vxor.u32 %v4702, 2147483648
        %v4848 = vxor.u32 %v4704, 2147483648
        %v4849 = vxor.u32 %v4773, 2147483648
        %v4850 = vxor.u32 %v4775, 2147483648
        %v4851 = vxor.u32 %v4844, 2147483648
        %v4852 = vmul.f32 %v4847, 1.442695
        %v4853 = vpow.pop %v4852
        %v4854 = vmul.f32 %v4848, 1.442695
        %v4855 = vpow.pop %v4854
        %v4856 = vmul.f32 %v4849, 1.442695
        %v4857 = vpow.pop %v4856
        %v4858 = vmul.f32 %v4850, 1.442695
        %v4859 = vpow.pop %v4858
        %v4860 = vmul.f32 %v4851, 1.442695
        %v4861 = vpow.pop %v4860
        %v4862 = vadd.f32 %v4853, 1.0
        %v4863 = vadd.f32 %v4855, 1.0
        %v4864 = vadd.f32 %v4857, 1.0
        %v4865 = vadd.f32 %v4859, 1.0
        %v4866 = vadd.f32 %v4861, 1.0
        %v4867 = vrcp.pop %v4862
        %v4868 = vmul.f32 1.0, %v4867
        %v4869 = vrcp.pop %v4863
        %v4870 = vmul.f32 1.0, %v4869
        %v4871 = vrcp.pop %v4864
        %v4872 = vmul.f32 1.0, %v4871
        %v4873 = vrcp.pop %v4865
        %v4874 = vmul.f32 1.0, %v4873
        %v4875 = vrcp.pop %v4866
        %v4876 = vmul.f32 1.0, %v4875
        %v4882 = vrot.slane %v4868, 2
        %v4883 = vrot.slane %v4870, 2
        %v4884 = vrot.slane %v4872, 2
        %v4885 = vrot.slane %v4874, 2
        %v4886 = vrot.slane %v4876, 2
        %v4892 = vmul.f32 %v4702, %v4882
        %v4893 = vmul.f32 %v4704, %v4883
        %v4894 = vmul.f32 %v4773, %v4884
        %v4895 = vmul.f32 %v4775, %v4885
        %v4896 = vmul.f32 %v4844, %v4886
        %v4897 = vld [vmem:[%s59] sm:$0x1f]
        %v4898 = vld [vmem:[%s57] sm:$0xff]
        %v4899 = vld [vmem:[%s57 + $0x8] sm:$0xff]
        %v4900 = vld [vmem:[%s57 + $0x10] sm:$0xff]
        %v4901 = vld [vmem:[%s57 + $0x18] sm:$0xff]
        %v4902 = vld [vmem:[%s57 + $0x20] sm:$0xff]
        %v4903 = vld [vmem:[%s57 + $0x28] sm:$0xff]
        %v4904 = vld [vmem:[%s57 + $0x30] sm:$0xff]
        %v4905 = vld [vmem:[%s57 + $0x38] sm:$0xff]
        %v4906 = vld [vmem:[%s57 + $0x40] sm:$0xff]
        %v4907 = vld [vmem:[%s57 + $0x48] sm:$0xff]
        %v4908 = vld [vmem:[%s57 + $0x50] sm:$0xff]
        %v4909 = vld [vmem:[%s57 + $0x58] sm:$0xff]
        %v4910 = vld [vmem:[%s57 + $0x60] sm:$0xff]
        %v4911 = vld [vmem:[%s57 + $0x68] sm:$0xff]
        %v4912 = vld [vmem:[%s57 + $0x70] sm:$0xff]
        %v4913 = vld [vmem:[%s57 + $0x78] sm:$0xff]
        %v4914 = vld [vmem:[%s57 + $0x80] sm:$0xff]
        %v4915 = vld [vmem:[%s57 + $0x88] sm:$0xff]
        %v4916 = vld [vmem:[%s57 + $0x90] sm:$0xff]
        %v4917 = vld [vmem:[%s57 + $0x98] sm:$0xff]
        %v4918 = vld [vmem:[%s57 + $0xa0] sm:$0xff]
        %v4919 = vld [vmem:[%s57 + $0xa8] sm:$0xff]
        %v4920 = vld [vmem:[%s57 + $0xb0] sm:$0xff]
        %v4921 = vld [vmem:[%s57 + $0xb8] sm:$0xff]
        %v4922 = vld [vmem:[%s57 + $0xc0] sm:$0xff]
        %v4923 = vld [vmem:[%s57 + $0xc8] sm:$0xff]
        %v4924 = vld [vmem:[%s57 + $0xd0] sm:$0xff]
        %v4925 = vld [vmem:[%s57 + $0xd8] sm:$0xff]
        %v4926 = vld [vmem:[%s57 + $0xe0] sm:$0xff]
        %v4927 = vld [vmem:[%s57 + $0xe8] sm:$0xff]
        %v4928 = vld [vmem:[%s57 + $0xf0] sm:$0xff]
        %v4929 = vld [vmem:[%s57 + $0xf8] sm:$0xff]
        %v4930 = vld [vmem:[%s57 + $0x100] sm:$0xff]
        %v4931 = vld [vmem:[%s57 + $0x108] sm:$0xff]
        %v4932 = vld [vmem:[%s57 + $0x110] sm:$0xff]
        %v4933 = vld [vmem:[%s57 + $0x118] sm:$0xff]
        %v4934 = vld [vmem:[%s57 + $0x120] sm:$0xff]
        %v4935 = vld [vmem:[%s57 + $0x128] sm:$0xff]
        %v4936 = vld [vmem:[%s57 + $0x130] sm:$0xff]
        %v4937 = vld [vmem:[%s57 + $0x138] sm:$0xff]
        %v4938 = vld [vmem:[%s57 + $0x140] sm:$0xff]
        %v4939 = vld [vmem:[%s57 + $0x148] sm:$0xff]
        %v4940 = vld [vmem:[%s57 + $0x150] sm:$0xff]
        %v4941 = vld [vmem:[%s57 + $0x158] sm:$0xff]
        %v4942 = vld [vmem:[%s57 + $0x160] sm:$0xff]
        %v4943 = vld [vmem:[%s57 + $0x168] sm:$0xff]
        %v4944 = vld [vmem:[%s57 + $0x170] sm:$0xff]
        %v4945 = vld [vmem:[%s57 + $0x178] sm:$0xff]
        %v4946 = vld [vmem:[%s57 + $0x180] sm:$0xff]
        %v4947 = vld [vmem:[%s57 + $0x188] sm:$0xff]
        %v4948 = vld [vmem:[%s57 + $0x190] sm:$0xff]
        %v4949 = vld [vmem:[%s57 + $0x198] sm:$0xff]
        %v4950 = vld [vmem:[%s57 + $0x1a0] sm:$0xff]
        %v4951 = vld [vmem:[%s57 + $0x1a8] sm:$0xff]
        %v4952 = vld [vmem:[%s57 + $0x1b0] sm:$0xff]
        %v4953 = vld [vmem:[%s57 + $0x1b8] sm:$0xff]
        %v4954 = vld [vmem:[%s57 + $0x1c0] sm:$0xff]
        %v4955 = vld [vmem:[%s57 + $0x1c8] sm:$0xff]
        %v4956 = vld [vmem:[%s57 + $0x1d0] sm:$0xff]
        %v4957 = vld [vmem:[%s57 + $0x1d8] sm:$0xff]
        %v4958 = vld [vmem:[%s57 + $0x1e0] sm:$0xff]
        %v4959 = vld [vmem:[%s57 + $0x1e8] sm:$0xff]
        %v4960 = vld [vmem:[%s57 + $0x1f0] sm:$0xff]
        %v4961 = vld [vmem:[%s57 + $0x1f8] sm:$0xff]
        %v4962 = vld [vmem:[%s57 + $0x200] sm:$0xff]
        %v4963 = vld [vmem:[%s57 + $0x208] sm:$0xff]
        %v4964 = vld [vmem:[%s57 + $0x210] sm:$0xff]
        %v4965 = vld [vmem:[%s57 + $0x218] sm:$0xff]
        %v4966 = vld [vmem:[%s57 + $0x220] sm:$0xff]
        %v4967 = vld [vmem:[%s57 + $0x228] sm:$0xff]
        %v4968 = vld [vmem:[%s57 + $0x230] sm:$0xff]
        %v4969 = vld [vmem:[%s57 + $0x238] sm:$0xff]
        %v4970 = vld [vmem:[%s57 + $0x240] sm:$0xff]
        %v4971 = vld [vmem:[%s57 + $0x248] sm:$0xff]
        %v4972 = vld [vmem:[%s57 + $0x250] sm:$0xff]
        %v4973 = vld [vmem:[%s57 + $0x258] sm:$0xff]
        %v4974 = vld [vmem:[%s57 + $0x260] sm:$0xff]
        %v4975 = vld [vmem:[%s57 + $0x268] sm:$0xff]
        %v4976 = vld [vmem:[%s57 + $0x270] sm:$0xff]
        %v4977 = vld [vmem:[%s57 + $0x278] sm:$0xff]
        %v4978 = vld [vmem:[%s57 + $0x280] sm:$0xff]
        %v4979 = vld [vmem:[%s57 + $0x288] sm:$0xff]
        %v4980 = vld [vmem:[%s57 + $0x290] sm:$0xff]
        %v4981 = vld [vmem:[%s57 + $0x298] sm:$0xff]
        %v4982 = vld [vmem:[%s57 + $0x2a0] sm:$0xff]
        %v4983 = vld [vmem:[%s57 + $0x2a8] sm:$0xff]
        %v4984 = vld [vmem:[%s57 + $0x2b0] sm:$0xff]
        %v4985 = vld [vmem:[%s57 + $0x2b8] sm:$0xff]
        %v4986 = vld [vmem:[%s57 + $0x2c0] sm:$0xff]
        %v4987 = vld [vmem:[%s57 + $0x2c8] sm:$0xff]
        %v4988 = vld [vmem:[%s57 + $0x2d0] sm:$0xff]
        %v4989 = vld [vmem:[%s57 + $0x2d8] sm:$0xff]
        %v4990 = vld [vmem:[%s57 + $0x2e0] sm:$0xff]
        %v4991 = vld [vmem:[%s57 + $0x2e8] sm:$0xff]
        %v4992 = vld [vmem:[%s57 + $0x2f0] sm:$0xff]
        %v4993 = vld [vmem:[%s57 + $0x2f8] sm:$0xff]
        %v4994 = vld [vmem:[%s57 + $0x300] sm:$0xff]
        %v4995 = vld [vmem:[%s57 + $0x308] sm:$0xff]
        %v4996 = vld [vmem:[%s57 + $0x310] sm:$0xff]
        %v4997 = vld [vmem:[%s57 + $0x318] sm:$0xff]
        %v4998 = vld [vmem:[%s57 + $0x320] sm:$0xff]
        %v4999 = vld [vmem:[%s57 + $0x328] sm:$0xff]
        %v5000 = vld [vmem:[%s57 + $0x330] sm:$0xff]
        %v5001 = vld [vmem:[%s57 + $0x338] sm:$0xff]
        %v5002 = vld [vmem:[%s57 + $0x340] sm:$0xff]
        %v5003 = vld [vmem:[%s57 + $0x348] sm:$0xff]
        %v5004 = vld [vmem:[%s57 + $0x350] sm:$0xff]
        %v5005 = vld [vmem:[%s57 + $0x358] sm:$0xff]
        %v5006 = vld [vmem:[%s57 + $0x360] sm:$0xff]
        %v5007 = vld [vmem:[%s57 + $0x368] sm:$0xff]
        %v5008 = vld [vmem:[%s57 + $0x370] sm:$0xff]
        %v5009 = vld [vmem:[%s57 + $0x378] sm:$0xff]
        %v5010 = vld [vmem:[%s57 + $0x380] sm:$0xff]
        %v5011 = vld [vmem:[%s57 + $0x388] sm:$0xff]
        %v5012 = vld [vmem:[%s57 + $0x390] sm:$0xff]
        %v5013 = vld [vmem:[%s57 + $0x398] sm:$0xff]
        %v5014 = vld [vmem:[%s57 + $0x3a0] sm:$0xff]
        %v5015 = vld [vmem:[%s57 + $0x3a8] sm:$0xff]
        %v5016 = vld [vmem:[%s57 + $0x3b0] sm:$0xff]
        %v5017 = vld [vmem:[%s57 + $0x3b8] sm:$0xff]
        %v5018 = vld [vmem:[%s57 + $0x3c0] sm:$0xff]
        %v5019 = vld [vmem:[%s57 + $0x3c8] sm:$0xff]
        %v5020 = vld [vmem:[%s57 + $0x3d0] sm:$0xff]
        %v5021 = vld [vmem:[%s57 + $0x3d8] sm:$0xff]
        %v5022 = vld [vmem:[%s57 + $0x3e0] sm:$0xff]
        %v5023 = vld [vmem:[%s57 + $0x3e8] sm:$0xff]
        %v5024 = vld [vmem:[%s57 + $0x3f0] sm:$0xff]
        %v5025 = vld [vmem:[%s57 + $0x3f8] sm:$0xff]
        %v5026 = vld [vmem:[%s57 + $0x400] sm:$0xff]
        %v5027 = vld [vmem:[%s57 + $0x408] sm:$0xff]
        %v5028 = vld [vmem:[%s57 + $0x410] sm:$0xff]
        %v5029 = vld [vmem:[%s57 + $0x418] sm:$0xff]
        %v5030 = vld [vmem:[%s57 + $0x420] sm:$0xff]
        %v5031 = vld [vmem:[%s57 + $0x428] sm:$0xff]
        %v5032 = vld [vmem:[%s57 + $0x430] sm:$0xff]
        %v5033 = vld [vmem:[%s57 + $0x438] sm:$0xff]
        %v5034 = vld [vmem:[%s57 + $0x440] sm:$0xff]
        %v5035 = vld [vmem:[%s57 + $0x448] sm:$0xff]
        %v5036 = vld [vmem:[%s57 + $0x450] sm:$0xff]
        %v5037 = vld [vmem:[%s57 + $0x458] sm:$0xff]
        %v5038 = vld [vmem:[%s57 + $0x460] sm:$0xff]
        %v5039 = vld [vmem:[%s57 + $0x468] sm:$0xff]
        %v5040 = vld [vmem:[%s57 + $0x470] sm:$0xff]
        %v5041 = vld [vmem:[%s57 + $0x478] sm:$0xff]
        %v5042 = vld [vmem:[%s57 + $0x480] sm:$0xff]
        %v5043 = vld [vmem:[%s57 + $0x488] sm:$0xff]
        %v5044 = vld [vmem:[%s57 + $0x490] sm:$0xff]
        %v5045 = vld [vmem:[%s57 + $0x498] sm:$0xff]
        %v5046 = vld [vmem:[%s57 + $0x4a0] sm:$0xff]
        %v5047 = vld [vmem:[%s57 + $0x4a8] sm:$0xff]
        %v5048 = vld [vmem:[%s57 + $0x4b0] sm:$0xff]
        %v5049 = vld [vmem:[%s57 + $0x4b8] sm:$0xff]
        %v5050 = vld [vmem:[%s57 + $0x4c0] sm:$0xff]
        %v5051 = vld [vmem:[%s57 + $0x4c8] sm:$0xff]
        %v5052 = vld [vmem:[%s57 + $0x4d0] sm:$0xff]
        %v5053 = vld [vmem:[%s57 + $0x4d8] sm:$0xff]
        %v5054 = vld [vmem:[%s57 + $0x4e0] sm:$0xff]
        %v5055 = vld [vmem:[%s57 + $0x4e8] sm:$0xff]
        %v5056 = vld [vmem:[%s57 + $0x4f0] sm:$0xff]
        %v5057 = vld [vmem:[%s57 + $0x4f8] sm:$0xff]
        %v5058 = vld [vmem:[%s57 + $0x500] sm:$0xff]
        %v5059 = vld [vmem:[%s57 + $0x508] sm:$0xff]
        %v5060 = vld [vmem:[%s57 + $0x510] sm:$0xff]
        %v5061 = vld [vmem:[%s57 + $0x518] sm:$0xff]
        %v5062 = vld [vmem:[%s57 + $0x520] sm:$0xff]
        %v5063 = vld [vmem:[%s57 + $0x528] sm:$0xff]
        %v5064 = vld [vmem:[%s57 + $0x530] sm:$0xff]
        %v5065 = vld [vmem:[%s57 + $0x538] sm:$0xff]
        %v5066 = vld [vmem:[%s57 + $0x540] sm:$0xff]
        %v5067 = vld [vmem:[%s57 + $0x548] sm:$0xff]
        %v5068 = vld [vmem:[%s57 + $0x550] sm:$0xff]
        %v5069 = vld [vmem:[%s57 + $0x558] sm:$0xff]
        %v5070 = vld [vmem:[%s57 + $0x560] sm:$0xff]
        %v5071 = vld [vmem:[%s57 + $0x568] sm:$0xff]
        %v5072 = vld [vmem:[%s57 + $0x570] sm:$0xff]
        %v5073 = vld [vmem:[%s57 + $0x578] sm:$0xff]
        %v5074 = vld [vmem:[%s57 + $0x580] sm:$0xff]
        %v5075 = vld [vmem:[%s57 + $0x588] sm:$0xff]
        %v5076 = vld [vmem:[%s57 + $0x590] sm:$0xff]
        %v5077 = vld [vmem:[%s57 + $0x598] sm:$0xff]
        %v5078 = vld [vmem:[%s57 + $0x5a0] sm:$0xff]
        %v5079 = vld [vmem:[%s57 + $0x5a8] sm:$0xff]
        %v5080 = vld [vmem:[%s57 + $0x5b0] sm:$0xff]
        %v5081 = vld [vmem:[%s57 + $0x5b8] sm:$0xff]
        %v5082 = vld [vmem:[%s57 + $0x5c0] sm:$0xff]
        %v5083 = vld [vmem:[%s57 + $0x5c8] sm:$0xff]
        %v5084 = vld [vmem:[%s57 + $0x5d0] sm:$0xff]
        %v5085 = vld [vmem:[%s57 + $0x5d8] sm:$0xff]
        %v5086 = vld [vmem:[%s57 + $0x5e0] sm:$0xff]
        %v5087 = vld [vmem:[%s57 + $0x5e8] sm:$0xff]
        %v5088 = vld [vmem:[%s57 + $0x5f0] sm:$0xff]
        %v5089 = vld [vmem:[%s57 + $0x5f8] sm:$0xff]
        %v5090 = vld [vmem:[%s57 + $0x600] sm:$0xff]
        %v5091 = vld [vmem:[%s57 + $0x608] sm:$0xff]
        %v5092 = vld [vmem:[%s57 + $0x610] sm:$0xff]
        %v5093 = vld [vmem:[%s57 + $0x618] sm:$0xff]
        %v5094 = vld [vmem:[%s57 + $0x620] sm:$0xff]
        %v5095 = vld [vmem:[%s57 + $0x628] sm:$0xff]
        %v5096 = vld [vmem:[%s57 + $0x630] sm:$0xff]
        %v5097 = vld [vmem:[%s57 + $0x638] sm:$0xff]
        %v5098 = vld [vmem:[%s57 + $0x640] sm:$0xff]
        %v5099 = vld [vmem:[%s57 + $0x648] sm:$0xff]
        %v5100 = vld [vmem:[%s57 + $0x650] sm:$0xff]
        %v5101 = vld [vmem:[%s57 + $0x658] sm:$0xff]
        %v5102 = vld [vmem:[%s57 + $0x660] sm:$0xff]
        %v5103 = vld [vmem:[%s57 + $0x668] sm:$0xff]
        %v5104 = vld [vmem:[%s57 + $0x670] sm:$0xff]
        %v5105 = vld [vmem:[%s57 + $0x678] sm:$0xff]
        %v5106 = vld [vmem:[%s57 + $0x680] sm:$0xff]
        %v5107 = vld [vmem:[%s57 + $0x688] sm:$0xff]
        %v5108 = vld [vmem:[%s57 + $0x690] sm:$0xff]
        %v5109 = vld [vmem:[%s57 + $0x698] sm:$0xff]
        %v5110 = vld [vmem:[%s57 + $0x6a0] sm:$0xff]
        %v5111 = vld [vmem:[%s57 + $0x6a8] sm:$0xff]
        %v5112 = vld [vmem:[%s57 + $0x6b0] sm:$0xff]
        %v5113 = vld [vmem:[%s57 + $0x6b8] sm:$0xff]
        %v5114 = vld [vmem:[%s57 + $0x6c0] sm:$0xff]
        %v5115 = vld [vmem:[%s57 + $0x6c8] sm:$0xff]
        %v5116 = vld [vmem:[%s57 + $0x6d0] sm:$0xff]
        %v5117 = vld [vmem:[%s57 + $0x6d8] sm:$0xff]
        %v5118 = vld [vmem:[%s57 + $0x6e0] sm:$0xff]
        %v5119 = vld [vmem:[%s57 + $0x6e8] sm:$0xff]
        %v5120 = vld [vmem:[%s57 + $0x6f0] sm:$0xff]
        %v5121 = vld [vmem:[%s57 + $0x6f8] sm:$0xff]
        %v5122 = vld [vmem:[%s57 + $0x700] sm:$0xff]
        %v5123 = vld [vmem:[%s57 + $0x708] sm:$0xff]
        %v5124 = vld [vmem:[%s57 + $0x710] sm:$0xff]
        %v5125 = vld [vmem:[%s57 + $0x718] sm:$0xff]
        %v5126 = vld [vmem:[%s57 + $0x720] sm:$0xff]
        %v5127 = vld [vmem:[%s57 + $0x728] sm:$0xff]
        %v5128 = vld [vmem:[%s57 + $0x730] sm:$0xff]
        %v5129 = vld [vmem:[%s57 + $0x738] sm:$0xff]
        %v5130 = vld [vmem:[%s57 + $0x740] sm:$0xff]
        %v5131 = vld [vmem:[%s57 + $0x748] sm:$0xff]
        %v5132 = vld [vmem:[%s57 + $0x750] sm:$0xff]
        %v5133 = vld [vmem:[%s57 + $0x758] sm:$0xff]
        %v5134 = vld [vmem:[%s57 + $0x760] sm:$0xff]
        %v5135 = vld [vmem:[%s57 + $0x768] sm:$0xff]
        %v5136 = vld [vmem:[%s57 + $0x770] sm:$0xff]
        %v5137 = vld [vmem:[%s57 + $0x778] sm:$0xff]
        %v5138 = vld [vmem:[%s57 + $0x780] sm:$0xff]
        %v5139 = vld [vmem:[%s57 + $0x788] sm:$0xff]
        %v5140 = vld [vmem:[%s57 + $0x790] sm:$0xff]
        %v5141 = vld [vmem:[%s57 + $0x798] sm:$0xff]
        %v5142 = vld [vmem:[%s57 + $0x7a0] sm:$0xff]
        %v5143 = vld [vmem:[%s57 + $0x7a8] sm:$0xff]
        %v5144 = vld [vmem:[%s57 + $0x7b0] sm:$0xff]
        %v5145 = vld [vmem:[%s57 + $0x7b8] sm:$0xff]
        %v5146 = vld [vmem:[%s57 + $0x7c0] sm:$0xff]
        %v5147 = vld [vmem:[%s57 + $0x7c8] sm:$0xff]
        %v5148 = vld [vmem:[%s57 + $0x7d0] sm:$0xff]
        %v5149 = vld [vmem:[%s57 + $0x7d8] sm:$0xff]
        %v5150 = vld [vmem:[%s57 + $0x7e0] sm:$0xff]
        %v5151 = vld [vmem:[%s57 + $0x7e8] sm:$0xff]
        %v5152 = vld [vmem:[%s57 + $0x7f0] sm:$0xff]
        %v5153 = vld [vmem:[%s57 + $0x7f8] sm:$0xff]
        %v5154 = vld [vmem:[%s57 + $0x800] sm:$0xff]
        %v5155 = vld [vmem:[%s57 + $0x808] sm:$0xff]
        %v5156 = vld [vmem:[%s57 + $0x810] sm:$0xff]
        %v5157 = vld [vmem:[%s57 + $0x818] sm:$0xff]
        %v5158 = vld [vmem:[%s57 + $0x820] sm:$0xff]
        %v5159 = vld [vmem:[%s57 + $0x828] sm:$0xff]
        %v5160 = vld [vmem:[%s57 + $0x830] sm:$0xff]
        %v5161 = vld [vmem:[%s57 + $0x838] sm:$0xff]
        %v5162 = vld [vmem:[%s57 + $0x840] sm:$0xff]
        %v5163 = vld [vmem:[%s57 + $0x848] sm:$0xff]
        %v5164 = vld [vmem:[%s57 + $0x850] sm:$0xff]
        %v5165 = vld [vmem:[%s57 + $0x858] sm:$0xff]
        %v5166 = vld [vmem:[%s57 + $0x860] sm:$0xff]
        %v5167 = vld [vmem:[%s57 + $0x868] sm:$0xff]
        %v5168 = vld [vmem:[%s57 + $0x870] sm:$0xff]
        %v5169 = vld [vmem:[%s57 + $0x878] sm:$0xff]
        %v5170 = vld [vmem:[%s57 + $0x880] sm:$0xff]
        %v5171 = vld [vmem:[%s57 + $0x888] sm:$0xff]
        %v5172 = vld [vmem:[%s57 + $0x890] sm:$0xff]
        %v5173 = vld [vmem:[%s57 + $0x898] sm:$0xff]
        %v5174 = vld [vmem:[%s57 + $0x8a0] sm:$0xff]
        %v5175 = vld [vmem:[%s57 + $0x8a8] sm:$0xff]
        %v5176 = vld [vmem:[%s57 + $0x8b0] sm:$0xff]
        %v5177 = vld [vmem:[%s57 + $0x8b8] sm:$0xff]
        %v5178 = vld [vmem:[%s57 + $0x8c0] sm:$0xff]
        %v5179 = vld [vmem:[%s57 + $0x8c8] sm:$0xff]
        %v5180 = vld [vmem:[%s57 + $0x8d0] sm:$0xff]
        %v5181 = vld [vmem:[%s57 + $0x8d8] sm:$0xff]
        %v5182 = vld [vmem:[%s57 + $0x8e0] sm:$0xff]
        %v5183 = vld [vmem:[%s57 + $0x8e8] sm:$0xff]
        %v5184 = vld [vmem:[%s57 + $0x8f0] sm:$0xff]
        %v5185 = vld [vmem:[%s57 + $0x8f8] sm:$0xff]
        %v5186 = vld [vmem:[%s57 + $0x900] sm:$0xff]
        %v5187 = vld [vmem:[%s57 + $0x908] sm:$0xff]
        %v5188 = vld [vmem:[%s57 + $0x910] sm:$0xff]
        %v5189 = vld [vmem:[%s57 + $0x918] sm:$0xff]
        %v5190 = vld [vmem:[%s57 + $0x920] sm:$0xff]
        %v5191 = vld [vmem:[%s57 + $0x928] sm:$0xff]
        %v5192 = vld [vmem:[%s57 + $0x930] sm:$0xff]
        %v5193 = vld [vmem:[%s57 + $0x938] sm:$0xff]
        %v5194 = vld [vmem:[%s57 + $0x940] sm:$0xff]
        %v5195 = vld [vmem:[%s57 + $0x948] sm:$0xff]
        %v5196 = vld [vmem:[%s57 + $0x950] sm:$0xff]
        %v5197 = vld [vmem:[%s57 + $0x958] sm:$0xff]
        %v5198 = vld [vmem:[%s57 + $0x960] sm:$0xff]
        %v5199 = vld [vmem:[%s57 + $0x968] sm:$0xff]
        %v5200 = vld [vmem:[%s57 + $0x970] sm:$0xff]
        %v5201 = vld [vmem:[%s57 + $0x978] sm:$0xff]
        %v5202 = vld [vmem:[%s57 + $0x980] sm:$0xff]
        %v5203 = vld [vmem:[%s57 + $0x988] sm:$0xff]
        %v5204 = vld [vmem:[%s57 + $0x990] sm:$0xff]
        %v5205 = vld [vmem:[%s57 + $0x998] sm:$0xff]
        %v5206 = vld [vmem:[%s57 + $0x9a0] sm:$0xff]
        %v5207 = vld [vmem:[%s57 + $0x9a8] sm:$0xff]
        %v5208 = vld [vmem:[%s57 + $0x9b0] sm:$0xff]
        %v5209 = vld [vmem:[%s57 + $0x9b8] sm:$0xff]
        %v5210 = vld [vmem:[%s57 + $0x9c0] sm:$0xff]
        %v5211 = vld [vmem:[%s57 + $0x9c8] sm:$0xff]
        %v5212 = vld [vmem:[%s57 + $0x9d0] sm:$0xff]
        %v5213 = vld [vmem:[%s57 + $0x9d8] sm:$0xff]
        %v5214 = vld [vmem:[%s57 + $0x9e0] sm:$0xff]
        %v5215 = vld [vmem:[%s57 + $0x9e8] sm:$0xff]
        %v5216 = vld [vmem:[%s57 + $0x9f0] sm:$0xff]
        %v5217 = vld [vmem:[%s57 + $0x9f8] sm:$0xff]
        %v5218 = vld [vmem:[%s57 + $0xa00] sm:$0xff]
        %v5219 = vld [vmem:[%s57 + $0xa08] sm:$0xff]
        %v5220 = vld [vmem:[%s57 + $0xa10] sm:$0xff]
        %v5221 = vld [vmem:[%s57 + $0xa18] sm:$0xff]
        %v5222 = vld [vmem:[%s57 + $0xa20] sm:$0xff]
        %v5223 = vld [vmem:[%s57 + $0xa28] sm:$0xff]
        %v5224 = vld [vmem:[%s57 + $0xa30] sm:$0xff]
        %v5225 = vld [vmem:[%s57 + $0xa38] sm:$0xff]
        %v5226 = vld [vmem:[%s57 + $0xa40] sm:$0xff]
        %v5227 = vld [vmem:[%s57 + $0xa48] sm:$0xff]
        %v5228 = vld [vmem:[%s57 + $0xa50] sm:$0xff]
        %v5229 = vld [vmem:[%s57 + $0xa58] sm:$0xff]
        %v5230 = vld [vmem:[%s57 + $0xa60] sm:$0xff]
        %v5231 = vld [vmem:[%s57 + $0xa68] sm:$0xff]
        %v5232 = vld [vmem:[%s57 + $0xa70] sm:$0xff]
        %v5233 = vld [vmem:[%s57 + $0xa78] sm:$0xff]
        %v5234 = vld [vmem:[%s57 + $0xa80] sm:$0xff]
        %v5235 = vld [vmem:[%s57 + $0xa88] sm:$0xff]
        %v5236 = vld [vmem:[%s57 + $0xa90] sm:$0xff]
        %v5237 = vld [vmem:[%s57 + $0xa98] sm:$0xff]
        %v5238 = vld [vmem:[%s57 + $0xaa0] sm:$0xff]
        %v5239 = vld [vmem:[%s57 + $0xaa8] sm:$0xff]
        %v5240 = vld [vmem:[%s57 + $0xab0] sm:$0xff]
        %v5241 = vld [vmem:[%s57 + $0xab8] sm:$0xff]
        %v5242 = vld [vmem:[%s57 + $0xac0] sm:$0xff]
        %v5243 = vld [vmem:[%s57 + $0xac8] sm:$0xff]
        %v5244 = vld [vmem:[%s57 + $0xad0] sm:$0xff]
        %v5245 = vld [vmem:[%s57 + $0xad8] sm:$0xff]
        %v5246 = vld [vmem:[%s57 + $0xae0] sm:$0xff]
        %v5247 = vld [vmem:[%s57 + $0xae8] sm:$0xff]
        %v5248 = vld [vmem:[%s57 + $0xaf0] sm:$0xff]
        %v5249 = vld [vmem:[%s57 + $0xaf8] sm:$0xff]
        %v5250 = vld [vmem:[%s57 + $0xb00] sm:$0xff]
        %v5251 = vld [vmem:[%s57 + $0xb08] sm:$0xff]
        %v5252 = vld [vmem:[%s57 + $0xb10] sm:$0xff]
        %v5253 = vld [vmem:[%s57 + $0xb18] sm:$0xff]
        %v5254 = vld [vmem:[%s57 + $0xb20] sm:$0xff]
        %v5255 = vld [vmem:[%s57 + $0xb28] sm:$0xff]
        %v5256 = vld [vmem:[%s57 + $0xb30] sm:$0xff]
        %v5257 = vld [vmem:[%s57 + $0xb38] sm:$0xff]
        %v5258 = vld [vmem:[%s57 + $0xb40] sm:$0xff]
        %v5259 = vld [vmem:[%s57 + $0xb48] sm:$0xff]
        %v5260 = vld [vmem:[%s57 + $0xb50] sm:$0xff]
        %v5261 = vld [vmem:[%s57 + $0xb58] sm:$0xff]
        %v5262 = vld [vmem:[%s57 + $0xb60] sm:$0xff]
        %v5263 = vld [vmem:[%s57 + $0xb68] sm:$0xff]
        %v5264 = vld [vmem:[%s57 + $0xb70] sm:$0xff]
        %v5265 = vld [vmem:[%s57 + $0xb78] sm:$0xff]
        %v5266 = vld [vmem:[%s57 + $0xb80] sm:$0xff]
        %v5267 = vld [vmem:[%s57 + $0xb88] sm:$0xff]
        %v5268 = vld [vmem:[%s57 + $0xb90] sm:$0xf]
        %v5269 = vld [vmem:[%s57 + $0xb98] sm:$0xf]
        %v5270 = vld [vmem:[%s57 + $0xba0] sm:$0xf]
        %v5271 = vld [vmem:[%s57 + $0xba8] sm:$0xf]
        %v5272 = vld [vmem:[%s57 + $0xbb0] sm:$0xf]
        %vm5273 = vcmask 687104
        %v5275 = vsel %vm5273, %v4896, 0
        %v5278 = vsel %vm2494, %v5268, 0
        %v5281 = vsel %vm2494, %v5269, 0
        %v5284 = vsel %vm2494, %v5270, 0
        %v5287 = vsel %vm2494, %v5271, 0
        %v5290 = vsel %vm2494, %v5272, 0
        %5292 = vmatprep.subr.mxu0 %v4899
        %5293 = vmatpush1.msra.mxu0 %v4898
        %5294 = vmatprep.subr.mxu0 %v4904
        %5295 = vmatpush1.msra.mxu0 %v4903
        %5296 = vmatprep.subr.mxu0 %v4909
        %5297 = vmatpush1.msra.mxu0 %v4908
        %5298 = vmatprep.subr.mxu0 %v4914
        %5299 = vmatpush1.msra.mxu0 %v4913
        %5300 = vmatprep.subr.mxu0 %v4919
        %5301 = vmatpush1.msra.mxu0 %v4918
        %5302 = vmatprep.subr.mxu0 %v4924
        %5303 = vmatpush1.msra.mxu0 %v4923
        %5304 = vmatprep.subr.mxu0 %v4929
        %5305 = vmatpush1.msra.mxu0 %v4928
        %5306 = vmatprep.subr.mxu0 %v4934
        %5307 = vmatpush1.msra.mxu0 %v4933
        %5308 = vmatprep.subr.mxu0 %v4939
        %5309 = vmatpush1.msra.mxu0 %v4938
        %5310 = vmatprep.subr.mxu0 %v4944
        %5311 = vmatpush1.msra.mxu0 %v4943
        %5312 = vmatprep.subr.mxu0 %v4949
        %5313 = vmatpush1.msra.mxu0 %v4948
        %5314 = vmatprep.subr.mxu0 %v4954
        %5315 = vmatpush1.msra.mxu0 %v4953
        %5316 = vmatprep.subr.mxu0 %v4959
        %5317 = vmatpush1.msra.mxu0 %v4958
        %5318 = vmatprep.subr.mxu0 %v4964
        %5319 = vmatpush1.msra.mxu0 %v4963
        %5320 = vmatprep.subr.mxu0 %v4969
        %5321 = vmatpush1.msra.mxu0 %v4968
        %5322 = vmatprep.subr.mxu0 %v4974
        %5323 = vmatpush1.msra.mxu0 %v4973
        %5324 = vmatprep.subr.mxu0 %v4979
        %5325 = vmatpush1.msra.mxu0 %v4978
        %5326 = vmatprep.subr.mxu0 %v4984
        %5327 = vmatpush1.msra.mxu0 %v4983
        %5328 = vmatprep.subr.mxu0 %v4989
        %5329 = vmatpush1.msra.mxu0 %v4988
        %5330 = vmatprep.subr.mxu0 %v4994
        %5331 = vmatpush1.msra.mxu0 %v4993
        %5332 = vmatprep.subr.mxu0 %v4999
        %5333 = vmatpush1.msra.mxu0 %v4998
        %5334 = vmatprep.subr.mxu0 %v5004
        %5335 = vmatpush1.msra.mxu0 %v5003
        %5336 = vmatprep.subr.mxu0 %v5009
        %5337 = vmatpush1.msra.mxu0 %v5008
        %5338 = vmatprep.subr.mxu0 %v5014
        %5339 = vmatpush1.msra.mxu0 %v5013
        %5340 = vmatprep.subr.mxu0 %v5019
        %5341 = vmatpush1.msra.mxu0 %v5018
        %5342 = vmatprep.subr.mxu0 %v5024
        %5343 = vmatpush1.msra.mxu0 %v5023
        %5344 = vmatprep.subr.mxu0 %v5029
        %5345 = vmatpush1.msra.mxu0 %v5028
        %5346 = vmatprep.subr.mxu0 %v5034
        %5347 = vmatpush1.msra.mxu0 %v5033
        %5348 = vmatprep.subr.mxu0 %v5039
        %5349 = vmatpush1.msra.mxu0 %v5038
        %5350 = vmatprep.subr.mxu0 %v5044
        %5351 = vmatpush1.msra.mxu0 %v5043
        %5352 = vmatprep.subr.mxu0 %v5049
        %5353 = vmatpush1.msra.mxu0 %v5048
        %5354 = vmatprep.subr.mxu0 %v5054
        %5355 = vmatpush1.msra.mxu0 %v5053
        %5356 = vmatprep.mubr.f32.mxu0 %v4893
        %5357 = vmatmul.mubr.f32.gmra.mrb[0].mxu0 %v4892
        %v5358 = vpop.f32.mrb[0].mxu0
        %v5359 = vadd.f32 0.0, %v5358
        %v5360 = vpop.f32.mrb[0].mxu0
        %v5361 = vadd.f32 0.0, %v5360
        %5362 = vdwg.mxu0
        %5363 = vmatprep.subr.mxu0 %v5059
        %5364 = vmatpush1.msra.mxu0 %v5058
        %5365 = vmatprep.subr.mxu0 %v5064
        %5366 = vmatpush1.msra.mxu0 %v5063
        %5367 = vmatprep.subr.mxu0 %v5069
        %5368 = vmatpush1.msra.mxu0 %v5068
        %5369 = vmatprep.subr.mxu0 %v5074
        %5370 = vmatpush1.msra.mxu0 %v5073
        %5371 = vmatprep.subr.mxu0 %v5079
        %5372 = vmatpush1.msra.mxu0 %v5078
        %5373 = vmatprep.subr.mxu0 %v5084
        %5374 = vmatpush1.msra.mxu0 %v5083
        %5375 = vmatprep.subr.mxu0 %v5089
        %5376 = vmatpush1.msra.mxu0 %v5088
        %5377 = vmatprep.subr.mxu0 %v5094
        %5378 = vmatpush1.msra.mxu0 %v5093
        %5379 = vmatprep.subr.mxu0 %v5099
        %5380 = vmatpush1.msra.mxu0 %v5098
        %5381 = vmatprep.subr.mxu0 %v5104
        %5382 = vmatpush1.msra.mxu0 %v5103
        %5383 = vmatprep.subr.mxu0 %v5109
        %5384 = vmatpush1.msra.mxu0 %v5108
        %5385 = vmatprep.subr.mxu0 %v5114
        %5386 = vmatpush1.msra.mxu0 %v5113
        %5387 = vmatprep.subr.mxu0 %v5119
        %5388 = vmatpush1.msra.mxu0 %v5118
        %5389 = vmatprep.subr.mxu0 %v5124
        %5390 = vmatpush1.msra.mxu0 %v5123
        %5391 = vmatprep.subr.mxu0 %v5129
        %5392 = vmatpush1.msra.mxu0 %v5128
        %5393 = vmatprep.subr.mxu0 %v5134
        %5394 = vmatpush1.msra.mxu0 %v5133
        %5395 = vmatprep.subr.mxu0 %v5139
        %5396 = vmatpush1.msra.mxu0 %v5138
        %5397 = vmatprep.subr.mxu0 %v5144
        %5398 = vmatpush1.msra.mxu0 %v5143
        %5399 = vmatprep.subr.mxu0 %v5149
        %5400 = vmatpush1.msra.mxu0 %v5148
        %5401 = vmatprep.subr.mxu0 %v5154
        %5402 = vmatpush1.msra.mxu0 %v5153
        %5403 = vmatprep.subr.mxu0 %v5159
        %5404 = vmatpush1.msra.mxu0 %v5158
        %5405 = vmatprep.subr.mxu0 %v5164
        %5406 = vmatpush1.msra.mxu0 %v5163
        %5407 = vmatprep.subr.mxu0 %v5169
        %5408 = vmatpush1.msra.mxu0 %v5168
        %5409 = vmatprep.subr.mxu0 %v5174
        %5410 = vmatpush1.msra.mxu0 %v5173
        %5411 = vmatprep.subr.mxu0 %v5179
        %5412 = vmatpush1.msra.mxu0 %v5178
        %5413 = vmatprep.subr.mxu0 %v5184
        %5414 = vmatpush1.msra.mxu0 %v5183
        %5415 = vmatprep.subr.mxu0 %v5189
        %5416 = vmatpush1.msra.mxu0 %v5188
        %5417 = vmatprep.subr.mxu0 %v5194
        %5418 = vmatpush1.msra.mxu0 %v5193
        %5419 = vmatprep.subr.mxu0 %v5199
        %5420 = vmatpush1.msra.mxu0 %v5198
        %5421 = vmatprep.subr.mxu0 %v5204
        %5422 = vmatpush1.msra.mxu0 %v5203
        %5423 = vmatprep.subr.mxu0 %v5209
        %5424 = vmatpush1.msra.mxu0 %v5208
        %5425 = vmatprep.subr.mxu0 %v5214
        %5426 = vmatpush1.msra.mxu0 %v5213
        %5427 = vmatprep.mubr.f32.mxu0 %v4895
        %5428 = vmatmul.mubr.f32.gmra.mrb[0].mxu0 %v4894
        %v5429 = vpop.f32.mrb[0].mxu0
        %v5430 = vadd.f32 %v5359, %v5429
        %v5431 = vpop.f32.mrb[0].mxu0
        %v5432 = vadd.f32 %v5361, %v5431
        %5433 = vdwg.mxu0
        %5434 = vmatprep.subr.mxu0 %v5219
        %5435 = vmatpush1.msra.mxu0 %v5218
        %5436 = vmatprep.subr.mxu0 %v5224
        %5437 = vmatpush1.msra.mxu0 %v5223
        %5438 = vmatprep.subr.mxu0 %v5229
        %5439 = vmatpush1.msra.mxu0 %v5228
        %5440 = vmatprep.subr.mxu0 %v5234
        %5441 = vmatpush1.msra.mxu0 %v5233
        %5442 = vmatprep.subr.mxu0 %v5239
        %5443 = vmatpush1.msra.mxu0 %v5238
        %5444 = vmatprep.subr.mxu0 %v5244
        %5445 = vmatpush1.msra.mxu0 %v5243
        %5446 = vmatprep.subr.mxu0 %v5249
        %5447 = vmatpush1.msra.mxu0 %v5248
        %5448 = vmatprep.subr.mxu0 %v5254
        %5449 = vmatpush1.msra.mxu0 %v5253
        %5450 = vmatprep.subr.mxu0 %v5259
        %5451 = vmatpush1.msra.mxu0 %v5258
        %5452 = vmatprep.subr.mxu0 %v5264
        %5453 = vmatpush1.msra.mxu0 %v5263
        %5454 = vmatprep.subr.mxu0 %v5281
        %5455 = vmatpush1.msra.mxu0 %v5278
        %5456 = vmatprep.subr.mxu0 0.0
        %5457 = vmatpush1.msra.mxu0 0.0
        %5458 = vmatprep.subr.mxu0 0.0
        %5459 = vmatpush1.msra.mxu0 0.0
        %5460 = vmatprep.subr.mxu0 0.0
        %5461 = vmatpush1.msra.mxu0 0.0
        %5462 = vmatprep.subr.mxu0 0.0
        %5463 = vmatpush1.msra.mxu0 0.0
        %5464 = vmatprep.subr.mxu0 0.0
        %5465 = vmatpush1.msra.mxu0 0.0
        %5466 = vmatprep.subr.mxu0 0.0
        %5467 = vmatpush1.msra.mxu0 0.0
        %5468 = vmatprep.subr.mxu0 0.0
        %5469 = vmatpush1.msra.mxu0 0.0
        %5470 = vmatprep.subr.mxu0 0.0
        %5471 = vmatpush1.msra.mxu0 0.0
        %5472 = vmatprep.subr.mxu0 0.0
        %5473 = vmatpush1.msra.mxu0 0.0
        %5474 = vmatprep.subr.mxu0 0.0
        %5475 = vmatpush1.msra.mxu0 0.0
        %5476 = vmatprep.subr.mxu0 0.0
        %5477 = vmatpush1.msra.mxu0 0.0
        %5478 = vmatprep.subr.mxu0 0.0
        %5479 = vmatpush1.msra.mxu0 0.0
        %5480 = vmatprep.subr.mxu0 0.0
        %5481 = vmatpush1.msra.mxu0 0.0
        %5482 = vmatprep.subr.mxu0 0.0
        %5483 = vmatpush1.msra.mxu0 0.0
        %5484 = vmatprep.subr.mxu0 0.0
        %5485 = vmatpush1.msra.mxu0 0.0
        %5486 = vmatprep.subr.mxu0 0.0
        %5487 = vmatpush1.msra.mxu0 0.0
        %5488 = vmatprep.subr.mxu0 0.0
        %5489 = vmatpush1.msra.mxu0 0.0
        %5490 = vmatprep.subr.mxu0 0.0
        %5491 = vmatpush1.msra.mxu0 0.0
        %5492 = vmatprep.subr.mxu0 0.0
        %5493 = vmatpush1.msra.mxu0 0.0
        %5494 = vmatprep.subr.mxu0 0.0
        %5495 = vmatpush1.msra.mxu0 0.0
        %5496 = vmatprep.subr.mxu0 0.0
        %5497 = vmatpush1.msra.mxu0 0.0
        %5498 = vmatprep.mubr.f32.mxu0 0.0
        %5499 = vmatmul.mubr.f32.gmra.mrb[0].mxu0 %v5275
        %v5500 = vpop.f32.mrb[0].mxu0
        %v5501 = vadd.f32 %v5430, %v5500
        %v5502 = vpop.f32.mrb[0].mxu0
        %v5503 = vadd.f32 %v5432, %v5502
        %5504 = vdwg.mxu0
        %5505 = vmatprep.subr.mxu0 %v4901
        %5506 = vmatpush1.msra.mxu0 %v4900
        %5507 = vmatprep.subr.mxu0 %v4906
        %5508 = vmatpush1.msra.mxu0 %v4905
        %5509 = vmatprep.subr.mxu0 %v4911
        %5510 = vmatpush1.msra.mxu0 %v4910
        %5511 = vmatprep.subr.mxu0 %v4916
        %5512 = vmatpush1.msra.mxu0 %v4915
        %5513 = vmatprep.subr.mxu0 %v4921
        %5514 = vmatpush1.msra.mxu0 %v4920
        %5515 = vmatprep.subr.mxu0 %v4926
        %5516 = vmatpush1.msra.mxu0 %v4925
        %5517 = vmatprep.subr.mxu0 %v4931
        %5518 = vmatpush1.msra.mxu0 %v4930
        %5519 = vmatprep.subr.mxu0 %v4936
        %5520 = vmatpush1.msra.mxu0 %v4935
        %5521 = vmatprep.subr.mxu0 %v4941
        %5522 = vmatpush1.msra.mxu0 %v4940
        %5523 = vmatprep.subr.mxu0 %v4946
        %5524 = vmatpush1.msra.mxu0 %v4945
        %5525 = vmatprep.subr.mxu0 %v4951
        %5526 = vmatpush1.msra.mxu0 %v4950
        %5527 = vmatprep.subr.mxu0 %v4956
        %5528 = vmatpush1.msra.mxu0 %v4955
        %5529 = vmatprep.subr.mxu0 %v4961
        %5530 = vmatpush1.msra.mxu0 %v4960
        %5531 = vmatprep.subr.mxu0 %v4966
        %5532 = vmatpush1.msra.mxu0 %v4965
        %5533 = vmatprep.subr.mxu0 %v4971
        %5534 = vmatpush1.msra.mxu0 %v4970
        %5535 = vmatprep.subr.mxu0 %v4976
        %5536 = vmatpush1.msra.mxu0 %v4975
        %5537 = vmatprep.subr.mxu0 %v4981
        %5538 = vmatpush1.msra.mxu0 %v4980
        %5539 = vmatprep.subr.mxu0 %v4986
        %5540 = vmatpush1.msra.mxu0 %v4985
        %5541 = vmatprep.subr.mxu0 %v4991
        %5542 = vmatpush1.msra.mxu0 %v4990
        %5543 = vmatprep.subr.mxu0 %v4996
        %5544 = vmatpush1.msra.mxu0 %v4995
        %5545 = vmatprep.subr.mxu0 %v5001
        %5546 = vmatpush1.msra.mxu0 %v5000
        %5547 = vmatprep.subr.mxu0 %v5006
        %5548 = vmatpush1.msra.mxu0 %v5005
        %5549 = vmatprep.subr.mxu0 %v5011
        %5550 = vmatpush1.msra.mxu0 %v5010
        %5551 = vmatprep.subr.mxu0 %v5016
        %5552 = vmatpush1.msra.mxu0 %v5015
        %5553 = vmatprep.subr.mxu0 %v5021
        %5554 = vmatpush1.msra.mxu0 %v5020
        %5555 = vmatprep.subr.mxu0 %v5026
        %5556 = vmatpush1.msra.mxu0 %v5025
        %5557 = vmatprep.subr.mxu0 %v5031
        %5558 = vmatpush1.msra.mxu0 %v5030
        %5559 = vmatprep.subr.mxu0 %v5036
        %5560 = vmatpush1.msra.mxu0 %v5035
        %5561 = vmatprep.subr.mxu0 %v5041
        %5562 = vmatpush1.msra.mxu0 %v5040
        %5563 = vmatprep.subr.mxu0 %v5046
        %5564 = vmatpush1.msra.mxu0 %v5045
        %5565 = vmatprep.subr.mxu0 %v5051
        %5566 = vmatpush1.msra.mxu0 %v5050
        %5567 = vmatprep.subr.mxu0 %v5056
        %5568 = vmatpush1.msra.mxu0 %v5055
        %5569 = vmatprep.mubr.f32.mxu0 %v4893
        %5570 = vmatmul.mubr.f32.gmra.mrb[0].mxu0 %v4892
        %v5571 = vpop.f32.mrb[0].mxu0
        %v5572 = vadd.f32 0.0, %v5571
        %v5573 = vpop.f32.mrb[0].mxu0
        %v5574 = vadd.f32 0.0, %v5573
        %5575 = vdwg.mxu0
        %5576 = vmatprep.subr.mxu0 %v5061
        %5577 = vmatpush1.msra.mxu0 %v5060
        %5578 = vmatprep.subr.mxu0 %v5066
        %5579 = vmatpush1.msra.mxu0 %v5065
        %5580 = vmatprep.subr.mxu0 %v5071
        %5581 = vmatpush1.msra.mxu0 %v5070
        %5582 = vmatprep.subr.mxu0 %v5076
        %5583 = vmatpush1.msra.mxu0 %v5075
        %5584 = vmatprep.subr.mxu0 %v5081
        %5585 = vmatpush1.msra.mxu0 %v5080
        %5586 = vmatprep.subr.mxu0 %v5086
        %5587 = vmatpush1.msra.mxu0 %v5085
        %5588 = vmatprep.subr.mxu0 %v5091
        %5589 = vmatpush1.msra.mxu0 %v5090
        %5590 = vmatprep.subr.mxu0 %v5096
        %5591 = vmatpush1.msra.mxu0 %v5095
        %5592 = vmatprep.subr.mxu0 %v5101
        %5593 = vmatpush1.msra.mxu0 %v5100
        %5594 = vmatprep.subr.mxu0 %v5106
        %5595 = vmatpush1.msra.mxu0 %v5105
        %5596 = vmatprep.subr.mxu0 %v5111
        %5597 = vmatpush1.msra.mxu0 %v5110
        %5598 = vmatprep.subr.mxu0 %v5116
        %5599 = vmatpush1.msra.mxu0 %v5115
        %5600 = vmatprep.subr.mxu0 %v5121
        %5601 = vmatpush1.msra.mxu0 %v5120
        %5602 = vmatprep.subr.mxu0 %v5126
        %5603 = vmatpush1.msra.mxu0 %v5125
        %5604 = vmatprep.subr.mxu0 %v5131
        %5605 = vmatpush1.msra.mxu0 %v5130
        %5606 = vmatprep.subr.mxu0 %v5136
        %5607 = vmatpush1.msra.mxu0 %v5135
        %5608 = vmatprep.subr.mxu0 %v5141
        %5609 = vmatpush1.msra.mxu0 %v5140
        %5610 = vmatprep.subr.mxu0 %v5146
        %5611 = vmatpush1.msra.mxu0 %v5145
        %5612 = vmatprep.subr.mxu0 %v5151
        %5613 = vmatpush1.msra.mxu0 %v5150
        %5614 = vmatprep.subr.mxu0 %v5156
        %5615 = vmatpush1.msra.mxu0 %v5155
        %5616 = vmatprep.subr.mxu0 %v5161
        %5617 = vmatpush1.msra.mxu0 %v5160
        %5618 = vmatprep.subr.mxu0 %v5166
        %5619 = vmatpush1.msra.mxu0 %v5165
        %5620 = vmatprep.subr.mxu0 %v5171
        %5621 = vmatpush1.msra.mxu0 %v5170
        %5622 = vmatprep.subr.mxu0 %v5176
        %5623 = vmatpush1.msra.mxu0 %v5175
        %5624 = vmatprep.subr.mxu0 %v5181
        %5625 = vmatpush1.msra.mxu0 %v5180
        %5626 = vmatprep.subr.mxu0 %v5186
        %5627 = vmatpush1.msra.mxu0 %v5185
        %5628 = vmatprep.subr.mxu0 %v5191
        %5629 = vmatpush1.msra.mxu0 %v5190
        %5630 = vmatprep.subr.mxu0 %v5196
        %5631 = vmatpush1.msra.mxu0 %v5195
        %5632 = vmatprep.subr.mxu0 %v5201
        %5633 = vmatpush1.msra.mxu0 %v5200
        %5634 = vmatprep.subr.mxu0 %v5206
        %5635 = vmatpush1.msra.mxu0 %v5205
        %5636 = vmatprep.subr.mxu0 %v5211
        %5637 = vmatpush1.msra.mxu0 %v5210
        %5638 = vmatprep.subr.mxu0 %v5216
        %5639 = vmatpush1.msra.mxu0 %v5215
        %5640 = vmatprep.mubr.f32.mxu0 %v4895
        %5641 = vmatmul.mubr.f32.gmra.mrb[0].mxu0 %v4894
        %v5642 = vpop.f32.mrb[0].mxu0
        %v5643 = vadd.f32 %v5572, %v5642
        %v5644 = vpop.f32.mrb[0].mxu0
        %v5645 = vadd.f32 %v5574, %v5644
        %5646 = vdwg.mxu0
        %5647 = vmatprep.subr.mxu0 %v5221
        %5648 = vmatpush1.msra.mxu0 %v5220
        %5649 = vmatprep.subr.mxu0 %v5226
        %5650 = vmatpush1.msra.mxu0 %v5225
        %5651 = vmatprep.subr.mxu0 %v5231
        %5652 = vmatpush1.msra.mxu0 %v5230
        %5653 = vmatprep.subr.mxu0 %v5236
        %5654 = vmatpush1.msra.mxu0 %v5235
        %5655 = vmatprep.subr.mxu0 %v5241
        %5656 = vmatpush1.msra.mxu0 %v5240
        %5657 = vmatprep.subr.mxu0 %v5246
        %5658 = vmatpush1.msra.mxu0 %v5245
        %5659 = vmatprep.subr.mxu0 %v5251
        %5660 = vmatpush1.msra.mxu0 %v5250
        %5661 = vmatprep.subr.mxu0 %v5256
        %5662 = vmatpush1.msra.mxu0 %v5255
        %5663 = vmatprep.subr.mxu0 %v5261
        %5664 = vmatpush1.msra.mxu0 %v5260
        %5665 = vmatprep.subr.mxu0 %v5266
        %5666 = vmatpush1.msra.mxu0 %v5265
        %5667 = vmatprep.subr.mxu0 %v5287
        %5668 = vmatpush1.msra.mxu0 %v5284
        %5669 = vmatprep.subr.mxu0 0.0
        %5670 = vmatpush1.msra.mxu0 0.0
        %5671 = vmatprep.subr.mxu0 0.0
        %5672 = vmatpush1.msra.mxu0 0.0
        %5673 = vmatprep.subr.mxu0 0.0
        %5674 = vmatpush1.msra.mxu0 0.0
        %5675 = vmatprep.subr.mxu0 0.0
        %5676 = vmatpush1.msra.mxu0 0.0
        %5677 = vmatprep.subr.mxu0 0.0
        %5678 = vmatpush1.msra.mxu0 0.0
        %5679 = vmatprep.subr.mxu0 0.0
        %5680 = vmatpush1.msra.mxu0 0.0
        %5681 = vmatprep.subr.mxu0 0.0
        %5682 = vmatpush1.msra.mxu0 0.0
        %5683 = vmatprep.subr.mxu0 0.0
        %5684 = vmatpush1.msra.mxu0 0.0
        %5685 = vmatprep.subr.mxu0 0.0
        %5686 = vmatpush1.msra.mxu0 0.0
        %5687 = vmatprep.subr.mxu0 0.0
        %5688 = vmatpush1.msra.mxu0 0.0
        %5689 = vmatprep.subr.mxu0 0.0
        %5690 = vmatpush1.msra.mxu0 0.0
        %5691 = vmatprep.subr.mxu0 0.0
        %5692 = vmatpush1.msra.mxu0 0.0
        %5693 = vmatprep.subr.mxu0 0.0
        %5694 = vmatpush1.msra.mxu0 0.0
        %5695 = vmatprep.subr.mxu0 0.0
        %5696 = vmatpush1.msra.mxu0 0.0
        %5697 = vmatprep.subr.mxu0 0.0
        %5698 = vmatpush1.msra.mxu0 0.0
        %5699 = vmatprep.subr.mxu0 0.0
        %5700 = vmatpush1.msra.mxu0 0.0
        %5701 = vmatprep.subr.mxu0 0.0
        %5702 = vmatpush1.msra.mxu0 0.0
        %5703 = vmatprep.subr.mxu0 0.0
        %5704 = vmatpush1.msra.mxu0 0.0
        %5705 = vmatprep.subr.mxu0 0.0
        %5706 = vmatpush1.msra.mxu0 0.0
        %5707 = vmatprep.subr.mxu0 0.0
        %5708 = vmatpush1.msra.mxu0 0.0
        %5709 = vmatprep.subr.mxu0 0.0
        %5710 = vmatpush1.msra.mxu0 0.0
        %5711 = vmatprep.mubr.f32.mxu0 0.0
        %5712 = vmatmul.mubr.f32.gmra.mrb[0].mxu0 %v5275
        %v5713 = vpop.f32.mrb[0].mxu0
        %v5714 = vadd.f32 %v5643, %v5713
        %v5715 = vpop.f32.mrb[0].mxu0
        %v5716 = vadd.f32 %v5645, %v5715
        %5717 = vdwg.mxu0
        %5718 = vmatprep.subr.mxu0 0.0
        %5719 = vmatpush1.msra.mxu0 %v4902
        %5720 = vmatprep.subr.mxu0 0.0
        %5721 = vmatpush1.msra.mxu0 %v4907
        %5722 = vmatprep.subr.mxu0 0.0
        %5723 = vmatpush1.msra.mxu0 %v4912
        %5724 = vmatprep.subr.mxu0 0.0
        %5725 = vmatpush1.msra.mxu0 %v4917
        %5726 = vmatprep.subr.mxu0 0.0
        %5727 = vmatpush1.msra.mxu0 %v4922
        %5728 = vmatprep.subr.mxu0 0.0
        %5729 = vmatpush1.msra.mxu0 %v4927
        %5730 = vmatprep.subr.mxu0 0.0
        %5731 = vmatpush1.msra.mxu0 %v4932
        %5732 = vmatprep.subr.mxu0 0.0
        %5733 = vmatpush1.msra.mxu0 %v4937
        %5734 = vmatprep.subr.mxu0 0.0
        %5735 = vmatpush1.msra.mxu0 %v4942
        %5736 = vmatprep.subr.mxu0 0.0
        %5737 = vmatpush1.msra.mxu0 %v4947
        %5738 = vmatprep.subr.mxu0 0.0
        %5739 = vmatpush1.msra.mxu0 %v4952
        %5740 = vmatprep.subr.mxu0 0.0
        %5741 = vmatpush1.msra.mxu0 %v4957
        %5742 = vmatprep.subr.mxu0 0.0
        %5743 = vmatpush1.msra.mxu0 %v4962
        %5744 = vmatprep.subr.mxu0 0.0
        %5745 = vmatpush1.msra.mxu0 %v4967
        %5746 = vmatprep.subr.mxu0 0.0
        %5747 = vmatpush1.msra.mxu0 %v4972
        %5748 = vmatprep.subr.mxu0 0.0
        %5749 = vmatpush1.msra.mxu0 %v4977
        %5750 = vmatprep.subr.mxu0 0.0
        %5751 = vmatpush1.msra.mxu0 %v4982
        %5752 = vmatprep.subr.mxu0 0.0
        %5753 = vmatpush1.msra.mxu0 %v4987
        %5754 = vmatprep.subr.mxu0 0.0
        %5755 = vmatpush1.msra.mxu0 %v4992
        %5756 = vmatprep.subr.mxu0 0.0
        %5757 = vmatpush1.msra.mxu0 %v4997
        %5758 = vmatprep.subr.mxu0 0.0
        %5759 = vmatpush1.msra.mxu0 %v5002
        %5760 = vmatprep.subr.mxu0 0.0
        %5761 = vmatpush1.msra.mxu0 %v5007
        %5762 = vmatprep.subr.mxu0 0.0
        %5763 = vmatpush1.msra.mxu0 %v5012
        %5764 = vmatprep.subr.mxu0 0.0
        %5765 = vmatpush1.msra.mxu0 %v5017
        %5766 = vmatprep.subr.mxu0 0.0
        %5767 = vmatpush1.msra.mxu0 %v5022
        %5768 = vmatprep.subr.mxu0 0.0
        %5769 = vmatpush1.msra.mxu0 %v5027
        %5770 = vmatprep.subr.mxu0 0.0
        %5771 = vmatpush1.msra.mxu0 %v5032
        %5772 = vmatprep.subr.mxu0 0.0
        %5773 = vmatpush1.msra.mxu0 %v5037
        %5774 = vmatprep.subr.mxu0 0.0
        %5775 = vmatpush1.msra.mxu0 %v5042
        %5776 = vmatprep.subr.mxu0 0.0
        %5777 = vmatpush1.msra.mxu0 %v5047
        %5778 = vmatprep.subr.mxu0 0.0
        %5779 = vmatpush1.msra.mxu0 %v5052
        %5780 = vmatprep.subr.mxu0 0.0
        %5781 = vmatpush1.msra.mxu0 %v5057
        %5782 = vmatprep.mubr.f32.mxu0 %v4893
        %5783 = vmatmul.mubr.f32.gmra.mrb[0].mxu0 %v4892
        %v5784 = vpop.f32.mrb[0].mxu0
        %v5785 = vadd.f32 0.0, %v5784
        %v5786 = vpop.f32.mrb[0].mxu0
        %5787 = vdwg.mxu0
        %5788 = vmatprep.subr.mxu0 0.0
        %5789 = vmatpush1.msra.mxu0 %v5062
        %5790 = vmatprep.subr.mxu0 0.0
        %5791 = vmatpush1.msra.mxu0 %v5067
        %5792 = vmatprep.subr.mxu0 0.0
        %5793 = vmatpush1.msra.mxu0 %v5072
        %5794 = vmatprep.subr.mxu0 0.0
        %5795 = vmatpush1.msra.mxu0 %v5077
        %5796 = vmatprep.subr.mxu0 0.0
        %5797 = vmatpush1.msra.mxu0 %v5082
        %5798 = vmatprep.subr.mxu0 0.0
        %5799 = vmatpush1.msra.mxu0 %v5087
        %5800 = vmatprep.subr.mxu0 0.0
        %5801 = vmatpush1.msra.mxu0 %v5092
        %5802 = vmatprep.subr.mxu0 0.0
        %5803 = vmatpush1.msra.mxu0 %v5097
        %5804 = vmatprep.subr.mxu0 0.0
        %5805 = vmatpush1.msra.mxu0 %v5102
        %5806 = vmatprep.subr.mxu0 0.0
        %5807 = vmatpush1.msra.mxu0 %v5107
        %5808 = vmatprep.subr.mxu0 0.0
        %5809 = vmatpush1.msra.mxu0 %v5112
        %5810 = vmatprep.subr.mxu0 0.0
        %5811 = vmatpush1.msra.mxu0 %v5117
        %5812 = vmatprep.subr.mxu0 0.0
        %5813 = vmatpush1.msra.mxu0 %v5122
        %5814 = vmatprep.subr.mxu0 0.0
        %5815 = vmatpush1.msra.mxu0 %v5127
        %5816 = vmatprep.subr.mxu0 0.0
        %5817 = vmatpush1.msra.mxu0 %v5132
        %5818 = vmatprep.subr.mxu0 0.0
        %5819 = vmatpush1.msra.mxu0 %v5137
        %5820 = vmatprep.subr.mxu0 0.0
        %5821 = vmatpush1.msra.mxu0 %v5142
        %5822 = vmatprep.subr.mxu0 0.0
        %5823 = vmatpush1.msra.mxu0 %v5147
        %5824 = vmatprep.subr.mxu0 0.0
        %5825 = vmatpush1.msra.mxu0 %v5152
        %5826 = vmatprep.subr.mxu0 0.0
        %5827 = vmatpush1.msra.mxu0 %v5157
        %5828 = vmatprep.subr.mxu0 0.0
        %5829 = vmatpush1.msra.mxu0 %v5162
        %5830 = vmatprep.subr.mxu0 0.0
        %5831 = vmatpush1.msra.mxu0 %v5167
        %5832 = vmatprep.subr.mxu0 0.0
        %5833 = vmatpush1.msra.mxu0 %v5172
        %5834 = vmatprep.subr.mxu0 0.0
        %5835 = vmatpush1.msra.mxu0 %v5177
        %5836 = vmatprep.subr.mxu0 0.0
        %5837 = vmatpush1.msra.mxu0 %v5182
        %5838 = vmatprep.subr.mxu0 0.0
        %5839 = vmatpush1.msra.mxu0 %v5187
        %5840 = vmatprep.subr.mxu0 0.0
        %5841 = vmatpush1.msra.mxu0 %v5192
        %5842 = vmatprep.subr.mxu0 0.0
        %5843 = vmatpush1.msra.mxu0 %v5197
        %5844 = vmatprep.subr.mxu0 0.0
        %5845 = vmatpush1.msra.mxu0 %v5202
        %5846 = vmatprep.subr.mxu0 0.0
        %5847 = vmatpush1.msra.mxu0 %v5207
        %5848 = vmatprep.subr.mxu0 0.0
        %5849 = vmatpush1.msra.mxu0 %v5212
        %5850 = vmatprep.subr.mxu0 0.0
        %5851 = vmatpush1.msra.mxu0 %v5217
        %5852 = vmatprep.mubr.f32.mxu0 %v4895
        %5853 = vmatmul.mubr.f32.gmra.mrb[0].mxu0 %v4894
        %v5854 = vpop.f32.mrb[0].mxu0
        %v5855 = vadd.f32 %v5785, %v5854
        %v5856 = vpop.f32.mrb[0].mxu0
        %5857 = vdwg.mxu0
        %5858 = vmatprep.subr.mxu0 0.0
        %5859 = vmatpush1.msra.mxu0 %v5222
        %5860 = vmatprep.subr.mxu0 0.0
        %5861 = vmatpush1.msra.mxu0 %v5227
        %5862 = vmatprep.subr.mxu0 0.0
        %5863 = vmatpush1.msra.mxu0 %v5232
        %5864 = vmatprep.subr.mxu0 0.0
        %5865 = vmatpush1.msra.mxu0 %v5237
        %5866 = vmatprep.subr.mxu0 0.0
        %5867 = vmatpush1.msra.mxu0 %v5242
        %5868 = vmatprep.subr.mxu0 0.0
        %5869 = vmatpush1.msra.mxu0 %v5247
        %5870 = vmatprep.subr.mxu0 0.0
        %5871 = vmatpush1.msra.mxu0 %v5252
        %5872 = vmatprep.subr.mxu0 0.0
        %5873 = vmatpush1.msra.mxu0 %v5257
        %5874 = vmatprep.subr.mxu0 0.0
        %5875 = vmatpush1.msra.mxu0 %v5262
        %5876 = vmatprep.subr.mxu0 0.0
        %5877 = vmatpush1.msra.mxu0 %v5267
        %5878 = vmatprep.subr.mxu0 0.0
        %5879 = vmatpush1.msra.mxu0 %v5290
        %5880 = vmatprep.subr.mxu0 0.0
        %5881 = vmatpush1.msra.mxu0 0.0
        %5882 = vmatprep.subr.mxu0 0.0
        %5883 = vmatpush1.msra.mxu0 0.0
        %5884 = vmatprep.subr.mxu0 0.0
        %5885 = vmatpush1.msra.mxu0 0.0
        %5886 = vmatprep.subr.mxu0 0.0
        %5887 = vmatpush1.msra.mxu0 0.0
        %5888 = vmatprep.subr.mxu0 0.0
        %5889 = vmatpush1.msra.mxu0 0.0
        %5890 = vmatprep.subr.mxu0 0.0
        %5891 = vmatpush1.msra.mxu0 0.0
        %5892 = vmatprep.subr.mxu0 0.0
        %5893 = vmatpush1.msra.mxu0 0.0
        %5894 = vmatprep.subr.mxu0 0.0
        %5895 = vmatpush1.msra.mxu0 0.0
        %5896 = vmatprep.subr.mxu0 0.0
        %5897 = vmatpush1.msra.mxu0 0.0
        %5898 = vmatprep.subr.mxu0 0.0
        %5899 = vmatpush1.msra.mxu0 0.0
        %5900 = vmatprep.subr.mxu0 0.0
        %5901 = vmatpush1.msra.mxu0 0.0
        %5902 = vmatprep.subr.mxu0 0.0
        %5903 = vmatpush1.msra.mxu0 0.0
        %5904 = vmatprep.subr.mxu0 0.0
        %5905 = vmatpush1.msra.mxu0 0.0
        %5906 = vmatprep.subr.mxu0 0.0
        %5907 = vmatpush1.msra.mxu0 0.0
        %5908 = vmatprep.subr.mxu0 0.0
        %5909 = vmatpush1.msra.mxu0 0.0
        %5910 = vmatprep.subr.mxu0 0.0
        %5911 = vmatpush1.msra.mxu0 0.0
        %5912 = vmatprep.subr.mxu0 0.0
        %5913 = vmatpush1.msra.mxu0 0.0
        %5914 = vmatprep.subr.mxu0 0.0
        %5915 = vmatpush1.msra.mxu0 0.0
        %5916 = vmatprep.subr.mxu0 0.0
        %5917 = vmatpush1.msra.mxu0 0.0
        %5918 = vmatprep.subr.mxu0 0.0
        %5919 = vmatpush1.msra.mxu0 0.0
        %5920 = vmatprep.subr.mxu0 0.0
        %5921 = vmatpush1.msra.mxu0 0.0
        %5922 = vmatprep.mubr.f32.mxu0 0.0
        %5923 = vmatmul.mubr.f32.gmra.mrb[0].mxu0 %v5275
        %v5924 = vpop.f32.mrb[0].mxu0
        %v5925 = vadd.f32 %v5855, %v5924
        %v5926 = vpop.f32.mrb[0].mxu0
        %5927 = vdwg.mxu0
        %v5933 = vcombine.low %v5501, %v5503
        %v5934 = vcombine.low %v5714, %v5716
        %v5936 = vunpack.c.l.s4 1966171168
        %v5937 = vunpack.c.0.s8 %v5936
        %v5938 = vlaneseq
        %v5939 = vshrl.u32 %v5938, 7
        %v5940 = vsub.s32 %v5937, %v5939
        %v5941 = vrot.slane %v5933, %v5940
        %v5943 = vunpack.c.l.s4 1966171168
        %v5944 = vunpack.c.0.s8 %v5943
        %v5945 = vlaneseq
        %v5946 = vshrl.u32 %v5945, 7
        %v5947 = vsub.s32 %v5944, %v5946
        %v5948 = vrot.slane %v5934, %v5947
        %v5950 = vunpack.c.l.s4 1966171168
        %v5951 = vunpack.c.0.s8 %v5950
        %v5952 = vlaneseq
        %v5953 = vshrl.u32 %v5952, 7
        %v5954 = vsub.s32 %v5951, %v5953
        %v5955 = vrot.slane %v5925, %v5954
        %v5956 = vcombine.low %v5941, %v5948
        %v5958 = vunpack.c.l.s4 1966171168
        %v5959 = vunpack.c.0.s8 %v5958
        %v5960 = vlaneseq
        %v5961 = vshrl.u32 %v5960, 7
        %v5962 = vsub.s32 %v5959, %v5961
        %v5963 = vrot.slane %v5956, %v5962
        %v5965 = vunpack.c.l.s4 1966171168
        %v5966 = vunpack.c.0.s8 %v5965
        %v5967 = vlaneseq
        %v5968 = vshrl.u32 %v5967, 7
        %v5969 = vsub.s32 %v5966, %v5968
        %v5970 = vrot.slane %v5955, %v5969
        %v5971 = vcombine.low %v5963, %v5970
        %v5973 = vadd.f32 %v4897, %v5971
        %s5974 = scalar_lea.vmem %s57, 3000
        %v5975 = vld [vmem:[%s5974] sm:$0xff]
        %v5976 = vld [vmem:[%s5974 + $0x8] sm:$0xff]
        %v5977 = vld [vmem:[%s5974 + $0x10] sm:$0xff]
        %v5978 = vld [vmem:[%s5974 + $0x18] sm:$0xff]
        %v5979 = vld [vmem:[%s5974 + $0x20] sm:$0xff]
        %v5980 = vld [vmem:[%s5974 + $0x28] sm:$0xff]
        %v5981 = vld [vmem:[%s5974 + $0x30] sm:$0xff]
        %v5982 = vld [vmem:[%s5974 + $0x38] sm:$0xff]
        %v5983 = vld [vmem:[%s5974 + $0x40] sm:$0xff]
        %v5984 = vld [vmem:[%s5974 + $0x48] sm:$0xff]
        %v5985 = vld [vmem:[%s5974 + $0x50] sm:$0xff]
        %v5986 = vld [vmem:[%s5974 + $0x58] sm:$0xff]
        %v5987 = vld [vmem:[%s5974 + $0x60] sm:$0xff]
        %v5988 = vld [vmem:[%s5974 + $0x68] sm:$0xff]
        %v5989 = vld [vmem:[%s5974 + $0x70] sm:$0xff]
        %v5990 = vld [vmem:[%s5974 + $0x78] sm:$0xff]
        %v5991 = vld [vmem:[%s5974 + $0x80] sm:$0xff]
        %v5992 = vld [vmem:[%s5974 + $0x88] sm:$0xff]
        %v5993 = vld [vmem:[%s5974 + $0x90] sm:$0xff]
        %v5994 = vld [vmem:[%s5974 + $0x98] sm:$0xff]
        %v5995 = vld [vmem:[%s5974 + $0xa0] sm:$0xff]
        %v5996 = vld [vmem:[%s5974 + $0xa8] sm:$0xff]
        %v5997 = vld [vmem:[%s5974 + $0xb0] sm:$0xff]
        %v5998 = vld [vmem:[%s5974 + $0xb8] sm:$0xff]
        %v5999 = vld [vmem:[%s5974 + $0xc0] sm:$0xff]
        %v6000 = vld [vmem:[%s5974 + $0xc8] sm:$0xff]
        %v6001 = vld [vmem:[%s5974 + $0xd0] sm:$0xff]
        %v6002 = vld [vmem:[%s5974 + $0xd8] sm:$0xff]
        %v6003 = vld [vmem:[%s5974 + $0xe0] sm:$0xff]
        %v6004 = vld [vmem:[%s5974 + $0xe8] sm:$0xff]
        %v6005 = vld [vmem:[%s5974 + $0xf0] sm:$0xff]
        %v6006 = vld [vmem:[%s5974 + $0xf8] sm:$0xff]
        %v6007 = vld [vmem:[%s5974 + $0x100] sm:$0xff]
        %v6008 = vld [vmem:[%s5974 + $0x108] sm:$0xff]
        %v6009 = vld [vmem:[%s5974 + $0x110] sm:$0xff]
        %v6010 = vld [vmem:[%s5974 + $0x118] sm:$0xff]
        %v6011 = vld [vmem:[%s5974 + $0x120] sm:$0xff]
        %v6012 = vld [vmem:[%s5974 + $0x128] sm:$0xff]
        %v6013 = vld [vmem:[%s5974 + $0x130] sm:$0xff]
        %v6014 = vld [vmem:[%s5974 + $0x138] sm:$0xff]
        %v6015 = vld [vmem:[%s5974 + $0x140] sm:$0xff]
        %v6016 = vld [vmem:[%s5974 + $0x148] sm:$0xff]
        %v6017 = vld [vmem:[%s5974 + $0x150] sm:$0xff]
        %v6018 = vld [vmem:[%s5974 + $0x158] sm:$0xff]
        %v6019 = vld [vmem:[%s5974 + $0x160] sm:$0xff]
        %v6020 = vld [vmem:[%s5974 + $0x168] sm:$0xff]
        %v6021 = vld [vmem:[%s5974 + $0x170] sm:$0xff]
        %v6022 = vld [vmem:[%s5974 + $0x178] sm:$0xff]
        %v6023 = vld [vmem:[%s5974 + $0x180] sm:$0xff]
        %v6024 = vld [vmem:[%s5974 + $0x188] sm:$0xff]
        %v6025 = vld [vmem:[%s5974 + $0x190] sm:$0xff]
        %v6026 = vld [vmem:[%s5974 + $0x198] sm:$0xff]
        %v6027 = vld [vmem:[%s5974 + $0x1a0] sm:$0xff]
        %v6028 = vld [vmem:[%s5974 + $0x1a8] sm:$0xff]
        %v6029 = vld [vmem:[%s5974 + $0x1b0] sm:$0xff]
        %v6030 = vld [vmem:[%s5974 + $0x1b8] sm:$0xff]
        %v6031 = vld [vmem:[%s5974 + $0x1c0] sm:$0xff]
        %v6032 = vld [vmem:[%s5974 + $0x1c8] sm:$0xff]
        %v6033 = vld [vmem:[%s5974 + $0x1d0] sm:$0xff]
        %v6034 = vld [vmem:[%s5974 + $0x1d8] sm:$0xff]
        %v6035 = vld [vmem:[%s5974 + $0x1e0] sm:$0xff]
        %v6036 = vld [vmem:[%s5974 + $0x1e8] sm:$0xff]
        %v6037 = vld [vmem:[%s5974 + $0x1f0] sm:$0xff]
        %v6038 = vld [vmem:[%s5974 + $0x1f8] sm:$0xff]
        %v6039 = vld [vmem:[%s5974 + $0x200] sm:$0xff]
        %v6040 = vld [vmem:[%s5974 + $0x208] sm:$0xff]
        %v6041 = vld [vmem:[%s5974 + $0x210] sm:$0xff]
        %v6042 = vld [vmem:[%s5974 + $0x218] sm:$0xff]
        %v6043 = vld [vmem:[%s5974 + $0x220] sm:$0xff]
        %v6044 = vld [vmem:[%s5974 + $0x228] sm:$0xff]
        %v6045 = vld [vmem:[%s5974 + $0x230] sm:$0xff]
        %v6046 = vld [vmem:[%s5974 + $0x238] sm:$0xff]
        %v6047 = vld [vmem:[%s5974 + $0x240] sm:$0xff]
        %v6048 = vld [vmem:[%s5974 + $0x248] sm:$0xff]
        %v6049 = vld [vmem:[%s5974 + $0x250] sm:$0xff]
        %v6050 = vld [vmem:[%s5974 + $0x258] sm:$0xff]
        %v6051 = vld [vmem:[%s5974 + $0x260] sm:$0xff]
        %v6052 = vld [vmem:[%s5974 + $0x268] sm:$0xff]
        %v6053 = vld [vmem:[%s5974 + $0x270] sm:$0xff]
        %v6054 = vld [vmem:[%s5974 + $0x278] sm:$0xff]
        %v6055 = vld [vmem:[%s5974 + $0x280] sm:$0xff]
        %v6056 = vld [vmem:[%s5974 + $0x288] sm:$0xff]
        %v6057 = vld [vmem:[%s5974 + $0x290] sm:$0xff]
        %v6058 = vld [vmem:[%s5974 + $0x298] sm:$0xff]
        %v6059 = vld [vmem:[%s5974 + $0x2a0] sm:$0xff]
        %v6060 = vld [vmem:[%s5974 + $0x2a8] sm:$0xff]
        %v6061 = vld [vmem:[%s5974 + $0x2b0] sm:$0xff]
        %v6062 = vld [vmem:[%s5974 + $0x2b8] sm:$0xff]
        %v6063 = vld [vmem:[%s5974 + $0x2c0] sm:$0xff]
        %v6064 = vld [vmem:[%s5974 + $0x2c8] sm:$0xff]
        %v6065 = vld [vmem:[%s5974 + $0x2d0] sm:$0xff]
        %v6066 = vld [vmem:[%s5974 + $0x2d8] sm:$0xff]
        %v6067 = vld [vmem:[%s5974 + $0x2e0] sm:$0xff]
        %v6068 = vld [vmem:[%s5974 + $0x2e8] sm:$0xff]
        %v6069 = vld [vmem:[%s5974 + $0x2f0] sm:$0xff]
        %v6070 = vld [vmem:[%s5974 + $0x2f8] sm:$0xff]
        %v6071 = vld [vmem:[%s5974 + $0x300] sm:$0xff]
        %v6072 = vld [vmem:[%s5974 + $0x308] sm:$0xff]
        %v6073 = vld [vmem:[%s5974 + $0x310] sm:$0xff]
        %v6074 = vld [vmem:[%s5974 + $0x318] sm:$0xff]
        %v6075 = vld [vmem:[%s5974 + $0x320] sm:$0xff]
        %v6076 = vld [vmem:[%s5974 + $0x328] sm:$0xff]
        %v6077 = vld [vmem:[%s5974 + $0x330] sm:$0xff]
        %v6078 = vld [vmem:[%s5974 + $0x338] sm:$0xff]
        %v6079 = vld [vmem:[%s5974 + $0x340] sm:$0xff]
        %v6080 = vld [vmem:[%s5974 + $0x348] sm:$0xff]
        %v6081 = vld [vmem:[%s5974 + $0x350] sm:$0xff]
        %v6082 = vld [vmem:[%s5974 + $0x358] sm:$0xff]
        %v6083 = vld [vmem:[%s5974 + $0x360] sm:$0xff]
        %v6084 = vld [vmem:[%s5974 + $0x368] sm:$0xff]
        %v6085 = vld [vmem:[%s5974 + $0x370] sm:$0xff]
        %v6086 = vld [vmem:[%s5974 + $0x378] sm:$0xff]
        %v6087 = vld [vmem:[%s5974 + $0x380] sm:$0xff]
        %v6088 = vld [vmem:[%s5974 + $0x388] sm:$0xff]
        %v6089 = vld [vmem:[%s5974 + $0x390] sm:$0xff]
        %v6090 = vld [vmem:[%s5974 + $0x398] sm:$0xff]
        %v6091 = vld [vmem:[%s5974 + $0x3a0] sm:$0xff]
        %v6092 = vld [vmem:[%s5974 + $0x3a8] sm:$0xff]
        %v6093 = vld [vmem:[%s5974 + $0x3b0] sm:$0xff]
        %v6094 = vld [vmem:[%s5974 + $0x3b8] sm:$0xff]
        %v6095 = vld [vmem:[%s5974 + $0x3c0] sm:$0xff]
        %v6096 = vld [vmem:[%s5974 + $0x3c8] sm:$0xff]
        %v6097 = vld [vmem:[%s5974 + $0x3d0] sm:$0xff]
        %v6098 = vld [vmem:[%s5974 + $0x3d8] sm:$0xff]
        %v6099 = vld [vmem:[%s5974 + $0x3e0] sm:$0xff]
        %v6100 = vld [vmem:[%s5974 + $0x3e8] sm:$0xff]
        %v6101 = vld [vmem:[%s5974 + $0x3f0] sm:$0xff]
        %v6102 = vld [vmem:[%s5974 + $0x3f8] sm:$0xff]
        %v6103 = vld [vmem:[%s5974 + $0x400] sm:$0xff]
        %v6104 = vld [vmem:[%s5974 + $0x408] sm:$0xff]
        %v6105 = vld [vmem:[%s5974 + $0x410] sm:$0xff]
        %v6106 = vld [vmem:[%s5974 + $0x418] sm:$0xff]
        %v6107 = vld [vmem:[%s5974 + $0x420] sm:$0xff]
        %v6108 = vld [vmem:[%s5974 + $0x428] sm:$0xff]
        %v6109 = vld [vmem:[%s5974 + $0x430] sm:$0xff]
        %v6110 = vld [vmem:[%s5974 + $0x438] sm:$0xff]
        %v6111 = vld [vmem:[%s5974 + $0x440] sm:$0xff]
        %v6112 = vld [vmem:[%s5974 + $0x448] sm:$0xff]
        %v6113 = vld [vmem:[%s5974 + $0x450] sm:$0xff]
        %v6114 = vld [vmem:[%s5974 + $0x458] sm:$0xff]
        %v6115 = vld [vmem:[%s5974 + $0x460] sm:$0xff]
        %v6116 = vld [vmem:[%s5974 + $0x468] sm:$0xff]
        %v6117 = vld [vmem:[%s5974 + $0x470] sm:$0xff]
        %v6118 = vld [vmem:[%s5974 + $0x478] sm:$0xff]
        %v6119 = vld [vmem:[%s5974 + $0x480] sm:$0xff]
        %v6120 = vld [vmem:[%s5974 + $0x488] sm:$0xff]
        %v6121 = vld [vmem:[%s5974 + $0x490] sm:$0xff]
        %v6122 = vld [vmem:[%s5974 + $0x498] sm:$0xff]
        %v6123 = vld [vmem:[%s5974 + $0x4a0] sm:$0xff]
        %v6124 = vld [vmem:[%s5974 + $0x4a8] sm:$0xff]
        %v6125 = vld [vmem:[%s5974 + $0x4b0] sm:$0xff]
        %v6126 = vld [vmem:[%s5974 + $0x4b8] sm:$0xff]
        %v6127 = vld [vmem:[%s5974 + $0x4c0] sm:$0xff]
        %v6128 = vld [vmem:[%s5974 + $0x4c8] sm:$0xff]
        %v6129 = vld [vmem:[%s5974 + $0x4d0] sm:$0xff]
        %v6130 = vld [vmem:[%s5974 + $0x4d8] sm:$0xff]
        %v6131 = vld [vmem:[%s5974 + $0x4e0] sm:$0xff]
        %v6132 = vld [vmem:[%s5974 + $0x4e8] sm:$0xff]
        %v6133 = vld [vmem:[%s5974 + $0x4f0] sm:$0xff]
        %v6134 = vld [vmem:[%s5974 + $0x4f8] sm:$0xff]
        %v6135 = vld [vmem:[%s5974 + $0x500] sm:$0xff]
        %v6136 = vld [vmem:[%s5974 + $0x508] sm:$0xff]
        %v6137 = vld [vmem:[%s5974 + $0x510] sm:$0xff]
        %v6138 = vld [vmem:[%s5974 + $0x518] sm:$0xff]
        %v6139 = vld [vmem:[%s5974 + $0x520] sm:$0xff]
        %v6140 = vld [vmem:[%s5974 + $0x528] sm:$0xff]
        %v6141 = vld [vmem:[%s5974 + $0x530] sm:$0xff]
        %v6142 = vld [vmem:[%s5974 + $0x538] sm:$0xff]
        %v6143 = vld [vmem:[%s5974 + $0x540] sm:$0xff]
        %v6144 = vld [vmem:[%s5974 + $0x548] sm:$0xff]
        %v6145 = vld [vmem:[%s5974 + $0x550] sm:$0xff]
        %v6146 = vld [vmem:[%s5974 + $0x558] sm:$0xff]
        %v6147 = vld [vmem:[%s5974 + $0x560] sm:$0xff]
        %v6148 = vld [vmem:[%s5974 + $0x568] sm:$0xff]
        %v6149 = vld [vmem:[%s5974 + $0x570] sm:$0xff]
        %v6150 = vld [vmem:[%s5974 + $0x578] sm:$0xff]
        %v6151 = vld [vmem:[%s5974 + $0x580] sm:$0xff]
        %v6152 = vld [vmem:[%s5974 + $0x588] sm:$0xff]
        %v6153 = vld [vmem:[%s5974 + $0x590] sm:$0xff]
        %v6154 = vld [vmem:[%s5974 + $0x598] sm:$0xff]
        %v6155 = vld [vmem:[%s5974 + $0x5a0] sm:$0xff]
        %v6156 = vld [vmem:[%s5974 + $0x5a8] sm:$0xff]
        %v6157 = vld [vmem:[%s5974 + $0x5b0] sm:$0xff]
        %v6158 = vld [vmem:[%s5974 + $0x5b8] sm:$0xff]
        %v6159 = vld [vmem:[%s5974 + $0x5c0] sm:$0xff]
        %v6160 = vld [vmem:[%s5974 + $0x5c8] sm:$0xff]
        %v6161 = vld [vmem:[%s5974 + $0x5d0] sm:$0xff]
        %v6162 = vld [vmem:[%s5974 + $0x5d8] sm:$0xff]
        %v6163 = vld [vmem:[%s5974 + $0x5e0] sm:$0xff]
        %v6164 = vld [vmem:[%s5974 + $0x5e8] sm:$0xff]
        %v6165 = vld [vmem:[%s5974 + $0x5f0] sm:$0xff]
        %v6166 = vld [vmem:[%s5974 + $0x5f8] sm:$0xff]
        %v6167 = vld [vmem:[%s5974 + $0x600] sm:$0xff]
        %v6168 = vld [vmem:[%s5974 + $0x608] sm:$0xff]
        %v6169 = vld [vmem:[%s5974 + $0x610] sm:$0xff]
        %v6170 = vld [vmem:[%s5974 + $0x618] sm:$0xff]
        %v6171 = vld [vmem:[%s5974 + $0x620] sm:$0xff]
        %v6172 = vld [vmem:[%s5974 + $0x628] sm:$0xff]
        %v6173 = vld [vmem:[%s5974 + $0x630] sm:$0xff]
        %v6174 = vld [vmem:[%s5974 + $0x638] sm:$0xff]
        %v6175 = vld [vmem:[%s5974 + $0x640] sm:$0xff]
        %v6176 = vld [vmem:[%s5974 + $0x648] sm:$0xff]
        %v6177 = vld [vmem:[%s5974 + $0x650] sm:$0xff]
        %v6178 = vld [vmem:[%s5974 + $0x658] sm:$0xff]
        %v6179 = vld [vmem:[%s5974 + $0x660] sm:$0xff]
        %v6180 = vld [vmem:[%s5974 + $0x668] sm:$0xff]
        %v6181 = vld [vmem:[%s5974 + $0x670] sm:$0xff]
        %v6182 = vld [vmem:[%s5974 + $0x678] sm:$0xff]
        %v6183 = vld [vmem:[%s5974 + $0x680] sm:$0xff]
        %v6184 = vld [vmem:[%s5974 + $0x688] sm:$0xff]
        %v6185 = vld [vmem:[%s5974 + $0x690] sm:$0xff]
        %v6186 = vld [vmem:[%s5974 + $0x698] sm:$0xff]
        %v6187 = vld [vmem:[%s5974 + $0x6a0] sm:$0xff]
        %v6188 = vld [vmem:[%s5974 + $0x6a8] sm:$0xff]
        %v6189 = vld [vmem:[%s5974 + $0x6b0] sm:$0xff]
        %v6190 = vld [vmem:[%s5974 + $0x6b8] sm:$0xff]
        %v6191 = vld [vmem:[%s5974 + $0x6c0] sm:$0xff]
        %v6192 = vld [vmem:[%s5974 + $0x6c8] sm:$0xff]
        %v6193 = vld [vmem:[%s5974 + $0x6d0] sm:$0xff]
        %v6194 = vld [vmem:[%s5974 + $0x6d8] sm:$0xff]
        %v6195 = vld [vmem:[%s5974 + $0x6e0] sm:$0xff]
        %v6196 = vld [vmem:[%s5974 + $0x6e8] sm:$0xff]
        %v6197 = vld [vmem:[%s5974 + $0x6f0] sm:$0xff]
        %v6198 = vld [vmem:[%s5974 + $0x6f8] sm:$0xff]
        %v6199 = vld [vmem:[%s5974 + $0x700] sm:$0xff]
        %v6200 = vld [vmem:[%s5974 + $0x708] sm:$0xff]
        %v6201 = vld [vmem:[%s5974 + $0x710] sm:$0xff]
        %v6202 = vld [vmem:[%s5974 + $0x718] sm:$0xff]
        %v6203 = vld [vmem:[%s5974 + $0x720] sm:$0xff]
        %v6204 = vld [vmem:[%s5974 + $0x728] sm:$0xff]
        %v6205 = vld [vmem:[%s5974 + $0x730] sm:$0xff]
        %v6206 = vld [vmem:[%s5974 + $0x738] sm:$0xff]
        %v6207 = vld [vmem:[%s5974 + $0x740] sm:$0xff]
        %v6208 = vld [vmem:[%s5974 + $0x748] sm:$0xff]
        %v6209 = vld [vmem:[%s5974 + $0x750] sm:$0xff]
        %v6210 = vld [vmem:[%s5974 + $0x758] sm:$0xff]
        %v6211 = vld [vmem:[%s5974 + $0x760] sm:$0xff]
        %v6212 = vld [vmem:[%s5974 + $0x768] sm:$0xff]
        %v6213 = vld [vmem:[%s5974 + $0x770] sm:$0xff]
        %v6214 = vld [vmem:[%s5974 + $0x778] sm:$0xff]
        %v6215 = vld [vmem:[%s5974 + $0x780] sm:$0xff]
        %v6216 = vld [vmem:[%s5974 + $0x788] sm:$0xff]
        %v6217 = vld [vmem:[%s5974 + $0x790] sm:$0xff]
        %v6218 = vld [vmem:[%s5974 + $0x798] sm:$0xff]
        %v6219 = vld [vmem:[%s5974 + $0x7a0] sm:$0xff]
        %v6220 = vld [vmem:[%s5974 + $0x7a8] sm:$0xff]
        %v6221 = vld [vmem:[%s5974 + $0x7b0] sm:$0xff]
        %v6222 = vld [vmem:[%s5974 + $0x7b8] sm:$0xff]
        %v6223 = vld [vmem:[%s5974 + $0x7c0] sm:$0xff]
        %v6224 = vld [vmem:[%s5974 + $0x7c8] sm:$0xff]
        %v6225 = vld [vmem:[%s5974 + $0x7d0] sm:$0xff]
        %v6226 = vld [vmem:[%s5974 + $0x7d8] sm:$0xff]
        %v6227 = vld [vmem:[%s5974 + $0x7e0] sm:$0xff]
        %v6228 = vld [vmem:[%s5974 + $0x7e8] sm:$0xff]
        %v6229 = vld [vmem:[%s5974 + $0x7f0] sm:$0xff]
        %v6230 = vld [vmem:[%s5974 + $0x7f8] sm:$0xff]
        %v6231 = vld [vmem:[%s5974 + $0x800] sm:$0xff]
        %v6232 = vld [vmem:[%s5974 + $0x808] sm:$0xff]
        %v6233 = vld [vmem:[%s5974 + $0x810] sm:$0xff]
        %v6234 = vld [vmem:[%s5974 + $0x818] sm:$0xff]
        %v6235 = vld [vmem:[%s5974 + $0x820] sm:$0xff]
        %v6236 = vld [vmem:[%s5974 + $0x828] sm:$0xff]
        %v6237 = vld [vmem:[%s5974 + $0x830] sm:$0xff]
        %v6238 = vld [vmem:[%s5974 + $0x838] sm:$0xff]
        %v6239 = vld [vmem:[%s5974 + $0x840] sm:$0xff]
        %v6240 = vld [vmem:[%s5974 + $0x848] sm:$0xff]
        %v6241 = vld [vmem:[%s5974 + $0x850] sm:$0xff]
        %v6242 = vld [vmem:[%s5974 + $0x858] sm:$0xff]
        %v6243 = vld [vmem:[%s5974 + $0x860] sm:$0xff]
        %v6244 = vld [vmem:[%s5974 + $0x868] sm:$0xff]
        %v6245 = vld [vmem:[%s5974 + $0x870] sm:$0xff]
        %v6246 = vld [vmem:[%s5974 + $0x878] sm:$0xff]
        %v6247 = vld [vmem:[%s5974 + $0x880] sm:$0xff]
        %v6248 = vld [vmem:[%s5974 + $0x888] sm:$0xff]
        %v6249 = vld [vmem:[%s5974 + $0x890] sm:$0xff]
        %v6250 = vld [vmem:[%s5974 + $0x898] sm:$0xff]
        %v6251 = vld [vmem:[%s5974 + $0x8a0] sm:$0xff]
        %v6252 = vld [vmem:[%s5974 + $0x8a8] sm:$0xff]
        %v6253 = vld [vmem:[%s5974 + $0x8b0] sm:$0xff]
        %v6254 = vld [vmem:[%s5974 + $0x8b8] sm:$0xff]
        %v6255 = vld [vmem:[%s5974 + $0x8c0] sm:$0xff]
        %v6256 = vld [vmem:[%s5974 + $0x8c8] sm:$0xff]
        %v6257 = vld [vmem:[%s5974 + $0x8d0] sm:$0xff]
        %v6258 = vld [vmem:[%s5974 + $0x8d8] sm:$0xff]
        %v6259 = vld [vmem:[%s5974 + $0x8e0] sm:$0xff]
        %v6260 = vld [vmem:[%s5974 + $0x8e8] sm:$0xff]
        %v6261 = vld [vmem:[%s5974 + $0x8f0] sm:$0xff]
        %v6262 = vld [vmem:[%s5974 + $0x8f8] sm:$0xff]
        %v6263 = vld [vmem:[%s5974 + $0x900] sm:$0xff]
        %v6264 = vld [vmem:[%s5974 + $0x908] sm:$0xff]
        %v6265 = vld [vmem:[%s5974 + $0x910] sm:$0xff]
        %v6266 = vld [vmem:[%s5974 + $0x918] sm:$0xff]
        %v6267 = vld [vmem:[%s5974 + $0x920] sm:$0xff]
        %v6268 = vld [vmem:[%s5974 + $0x928] sm:$0xff]
        %v6269 = vld [vmem:[%s5974 + $0x930] sm:$0xff]
        %v6270 = vld [vmem:[%s5974 + $0x938] sm:$0xff]
        %v6271 = vld [vmem:[%s5974 + $0x940] sm:$0xff]
        %v6272 = vld [vmem:[%s5974 + $0x948] sm:$0xff]
        %v6273 = vld [vmem:[%s5974 + $0x950] sm:$0xff]
        %v6274 = vld [vmem:[%s5974 + $0x958] sm:$0xff]
        %v6275 = vld [vmem:[%s5974 + $0x960] sm:$0xff]
        %v6276 = vld [vmem:[%s5974 + $0x968] sm:$0xff]
        %v6277 = vld [vmem:[%s5974 + $0x970] sm:$0xff]
        %v6278 = vld [vmem:[%s5974 + $0x978] sm:$0xff]
        %v6279 = vld [vmem:[%s5974 + $0x980] sm:$0xff]
        %v6280 = vld [vmem:[%s5974 + $0x988] sm:$0xff]
        %v6281 = vld [vmem:[%s5974 + $0x990] sm:$0xff]
        %v6282 = vld [vmem:[%s5974 + $0x998] sm:$0xff]
        %v6283 = vld [vmem:[%s5974 + $0x9a0] sm:$0xff]
        %v6284 = vld [vmem:[%s5974 + $0x9a8] sm:$0xff]
        %v6285 = vld [vmem:[%s5974 + $0x9b0] sm:$0xff]
        %v6286 = vld [vmem:[%s5974 + $0x9b8] sm:$0xff]
        %v6287 = vld [vmem:[%s5974 + $0x9c0] sm:$0xff]
        %v6288 = vld [vmem:[%s5974 + $0x9c8] sm:$0xff]
        %v6289 = vld [vmem:[%s5974 + $0x9d0] sm:$0xff]
        %v6290 = vld [vmem:[%s5974 + $0x9d8] sm:$0xff]
        %v6291 = vld [vmem:[%s5974 + $0x9e0] sm:$0xff]
        %v6292 = vld [vmem:[%s5974 + $0x9e8] sm:$0xff]
        %v6293 = vld [vmem:[%s5974 + $0x9f0] sm:$0xff]
        %v6294 = vld [vmem:[%s5974 + $0x9f8] sm:$0xff]
        %v6295 = vld [vmem:[%s5974 + $0xa00] sm:$0xff]
        %v6296 = vld [vmem:[%s5974 + $0xa08] sm:$0xff]
        %v6297 = vld [vmem:[%s5974 + $0xa10] sm:$0xff]
        %v6298 = vld [vmem:[%s5974 + $0xa18] sm:$0xff]
        %v6299 = vld [vmem:[%s5974 + $0xa20] sm:$0xff]
        %v6300 = vld [vmem:[%s5974 + $0xa28] sm:$0xff]
        %v6301 = vld [vmem:[%s5974 + $0xa30] sm:$0xff]
        %v6302 = vld [vmem:[%s5974 + $0xa38] sm:$0xff]
        %v6303 = vld [vmem:[%s5974 + $0xa40] sm:$0xff]
        %v6304 = vld [vmem:[%s5974 + $0xa48] sm:$0xff]
        %v6305 = vld [vmem:[%s5974 + $0xa50] sm:$0xff]
        %v6306 = vld [vmem:[%s5974 + $0xa58] sm:$0xff]
        %v6307 = vld [vmem:[%s5974 + $0xa60] sm:$0xff]
        %v6308 = vld [vmem:[%s5974 + $0xa68] sm:$0xff]
        %v6309 = vld [vmem:[%s5974 + $0xa70] sm:$0xff]
        %v6310 = vld [vmem:[%s5974 + $0xa78] sm:$0xff]
        %v6311 = vld [vmem:[%s5974 + $0xa80] sm:$0xff]
        %v6312 = vld [vmem:[%s5974 + $0xa88] sm:$0xff]
        %v6313 = vld [vmem:[%s5974 + $0xa90] sm:$0xff]
        %v6314 = vld [vmem:[%s5974 + $0xa98] sm:$0xff]
        %v6315 = vld [vmem:[%s5974 + $0xaa0] sm:$0xff]
        %v6316 = vld [vmem:[%s5974 + $0xaa8] sm:$0xff]
        %v6317 = vld [vmem:[%s5974 + $0xab0] sm:$0xff]
        %v6318 = vld [vmem:[%s5974 + $0xab8] sm:$0xff]
        %v6319 = vld [vmem:[%s5974 + $0xac0] sm:$0xff]
        %v6320 = vld [vmem:[%s5974 + $0xac8] sm:$0xff]
        %v6321 = vld [vmem:[%s5974 + $0xad0] sm:$0xff]
        %v6322 = vld [vmem:[%s5974 + $0xad8] sm:$0xff]
        %v6323 = vld [vmem:[%s5974 + $0xae0] sm:$0xff]
        %v6324 = vld [vmem:[%s5974 + $0xae8] sm:$0xff]
        %v6325 = vld [vmem:[%s5974 + $0xaf0] sm:$0xff]
        %v6326 = vld [vmem:[%s5974 + $0xaf8] sm:$0xff]
        %v6327 = vld [vmem:[%s5974 + $0xb00] sm:$0xff]
        %v6328 = vld [vmem:[%s5974 + $0xb08] sm:$0xff]
        %v6329 = vld [vmem:[%s5974 + $0xb10] sm:$0xff]
        %v6330 = vld [vmem:[%s5974 + $0xb18] sm:$0xff]
        %v6331 = vld [vmem:[%s5974 + $0xb20] sm:$0xff]
        %v6332 = vld [vmem:[%s5974 + $0xb28] sm:$0xff]
        %v6333 = vld [vmem:[%s5974 + $0xb30] sm:$0xff]
        %v6334 = vld [vmem:[%s5974 + $0xb38] sm:$0xff]
        %v6335 = vld [vmem:[%s5974 + $0xb40] sm:$0xff]
        %v6336 = vld [vmem:[%s5974 + $0xb48] sm:$0xff]
        %v6337 = vld [vmem:[%s5974 + $0xb50] sm:$0xff]
        %v6338 = vld [vmem:[%s5974 + $0xb58] sm:$0xff]
        %v6339 = vld [vmem:[%s5974 + $0xb60] sm:$0xff]
        %v6340 = vld [vmem:[%s5974 + $0xb68] sm:$0xff]
        %v6341 = vld [vmem:[%s5974 + $0xb70] sm:$0xff]
        %v6342 = vld [vmem:[%s5974 + $0xb78] sm:$0xff]
        %v6343 = vld [vmem:[%s5974 + $0xb80] sm:$0xff]
        %v6344 = vld [vmem:[%s5974 + $0xb88] sm:$0xff]
        %v6345 = vld [vmem:[%s5974 + $0xb90] sm:$0xf]
        %v6346 = vld [vmem:[%s5974 + $0xb98] sm:$0xf]
        %v6347 = vld [vmem:[%s5974 + $0xba0] sm:$0xf]
        %v6348 = vld [vmem:[%s5974 + $0xba8] sm:$0xf]
        %v6349 = vld [vmem:[%s5974 + $0xbb0] sm:$0xf]
        %v6354 = vrot.slane %v4892, 1
        %v6355 = vrot.slane %v4893, 1
        %v6356 = vrot.slane %v4894, 1
        %v6357 = vrot.slane %v4895, 1
        %v6358 = vrot.slane %v4896, 1
        %v6363 = vsel %vm5273, %v6358, 0
        %v6366 = vsel %vm2494, %v6345, 0
        %v6369 = vsel %vm2494, %v6346, 0
        %v6372 = vsel %vm2494, %v6347, 0
        %v6375 = vsel %vm2494, %v6348, 0
        %v6378 = vsel %vm2494, %v6349, 0
        %6380 = vmatprep.subr.mxu0 %v5976
        %6381 = vmatpush1.msra.mxu0 %v5975
        %6382 = vmatprep.subr.mxu0 %v5981
        %6383 = vmatpush1.msra.mxu0 %v5980
        %6384 = vmatprep.subr.mxu0 %v5986
        %6385 = vmatpush1.msra.mxu0 %v5985
        %6386 = vmatprep.subr.mxu0 %v5991
        %6387 = vmatpush1.msra.mxu0 %v5990
        %6388 = vmatprep.subr.mxu0 %v5996
        %6389 = vmatpush1.msra.mxu0 %v5995
        %6390 = vmatprep.subr.mxu0 %v6001
        %6391 = vmatpush1.msra.mxu0 %v6000
        %6392 = vmatprep.subr.mxu0 %v6006
        %6393 = vmatpush1.msra.mxu0 %v6005
        %6394 = vmatprep.subr.mxu0 %v6011
        %6395 = vmatpush1.msra.mxu0 %v6010
        %6396 = vmatprep.subr.mxu0 %v6016
        %6397 = vmatpush1.msra.mxu0 %v6015
        %6398 = vmatprep.subr.mxu0 %v6021
        %6399 = vmatpush1.msra.mxu0 %v6020
        %6400 = vmatprep.subr.mxu0 %v6026
        %6401 = vmatpush1.msra.mxu0 %v6025
        %6402 = vmatprep.subr.mxu0 %v6031
        %6403 = vmatpush1.msra.mxu0 %v6030
        %6404 = vmatprep.subr.mxu0 %v6036
        %6405 = vmatpush1.msra.mxu0 %v6035
        %6406 = vmatprep.subr.mxu0 %v6041
        %6407 = vmatpush1.msra.mxu0 %v6040
        %6408 = vmatprep.subr.mxu0 %v6046
        %6409 = vmatpush1.msra.mxu0 %v6045
        %6410 = vmatprep.subr.mxu0 %v6051
        %6411 = vmatpush1.msra.mxu0 %v6050
        %6412 = vmatprep.subr.mxu0 %v6056
        %6413 = vmatpush1.msra.mxu0 %v6055
        %6414 = vmatprep.subr.mxu0 %v6061
        %6415 = vmatpush1.msra.mxu0 %v6060
        %6416 = vmatprep.subr.mxu0 %v6066
        %6417 = vmatpush1.msra.mxu0 %v6065
        %6418 = vmatprep.subr.mxu0 %v6071
        %6419 = vmatpush1.msra.mxu0 %v6070
        %6420 = vmatprep.subr.mxu0 %v6076
        %6421 = vmatpush1.msra.mxu0 %v6075
        %6422 = vmatprep.subr.mxu0 %v6081
        %6423 = vmatpush1.msra.mxu0 %v6080
        %6424 = vmatprep.subr.mxu0 %v6086
        %6425 = vmatpush1.msra.mxu0 %v6085
        %6426 = vmatprep.subr.mxu0 %v6091
        %6427 = vmatpush1.msra.mxu0 %v6090
        %6428 = vmatprep.subr.mxu0 %v6096
        %6429 = vmatpush1.msra.mxu0 %v6095
        %6430 = vmatprep.subr.mxu0 %v6101
        %6431 = vmatpush1.msra.mxu0 %v6100
        %6432 = vmatprep.subr.mxu0 %v6106
        %6433 = vmatpush1.msra.mxu0 %v6105
        %6434 = vmatprep.subr.mxu0 %v6111
        %6435 = vmatpush1.msra.mxu0 %v6110
        %6436 = vmatprep.subr.mxu0 %v6116
        %6437 = vmatpush1.msra.mxu0 %v6115
        %6438 = vmatprep.subr.mxu0 %v6121
        %6439 = vmatpush1.msra.mxu0 %v6120
        %6440 = vmatprep.subr.mxu0 %v6126
        %6441 = vmatpush1.msra.mxu0 %v6125
        %6442 = vmatprep.subr.mxu0 %v6131
        %6443 = vmatpush1.msra.mxu0 %v6130
        %6444 = vmatprep.mubr.f32.mxu0 %v6355
        %6445 = vmatmul.mubr.f32.gmra.mrb[0].mxu0 %v6354
        %v6446 = vpop.f32.mrb[0].mxu0
        %v6447 = vadd.f32 0.0, %v6446
        %v6448 = vpop.f32.mrb[0].mxu0
        %v6449 = vadd.f32 0.0, %v6448
        %6450 = vdwg.mxu0
        %6451 = vmatprep.subr.mxu0 %v6136
        %6452 = vmatpush1.msra.mxu0 %v6135
        %6453 = vmatprep.subr.mxu0 %v6141
        %6454 = vmatpush1.msra.mxu0 %v6140
        %6455 = vmatprep.subr.mxu0 %v6146
        %6456 = vmatpush1.msra.mxu0 %v6145
        %6457 = vmatprep.subr.mxu0 %v6151
        %6458 = vmatpush1.msra.mxu0 %v6150
        %6459 = vmatprep.subr.mxu0 %v6156
        %6460 = vmatpush1.msra.mxu0 %v6155
        %6461 = vmatprep.subr.mxu0 %v6161
        %6462 = vmatpush1.msra.mxu0 %v6160
        %6463 = vmatprep.subr.mxu0 %v6166
        %6464 = vmatpush1.msra.mxu0 %v6165
        %6465 = vmatprep.subr.mxu0 %v6171
        %6466 = vmatpush1.msra.mxu0 %v6170
        %6467 = vmatprep.subr.mxu0 %v6176
        %6468 = vmatpush1.msra.mxu0 %v6175
        %6469 = vmatprep.subr.mxu0 %v6181
        %6470 = vmatpush1.msra.mxu0 %v6180
        %6471 = vmatprep.subr.mxu0 %v6186
        %6472 = vmatpush1.msra.mxu0 %v6185
        %6473 = vmatprep.subr.mxu0 %v6191
        %6474 = vmatpush1.msra.mxu0 %v6190
        %6475 = vmatprep.subr.mxu0 %v6196
        %6476 = vmatpush1.msra.mxu0 %v6195
        %6477 = vmatprep.subr.mxu0 %v6201
        %6478 = vmatpush1.msra.mxu0 %v6200
        %6479 = vmatprep.subr.mxu0 %v6206
        %6480 = vmatpush1.msra.mxu0 %v6205
        %6481 = vmatprep.subr.mxu0 %v6211
        %6482 = vmatpush1.msra.mxu0 %v6210
        %6483 = vmatprep.subr.mxu0 %v6216
        %6484 = vmatpush1.msra.mxu0 %v6215
        %6485 = vmatprep.subr.mxu0 %v6221
        %6486 = vmatpush1.msra.mxu0 %v6220
        %6487 = vmatprep.subr.mxu0 %v6226
        %6488 = vmatpush1.msra.mxu0 %v6225
        %6489 = vmatprep.subr.mxu0 %v6231
        %6490 = vmatpush1.msra.mxu0 %v6230
        %6491 = vmatprep.subr.mxu0 %v6236
        %6492 = vmatpush1.msra.mxu0 %v6235
        %6493 = vmatprep.subr.mxu0 %v6241
        %6494 = vmatpush1.msra.mxu0 %v6240
        %6495 = vmatprep.subr.mxu0 %v6246
        %6496 = vmatpush1.msra.mxu0 %v6245
        %6497 = vmatprep.subr.mxu0 %v6251
        %6498 = vmatpush1.msra.mxu0 %v6250
        %6499 = vmatprep.subr.mxu0 %v6256
        %6500 = vmatpush1.msra.mxu0 %v6255
        %6501 = vmatprep.subr.mxu0 %v6261
        %6502 = vmatpush1.msra.mxu0 %v6260
        %6503 = vmatprep.subr.mxu0 %v6266
        %6504 = vmatpush1.msra.mxu0 %v6265
        %6505 = vmatprep.subr.mxu0 %v6271
        %6506 = vmatpush1.msra.mxu0 %v6270
        %6507 = vmatprep.subr.mxu0 %v6276
        %6508 = vmatpush1.msra.mxu0 %v6275
        %6509 = vmatprep.subr.mxu0 %v6281
        %6510 = vmatpush1.msra.mxu0 %v6280
        %6511 = vmatprep.subr.mxu0 %v6286
        %6512 = vmatpush1.msra.mxu0 %v6285
        %6513 = vmatprep.subr.mxu0 %v6291
        %6514 = vmatpush1.msra.mxu0 %v6290
        %6515 = vmatprep.mubr.f32.mxu0 %v6357
        %6516 = vmatmul.mubr.f32.gmra.mrb[0].mxu0 %v6356
        %v6517 = vpop.f32.mrb[0].mxu0
        %v6518 = vadd.f32 %v6447, %v6517
        %v6519 = vpop.f32.mrb[0].mxu0
        %v6520 = vadd.f32 %v6449, %v6519
        %6521 = vdwg.mxu0
        %6522 = vmatprep.subr.mxu0 %v6296
        %6523 = vmatpush1.msra.mxu0 %v6295
        %6524 = vmatprep.subr.mxu0 %v6301
        %6525 = vmatpush1.msra.mxu0 %v6300
        %6526 = vmatprep.subr.mxu0 %v6306
        %6527 = vmatpush1.msra.mxu0 %v6305
        %6528 = vmatprep.subr.mxu0 %v6311
        %6529 = vmatpush1.msra.mxu0 %v6310
        %6530 = vmatprep.subr.mxu0 %v6316
        %6531 = vmatpush1.msra.mxu0 %v6315
        %6532 = vmatprep.subr.mxu0 %v6321
        %6533 = vmatpush1.msra.mxu0 %v6320
        %6534 = vmatprep.subr.mxu0 %v6326
        %6535 = vmatpush1.msra.mxu0 %v6325
        %6536 = vmatprep.subr.mxu0 %v6331
        %6537 = vmatpush1.msra.mxu0 %v6330
        %6538 = vmatprep.subr.mxu0 %v6336
        %6539 = vmatpush1.msra.mxu0 %v6335
        %6540 = vmatprep.subr.mxu0 %v6341
        %6541 = vmatpush1.msra.mxu0 %v6340
        %6542 = vmatprep.subr.mxu0 %v6369
        %6543 = vmatpush1.msra.mxu0 %v6366
        %6544 = vmatprep.subr.mxu0 0.0
        %6545 = vmatpush1.msra.mxu0 0.0
        %6546 = vmatprep.subr.mxu0 0.0
        %6547 = vmatpush1.msra.mxu0 0.0
        %6548 = vmatprep.subr.mxu0 0.0
        %6549 = vmatpush1.msra.mxu0 0.0
        %6550 = vmatprep.subr.mxu0 0.0
        %6551 = vmatpush1.msra.mxu0 0.0
        %6552 = vmatprep.subr.mxu0 0.0
        %6553 = vmatpush1.msra.mxu0 0.0
        %6554 = vmatprep.subr.mxu0 0.0
        %6555 = vmatpush1.msra.mxu0 0.0
        %6556 = vmatprep.subr.mxu0 0.0
        %6557 = vmatpush1.msra.mxu0 0.0
        %6558 = vmatprep.subr.mxu0 0.0
        %6559 = vmatpush1.msra.mxu0 0.0
        %6560 = vmatprep.subr.mxu0 0.0
        %6561 = vmatpush1.msra.mxu0 0.0
        %6562 = vmatprep.subr.mxu0 0.0
        %6563 = vmatpush1.msra.mxu0 0.0
        %6564 = vmatprep.subr.mxu0 0.0
        %6565 = vmatpush1.msra.mxu0 0.0
        %6566 = vmatprep.subr.mxu0 0.0
        %6567 = vmatpush1.msra.mxu0 0.0
        %6568 = vmatprep.subr.mxu0 0.0
        %6569 = vmatpush1.msra.mxu0 0.0
        %6570 = vmatprep.subr.mxu0 0.0
        %6571 = vmatpush1.msra.mxu0 0.0
        %6572 = vmatprep.subr.mxu0 0.0
        %6573 = vmatpush1.msra.mxu0 0.0
        %6574 = vmatprep.subr.mxu0 0.0
        %6575 = vmatpush1.msra.mxu0 0.0
        %6576 = vmatprep.subr.mxu0 0.0
        %6577 = vmatpush1.msra.mxu0 0.0
        %6578 = vmatprep.subr.mxu0 0.0
        %6579 = vmatpush1.msra.mxu0 0.0
        %6580 = vmatprep.subr.mxu0 0.0
        %6581 = vmatpush1.msra.mxu0 0.0
        %6582 = vmatprep.subr.mxu0 0.0
        %6583 = vmatpush1.msra.mxu0 0.0
        %6584 = vmatprep.subr.mxu0 0.0
        %6585 = vmatpush1.msra.mxu0 0.0
        %6586 = vmatprep.mubr.f32.mxu0 0.0
        %6587 = vmatmul.mubr.f32.gmra.mrb[0].mxu0 %v6363
        %v6588 = vpop.f32.mrb[0].mxu0
        %v6589 = vadd.f32 %v6518, %v6588
        %v6590 = vpop.f32.mrb[0].mxu0
        %v6591 = vadd.f32 %v6520, %v6590
        %6592 = vdwg.mxu0
        %6593 = vmatprep.subr.mxu0 %v5978
        %6594 = vmatpush1.msra.mxu0 %v5977
        %6595 = vmatprep.subr.mxu0 %v5983
        %6596 = vmatpush1.msra.mxu0 %v5982
        %6597 = vmatprep.subr.mxu0 %v5988
        %6598 = vmatpush1.msra.mxu0 %v5987
        %6599 = vmatprep.subr.mxu0 %v5993
        %6600 = vmatpush1.msra.mxu0 %v5992
        %6601 = vmatprep.subr.mxu0 %v5998
        %6602 = vmatpush1.msra.mxu0 %v5997
        %6603 = vmatprep.subr.mxu0 %v6003
        %6604 = vmatpush1.msra.mxu0 %v6002
        %6605 = vmatprep.subr.mxu0 %v6008
        %6606 = vmatpush1.msra.mxu0 %v6007
        %6607 = vmatprep.subr.mxu0 %v6013
        %6608 = vmatpush1.msra.mxu0 %v6012
        %6609 = vmatprep.subr.mxu0 %v6018
        %6610 = vmatpush1.msra.mxu0 %v6017
        %6611 = vmatprep.subr.mxu0 %v6023
        %6612 = vmatpush1.msra.mxu0 %v6022
        %6613 = vmatprep.subr.mxu0 %v6028
        %6614 = vmatpush1.msra.mxu0 %v6027
        %6615 = vmatprep.subr.mxu0 %v6033
        %6616 = vmatpush1.msra.mxu0 %v6032
        %6617 = vmatprep.subr.mxu0 %v6038
        %6618 = vmatpush1.msra.mxu0 %v6037
        %6619 = vmatprep.subr.mxu0 %v6043
        %6620 = vmatpush1.msra.mxu0 %v6042
        %6621 = vmatprep.subr.mxu0 %v6048
        %6622 = vmatpush1.msra.mxu0 %v6047
        %6623 = vmatprep.subr.mxu0 %v6053
        %6624 = vmatpush1.msra.mxu0 %v6052
        %6625 = vmatprep.subr.mxu0 %v6058
        %6626 = vmatpush1.msra.mxu0 %v6057
        %6627 = vmatprep.subr.mxu0 %v6063
        %6628 = vmatpush1.msra.mxu0 %v6062
        %6629 = vmatprep.subr.mxu0 %v6068
        %6630 = vmatpush1.msra.mxu0 %v6067
        %6631 = vmatprep.subr.mxu0 %v6073
        %6632 = vmatpush1.msra.mxu0 %v6072
        %6633 = vmatprep.subr.mxu0 %v6078
        %6634 = vmatpush1.msra.mxu0 %v6077
        %6635 = vmatprep.subr.mxu0 %v6083
        %6636 = vmatpush1.msra.mxu0 %v6082
        %6637 = vmatprep.subr.mxu0 %v6088
        %6638 = vmatpush1.msra.mxu0 %v6087
        %6639 = vmatprep.subr.mxu0 %v6093
        %6640 = vmatpush1.msra.mxu0 %v6092
        %6641 = vmatprep.subr.mxu0 %v6098
        %6642 = vmatpush1.msra.mxu0 %v6097
        %6643 = vmatprep.subr.mxu0 %v6103
        %6644 = vmatpush1.msra.mxu0 %v6102
        %6645 = vmatprep.subr.mxu0 %v6108
        %6646 = vmatpush1.msra.mxu0 %v6107
        %6647 = vmatprep.subr.mxu0 %v6113
        %6648 = vmatpush1.msra.mxu0 %v6112
        %6649 = vmatprep.subr.mxu0 %v6118
        %6650 = vmatpush1.msra.mxu0 %v6117
        %6651 = vmatprep.subr.mxu0 %v6123
        %6652 = vmatpush1.msra.mxu0 %v6122
        %6653 = vmatprep.subr.mxu0 %v6128
        %6654 = vmatpush1.msra.mxu0 %v6127
        %6655 = vmatprep.subr.mxu0 %v6133
        %6656 = vmatpush1.msra.mxu0 %v6132
        %6657 = vmatprep.mubr.f32.mxu0 %v6355
        %6658 = vmatmul.mubr.f32.gmra.mrb[0].mxu0 %v6354
        %v6659 = vpop.f32.mrb[0].mxu0
        %v6660 = vadd.f32 0.0, %v6659
        %v6661 = vpop.f32.mrb[0].mxu0
        %v6662 = vadd.f32 0.0, %v6661
        %6663 = vdwg.mxu0
        %6664 = vmatprep.subr.mxu0 %v6138
        %6665 = vmatpush1.msra.mxu0 %v6137
        %6666 = vmatprep.subr.mxu0 %v6143
        %6667 = vmatpush1.msra.mxu0 %v6142
        %6668 = vmatprep.subr.mxu0 %v6148
        %6669 = vmatpush1.msra.mxu0 %v6147
        %6670 = vmatprep.subr.mxu0 %v6153
        %6671 = vmatpush1.msra.mxu0 %v6152
        %6672 = vmatprep.subr.mxu0 %v6158
        %6673 = vmatpush1.msra.mxu0 %v6157
        %6674 = vmatprep.subr.mxu0 %v6163
        %6675 = vmatpush1.msra.mxu0 %v6162
        %6676 = vmatprep.subr.mxu0 %v6168
        %6677 = vmatpush1.msra.mxu0 %v6167
        %6678 = vmatprep.subr.mxu0 %v6173
        %6679 = vmatpush1.msra.mxu0 %v6172
        %6680 = vmatprep.subr.mxu0 %v6178
        %6681 = vmatpush1.msra.mxu0 %v6177
        %6682 = vmatprep.subr.mxu0 %v6183
        %6683 = vmatpush1.msra.mxu0 %v6182
        %6684 = vmatprep.subr.mxu0 %v6188
        %6685 = vmatpush1.msra.mxu0 %v6187
        %6686 = vmatprep.subr.mxu0 %v6193
        %6687 = vmatpush1.msra.mxu0 %v6192
        %6688 = vmatprep.subr.mxu0 %v6198
        %6689 = vmatpush1.msra.mxu0 %v6197
        %6690 = vmatprep.subr.mxu0 %v6203
        %6691 = vmatpush1.msra.mxu0 %v6202
        %6692 = vmatprep.subr.mxu0 %v6208
        %6693 = vmatpush1.msra.mxu0 %v6207
        %6694 = vmatprep.subr.mxu0 %v6213
        %6695 = vmatpush1.msra.mxu0 %v6212
        %6696 = vmatprep.subr.mxu0 %v6218
        %6697 = vmatpush1.msra.mxu0 %v6217
        %6698 = vmatprep.subr.mxu0 %v6223
        %6699 = vmatpush1.msra.mxu0 %v6222
        %6700 = vmatprep.subr.mxu0 %v6228
        %6701 = vmatpush1.msra.mxu0 %v6227
        %6702 = vmatprep.subr.mxu0 %v6233
        %6703 = vmatpush1.msra.mxu0 %v6232
        %6704 = vmatprep.subr.mxu0 %v6238
        %6705 = vmatpush1.msra.mxu0 %v6237
        %6706 = vmatprep.subr.mxu0 %v6243
        %6707 = vmatpush1.msra.mxu0 %v6242
        %6708 = vmatprep.subr.mxu0 %v6248
        %6709 = vmatpush1.msra.mxu0 %v6247
        %6710 = vmatprep.subr.mxu0 %v6253
        %6711 = vmatpush1.msra.mxu0 %v6252
        %6712 = vmatprep.subr.mxu0 %v6258
        %6713 = vmatpush1.msra.mxu0 %v6257
        %6714 = vmatprep.subr.mxu0 %v6263
        %6715 = vmatpush1.msra.mxu0 %v6262
        %6716 = vmatprep.subr.mxu0 %v6268
        %6717 = vmatpush1.msra.mxu0 %v6267
        %6718 = vmatprep.subr.mxu0 %v6273
        %6719 = vmatpush1.msra.mxu0 %v6272
        %6720 = vmatprep.subr.mxu0 %v6278
        %6721 = vmatpush1.msra.mxu0 %v6277
        %6722 = vmatprep.subr.mxu0 %v6283
        %6723 = vmatpush1.msra.mxu0 %v6282
        %6724 = vmatprep.subr.mxu0 %v6288
        %6725 = vmatpush1.msra.mxu0 %v6287
        %6726 = vmatprep.subr.mxu0 %v6293
        %6727 = vmatpush1.msra.mxu0 %v6292
        %6728 = vmatprep.mubr.f32.mxu0 %v6357
        %6729 = vmatmul.mubr.f32.gmra.mrb[0].mxu0 %v6356
        %v6730 = vpop.f32.mrb[0].mxu0
        %v6731 = vadd.f32 %v6660, %v6730
        %v6732 = vpop.f32.mrb[0].mxu0
        %v6733 = vadd.f32 %v6662, %v6732
        %6734 = vdwg.mxu0
        %6735 = vmatprep.subr.mxu0 %v6298
        %6736 = vmatpush1.msra.mxu0 %v6297
        %6737 = vmatprep.subr.mxu0 %v6303
        %6738 = vmatpush1.msra.mxu0 %v6302
        %6739 = vmatprep.subr.mxu0 %v6308
        %6740 = vmatpush1.msra.mxu0 %v6307
        %6741 = vmatprep.subr.mxu0 %v6313
        %6742 = vmatpush1.msra.mxu0 %v6312
        %6743 = vmatprep.subr.mxu0 %v6318
        %6744 = vmatpush1.msra.mxu0 %v6317
        %6745 = vmatprep.subr.mxu0 %v6323
        %6746 = vmatpush1.msra.mxu0 %v6322
        %6747 = vmatprep.subr.mxu0 %v6328
        %6748 = vmatpush1.msra.mxu0 %v6327
        %6749 = vmatprep.subr.mxu0 %v6333
        %6750 = vmatpush1.msra.mxu0 %v6332
        %6751 = vmatprep.subr.mxu0 %v6338
        %6752 = vmatpush1.msra.mxu0 %v6337
        %6753 = vmatprep.subr.mxu0 %v6343
        %6754 = vmatpush1.msra.mxu0 %v6342
        %6755 = vmatprep.subr.mxu0 %v6375
        %6756 = vmatpush1.msra.mxu0 %v6372
        %6757 = vmatprep.subr.mxu0 0.0
        %6758 = vmatpush1.msra.mxu0 0.0
        %6759 = vmatprep.subr.mxu0 0.0
        %6760 = vmatpush1.msra.mxu0 0.0
        %6761 = vmatprep.subr.mxu0 0.0
        %6762 = vmatpush1.msra.mxu0 0.0
        %6763 = vmatprep.subr.mxu0 0.0
        %6764 = vmatpush1.msra.mxu0 0.0
        %6765 = vmatprep.subr.mxu0 0.0
        %6766 = vmatpush1.msra.mxu0 0.0
        %6767 = vmatprep.subr.mxu0 0.0
        %6768 = vmatpush1.msra.mxu0 0.0
        %6769 = vmatprep.subr.mxu0 0.0
        %6770 = vmatpush1.msra.mxu0 0.0
        %6771 = vmatprep.subr.mxu0 0.0
        %6772 = vmatpush1.msra.mxu0 0.0
        %6773 = vmatprep.subr.mxu0 0.0
        %6774 = vmatpush1.msra.mxu0 0.0
        %6775 = vmatprep.subr.mxu0 0.0
        %6776 = vmatpush1.msra.mxu0 0.0
        %6777 = vmatprep.subr.mxu0 0.0
        %6778 = vmatpush1.msra.mxu0 0.0
        %6779 = vmatprep.subr.mxu0 0.0
        %6780 = vmatpush1.msra.mxu0 0.0
        %6781 = vmatprep.subr.mxu0 0.0
        %6782 = vmatpush1.msra.mxu0 0.0
        %6783 = vmatprep.subr.mxu0 0.0
        %6784 = vmatpush1.msra.mxu0 0.0
        %6785 = vmatprep.subr.mxu0 0.0
        %6786 = vmatpush1.msra.mxu0 0.0
        %6787 = vmatprep.subr.mxu0 0.0
        %6788 = vmatpush1.msra.mxu0 0.0
        %6789 = vmatprep.subr.mxu0 0.0
        %6790 = vmatpush1.msra.mxu0 0.0
        %6791 = vmatprep.subr.mxu0 0.0
        %6792 = vmatpush1.msra.mxu0 0.0
        %6793 = vmatprep.subr.mxu0 0.0
        %6794 = vmatpush1.msra.mxu0 0.0
        %6795 = vmatprep.subr.mxu0 0.0
        %6796 = vmatpush1.msra.mxu0 0.0
        %6797 = vmatprep.subr.mxu0 0.0
        %6798 = vmatpush1.msra.mxu0 0.0
        %6799 = vmatprep.mubr.f32.mxu0 0.0
        %6800 = vmatmul.mubr.f32.gmra.mrb[0].mxu0 %v6363
        %v6801 = vpop.f32.mrb[0].mxu0
        %v6802 = vadd.f32 %v6731, %v6801
        %v6803 = vpop.f32.mrb[0].mxu0
        %v6804 = vadd.f32 %v6733, %v6803
        %6805 = vdwg.mxu0
        %6806 = vmatprep.subr.mxu0 0.0
        %6807 = vmatpush1.msra.mxu0 %v5979
        %6808 = vmatprep.subr.mxu0 0.0
        %6809 = vmatpush1.msra.mxu0 %v5984
        %6810 = vmatprep.subr.mxu0 0.0
        %6811 = vmatpush1.msra.mxu0 %v5989
        %6812 = vmatprep.subr.mxu0 0.0
        %6813 = vmatpush1.msra.mxu0 %v5994
        %6814 = vmatprep.subr.mxu0 0.0
        %6815 = vmatpush1.msra.mxu0 %v5999
        %6816 = vmatprep.subr.mxu0 0.0
        %6817 = vmatpush1.msra.mxu0 %v6004
        %6818 = vmatprep.subr.mxu0 0.0
        %6819 = vmatpush1.msra.mxu0 %v6009
        %6820 = vmatprep.subr.mxu0 0.0
        %6821 = vmatpush1.msra.mxu0 %v6014
        %6822 = vmatprep.subr.mxu0 0.0
        %6823 = vmatpush1.msra.mxu0 %v6019
        %6824 = vmatprep.subr.mxu0 0.0
        %6825 = vmatpush1.msra.mxu0 %v6024
        %6826 = vmatprep.subr.mxu0 0.0
        %6827 = vmatpush1.msra.mxu0 %v6029
        %6828 = vmatprep.subr.mxu0 0.0
        %6829 = vmatpush1.msra.mxu0 %v6034
        %6830 = vmatprep.subr.mxu0 0.0
        %6831 = vmatpush1.msra.mxu0 %v6039
        %6832 = vmatprep.subr.mxu0 0.0
        %6833 = vmatpush1.msra.mxu0 %v6044
        %6834 = vmatprep.subr.mxu0 0.0
        %6835 = vmatpush1.msra.mxu0 %v6049
        %6836 = vmatprep.subr.mxu0 0.0
        %6837 = vmatpush1.msra.mxu0 %v6054
        %6838 = vmatprep.subr.mxu0 0.0
        %6839 = vmatpush1.msra.mxu0 %v6059
        %6840 = vmatprep.subr.mxu0 0.0
        %6841 = vmatpush1.msra.mxu0 %v6064
        %6842 = vmatprep.subr.mxu0 0.0
        %6843 = vmatpush1.msra.mxu0 %v6069
        %6844 = vmatprep.subr.mxu0 0.0
        %6845 = vmatpush1.msra.mxu0 %v6074
        %6846 = vmatprep.subr.mxu0 0.0
        %6847 = vmatpush1.msra.mxu0 %v6079
        %6848 = vmatprep.subr.mxu0 0.0
        %6849 = vmatpush1.msra.mxu0 %v6084
        %6850 = vmatprep.subr.mxu0 0.0
        %6851 = vmatpush1.msra.mxu0 %v6089
        %6852 = vmatprep.subr.mxu0 0.0
        %6853 = vmatpush1.msra.mxu0 %v6094
        %6854 = vmatprep.subr.mxu0 0.0
        %6855 = vmatpush1.msra.mxu0 %v6099
        %6856 = vmatprep.subr.mxu0 0.0
        %6857 = vmatpush1.msra.mxu0 %v6104
        %6858 = vmatprep.subr.mxu0 0.0
        %6859 = vmatpush1.msra.mxu0 %v6109
        %6860 = vmatprep.subr.mxu0 0.0
        %6861 = vmatpush1.msra.mxu0 %v6114
        %6862 = vmatprep.subr.mxu0 0.0
        %6863 = vmatpush1.msra.mxu0 %v6119
        %6864 = vmatprep.subr.mxu0 0.0
        %6865 = vmatpush1.msra.mxu0 %v6124
        %6866 = vmatprep.subr.mxu0 0.0
        %6867 = vmatpush1.msra.mxu0 %v6129
        %6868 = vmatprep.subr.mxu0 0.0
        %6869 = vmatpush1.msra.mxu0 %v6134
        %6870 = vmatprep.mubr.f32.mxu0 %v6355
        %6871 = vmatmul.mubr.f32.gmra.mrb[0].mxu0 %v6354
        %v6872 = vpop.f32.mrb[0].mxu0
        %v6873 = vadd.f32 0.0, %v6872
        %v6874 = vpop.f32.mrb[0].mxu0
        %6875 = vdwg.mxu0
        %6876 = vmatprep.subr.mxu0 0.0
        %6877 = vmatpush1.msra.mxu0 %v6139
        %6878 = vmatprep.subr.mxu0 0.0
        %6879 = vmatpush1.msra.mxu0 %v6144
        %6880 = vmatprep.subr.mxu0 0.0
        %6881 = vmatpush1.msra.mxu0 %v6149
        %6882 = vmatprep.subr.mxu0 0.0
        %6883 = vmatpush1.msra.mxu0 %v6154
        %6884 = vmatprep.subr.mxu0 0.0
        %6885 = vmatpush1.msra.mxu0 %v6159
        %6886 = vmatprep.subr.mxu0 0.0
        %6887 = vmatpush1.msra.mxu0 %v6164
        %6888 = vmatprep.subr.mxu0 0.0
        %6889 = vmatpush1.msra.mxu0 %v6169
        %6890 = vmatprep.subr.mxu0 0.0
        %6891 = vmatpush1.msra.mxu0 %v6174
        %6892 = vmatprep.subr.mxu0 0.0
        %6893 = vmatpush1.msra.mxu0 %v6179
        %6894 = vmatprep.subr.mxu0 0.0
        %6895 = vmatpush1.msra.mxu0 %v6184
        %6896 = vmatprep.subr.mxu0 0.0
        %6897 = vmatpush1.msra.mxu0 %v6189
        %6898 = vmatprep.subr.mxu0 0.0
        %6899 = vmatpush1.msra.mxu0 %v6194
        %6900 = vmatprep.subr.mxu0 0.0
        %6901 = vmatpush1.msra.mxu0 %v6199
        %6902 = vmatprep.subr.mxu0 0.0
        %6903 = vmatpush1.msra.mxu0 %v6204
        %6904 = vmatprep.subr.mxu0 0.0
        %6905 = vmatpush1.msra.mxu0 %v6209
        %6906 = vmatprep.subr.mxu0 0.0
        %6907 = vmatpush1.msra.mxu0 %v6214
        %6908 = vmatprep.subr.mxu0 0.0
        %6909 = vmatpush1.msra.mxu0 %v6219
        %6910 = vmatprep.subr.mxu0 0.0
        %6911 = vmatpush1.msra.mxu0 %v6224
        %6912 = vmatprep.subr.mxu0 0.0
        %6913 = vmatpush1.msra.mxu0 %v6229
        %6914 = vmatprep.subr.mxu0 0.0
        %6915 = vmatpush1.msra.mxu0 %v6234
        %6916 = vmatprep.subr.mxu0 0.0
        %6917 = vmatpush1.msra.mxu0 %v6239
        %6918 = vmatprep.subr.mxu0 0.0
        %6919 = vmatpush1.msra.mxu0 %v6244
        %6920 = vmatprep.subr.mxu0 0.0
        %6921 = vmatpush1.msra.mxu0 %v6249
        %6922 = vmatprep.subr.mxu0 0.0
        %6923 = vmatpush1.msra.mxu0 %v6254
        %6924 = vmatprep.subr.mxu0 0.0
        %6925 = vmatpush1.msra.mxu0 %v6259
        %6926 = vmatprep.subr.mxu0 0.0
        %6927 = vmatpush1.msra.mxu0 %v6264
        %6928 = vmatprep.subr.mxu0 0.0
        %6929 = vmatpush1.msra.mxu0 %v6269
        %6930 = vmatprep.subr.mxu0 0.0
        %6931 = vmatpush1.msra.mxu0 %v6274
        %6932 = vmatprep.subr.mxu0 0.0
        %6933 = vmatpush1.msra.mxu0 %v6279
        %6934 = vmatprep.subr.mxu0 0.0
        %6935 = vmatpush1.msra.mxu0 %v6284
        %6936 = vmatprep.subr.mxu0 0.0
        %6937 = vmatpush1.msra.mxu0 %v6289
        %6938 = vmatprep.subr.mxu0 0.0
        %6939 = vmatpush1.msra.mxu0 %v6294
        %6940 = vmatprep.mubr.f32.mxu0 %v6357
        %6941 = vmatmul.mubr.f32.gmra.mrb[0].mxu0 %v6356
        %v6942 = vpop.f32.mrb[0].mxu0
        %v6943 = vadd.f32 %v6873, %v6942
        %v6944 = vpop.f32.mrb[0].mxu0
        %6945 = vdwg.mxu0
        %6946 = vmatprep.subr.mxu0 0.0
        %6947 = vmatpush1.msra.mxu0 %v6299
        %6948 = vmatprep.subr.mxu0 0.0
        %6949 = vmatpush1.msra.mxu0 %v6304
        %6950 = vmatprep.subr.mxu0 0.0
        %6951 = vmatpush1.msra.mxu0 %v6309
        %6952 = vmatprep.subr.mxu0 0.0
        %6953 = vmatpush1.msra.mxu0 %v6314
        %6954 = vmatprep.subr.mxu0 0.0
        %6955 = vmatpush1.msra.mxu0 %v6319
        %6956 = vmatprep.subr.mxu0 0.0
        %6957 = vmatpush1.msra.mxu0 %v6324
        %6958 = vmatprep.subr.mxu0 0.0
        %6959 = vmatpush1.msra.mxu0 %v6329
        %6960 = vmatprep.subr.mxu0 0.0
        %6961 = vmatpush1.msra.mxu0 %v6334
        %6962 = vmatprep.subr.mxu0 0.0
        %6963 = vmatpush1.msra.mxu0 %v6339
        %6964 = vmatprep.subr.mxu0 0.0
        %6965 = vmatpush1.msra.mxu0 %v6344
        %6966 = vmatprep.subr.mxu0 0.0
        %6967 = vmatpush1.msra.mxu0 %v6378
        %6968 = vmatprep.subr.mxu0 0.0
        %6969 = vmatpush1.msra.mxu0 0.0
        %6970 = vmatprep.subr.mxu0 0.0
        %6971 = vmatpush1.msra.mxu0 0.0
        %6972 = vmatprep.subr.mxu0 0.0
        %6973 = vmatpush1.msra.mxu0 0.0
        %6974 = vmatprep.subr.mxu0 0.0
        %6975 = vmatpush1.msra.mxu0 0.0
        %6976 = vmatprep.subr.mxu0 0.0
        %6977 = vmatpush1.msra.mxu0 0.0
        %6978 = vmatprep.subr.mxu0 0.0
        %6979 = vmatpush1.msra.mxu0 0.0
        %6980 = vmatprep.subr.mxu0 0.0
        %6981 = vmatpush1.msra.mxu0 0.0
        %6982 = vmatprep.subr.mxu0 0.0
        %6983 = vmatpush1.msra.mxu0 0.0
        %6984 = vmatprep.subr.mxu0 0.0
        %6985 = vmatpush1.msra.mxu0 0.0
        %6986 = vmatprep.subr.mxu0 0.0
        %6987 = vmatpush1.msra.mxu0 0.0
        %6988 = vmatprep.subr.mxu0 0.0
        %6989 = vmatpush1.msra.mxu0 0.0
        %6990 = vmatprep.subr.mxu0 0.0
        %6991 = vmatpush1.msra.mxu0 0.0
        %6992 = vmatprep.subr.mxu0 0.0
        %6993 = vmatpush1.msra.mxu0 0.0
        %6994 = vmatprep.subr.mxu0 0.0
        %6995 = vmatpush1.msra.mxu0 0.0
        %6996 = vmatprep.subr.mxu0 0.0
        %6997 = vmatpush1.msra.mxu0 0.0
        %6998 = vmatprep.subr.mxu0 0.0
        %6999 = vmatpush1.msra.mxu0 0.0
        %7000 = vmatprep.subr.mxu0 0.0
        %7001 = vmatpush1.msra.mxu0 0.0
        %7002 = vmatprep.subr.mxu0 0.0
        %7003 = vmatpush1.msra.mxu0 0.0
        %7004 = vmatprep.subr.mxu0 0.0
        %7005 = vmatpush1.msra.mxu0 0.0
        %7006 = vmatprep.subr.mxu0 0.0
        %7007 = vmatpush1.msra.mxu0 0.0
        %7008 = vmatprep.subr.mxu0 0.0
        %7009 = vmatpush1.msra.mxu0 0.0
        %7010 = vmatprep.mubr.f32.mxu0 0.0
        %7011 = vmatmul.mubr.f32.gmra.mrb[0].mxu0 %v6363
        %v7012 = vpop.f32.mrb[0].mxu0
        %v7013 = vadd.f32 %v6943, %v7012
        %v7014 = vpop.f32.mrb[0].mxu0
        %7015 = vdwg.mxu0
        %v7021 = vcombine.low %v6589, %v6591
        %v7022 = vcombine.low %v6802, %v6804
        %v7024 = vunpack.c.l.s4 1966171168
        %v7025 = vunpack.c.0.s8 %v7024
        %v7026 = vlaneseq
        %v7027 = vshrl.u32 %v7026, 7
        %v7028 = vsub.s32 %v7025, %v7027
        %v7029 = vrot.slane %v7021, %v7028
        %v7031 = vunpack.c.l.s4 1966171168
        %v7032 = vunpack.c.0.s8 %v7031
        %v7033 = vlaneseq
        %v7034 = vshrl.u32 %v7033, 7
        %v7035 = vsub.s32 %v7032, %v7034
        %v7036 = vrot.slane %v7022, %v7035
        %v7038 = vunpack.c.l.s4 1966171168
        %v7039 = vunpack.c.0.s8 %v7038
        %v7040 = vlaneseq
        %v7041 = vshrl.u32 %v7040, 7
        %v7042 = vsub.s32 %v7039, %v7041
        %v7043 = vrot.slane %v7013, %v7042
        %v7044 = vcombine.low %v7029, %v7036
        %v7046 = vunpack.c.l.s4 1966171168
        %v7047 = vunpack.c.0.s8 %v7046
        %v7048 = vlaneseq
        %v7049 = vshrl.u32 %v7048, 7
        %v7050 = vsub.s32 %v7047, %v7049
        %v7051 = vrot.slane %v7044, %v7050
        %v7053 = vunpack.c.l.s4 1966171168
        %v7054 = vunpack.c.0.s8 %v7053
        %v7055 = vlaneseq
        %v7056 = vshrl.u32 %v7055, 7
        %v7057 = vsub.s32 %v7054, %v7056
        %v7058 = vrot.slane %v7043, %v7057
        %v7059 = vcombine.low %v7051, %v7058
        %v7061 = vadd.f32 %v5973, %v7059
        %v7062 = vlaneseq
        %vm7063 = vcmp.ge.s32.totalorder %v7062, 0
        %vm7064 = vcmp.lt.s32.totalorder %v7062, 640
        %vm7065 = vmand %vm7063, %vm7064
        %7066 = vst.msk [vmem:[%s996] sm:$0x1f] %vm7065, %v7061
        %s7067 = sand.u32 %s743, 1
        %s7068 = scalar_lea.sflag [#allocation3], %s7067
        %s7069 = sand.u32 %s743, 1
        %s7070 = smul.addr %s7069, 5
        %s7071 = scalar_lea.vmem [#allocation2], %s7070
        // Predicated region
        $region141: #{tpu_custom_call.1} parent=139 // pred_check
          %p7072 = pneg %p753
        $region142: #{tpu_custom_call.1} parent=139 // pred_check_branch
          %7074 = sbr.rel (%p7072) target = $region144
        $region143: #{tpu_custom_call.1} parent=139 // pred_region
          %s7076 = ssub.s32 80, 80
          %7077 = vsyncadd %s7068, %s7076
          %s7078 = smul.addr %s75, 5
          %s7079 = smul.addr %s7078, 16
          %s7080 = scalar_lea.hbm %s61, %s7079
          %s7082 = sshll.u32 %s7071, 4
          %s7083 = int_to_ptr.vmem [resolvable:$true] %s7082
          %7085 = dma.vmem_to_hbm [thread:$0]  %s7083, 80, %s7080, %s7068
        $region144: #{tpu_custom_call.1} parent=139 // pred_fallthru
          _
      $region140: #{tpu_custom_call.1} parent=5 // pred_fallthru
        _
      %p7086 = scmp.le.s32.totalorder 2, %s70
      // Predicated region
      $region145: #{tpu_custom_call.1} parent=5 // pred_check
        %p7087 = pneg %p7086
      $region146: #{tpu_custom_call.1} parent=5 // pred_check_branch
        %7089 = sbr.rel (%p7087) target = $region148
      $region147: #{tpu_custom_call.1} parent=5 // pred_region
        %s7090 = ssub.s32 %s70, 2
        // Predicated region
        $region149: #{tpu_custom_call.1} parent=147 // pred_check
          %p7091 = pneg %p759
        $region150: #{tpu_custom_call.1} parent=147 // pred_check_branch
          %7093 = sbr.rel (%p7091) target = $region152
        $region151: #{tpu_custom_call.1} parent=147 // pred_region
          %s7094 = sand.u32 %s744, 1
          %s7095 = scalar_lea.sflag [#allocation3], %s7094
          %s7096 = sand.u32 %s744, 1
          %s7097 = smul.addr %s7096, 5
          %s7098 = scalar_lea.vmem [#allocation2], %s7097
          %7099 = dma.done %s7095, 80
        $region152: #{tpu_custom_call.1} parent=147 // pred_fallthru
          _
      $region148: #{tpu_custom_call.1} parent=5 // pred_fallthru
        _
    $region6: #{tpu_custom_call.1} parent=1 // loop_footer
      %s74 = sadd.s32 1, %s70
    $region7: #{tpu_custom_call.1} parent=1 // loop_footer_branch
      %69 = sbr.rel target = $region3
    $region8: #{tpu_custom_call.1} parent=1 // loop_exit
      _
    %7100 = vsyncpa [#allocation3], 1
    %s7101 = scalar_lea.sflag [#allocation3], 1
    %7102 = vsyncpa %s7101, 1

</llo_original>
